<compile_context>
chip_gen: v7x
topology: tpu7x:2x2x1
jax: 0.10.0
libtpu: 0.0.40
codegen_flags: <defaults>
</compile_context>

<pallas_src>
import functools

import jax
import jax.numpy as jnp
from jax import lax
from jax.experimental import pallas as pl
from jax.experimental.pallas import tpu as pltpu


# ----------------------------------------------------------------------------
# Pallas kernel: full bidirectional multi-layer LSTM stack in one invocation
# ----------------------------------------------------------------------------
def _bilstm_stack_kernel(x0_ref, msk_ref, wx_ref, wh_ref, b_ref,
                         out_ref, hn_ref, cn_ref,
                         xin_sc, gx_sc, act_sc, h_sc, c_sc, *, batch):
    """Fused bidirectional LSTM stack.

    Layout ("stacked rows"): rows 0:B are the forward direction (walking time
    t = s), rows B:2B are the backward direction (walking time t = T-1-s),
    rows 2B:BP are padding.  All feature/gate blocks are padded to multiples of
    128 lanes.

    x0_ref : [T*BP, Win] bf16  layer-0 stacked input (block-diag per direction)
    msk_ref: [T*BP, Hp]  f32   1.0 where the step is inside the valid length
    wx_ref : [L, Win, 4Hp] bf16  packed input-to-gate weights (both directions)
    wh_ref : [L, 2Hp, 4Hp] bf16  packed hidden-to-gate weights (block diagonal)
    b_ref  : [L, BP, 4Hp]  f32   packed biases (per direction row block)
    out_ref: [T*BP, Hp]  f32   last layer outputs (bwd rows in step order)
    hn_ref : [L, BP, Hp] f32   final hidden state per layer (fwd rows / bwd rows)
    cn_ref : [L, BP, Hp] f32   final cell state per layer
    """
    L, BP, G = b_ref.shape
    Hp = G // 4
    Win = x0_ref.shape[1]
    Fp = Win // 2
    TB = out_ref.shape[0]
    T = TB // BP
    B = batch

    # Row-block masks for building the block-diagonal recurrent LHS (hoisted).
    row = lax.broadcasted_iota(jnp.int32, (BP, Hp), 0)
    fm = (row < B).astype(jnp.float32)                       # forward rows
    bm = ((row >= B) & (row < 2 * B)).astype(jnp.float32)    # backward rows

    for layer in range(L):
        dst = out_ref if layer == L - 1 else act_sc

        # ---- hoisted input projection: one wide bf16 MXU matmul over all T ----
        if layer == 0:
            xin = x0_ref[...]                                # already bf16
        else:
            xin = xin_sc[...].astype(jnp.bfloat16)
        gx_sc[...] = jnp.dot(xin, wx_ref[layer],
                             preferred_element_type=jnp.float32)  # [T*BP, 4Hp]

        wh_l = wh_ref[layer]                                 # [2Hp, 4Hp] bf16
        b_l = b_ref[layer]                                   # [BP, 4Hp] f32

        h_sc[...] = jnp.zeros_like(h_sc)
        c_sc[...] = jnp.zeros_like(c_sc)

        # ---- fully unrolled recurrence; fwd rows see t=s, bwd rows see t=T-1-s
        for s in range(T):
            r0 = s * BP
            h = h_sc[...]
            c = c_sc[...]
            # block-diagonal recurrent LHS: fwd rows use cols 0:Hp, bwd Hp:2Hp
            h_bd = jnp.concatenate([h * fm, h * bm],
                                   axis=-1).astype(jnp.bfloat16)
            gates = (gx_sc[r0:r0 + BP, :] + b_l
                     + jnp.dot(h_bd, wh_l,
                               preferred_element_type=jnp.float32))
            # PyTorch gate order i, f, g, o; each block is a full 128-lane slab.
            i = jax.nn.sigmoid(gates[:, 0:Hp])
            f = jax.nn.sigmoid(gates[:, Hp:2 * Hp])
            g = jnp.tanh(gates[:, 2 * Hp:3 * Hp])
            o = jax.nn.sigmoid(gates[:, 3 * Hp:4 * Hp])
            c_new = f * c + i * g
            h_new = o * jnp.tanh(c_new)
            # length masking (packed-sequence semantics), pure VPU arithmetic.
            m = msk_ref[r0:r0 + BP, :]
            c_sc[...] = c + m * (c_new - c)
            h_sc[...] = h + m * (h_new - h)
            dst[r0:r0 + BP, :] = m * h_new        # lane-dense full-block store

        hn_ref[layer] = h_sc[...]
        cn_ref[layer] = c_sc[...]

        # ---- build next layer's block-diagonal stacked input in VMEM ----
        if layer < L - 1:
            xin_sc[...] = jnp.zeros_like(xin_sc)
            for s in range(T):
                r0 = s * BP
                q0 = (T - 1 - s) * BP
                blk_s = dst[r0:r0 + BP, :]        # step s
                blk_r = dst[q0:q0 + BP, :]        # step T-1-s
                # fwd rows (natural time s): [fwd_prev@s | bwd_prev@s]
                xin_sc[r0:r0 + B, 0:Hp] = blk_s[0:B, :]
                xin_sc[r0:r0 + B, Hp:2 * Hp] = blk_r[B:2 * B, :]
                # bwd rows (natural time T-1-s): [fwd_prev | bwd_prev] @ T-1-s
                xin_sc[r0 + B:r0 + 2 * B, Fp:Fp + Hp] = blk_r[0:B, :]
                xin_sc[r0 + B:r0 + 2 * B, Fp + Hp:Fp + 2 * Hp] = blk_s[B:2 * B, :]


# ----------------------------------------------------------------------------
# Weight / input packing helpers (plain JAX, done once per call)
# ----------------------------------------------------------------------------
def _round_up(x, m):
    return (x + m - 1) // m * m


def _pack_gate_cols(w_t, H, Hp):
    """[rows, 4H] -> [rows, 4*Hp] with gate blocks (i,f,g,o) at Hp boundaries."""
    rows = w_t.shape[0]
    out = jnp.zeros((rows, 4 * Hp), jnp.float32)
    for gi in range(4):
        out = out.at[:, gi * Hp:gi * Hp + H].set(w_t[:, gi * H:(gi + 1) * H])
    return out


def _pack_layer(lp, layer, *, B, BP, E, H, Hp, Fp):
    """Pack one layer's fwd/bwd weights into the kernel's padded layout."""
    G = 4 * Hp
    Win = 2 * Fp
    wx = jnp.zeros((Win, G), jnp.float32)
    wh = jnp.zeros((2 * Hp, G), jnp.float32)
    bias = jnp.zeros((BP, G), jnp.float32)
    for d, dname in enumerate(("fwd", "bwd")):
        w_ih, w_hh, b_ih, b_hh = lp[dname]
        wih_t = _pack_gate_cols(jnp.transpose(w_ih), H, Hp)   # [in_dim, G]
        base = d * Fp
        if layer == 0:
            wx = wx.at[base:base + E, :].set(wih_t)
        else:
            # input features of layer>0 are [fwd_prev(0:H) | bwd_prev(H:2H)]
            wx = wx.at[base:base + H, :].set(wih_t[0:H])
            wx = wx.at[base + Hp:base + Hp + H, :].set(wih_t[H:2 * H])
        whh_t = _pack_gate_cols(jnp.transpose(w_hh), H, Hp)   # [H, G]
        wh = wh.at[d * Hp:d * Hp + H, :].set(whh_t)
        b_p = _pack_gate_cols((b_ih + b_hh)[None, :], H, Hp)  # [1, G]
        bias = bias.at[d * B:(d + 1) * B, :].set(jnp.broadcast_to(b_p, (B, G)))
    return wx.astype(jnp.bfloat16), wh.astype(jnp.bfloat16), bias


# ----------------------------------------------------------------------------
# Forward pass (equivalent of InputEncoder.forward, mode='lstm', eval)
# ----------------------------------------------------------------------------
def input_encoder_forward(params, sentence_batch, sentence_lengths, *,
                          hidden_size, num_layers, sum_directions=True):
    lengths = jnp.asarray(sentence_lengths, jnp.int32)

    # nn.Embedding (padding row is zero in the weight matrix)
    emb = params["embedding"][sentence_batch].astype(jnp.float32)   # [B, T, E]
    B, T, E = emb.shape
    H = hidden_size
    L = num_layers
    Hp = _round_up(H, 128)                 # per-gate lane block
    BP = _round_up(2 * B, 8)               # stacked direction-batch rows
    Fp = max(2 * Hp, _round_up(E, 128))    # per-direction input feature block
    Win = 2 * Fp
    G = 4 * Hp

    # ---- layer-0 stacked input: fwd rows see time s, bwd rows see time T-1-s
    xf = jnp.transpose(emb, (1, 0, 2))                      # [T, B, E]
    xb = xf[::-1]                                           # global time flip
    x0 = jnp.zeros((T, BP, Win), jnp.float32)
    x0 = x0.at[:, 0:B, 0:E].set(xf)
    x0 = x0.at[:, B:2 * B, Fp:Fp + E].set(xb)
    x0 = x0.reshape(T * BP, Win).astype(jnp.bfloat16)

    # ---- validity mask in the same (step, stacked-row) layout
    t_idx = jnp.arange(T)
    mf = (t_idx[:, None] < lengths[None, :]).astype(jnp.float32)            # [T,B]
    mb = ((T - 1 - t_idx)[:, None] < lengths[None, :]).astype(jnp.float32)  # [T,B]
    msk = jnp.zeros((T, BP), jnp.float32)
    msk = msk.at[:, 0:B].set(mf).at[:, B:2 * B].set(mb)
    msk = jnp.broadcast_to(msk[:, :, None], (T, BP, Hp)).reshape(T * BP, Hp)

    # ---- pack weights (bf16 for MXU operands, biases stay f32)
    wx_l, wh_l, b_l = [], [], []
    for layer in range(L):
        wx, wh, bias = _pack_layer(params["lstm"][layer], layer,
                                   B=B, BP=BP, E=E, H=H, Hp=Hp, Fp=Fp)
        wx_l.append(wx)
        wh_l.append(wh)
        b_l.append(bias)
    wx_all = jnp.stack(wx_l)        # [L, Win, G]  bf16
    wh_all = jnp.stack(wh_l)        # [L, 2Hp, G]  bf16
    b_all = jnp.stack(b_l)          # [L, BP, G]   f32

    vmem = pl.BlockSpec(memory_space=pltpu.MemorySpace.VMEM)
    out2d, hn, cn = pl.pallas_call(
        functools.partial(_bilstm_stack_kernel, batch=B),
        out_shape=(jax.ShapeDtypeStruct((T * BP, Hp), jnp.float32),
                   jax.ShapeDtypeStruct((L, BP, Hp), jnp.float32),
                   jax.ShapeDtypeStruct((L, BP, Hp), jnp.float32)),
        in_specs=[vmem] * 5,
        out_specs=(vmem, vmem, vmem),
        scratch_shapes=[pltpu.VMEM((T * BP, Win), jnp.float32),   # next-layer input
                        pltpu.VMEM((T * BP, G), jnp.float32),     # hoisted x@W_ih
                        pltpu.VMEM((T * BP, Hp), jnp.float32),    # per-layer outputs
                        pltpu.VMEM((BP, Hp), jnp.float32),        # h state
                        pltpu.VMEM((BP, Hp), jnp.float32)],       # c state
    )(x0, msk, wx_all, wh_all, b_all)

    # ---- unpack: slice real lanes, un-flip the backward rows, sum directions
    out = out2d.reshape(T, BP, Hp)
    out_f = jnp.transpose(out[:, 0:B, 0:H], (1, 0, 2))            # [B, T, H]
    out_b = jnp.transpose(out[::-1, B:2 * B, 0:H], (1, 0, 2))     # [B, T, H]
    if sum_directions:
        outputs = out_f + out_b
    else:
        outputs = jnp.concatenate([out_f, out_b], axis=-1)

    h_n, c_n = [], []
    for layer in range(L):
        h_n += [hn[layer, 0:B, 0:H], hn[layer, B:2 * B, 0:H]]
        c_n += [cn[layer, 0:B, 0:H], cn[layer, B:2 * B, 0:H]]
    hidden = (jnp.stack(h_n, axis=0), jnp.stack(c_n, axis=0))     # [2L, B, H]
    # TODO(synk): inter-layer dropout (p=0.33, training mode) omitted -- eval semantics.
    return outputs, hidden


# ----------------------------------------------------------------------------
# Pure-JAX f32 reference (packed bidirectional LSTM semantics) for checking
# ----------------------------------------------------------------------------
def _lstm_ref_dir(x_tm, lengths, w_ih, w_hh, b_ih, b_hh, reverse):
    T, B, _ = x_tm.shape
    H = w_hh.shape[1]
    h = jnp.zeros((B, H), jnp.float32)
    c = jnp.zeros((B, H), jnp.float32)
    outs = [None] * T
    order = range(T - 1, -1, -1) if reverse else range(T)
    for t in order:
        gates = x_tm[t] @ w_ih.T + h @ w_hh.T + b_ih + b_hh
        i = jax.nn.sigmoid(gates[:, 0:H])
        f = jax.nn.sigmoid(gates[:, H:2 * H])
        g = jnp.tanh(gates[:, 2 * H:3 * H])
        o = jax.nn.sigmoid(gates[:, 3 * H:4 * H])
        c_new = f * c + i * g
        h_new = o * jnp.tanh(c_new)
        valid = (lengths > t)[:, None]
        h = jnp.where(valid, h_new, h)
        c = jnp.where(valid, c_new, c)
        outs[t] = jnp.where(valid, h_new, jnp.zeros_like(h_new))
    return jnp.stack(outs, 0), h, c


def input_encoder_reference(params, sentence_batch, sentence_lengths, *,
                            hidden_size, num_layers, sum_directions=True):
    lengths = jnp.asarray(sentence_lengths, jnp.int32)
    emb = params["embedding"][sentence_batch].astype(jnp.float32)
    x = jnp.transpose(emb, (1, 0, 2))                       # [T, B, E]
    hs, cs = [], []
    for layer in range(num_layers):
        lp = params["lstm"][layer]
        of, hf, cf = _lstm_ref_dir(x, lengths, *lp["fwd"], reverse=False)
        ob, hb, cb = _lstm_ref_dir(x, lengths, *lp["bwd"], reverse=True)
        x = jnp.concatenate([of, ob], axis=-1)
        hs += [hf, hb]
        cs += [cf, cb]
    out = jnp.transpose(x, (1, 0, 2))
    if sum_directions:
        out = out[:, :, :hidden_size] + out[:, :, hidden_size:]
    return out, (jnp.stack(hs, 0), jnp.stack(cs, 0))


# ----------------------------------------------------------------------------
# Parameter init (matches the PyTorch module's shapes)
# ----------------------------------------------------------------------------
def init_params(key, *, vocab_size, emb_size, hidden_size, num_layers,
                padding_idx):
    k_emb, k_lstm = jax.random.split(key)
    emb = jax.random.normal(k_emb, (vocab_size, emb_size), jnp.float32)
    emb = emb.at[padding_idx].set(0.0)                 # padding_idx row is zero

    bound = 1.0 / jnp.sqrt(hidden_size)
    lstm_params = []
    keys = jax.random.split(k_lstm, num_layers * 2 * 4)
    ki = 0

    def u(k, shape):
        return jax.random.uniform(k, shape, jnp.float32, -bound, bound)

    for layer in range(num_layers):
        in_dim = emb_size if layer == 0 else 2 * hidden_size
        layer_p = {}
        for direction in ("fwd", "bwd"):
            w_ih = u(keys[ki], (4 * hidden_size, in_dim)); ki += 1
            w_hh = u(keys[ki], (4 * hidden_size, hidden_size)); ki += 1
            b_ih = u(keys[ki], (4 * hidden_size,)); ki += 1
            b_hh = u(keys[ki], (4 * hidden_size,)); ki += 1
            layer_p[direction] = (w_ih, w_hh, b_ih, b_hh)
        lstm_params.append(layer_p)

    return {"embedding": emb, "lstm": lstm_params}


if __name__ == "__main__":
    key = jax.random.PRNGKey(0)

    # small, forward-consistent shapes
    vocab_size = 50
    emb_size = 32          # token_embedding_size
    hidden_size = 32
    num_layers = 2
    B, T = 2, 8
    padding_idx = 0        # token_vocabulary.get_id('<<<PADDING>>>')

    k_params, k_tok = jax.random.split(key)
    params = init_params(k_params, vocab_size=vocab_size, emb_size=emb_size,
                         hidden_size=hidden_size, num_layers=num_layers,
                         padding_idx=padding_idx)

    # lengths sorted descending (pack_padded_sequence enforce_sorted=True)
    sentence_lengths = jnp.array([8, 5], jnp.int32)
    tokens = jax.random.randint(k_tok, (B, T), 1, vocab_size, jnp.int32)
    pad_mask = jnp.arange(T)[None, :] >= sentence_lengths[:, None]
    sentence_batch = jnp.where(pad_mask, padding_idx, tokens)

    outputs, (h_n, c_n) = input_encoder_forward(
        params, sentence_batch, sentence_lengths,
        hidden_size=hidden_size, num_layers=num_layers, sum_directions=True)
    jax.block_until_ready((outputs, h_n, c_n))

    # shape / padding checks
    assert outputs.shape == (B, T, hidden_size)
    assert h_n.shape == (2 * num_layers, B, hidden_size)
    assert c_n.shape == (2 * num_layers, B, hidden_size)
    assert bool(jnp.all(jnp.isfinite(outputs)))
    # padded timesteps must be exactly zero (pack/pad_packed semantics)
    assert bool(jnp.all(outputs[1, 5:, :] == 0.0))

    # numerical check vs. pure-f32 reference (kernel uses bf16 MXU operands)
    ref_out, (ref_h, ref_c) = input_encoder_reference(
        params, sentence_batch, sentence_lengths,
        hidden_size=hidden_size, num_layers=num_layers, sum_directions=True)
    assert float(jnp.max(jnp.abs(outputs - ref_out))) < 7e-2
    assert float(jnp.max(jnp.abs(h_n - ref_h))) < 7e-2
    assert float(jnp.max(jnp.abs(c_n - ref_c))) < 7e-2

    print("KERNEL_OK")
</pallas_src>

<mosaic_0001>
module attributes {stable_mosaic.version = 11 : i64} {
  func.func @_bilstm_stack_kernel(%arg0: memref<64x512xbf16, #tpu.memory_space<vmem>>, %arg1: memref<64x128xf32, #tpu.memory_space<vmem>>, %arg2: memref<2x512x512xbf16, #tpu.memory_space<vmem>>, %arg3: memref<2x256x512xbf16, #tpu.memory_space<vmem>>, %arg4: memref<2x8x512xf32, #tpu.memory_space<vmem>>, %arg5: memref<64x128xf32, #tpu.memory_space<vmem>>, %arg6: memref<2x8x128xf32, #tpu.memory_space<vmem>>, %arg7: memref<2x8x128xf32, #tpu.memory_space<vmem>>, %arg8: memref<64x512xf32, #tpu.memory_space<vmem>>, %arg9: memref<64x512xf32, #tpu.memory_space<vmem>>, %arg10: memref<64x128xf32, #tpu.memory_space<vmem>>, %arg11: memref<8x128xf32, #tpu.memory_space<vmem>>, %arg12: memref<8x128xf32, #tpu.memory_space<vmem>>) attributes {dimension_semantics = [], scalar_prefetch = 0 : i64, scratch_operands = 5 : i64, tpu.core_type = #tpu.core_type<tc>} {
    %0 = tpu.iota {dimensions = array<i32: 0>} : vector<8x128xi32>
    %c2_i32 = arith.constant 2 : i32
    %1 = vector.broadcast %c2_i32 : i32 to vector<8x128xi32>
    %2 = arith.cmpi slt, %0, %1 : vector<8x128xi32>
    %3 = arith.extui %2 : vector<8x128xi1> to vector<8x128xi32>
    %4 = arith.sitofp %3 : vector<8x128xi32> to vector<8x128xf32>
    %c2_i32_0 = arith.constant 2 : i32
    %5 = vector.broadcast %c2_i32_0 : i32 to vector<8x128xi32>
    %6 = arith.cmpi sge, %0, %5 : vector<8x128xi32>
    %c4_i32 = arith.constant 4 : i32
    %7 = vector.broadcast %c4_i32 : i32 to vector<8x128xi32>
    %8 = arith.cmpi slt, %0, %7 : vector<8x128xi32>
    %9 = arith.andi %6, %8 : vector<8x128xi1>
    %10 = arith.extui %9 : vector<8x128xi1> to vector<8x128xi32>
    %11 = arith.sitofp %10 : vector<8x128xi32> to vector<8x128xf32>
    %c0 = arith.constant 0 : index
    %c0_1 = arith.constant 0 : index
    %12 = vector.load %arg0[%c0, %c0_1] : memref<64x512xbf16, #tpu.memory_space<vmem>>, vector<64x512xbf16>
    %c0_2 = arith.constant 0 : index
    %c0_3 = arith.constant 0 : index
    %c0_4 = arith.constant 0 : index
    %13 = vector.load %arg2[%c0_2, %c0_3, %c0_4] : memref<2x512x512xbf16, #tpu.memory_space<vmem>>, vector<1x512x512xbf16>
    %14 = vector.shape_cast %13 : vector<1x512x512xbf16> to vector<512x512xbf16>
    %cst = arith.constant dense<0.000000e+00> : vector<64x512xf32>
    %15 = tpu.matmul %12, %14, %cst {dimension_numbers = #tpu.dot_dimension_numbers<[1], [0], [0], [1], [0, 0, 1, 1], [], []>} : vector<64x512xbf16>, vector<512x512xbf16>, vector<64x512xf32> -> vector<64x512xf32>
    %c0_5 = arith.constant 0 : index
    %c0_6 = arith.constant 0 : index
    %16 = vector.load %arg9[%c0_5, %c0_6] : memref<64x512xf32, #tpu.memory_space<vmem>>, vector<64x512xf32>
    tpu.vector_store %arg9[%c0_5, %c0_6], %15 {strides = array<i32>} : memref<64x512xf32, #tpu.memory_space<vmem>>, vector<64x512xf32>,
    %c0_7 = arith.constant 0 : index
    %c0_8 = arith.constant 0 : index
    %c0_9 = arith.constant 0 : index
    %17 = vector.load %arg3[%c0_7, %c0_8, %c0_9] : memref<2x256x512xbf16, #tpu.memory_space<vmem>>, vector<1x256x512xbf16>
    %18 = vector.shape_cast %17 : vector<1x256x512xbf16> to vector<256x512xbf16>
    %c0_10 = arith.constant 0 : index
    %c0_11 = arith.constant 0 : index
    %c0_12 = arith.constant 0 : index
    %19 = vector.load %arg4[%c0_10, %c0_11, %c0_12] : memref<2x8x512xf32, #tpu.memory_space<vmem>>, vector<1x8x512xf32>
    %20 = vector.shape_cast %19 : vector<1x8x512xf32> to vector<8x512xf32>
    %cst_13 = arith.constant 0.000000e+00 : f32
    %21 = vector.broadcast %cst_13 : f32 to vector<8x128xf32>
    %c0_14 = arith.constant 0 : index
    %c0_15 = arith.constant 0 : index
    %22 = vector.load %arg11[%c0_14, %c0_15] : memref<8x128xf32, #tpu.memory_space<vmem>>, vector<8x128xf32>
    tpu.vector_store %arg11[%c0_14, %c0_15], %21 {strides = array<i32>} : memref<8x128xf32, #tpu.memory_space<vmem>>, vector<8x128xf32>,
    %cst_16 = arith.constant 0.000000e+00 : f32
    %23 = vector.broadcast %cst_16 : f32 to vector<8x128xf32>
    %c0_17 = arith.constant 0 : index
    %c0_18 = arith.constant 0 : index
    %24 = vector.load %arg12[%c0_17, %c0_18] : memref<8x128xf32, #tpu.memory_space<vmem>>, vector<8x128xf32>
    tpu.vector_store %arg12[%c0_17, %c0_18], %23 {strides = array<i32>} : memref<8x128xf32, #tpu.memory_space<vmem>>, vector<8x128xf32>,
    %c0_19 = arith.constant 0 : index
    %c0_20 = arith.constant 0 : index
    %25 = vector.load %arg11[%c0_19, %c0_20] : memref<8x128xf32, #tpu.memory_space<vmem>>, vector<8x128xf32>
    %c0_21 = arith.constant 0 : index
    %c0_22 = arith.constant 0 : index
    %26 = vector.load %arg12[%c0_21, %c0_22] : memref<8x128xf32, #tpu.memory_space<vmem>>, vector<8x128xf32>
    %27 = arith.mulf %25, %4 : vector<8x128xf32>
    %28 = arith.mulf %25, %11 : vector<8x128xf32>
    %29 = tpu.concatenate %27, %28 in 1 : vector<8x128xf32>, vector<8x128xf32> -> vector<8x256xf32>
    %30 = arith.truncf %29 : vector<8x256xf32> to vector<8x256xbf16>
    %c0_23 = arith.constant 0 : index
    %c0_24 = arith.constant 0 : index
    %31 = vector.load %arg9[%c0_23, %c0_24] : memref<64x512xf32, #tpu.memory_space<vmem>>, vector<8x512xf32>
    %32 = arith.addf %31, %20 : vector<8x512xf32>
    %cst_25 = arith.constant dense<0.000000e+00> : vector<8x512xf32>
    %33 = tpu.matmul %30, %18, %cst_25 {dimension_numbers = #tpu.dot_dimension_numbers<[1], [0], [0], [1], [0, 0, 1, 1], [], []>} : vector<8x256xbf16>, vector<256x512xbf16>, vector<8x512xf32> -> vector<8x512xf32>
    %34 = arith.addf %32, %33 : vector<8x512xf32>
    %35 = vector.extract_strided_slice %34 {offsets = [0, 0], sizes = [8, 128], strides = [1, 1]} : vector<8x512xf32> to vector<8x128xf32>
    %36 = arith.negf %35 : vector<8x128xf32>
    %37 = math.exp %36 : vector<8x128xf32>
    %cst_26 = arith.constant 1.000000e+00 : f32
    %38 = vector.broadcast %cst_26 : f32 to vector<8x128xf32>
    %39 = arith.addf %38, %37 : vector<8x128xf32>
    %40 = arith.divf %38, %39 : vector<8x128xf32>
    %41 = vector.extract_strided_slice %34 {offsets = [0, 128], sizes = [8, 128], strides = [1, 1]} : vector<8x512xf32> to vector<8x128xf32>
    %42 = arith.negf %41 : vector<8x128xf32>
    %43 = math.exp %42 : vector<8x128xf32>
    %cst_27 = arith.constant 1.000000e+00 : f32
    %44 = vector.broadcast %cst_27 : f32 to vector<8x128xf32>
    %45 = arith.addf %44, %43 : vector<8x128xf32>
    %46 = arith.divf %44, %45 : vector<8x128xf32>
    %47 = vector.extract_strided_slice %34 {offsets = [0, 256], sizes = [8, 128], strides = [1, 1]} : vector<8x512xf32> to vector<8x128xf32>
    %48 = math.tanh %47 : vector<8x128xf32>
    %49 = vector.extract_strided_slice %34 {offsets = [0, 384], sizes = [8, 128], strides = [1, 1]} : vector<8x512xf32> to vector<8x128xf32>
    %50 = arith.negf %49 : vector<8x128xf32>
    %51 = math.exp %50 : vector<8x128xf32>
    %cst_28 = arith.constant 1.000000e+00 : f32
    %52 = vector.broadcast %cst_28 : f32 to vector<8x128xf32>
    %53 = arith.addf %52, %51 : vector<8x128xf32>
    %54 = arith.divf %52, %53 : vector<8x128xf32>
    %55 = arith.mulf %46, %26 : vector<8x128xf32>
    %56 = arith.mulf %40, %48 : vector<8x128xf32>
    %57 = arith.addf %55, %56 : vector<8x128xf32>
    %58 = math.tanh %57 : vector<8x128xf32>
    %59 = arith.mulf %54, %58 : vector<8x128xf32>
    %c0_29 = arith.constant 0 : index
    %c0_30 = arith.constant 0 : index
    %60 = vector.load %arg1[%c0_29, %c0_30] : memref<64x128xf32, #tpu.memory_space<vmem>>, vector<8x128xf32>
    %61 = arith.subf %57, %26 : vector<8x128xf32>
    %62 = arith.mulf %60, %61 : vector<8x128xf32>
    %63 = arith.addf %26, %62 : vector<8x128xf32>
    %c0_31 = arith.constant 0 : index
    %c0_32 = arith.constant 0 : index
    %64 = vector.load %arg12[%c0_31, %c0_32] : memref<8x128xf32, #tpu.memory_space<vmem>>, vector<8x128xf32>
    tpu.vector_store %arg12[%c0_31, %c0_32], %63 {strides = array<i32>} : memref<8x128xf32, #tpu.memory_space<vmem>>, vector<8x128xf32>,
    %65 = arith.subf %59, %25 : vector<8x128xf32>
    %66 = arith.mulf %60, %65 : vector<8x128xf32>
    %67 = arith.addf %25, %66 : vector<8x128xf32>
    %c0_33 = arith.constant 0 : index
    %c0_34 = arith.constant 0 : index
    %68 = vector.load %arg11[%c0_33, %c0_34] : memref<8x128xf32, #tpu.memory_space<vmem>>, vector<8x128xf32>
    tpu.vector_store %arg11[%c0_33, %c0_34], %67 {strides = array<i32>} : memref<8x128xf32, #tpu.memory_space<vmem>>, vector<8x128xf32>,
    %69 = arith.mulf %60, %59 : vector<8x128xf32>
    %c0_35 = arith.constant 0 : index
    %c0_36 = arith.constant 0 : index
    %70 = vector.load %arg10[%c0_35, %c0_36] : memref<64x128xf32, #tpu.memory_space<vmem>>, vector<8x128xf32>
    tpu.vector_store %arg10[%c0_35, %c0_36], %69 {strides = array<i32>} : memref<64x128xf32, #tpu.memory_space<vmem>>, vector<8x128xf32>,
    %c0_37 = arith.constant 0 : index
    %c0_38 = arith.constant 0 : index
    %71 = vector.load %arg11[%c0_37, %c0_38] : memref<8x128xf32, #tpu.memory_space<vmem>>, vector<8x128xf32>
    %c0_39 = arith.constant 0 : index
    %c0_40 = arith.constant 0 : index
    %72 = vector.load %arg12[%c0_39, %c0_40] : memref<8x128xf32, #tpu.memory_space<vmem>>, vector<8x128xf32>
    %73 = arith.mulf %71, %4 : vector<8x128xf32>
    %74 = arith.mulf %71, %11 : vector<8x128xf32>
    %75 = tpu.concatenate %73, %74 in 1 : vector<8x128xf32>, vector<8x128xf32> -> vector<8x256xf32>
    %76 = arith.truncf %75 : vector<8x256xf32> to vector<8x256xbf16>
    %c8 = arith.constant 8 : index
    %c0_41 = arith.constant 0 : index
    %77 = vector.load %arg9[%c8, %c0_41] : memref<64x512xf32, #tpu.memory_space<vmem>>, vector<8x512xf32>
    %78 = arith.addf %77, %20 : vector<8x512xf32>
    %cst_42 = arith.constant dense<0.000000e+00> : vector<8x512xf32>
    %79 = tpu.matmul %76, %18, %cst_42 {dimension_numbers = #tpu.dot_dimension_numbers<[1], [0], [0], [1], [0, 0, 1, 1], [], []>} : vector<8x256xbf16>, vector<256x512xbf16>, vector<8x512xf32> -> vector<8x512xf32>
    %80 = arith.addf %78, %79 : vector<8x512xf32>
    %81 = vector.extract_strided_slice %80 {offsets = [0, 0], sizes = [8, 128], strides = [1, 1]} : vector<8x512xf32> to vector<8x128xf32>
    %82 = arith.negf %81 : vector<8x128xf32>
    %83 = math.exp %82 : vector<8x128xf32>
    %cst_43 = arith.constant 1.000000e+00 : f32
    %84 = vector.broadcast %cst_43 : f32 to vector<8x128xf32>
    %85 = arith.addf %84, %83 : vector<8x128xf32>
    %86 = arith.divf %84, %85 : vector<8x128xf32>
    %87 = vector.extract_strided_slice %80 {offsets = [0, 128], sizes = [8, 128], strides = [1, 1]} : vector<8x512xf32> to vector<8x128xf32>
    %88 = arith.negf %87 : vector<8x128xf32>
    %89 = math.exp %88 : vector<8x128xf32>
    %cst_44 = arith.constant 1.000000e+00 : f32
    %90 = vector.broadcast %cst_44 : f32 to vector<8x128xf32>
    %91 = arith.addf %90, %89 : vector<8x128xf32>
    %92 = arith.divf %90, %91 : vector<8x128xf32>
    %93 = vector.extract_strided_slice %80 {offsets = [0, 256], sizes = [8, 128], strides = [1, 1]} : vector<8x512xf32> to vector<8x128xf32>
    %94 = math.tanh %93 : vector<8x128xf32>
    %95 = vector.extract_strided_slice %80 {offsets = [0, 384], sizes = [8, 128], strides = [1, 1]} : vector<8x512xf32> to vector<8x128xf32>
    %96 = arith.negf %95 : vector<8x128xf32>
    %97 = math.exp %96 : vector<8x128xf32>
    %cst_45 = arith.constant 1.000000e+00 : f32
    %98 = vector.broadcast %cst_45 : f32 to vector<8x128xf32>
    %99 = arith.addf %98, %97 : vector<8x128xf32>
    %100 = arith.divf %98, %99 : vector<8x128xf32>
    %101 = arith.mulf %92, %72 : vector<8x128xf32>
    %102 = arith.mulf %86, %94 : vector<8x128xf32>
    %103 = arith.addf %101, %102 : vector<8x128xf32>
    %104 = math.tanh %103 : vector<8x128xf32>
    %105 = arith.mulf %100, %104 : vector<8x128xf32>
    %c8_46 = arith.constant 8 : index
    %c0_47 = arith.constant 0 : index
    %106 = vector.load %arg1[%c8_46, %c0_47] : memref<64x128xf32, #tpu.memory_space<vmem>>, vector<8x128xf32>
    %107 = arith.subf %103, %72 : vector<8x128xf32>
    %108 = arith.mulf %106, %107 : vector<8x128xf32>
    %109 = arith.addf %72, %108 : vector<8x128xf32>
    %c0_48 = arith.constant 0 : index
    %c0_49 = arith.constant 0 : index
    %110 = vector.load %arg12[%c0_48, %c0_49] : memref<8x128xf32, #tpu.memory_space<vmem>>, vector<8x128xf32>
    tpu.vector_store %arg12[%c0_48, %c0_49], %109 {strides = array<i32>} : memref<8x128xf32, #tpu.memory_space<vmem>>, vector<8x128xf32>,
    %111 = arith.subf %105, %71 : vector<8x128xf32>
    %112 = arith.mulf %106, %111 : vector<8x128xf32>
    %113 = arith.addf %71, %112 : vector<8x128xf32>
    %c0_50 = arith.constant 0 : index
    %c0_51 = arith.constant 0 : index
    %114 = vector.load %arg11[%c0_50, %c0_51] : memref<8x128xf32, #tpu.memory_space<vmem>>, vector<8x128xf32>
    tpu.vector_store %arg11[%c0_50, %c0_51], %113 {strides = array<i32>} : memref<8x128xf32, #tpu.memory_space<vmem>>, vector<8x128xf32>,
    %115 = arith.mulf %106, %105 : vector<8x128xf32>
    %c8_52 = arith.constant 8 : index
    %c0_53 = arith.constant 0 : index
    %116 = vector.load %arg10[%c8_52, %c0_53] : memref<64x128xf32, #tpu.memory_space<vmem>>, vector<8x128xf32>
    tpu.vector_store %arg10[%c8_52, %c0_53], %115 {strides = array<i32>} : memref<64x128xf32, #tpu.memory_space<vmem>>, vector<8x128xf32>,
    %c0_54 = arith.constant 0 : index
    %c0_55 = arith.constant 0 : index
    %117 = vector.load %arg11[%c0_54, %c0_55] : memref<8x128xf32, #tpu.memory_space<vmem>>, vector<8x128xf32>
    %c0_56 = arith.constant 0 : index
    %c0_57 = arith.constant 0 : index
    %118 = vector.load %arg12[%c0_56, %c0_57] : memref<8x128xf32, #tpu.memory_space<vmem>>, vector<8x128xf32>
    %119 = arith.mulf %117, %4 : vector<8x128xf32>
    %120 = arith.mulf %117, %11 : vector<8x128xf32>
    %121 = tpu.concatenate %119, %120 in 1 : vector<8x128xf32>, vector<8x128xf32> -> vector<8x256xf32>
    %122 = arith.truncf %121 : vector<8x256xf32> to vector<8x256xbf16>
    %c16 = arith.constant 16 : index
    %c0_58 = arith.constant 0 : index
    %123 = vector.load %arg9[%c16, %c0_58] : memref<64x512xf32, #tpu.memory_space<vmem>>, vector<8x512xf32>
    %124 = arith.addf %123, %20 : vector<8x512xf32>
    %cst_59 = arith.constant dense<0.000000e+00> : vector<8x512xf32>
    %125 = tpu.matmul %122, %18, %cst_59 {dimension_numbers = #tpu.dot_dimension_numbers<[1], [0], [0], [1], [0, 0, 1, 1], [], []>} : vector<8x256xbf16>, vector<256x512xbf16>, vector<8x512xf32> -> vector<8x512xf32>
    %126 = arith.addf %124, %125 : vector<8x512xf32>
    %127 = vector.extract_strided_slice %126 {offsets = [0, 0], sizes = [8, 128], strides = [1, 1]} : vector<8x512xf32> to vector<8x128xf32>
    %128 = arith.negf %127 : vector<8x128xf32>
    %129 = math.exp %128 : vector<8x128xf32>
    %cst_60 = arith.constant 1.000000e+00 : f32
    %130 = vector.broadcast %cst_60 : f32 to vector<8x128xf32>
    %131 = arith.addf %130, %129 : vector<8x128xf32>
    %132 = arith.divf %130, %131 : vector<8x128xf32>
    %133 = vector.extract_strided_slice %126 {offsets = [0, 128], sizes = [8, 128], strides = [1, 1]} : vector<8x512xf32> to vector<8x128xf32>
    %134 = arith.negf %133 : vector<8x128xf32>
    %135 = math.exp %134 : vector<8x128xf32>
    %cst_61 = arith.constant 1.000000e+00 : f32
    %136 = vector.broadcast %cst_61 : f32 to vector<8x128xf32>
    %137 = arith.addf %136, %135 : vector<8x128xf32>
    %138 = arith.divf %136, %137 : vector<8x128xf32>
    %139 = vector.extract_strided_slice %126 {offsets = [0, 256], sizes = [8, 128], strides = [1, 1]} : vector<8x512xf32> to vector<8x128xf32>
    %140 = math.tanh %139 : vector<8x128xf32>
    %141 = vector.extract_strided_slice %126 {offsets = [0, 384], sizes = [8, 128], strides = [1, 1]} : vector<8x512xf32> to vector<8x128xf32>
    %142 = arith.negf %141 : vector<8x128xf32>
    %143 = math.exp %142 : vector<8x128xf32>
    %cst_62 = arith.constant 1.000000e+00 : f32
    %144 = vector.broadcast %cst_62 : f32 to vector<8x128xf32>
    %145 = arith.addf %144, %143 : vector<8x128xf32>
    %146 = arith.divf %144, %145 : vector<8x128xf32>
    %147 = arith.mulf %138, %118 : vector<8x128xf32>
    %148 = arith.mulf %132, %140 : vector<8x128xf32>
    %149 = arith.addf %147, %148 : vector<8x128xf32>
    %150 = math.tanh %149 : vector<8x128xf32>
    %151 = arith.mulf %146, %150 : vector<8x128xf32>
    %c16_63 = arith.constant 16 : index
    %c0_64 = arith.constant 0 : index
    %152 = vector.load %arg1[%c16_63, %c0_64] : memref<64x128xf32, #tpu.memory_space<vmem>>, vector<8x128xf32>
    %153 = arith.subf %149, %118 : vector<8x128xf32>
    %154 = arith.mulf %152, %153 : vector<8x128xf32>
    %155 = arith.addf %118, %154 : vector<8x128xf32>
    %c0_65 = arith.constant 0 : index
    %c0_66 = arith.constant 0 : index
    %156 = vector.load %arg12[%c0_65, %c0_66] : memref<8x128xf32, #tpu.memory_space<vmem>>, vector<8x128xf32>
    tpu.vector_store %arg12[%c0_65, %c0_66], %155 {strides = array<i32>} : memref<8x128xf32, #tpu.memory_space<vmem>>, vector<8x128xf32>,
    %157 = arith.subf %151, %117 : vector<8x128xf32>
    %158 = arith.mulf %152, %157 : vector<8x128xf32>
    %159 = arith.addf %117, %158 : vector<8x128xf32>
    %c0_67 = arith.constant 0 : index
    %c0_68 = arith.constant 0 : index
    %160 = vector.load %arg11[%c0_67, %c0_68] : memref<8x128xf32, #tpu.memory_space<vmem>>, vector<8x128xf32>
    tpu.vector_store %arg11[%c0_67, %c0_68], %159 {strides = array<i32>} : memref<8x128xf32, #tpu.memory_space<vmem>>, vector<8x128xf32>,
    %161 = arith.mulf %152, %151 : vector<8x128xf32>
    %c16_69 = arith.constant 16 : index
    %c0_70 = arith.constant 0 : index
    %162 = vector.load %arg10[%c16_69, %c0_70] : memref<64x128xf32, #tpu.memory_space<vmem>>, vector<8x128xf32>
    tpu.vector_store %arg10[%c16_69, %c0_70], %161 {strides = array<i32>} : memref<64x128xf32, #tpu.memory_space<vmem>>, vector<8x128xf32>,
    %c0_71 = arith.constant 0 : index
    %c0_72 = arith.constant 0 : index
    %163 = vector.load %arg11[%c0_71, %c0_72] : memref<8x128xf32, #tpu.memory_space<vmem>>, vector<8x128xf32>
    %c0_73 = arith.constant 0 : index
    %c0_74 = arith.constant 0 : index
    %164 = vector.load %arg12[%c0_73, %c0_74] : memref<8x128xf32, #tpu.memory_space<vmem>>, vector<8x128xf32>
    %165 = arith.mulf %163, %4 : vector<8x128xf32>
    %166 = arith.mulf %163, %11 : vector<8x128xf32>
    %167 = tpu.concatenate %165, %166 in 1 : vector<8x128xf32>, vector<8x128xf32> -> vector<8x256xf32>
    %168 = arith.truncf %167 : vector<8x256xf32> to vector<8x256xbf16>
    %c24 = arith.constant 24 : index
    %c0_75 = arith.constant 0 : index
    %169 = vector.load %arg9[%c24, %c0_75] : memref<64x512xf32, #tpu.memory_space<vmem>>, vector<8x512xf32>
    %170 = arith.addf %169, %20 : vector<8x512xf32>
    %cst_76 = arith.constant dense<0.000000e+00> : vector<8x512xf32>
    %171 = tpu.matmul %168, %18, %cst_76 {dimension_numbers = #tpu.dot_dimension_numbers<[1], [0], [0], [1], [0, 0, 1, 1], [], []>} : vector<8x256xbf16>, vector<256x512xbf16>, vector<8x512xf32> -> vector<8x512xf32>
    %172 = arith.addf %170, %171 : vector<8x512xf32>
    %173 = vector.extract_strided_slice %172 {offsets = [0, 0], sizes = [8, 128], strides = [1, 1]} : vector<8x512xf32> to vector<8x128xf32>
    %174 = arith.negf %173 : vector<8x128xf32>
    %175 = math.exp %174 : vector<8x128xf32>
    %cst_77 = arith.constant 1.000000e+00 : f32
    %176 = vector.broadcast %cst_77 : f32 to vector<8x128xf32>
    %177 = arith.addf %176, %175 : vector<8x128xf32>
    %178 = arith.divf %176, %177 : vector<8x128xf32>
    %179 = vector.extract_strided_slice %172 {offsets = [0, 128], sizes = [8, 128], strides = [1, 1]} : vector<8x512xf32> to vector<8x128xf32>
    %180 = arith.negf %179 : vector<8x128xf32>
    %181 = math.exp %180 : vector<8x128xf32>
    %cst_78 = arith.constant 1.000000e+00 : f32
    %182 = vector.broadcast %cst_78 : f32 to vector<8x128xf32>
    %183 = arith.addf %182, %181 : vector<8x128xf32>
    %184 = arith.divf %182, %183 : vector<8x128xf32>
    %185 = vector.extract_strided_slice %172 {offsets = [0, 256], sizes = [8, 128], strides = [1, 1]} : vector<8x512xf32> to vector<8x128xf32>
    %186 = math.tanh %185 : vector<8x128xf32>
    %187 = vector.extract_strided_slice %172 {offsets = [0, 384], sizes = [8, 128], strides = [1, 1]} : vector<8x512xf32> to vector<8x128xf32>
    %188 = arith.negf %187 : vector<8x128xf32>
    %189 = math.exp %188 : vector<8x128xf32>
    %cst_79 = arith.constant 1.000000e+00 : f32
    %190 = vector.broadcast %cst_79 : f32 to vector<8x128xf32>
    %191 = arith.addf %190, %189 : vector<8x128xf32>
    %192 = arith.divf %190, %191 : vector<8x128xf32>
    %193 = arith.mulf %184, %164 : vector<8x128xf32>
    %194 = arith.mulf %178, %186 : vector<8x128xf32>
    %195 = arith.addf %193, %194 : vector<8x128xf32>
    %196 = math.tanh %195 : vector<8x128xf32>
    %197 = arith.mulf %192, %196 : vector<8x128xf32>
    %c24_80 = arith.constant 24 : index
    %c0_81 = arith.constant 0 : index
    %198 = vector.load %arg1[%c24_80, %c0_81] : memref<64x128xf32, #tpu.memory_space<vmem>>, vector<8x128xf32>
    %199 = arith.subf %195, %164 : vector<8x128xf32>
    %200 = arith.mulf %198, %199 : vector<8x128xf32>
    %201 = arith.addf %164, %200 : vector<8x128xf32>
    %c0_82 = arith.constant 0 : index
    %c0_83 = arith.constant 0 : index
    %202 = vector.load %arg12[%c0_82, %c0_83] : memref<8x128xf32, #tpu.memory_space<vmem>>, vector<8x128xf32>
    tpu.vector_store %arg12[%c0_82, %c0_83], %201 {strides = array<i32>} : memref<8x128xf32, #tpu.memory_space<vmem>>, vector<8x128xf32>,
    %203 = arith.subf %197, %163 : vector<8x128xf32>
    %204 = arith.mulf %198, %203 : vector<8x128xf32>
    %205 = arith.addf %163, %204 : vector<8x128xf32>
    %c0_84 = arith.constant 0 : index
    %c0_85 = arith.constant 0 : index
    %206 = vector.load %arg11[%c0_84, %c0_85] : memref<8x128xf32, #tpu.memory_space<vmem>>, vector<8x128xf32>
    tpu.vector_store %arg11[%c0_84, %c0_85], %205 {strides = array<i32>} : memref<8x128xf32, #tpu.memory_space<vmem>>, vector<8x128xf32>,
    %207 = arith.mulf %198, %197 : vector<8x128xf32>
    %c24_86 = arith.constant 24 : index
    %c0_87 = arith.constant 0 : index
    %208 = vector.load %arg10[%c24_86, %c0_87] : memref<64x128xf32, #tpu.memory_space<vmem>>, vector<8x128xf32>
    tpu.vector_store %arg10[%c24_86, %c0_87], %207 {strides = array<i32>} : memref<64x128xf32, #tpu.memory_space<vmem>>, vector<8x128xf32>,
    %c0_88 = arith.constant 0 : index
    %c0_89 = arith.constant 0 : index
    %209 = vector.load %arg11[%c0_88, %c0_89] : memref<8x128xf32, #tpu.memory_space<vmem>>, vector<8x128xf32>
    %c0_90 = arith.constant 0 : index
    %c0_91 = arith.constant 0 : index
    %210 = vector.load %arg12[%c0_90, %c0_91] : memref<8x128xf32, #tpu.memory_space<vmem>>, vector<8x128xf32>
    %211 = arith.mulf %209, %4 : vector<8x128xf32>
    %212 = arith.mulf %209, %11 : vector<8x128xf32>
    %213 = tpu.concatenate %211, %212 in 1 : vector<8x128xf32>, vector<8x128xf32> -> vector<8x256xf32>
    %214 = arith.truncf %213 : vector<8x256xf32> to vector<8x256xbf16>
    %c32 = arith.constant 32 : index
    %c0_92 = arith.constant 0 : index
    %215 = vector.load %arg9[%c32, %c0_92] : memref<64x512xf32, #tpu.memory_space<vmem>>, vector<8x512xf32>
    %216 = arith.addf %215, %20 : vector<8x512xf32>
    %cst_93 = arith.constant dense<0.000000e+00> : vector<8x512xf32>
    %217 = tpu.matmul %214, %18, %cst_93 {dimension_numbers = #tpu.dot_dimension_numbers<[1], [0], [0], [1], [0, 0, 1, 1], [], []>} : vector<8x256xbf16>, vector<256x512xbf16>, vector<8x512xf32> -> vector<8x512xf32>
    %218 = arith.addf %216, %217 : vector<8x512xf32>
    %219 = vector.extract_strided_slice %218 {offsets = [0, 0], sizes = [8, 128], strides = [1, 1]} : vector<8x512xf32> to vector<8x128xf32>
    %220 = arith.negf %219 : vector<8x128xf32>
    %221 = math.exp %220 : vector<8x128xf32>
    %cst_94 = arith.constant 1.000000e+00 : f32
    %222 = vector.broadcast %cst_94 : f32 to vector<8x128xf32>
    %223 = arith.addf %222, %221 : vector<8x128xf32>
    %224 = arith.divf %222, %223 : vector<8x128xf32>
    %225 = vector.extract_strided_slice %218 {offsets = [0, 128], sizes = [8, 128], strides = [1, 1]} : vector<8x512xf32> to vector<8x128xf32>
    %226 = arith.negf %225 : vector<8x128xf32>
    %227 = math.exp %226 : vector<8x128xf32>
    %cst_95 = arith.constant 1.000000e+00 : f32
    %228 = vector.broadcast %cst_95 : f32 to vector<8x128xf32>
    %229 = arith.addf %228, %227 : vector<8x128xf32>
    %230 = arith.divf %228, %229 : vector<8x128xf32>
    %231 = vector.extract_strided_slice %218 {offsets = [0, 256], sizes = [8, 128], strides = [1, 1]} : vector<8x512xf32> to vector<8x128xf32>
    %232 = math.tanh %231 : vector<8x128xf32>
    %233 = vector.extract_strided_slice %218 {offsets = [0, 384], sizes = [8, 128], strides = [1, 1]} : vector<8x512xf32> to vector<8x128xf32>
    %234 = arith.negf %233 : vector<8x128xf32>
    %235 = math.exp %234 : vector<8x128xf32>
    %cst_96 = arith.constant 1.000000e+00 : f32
    %236 = vector.broadcast %cst_96 : f32 to vector<8x128xf32>
    %237 = arith.addf %236, %235 : vector<8x128xf32>
    %238 = arith.divf %236, %237 : vector<8x128xf32>
    %239 = arith.mulf %230, %210 : vector<8x128xf32>
    %240 = arith.mulf %224, %232 : vector<8x128xf32>
    %241 = arith.addf %239, %240 : vector<8x128xf32>
    %242 = math.tanh %241 : vector<8x128xf32>
    %243 = arith.mulf %238, %242 : vector<8x128xf32>
    %c32_97 = arith.constant 32 : index
    %c0_98 = arith.constant 0 : index
    %244 = vector.load %arg1[%c32_97, %c0_98] : memref<64x128xf32, #tpu.memory_space<vmem>>, vector<8x128xf32>
    %245 = arith.subf %241, %210 : vector<8x128xf32>
    %246 = arith.mulf %244, %245 : vector<8x128xf32>
    %247 = arith.addf %210, %246 : vector<8x128xf32>
    %c0_99 = arith.constant 0 : index
    %c0_100 = arith.constant 0 : index
    %248 = vector.load %arg12[%c0_99, %c0_100] : memref<8x128xf32, #tpu.memory_space<vmem>>, vector<8x128xf32>
    tpu.vector_store %arg12[%c0_99, %c0_100], %247 {strides = array<i32>} : memref<8x128xf32, #tpu.memory_space<vmem>>, vector<8x128xf32>,
    %249 = arith.subf %243, %209 : vector<8x128xf32>
    %250 = arith.mulf %244, %249 : vector<8x128xf32>
    %251 = arith.addf %209, %250 : vector<8x128xf32>
    %c0_101 = arith.constant 0 : index
    %c0_102 = arith.constant 0 : index
    %252 = vector.load %arg11[%c0_101, %c0_102] : memref<8x128xf32, #tpu.memory_space<vmem>>, vector<8x128xf32>
    tpu.vector_store %arg11[%c0_101, %c0_102], %251 {strides = array<i32>} : memref<8x128xf32, #tpu.memory_space<vmem>>, vector<8x128xf32>,
    %253 = arith.mulf %244, %243 : vector<8x128xf32>
    %c32_103 = arith.constant 32 : index
    %c0_104 = arith.constant 0 : index
    %254 = vector.load %arg10[%c32_103, %c0_104] : memref<64x128xf32, #tpu.memory_space<vmem>>, vector<8x128xf32>
    tpu.vector_store %arg10[%c32_103, %c0_104], %253 {strides = array<i32>} : memref<64x128xf32, #tpu.memory_space<vmem>>, vector<8x128xf32>,
    %c0_105 = arith.constant 0 : index
    %c0_106 = arith.constant 0 : index
    %255 = vector.load %arg11[%c0_105, %c0_106] : memref<8x128xf32, #tpu.memory_space<vmem>>, vector<8x128xf32>
    %c0_107 = arith.constant 0 : index
    %c0_108 = arith.constant 0 : index
    %256 = vector.load %arg12[%c0_107, %c0_108] : memref<8x128xf32, #tpu.memory_space<vmem>>, vector<8x128xf32>
    %257 = arith.mulf %255, %4 : vector<8x128xf32>
    %258 = arith.mulf %255, %11 : vector<8x128xf32>
    %259 = tpu.concatenate %257, %258 in 1 : vector<8x128xf32>, vector<8x128xf32> -> vector<8x256xf32>
    %260 = arith.truncf %259 : vector<8x256xf32> to vector<8x256xbf16>
    %c40 = arith.constant 40 : index
    %c0_109 = arith.constant 0 : index
    %261 = vector.load %arg9[%c40, %c0_109] : memref<64x512xf32, #tpu.memory_space<vmem>>, vector<8x512xf32>
    %262 = arith.addf %261, %20 : vector<8x512xf32>
    %cst_110 = arith.constant dense<0.000000e+00> : vector<8x512xf32>
    %263 = tpu.matmul %260, %18, %cst_110 {dimension_numbers = #tpu.dot_dimension_numbers<[1], [0], [0], [1], [0, 0, 1, 1], [], []>} : vector<8x256xbf16>, vector<256x512xbf16>, vector<8x512xf32> -> vector<8x512xf32>
    %264 = arith.addf %262, %263 : vector<8x512xf32>
    %265 = vector.extract_strided_slice %264 {offsets = [0, 0], sizes = [8, 128], strides = [1, 1]} : vector<8x512xf32> to vector<8x128xf32>
    %266 = arith.negf %265 : vector<8x128xf32>
    %267 = math.exp %266 : vector<8x128xf32>
    %cst_111 = arith.constant 1.000000e+00 : f32
    %268 = vector.broadcast %cst_111 : f32 to vector<8x128xf32>
    %269 = arith.addf %268, %267 : vector<8x128xf32>
    %270 = arith.divf %268, %269 : vector<8x128xf32>
    %271 = vector.extract_strided_slice %264 {offsets = [0, 128], sizes = [8, 128], strides = [1, 1]} : vector<8x512xf32> to vector<8x128xf32>
    %272 = arith.negf %271 : vector<8x128xf32>
    %273 = math.exp %272 : vector<8x128xf32>
    %cst_112 = arith.constant 1.000000e+00 : f32
    %274 = vector.broadcast %cst_112 : f32 to vector<8x128xf32>
    %275 = arith.addf %274, %273 : vector<8x128xf32>
    %276 = arith.divf %274, %275 : vector<8x128xf32>
    %277 = vector.extract_strided_slice %264 {offsets = [0, 256], sizes = [8, 128], strides = [1, 1]} : vector<8x512xf32> to vector<8x128xf32>
    %278 = math.tanh %277 : vector<8x128xf32>
    %279 = vector.extract_strided_slice %264 {offsets = [0, 384], sizes = [8, 128], strides = [1, 1]} : vector<8x512xf32> to vector<8x128xf32>
    %280 = arith.negf %279 : vector<8x128xf32>
    %281 = math.exp %280 : vector<8x128xf32>
    %cst_113 = arith.constant 1.000000e+00 : f32
    %282 = vector.broadcast %cst_113 : f32 to vector<8x128xf32>
    %283 = arith.addf %282, %281 : vector<8x128xf32>
    %284 = arith.divf %282, %283 : vector<8x128xf32>
    %285 = arith.mulf %276, %256 : vector<8x128xf32>
    %286 = arith.mulf %270, %278 : vector<8x128xf32>
    %287 = arith.addf %285, %286 : vector<8x128xf32>
    %288 = math.tanh %287 : vector<8x128xf32>
    %289 = arith.mulf %284, %288 : vector<8x128xf32>
    %c40_114 = arith.constant 40 : index
    %c0_115 = arith.constant 0 : index
    %290 = vector.load %arg1[%c40_114, %c0_115] : memref<64x128xf32, #tpu.memory_space<vmem>>, vector<8x128xf32>
    %291 = arith.subf %287, %256 : vector<8x128xf32>
    %292 = arith.mulf %290, %291 : vector<8x128xf32>
    %293 = arith.addf %256, %292 : vector<8x128xf32>
    %c0_116 = arith.constant 0 : index
    %c0_117 = arith.constant 0 : index
    %294 = vector.load %arg12[%c0_116, %c0_117] : memref<8x128xf32, #tpu.memory_space<vmem>>, vector<8x128xf32>
    tpu.vector_store %arg12[%c0_116, %c0_117], %293 {strides = array<i32>} : memref<8x128xf32, #tpu.memory_space<vmem>>, vector<8x128xf32>,
    %295 = arith.subf %289, %255 : vector<8x128xf32>
    %296 = arith.mulf %290, %295 : vector<8x128xf32>
    %297 = arith.addf %255, %296 : vector<8x128xf32>
    %c0_118 = arith.constant 0 : index
    %c0_119 = arith.constant 0 : index
    %298 = vector.load %arg11[%c0_118, %c0_119] : memref<8x128xf32, #tpu.memory_space<vmem>>, vector<8x128xf32>
    tpu.vector_store %arg11[%c0_118, %c0_119], %297 {strides = array<i32>} : memref<8x128xf32, #tpu.memory_space<vmem>>, vector<8x128xf32>,
    %299 = arith.mulf %290, %289 : vector<8x128xf32>
    %c40_120 = arith.constant 40 : index
    %c0_121 = arith.constant 0 : index
    %300 = vector.load %arg10[%c40_120, %c0_121] : memref<64x128xf32, #tpu.memory_space<vmem>>, vector<8x128xf32>
    tpu.vector_store %arg10[%c40_120, %c0_121], %299 {strides = array<i32>} : memref<64x128xf32, #tpu.memory_space<vmem>>, vector<8x128xf32>,
    %c0_122 = arith.constant 0 : index
    %c0_123 = arith.constant 0 : index
    %301 = vector.load %arg11[%c0_122, %c0_123] : memref<8x128xf32, #tpu.memory_space<vmem>>, vector<8x128xf32>
    %c0_124 = arith.constant 0 : index
    %c0_125 = arith.constant 0 : index
    %302 = vector.load %arg12[%c0_124, %c0_125] : memref<8x128xf32, #tpu.memory_space<vmem>>, vector<8x128xf32>
    %303 = arith.mulf %301, %4 : vector<8x128xf32>
    %304 = arith.mulf %301, %11 : vector<8x128xf32>
    %305 = tpu.concatenate %303, %304 in 1 : vector<8x128xf32>, vector<8x128xf32> -> vector<8x256xf32>
    %306 = arith.truncf %305 : vector<8x256xf32> to vector<8x256xbf16>
    %c48 = arith.constant 48 : index
    %c0_126 = arith.constant 0 : index
    %307 = vector.load %arg9[%c48, %c0_126] : memref<64x512xf32, #tpu.memory_space<vmem>>, vector<8x512xf32>
    %308 = arith.addf %307, %20 : vector<8x512xf32>
    %cst_127 = arith.constant dense<0.000000e+00> : vector<8x512xf32>
    %309 = tpu.matmul %306, %18, %cst_127 {dimension_numbers = #tpu.dot_dimension_numbers<[1], [0], [0], [1], [0, 0, 1, 1], [], []>} : vector<8x256xbf16>, vector<256x512xbf16>, vector<8x512xf32> -> vector<8x512xf32>
    %310 = arith.addf %308, %309 : vector<8x512xf32>
    %311 = vector.extract_strided_slice %310 {offsets = [0, 0], sizes = [8, 128], strides = [1, 1]} : vector<8x512xf32> to vector<8x128xf32>
    %312 = arith.negf %311 : vector<8x128xf32>
    %313 = math.exp %312 : vector<8x128xf32>
    %cst_128 = arith.constant 1.000000e+00 : f32
    %314 = vector.broadcast %cst_128 : f32 to vector<8x128xf32>
    %315 = arith.addf %314, %313 : vector<8x128xf32>
    %316 = arith.divf %314, %315 : vector<8x128xf32>
    %317 = vector.extract_strided_slice %310 {offsets = [0, 128], sizes = [8, 128], strides = [1, 1]} : vector<8x512xf32> to vector<8x128xf32>
    %318 = arith.negf %317 : vector<8x128xf32>
    %319 = math.exp %318 : vector<8x128xf32>
    %cst_129 = arith.constant 1.000000e+00 : f32
    %320 = vector.broadcast %cst_129 : f32 to vector<8x128xf32>
    %321 = arith.addf %320, %319 : vector<8x128xf32>
    %322 = arith.divf %320, %321 : vector<8x128xf32>
    %323 = vector.extract_strided_slice %310 {offsets = [0, 256], sizes = [8, 128], strides = [1, 1]} : vector<8x512xf32> to vector<8x128xf32>
    %324 = math.tanh %323 : vector<8x128xf32>
    %325 = vector.extract_strided_slice %310 {offsets = [0, 384], sizes = [8, 128], strides = [1, 1]} : vector<8x512xf32> to vector<8x128xf32>
    %326 = arith.negf %325 : vector<8x128xf32>
    %327 = math.exp %326 : vector<8x128xf32>
    %cst_130 = arith.constant 1.000000e+00 : f32
    %328 = vector.broadcast %cst_130 : f32 to vector<8x128xf32>
    %329 = arith.addf %328, %327 : vector<8x128xf32>
    %330 = arith.divf %328, %329 : vector<8x128xf32>
    %331 = arith.mulf %322, %302 : vector<8x128xf32>
    %332 = arith.mulf %316, %324 : vector<8x128xf32>
    %333 = arith.addf %331, %332 : vector<8x128xf32>
    %334 = math.tanh %333 : vector<8x128xf32>
    %335 = arith.mulf %330, %334 : vector<8x128xf32>
    %c48_131 = arith.constant 48 : index
    %c0_132 = arith.constant 0 : index
    %336 = vector.load %arg1[%c48_131, %c0_132] : memref<64x128xf32, #tpu.memory_space<vmem>>, vector<8x128xf32>
    %337 = arith.subf %333, %302 : vector<8x128xf32>
    %338 = arith.mulf %336, %337 : vector<8x128xf32>
    %339 = arith.addf %302, %338 : vector<8x128xf32>
    %c0_133 = arith.constant 0 : index
    %c0_134 = arith.constant 0 : index
    %340 = vector.load %arg12[%c0_133, %c0_134] : memref<8x128xf32, #tpu.memory_space<vmem>>, vector<8x128xf32>
    tpu.vector_store %arg12[%c0_133, %c0_134], %339 {strides = array<i32>} : memref<8x128xf32, #tpu.memory_space<vmem>>, vector<8x128xf32>,
    %341 = arith.subf %335, %301 : vector<8x128xf32>
    %342 = arith.mulf %336, %341 : vector<8x128xf32>
    %343 = arith.addf %301, %342 : vector<8x128xf32>
    %c0_135 = arith.constant 0 : index
    %c0_136 = arith.constant 0 : index
    %344 = vector.load %arg11[%c0_135, %c0_136] : memref<8x128xf32, #tpu.memory_space<vmem>>, vector<8x128xf32>
    tpu.vector_store %arg11[%c0_135, %c0_136], %343 {strides = array<i32>} : memref<8x128xf32, #tpu.memory_space<vmem>>, vector<8x128xf32>,
    %345 = arith.mulf %336, %335 : vector<8x128xf32>
    %c48_137 = arith.constant 48 : index
    %c0_138 = arith.constant 0 : index
    %346 = vector.load %arg10[%c48_137, %c0_138] : memref<64x128xf32, #tpu.memory_space<vmem>>, vector<8x128xf32>
    tpu.vector_store %arg10[%c48_137, %c0_138], %345 {strides = array<i32>} : memref<64x128xf32, #tpu.memory_space<vmem>>, vector<8x128xf32>,
    %c0_139 = arith.constant 0 : index
    %c0_140 = arith.constant 0 : index
    %347 = vector.load %arg11[%c0_139, %c0_140] : memref<8x128xf32, #tpu.memory_space<vmem>>, vector<8x128xf32>
    %c0_141 = arith.constant 0 : index
    %c0_142 = arith.constant 0 : index
    %348 = vector.load %arg12[%c0_141, %c0_142] : memref<8x128xf32, #tpu.memory_space<vmem>>, vector<8x128xf32>
    %349 = arith.mulf %347, %4 : vector<8x128xf32>
    %350 = arith.mulf %347, %11 : vector<8x128xf32>
    %351 = tpu.concatenate %349, %350 in 1 : vector<8x128xf32>, vector<8x128xf32> -> vector<8x256xf32>
    %352 = arith.truncf %351 : vector<8x256xf32> to vector<8x256xbf16>
    %c56 = arith.constant 56 : index
    %c0_143 = arith.constant 0 : index
    %353 = vector.load %arg9[%c56, %c0_143] : memref<64x512xf32, #tpu.memory_space<vmem>>, vector<8x512xf32>
    %354 = arith.addf %353, %20 : vector<8x512xf32>
    %cst_144 = arith.constant dense<0.000000e+00> : vector<8x512xf32>
    %355 = tpu.matmul %352, %18, %cst_144 {dimension_numbers = #tpu.dot_dimension_numbers<[1], [0], [0], [1], [0, 0, 1, 1], [], []>} : vector<8x256xbf16>, vector<256x512xbf16>, vector<8x512xf32> -> vector<8x512xf32>
    %356 = arith.addf %354, %355 : vector<8x512xf32>
    %357 = vector.extract_strided_slice %356 {offsets = [0, 0], sizes = [8, 128], strides = [1, 1]} : vector<8x512xf32> to vector<8x128xf32>
    %358 = arith.negf %357 : vector<8x128xf32>
    %359 = math.exp %358 : vector<8x128xf32>
    %cst_145 = arith.constant 1.000000e+00 : f32
    %360 = vector.broadcast %cst_145 : f32 to vector<8x128xf32>
    %361 = arith.addf %360, %359 : vector<8x128xf32>
    %362 = arith.divf %360, %361 : vector<8x128xf32>
    %363 = vector.extract_strided_slice %356 {offsets = [0, 128], sizes = [8, 128], strides = [1, 1]} : vector<8x512xf32> to vector<8x128xf32>
    %364 = arith.negf %363 : vector<8x128xf32>
    %365 = math.exp %364 : vector<8x128xf32>
    %cst_146 = arith.constant 1.000000e+00 : f32
    %366 = vector.broadcast %cst_146 : f32 to vector<8x128xf32>
    %367 = arith.addf %366, %365 : vector<8x128xf32>
    %368 = arith.divf %366, %367 : vector<8x128xf32>
    %369 = vector.extract_strided_slice %356 {offsets = [0, 256], sizes = [8, 128], strides = [1, 1]} : vector<8x512xf32> to vector<8x128xf32>
    %370 = math.tanh %369 : vector<8x128xf32>
    %371 = vector.extract_strided_slice %356 {offsets = [0, 384], sizes = [8, 128], strides = [1, 1]} : vector<8x512xf32> to vector<8x128xf32>
    %372 = arith.negf %371 : vector<8x128xf32>
    %373 = math.exp %372 : vector<8x128xf32>
    %cst_147 = arith.constant 1.000000e+00 : f32
    %374 = vector.broadcast %cst_147 : f32 to vector<8x128xf32>
    %375 = arith.addf %374, %373 : vector<8x128xf32>
    %376 = arith.divf %374, %375 : vector<8x128xf32>
    %377 = arith.mulf %368, %348 : vector<8x128xf32>
    %378 = arith.mulf %362, %370 : vector<8x128xf32>
    %379 = arith.addf %377, %378 : vector<8x128xf32>
    %380 = math.tanh %379 : vector<8x128xf32>
    %381 = arith.mulf %376, %380 : vector<8x128xf32>
    %c56_148 = arith.constant 56 : index
    %c0_149 = arith.constant 0 : index
    %382 = vector.load %arg1[%c56_148, %c0_149] : memref<64x128xf32, #tpu.memory_space<vmem>>, vector<8x128xf32>
    %383 = arith.subf %379, %348 : vector<8x128xf32>
    %384 = arith.mulf %382, %383 : vector<8x128xf32>
    %385 = arith.addf %348, %384 : vector<8x128xf32>
    %c0_150 = arith.constant 0 : index
    %c0_151 = arith.constant 0 : index
    %386 = vector.load %arg12[%c0_150, %c0_151] : memref<8x128xf32, #tpu.memory_space<vmem>>, vector<8x128xf32>
    tpu.vector_store %arg12[%c0_150, %c0_151], %385 {strides = array<i32>} : memref<8x128xf32, #tpu.memory_space<vmem>>, vector<8x128xf32>,
    %387 = arith.subf %381, %347 : vector<8x128xf32>
    %388 = arith.mulf %382, %387 : vector<8x128xf32>
    %389 = arith.addf %347, %388 : vector<8x128xf32>
    %c0_152 = arith.constant 0 : index
    %c0_153 = arith.constant 0 : index
    %390 = vector.load %arg11[%c0_152, %c0_153] : memref<8x128xf32, #tpu.memory_space<vmem>>, vector<8x128xf32>
    tpu.vector_store %arg11[%c0_152, %c0_153], %389 {strides = array<i32>} : memref<8x128xf32, #tpu.memory_space<vmem>>, vector<8x128xf32>,
    %391 = arith.mulf %382, %381 : vector<8x128xf32>
    %c56_154 = arith.constant 56 : index
    %c0_155 = arith.constant 0 : index
    %392 = vector.load %arg10[%c56_154, %c0_155] : memref<64x128xf32, #tpu.memory_space<vmem>>, vector<8x128xf32>
    tpu.vector_store %arg10[%c56_154, %c0_155], %391 {strides = array<i32>} : memref<64x128xf32, #tpu.memory_space<vmem>>, vector<8x128xf32>,
    %c0_156 = arith.constant 0 : index
    %c0_157 = arith.constant 0 : index
    %393 = vector.load %arg11[%c0_156, %c0_157] : memref<8x128xf32, #tpu.memory_space<vmem>>, vector<8x128xf32>
    %c0_158 = arith.constant 0 : index
    %c0_159 = arith.constant 0 : index
    %c0_160 = arith.constant 0 : index
    %394 = vector.load %arg6[%c0_158, %c0_159, %c0_160] : memref<2x8x128xf32, #tpu.memory_space<vmem>>, vector<1x8x128xf32>
    %395 = vector.shape_cast %394 : vector<1x8x128xf32> to vector<8x128xf32>
    %396 = vector.shape_cast %393 : vector<8x128xf32> to vector<1x8x128xf32>
    tpu.vector_store %arg6[%c0_158, %c0_159, %c0_160], %396 {strides = array<i32>} : memref<2x8x128xf32, #tpu.memory_space<vmem>>, vector<1x8x128xf32>,
    %c0_161 = arith.constant 0 : index
    %c0_162 = arith.constant 0 : index
    %397 = vector.load %arg12[%c0_161, %c0_162] : memref<8x128xf32, #tpu.memory_space<vmem>>, vector<8x128xf32>
    %c0_163 = arith.constant 0 : index
    %c0_164 = arith.constant 0 : index
    %c0_165 = arith.constant 0 : index
    %398 = vector.load %arg7[%c0_163, %c0_164, %c0_165] : memref<2x8x128xf32, #tpu.memory_space<vmem>>, vector<1x8x128xf32>
    %399 = vector.shape_cast %398 : vector<1x8x128xf32> to vector<8x128xf32>
    %400 = vector.shape_cast %397 : vector<8x128xf32> to vector<1x8x128xf32>
    tpu.vector_store %arg7[%c0_163, %c0_164, %c0_165], %400 {strides = array<i32>} : memref<2x8x128xf32, #tpu.memory_space<vmem>>, vector<1x8x128xf32>,
    %cst_166 = arith.constant 0.000000e+00 : f32
    %401 = vector.broadcast %cst_166 : f32 to vector<64x512xf32>
    %c0_167 = arith.constant 0 : index
    %c0_168 = arith.constant 0 : index
    %402 = vector.load %arg8[%c0_167, %c0_168] : memref<64x512xf32, #tpu.memory_space<vmem>>, vector<64x512xf32>
    tpu.vector_store %arg8[%c0_167, %c0_168], %401 {strides = array<i32>} : memref<64x512xf32, #tpu.memory_space<vmem>>, vector<64x512xf32>,
    %c0_169 = arith.constant 0 : index
    %c0_170 = arith.constant 0 : index
    %403 = vector.load %arg10[%c0_169, %c0_170] : memref<64x128xf32, #tpu.memory_space<vmem>>, vector<8x128xf32>
    %c56_171 = arith.constant 56 : index
    %c0_172 = arith.constant 0 : index
    %404 = vector.load %arg10[%c56_171, %c0_172] : memref<64x128xf32, #tpu.memory_space<vmem>>, vector<8x128xf32>
    %405 = vector.extract_strided_slice %403 {offsets = [0, 0], sizes = [2, 128], strides = [1, 1]} : vector<8x128xf32> to vector<2x128xf32>
    %c0_173 = arith.constant 0 : index
    %c0_174 = arith.constant 0 : index
    %406 = vector.load %arg8[%c0_173, %c0_174] : memref<64x512xf32, #tpu.memory_space<vmem>>, vector<2x128xf32>
    tpu.vector_store %arg8[%c0_173, %c0_174], %405 {strides = array<i32>} : memref<64x512xf32, #tpu.memory_space<vmem>>, vector<2x128xf32>,
    %407 = vector.extract_strided_slice %404 {offsets = [2, 0], sizes = [2, 128], strides = [1, 1]} : vector<8x128xf32> to vector<2x128xf32>
    %c0_175 = arith.constant 0 : index
    %c128 = arith.constant 128 : index
    %408 = vector.load %arg8[%c0_175, %c128] : memref<64x512xf32, #tpu.memory_space<vmem>>, vector<2x128xf32>
    tpu.vector_store %arg8[%c0_175, %c128], %407 {strides = array<i32>} : memref<64x512xf32, #tpu.memory_space<vmem>>, vector<2x128xf32>,
    %409 = vector.extract_strided_slice %404 {offsets = [0, 0], sizes = [2, 128], strides = [1, 1]} : vector<8x128xf32> to vector<2x128xf32>
    %c2 = arith.constant 2 : index
    %c256 = arith.constant 256 : index
    %410 = vector.load %arg8[%c2, %c256] : memref<64x512xf32, #tpu.memory_space<vmem>>, vector<2x128xf32>
    tpu.vector_store %arg8[%c2, %c256], %409 {strides = array<i32>} : memref<64x512xf32, #tpu.memory_space<vmem>>, vector<2x128xf32>,
    %411 = vector.extract_strided_slice %403 {offsets = [2, 0], sizes = [2, 128], strides = [1, 1]} : vector<8x128xf32> to vector<2x128xf32>
    %c2_176 = arith.constant 2 : index
    %c384 = arith.constant 384 : index
    %412 = vector.load %arg8[%c2_176, %c384] : memref<64x512xf32, #tpu.memory_space<vmem>>, vector<2x128xf32>
    tpu.vector_store %arg8[%c2_176, %c384], %411 {strides = array<i32>} : memref<64x512xf32, #tpu.memory_space<vmem>>, vector<2x128xf32>,
    %c8_177 = arith.constant 8 : index
    %c0_178 = arith.constant 0 : index
    %413 = vector.load %arg10[%c8_177, %c0_178] : memref<64x128xf32, #tpu.memory_space<vmem>>, vector<8x128xf32>
    %c48_179 = arith.constant 48 : index
    %c0_180 = arith.constant 0 : index
    %414 = vector.load %arg10[%c48_179, %c0_180] : memref<64x128xf32, #tpu.memory_space<vmem>>, vector<8x128xf32>
    %415 = vector.extract_strided_slice %413 {offsets = [0, 0], sizes = [2, 128], strides = [1, 1]} : vector<8x128xf32> to vector<2x128xf32>
    %c8_181 = arith.constant 8 : index
    %c0_182 = arith.constant 0 : index
    %416 = vector.load %arg8[%c8_181, %c0_182] : memref<64x512xf32, #tpu.memory_space<vmem>>, vector<2x128xf32>
    tpu.vector_store %arg8[%c8_181, %c0_182], %415 {strides = array<i32>} : memref<64x512xf32, #tpu.memory_space<vmem>>, vector<2x128xf32>,
    %417 = vector.extract_strided_slice %414 {offsets = [2, 0], sizes = [2, 128], strides = [1, 1]} : vector<8x128xf32> to vector<2x128xf32>
    %c8_183 = arith.constant 8 : index
    %c128_184 = arith.constant 128 : index
    %418 = vector.load %arg8[%c8_183, %c128_184] : memref<64x512xf32, #tpu.memory_space<vmem>>, vector<2x128xf32>
    tpu.vector_store %arg8[%c8_183, %c128_184], %417 {strides = array<i32>} : memref<64x512xf32, #tpu.memory_space<vmem>>, vector<2x128xf32>,
    %419 = vector.extract_strided_slice %414 {offsets = [0, 0], sizes = [2, 128], strides = [1, 1]} : vector<8x128xf32> to vector<2x128xf32>
    %c10 = arith.constant 10 : index
    %c256_185 = arith.constant 256 : index
    %420 = vector.load %arg8[%c10, %c256_185] : memref<64x512xf32, #tpu.memory_space<vmem>>, vector<2x128xf32>
    tpu.vector_store %arg8[%c10, %c256_185], %419 {strides = array<i32>} : memref<64x512xf32, #tpu.memory_space<vmem>>, vector<2x128xf32>,
    %421 = vector.extract_strided_slice %413 {offsets = [2, 0], sizes = [2, 128], strides = [1, 1]} : vector<8x128xf32> to vector<2x128xf32>
    %c10_186 = arith.constant 10 : index
    %c384_187 = arith.constant 384 : index
    %422 = vector.load %arg8[%c10_186, %c384_187] : memref<64x512xf32, #tpu.memory_space<vmem>>, vector<2x128xf32>
    tpu.vector_store %arg8[%c10_186, %c384_187], %421 {strides = array<i32>} : memref<64x512xf32, #tpu.memory_space<vmem>>, vector<2x128xf32>,
    %c16_188 = arith.constant 16 : index
    %c0_189 = arith.constant 0 : index
    %423 = vector.load %arg10[%c16_188, %c0_189] : memref<64x128xf32, #tpu.memory_space<vmem>>, vector<8x128xf32>
    %c40_190 = arith.constant 40 : index
    %c0_191 = arith.constant 0 : index
    %424 = vector.load %arg10[%c40_190, %c0_191] : memref<64x128xf32, #tpu.memory_space<vmem>>, vector<8x128xf32>
    %425 = vector.extract_strided_slice %423 {offsets = [0, 0], sizes = [2, 128], strides = [1, 1]} : vector<8x128xf32> to vector<2x128xf32>
    %c16_192 = arith.constant 16 : index
    %c0_193 = arith.constant 0 : index
    %426 = vector.load %arg8[%c16_192, %c0_193] : memref<64x512xf32, #tpu.memory_space<vmem>>, vector<2x128xf32>
    tpu.vector_store %arg8[%c16_192, %c0_193], %425 {strides = array<i32>} : memref<64x512xf32, #tpu.memory_space<vmem>>, vector<2x128xf32>,
    %427 = vector.extract_strided_slice %424 {offsets = [2, 0], sizes = [2, 128], strides = [1, 1]} : vector<8x128xf32> to vector<2x128xf32>
    %c16_194 = arith.constant 16 : index
    %c128_195 = arith.constant 128 : index
    %428 = vector.load %arg8[%c16_194, %c128_195] : memref<64x512xf32, #tpu.memory_space<vmem>>, vector<2x128xf32>
    tpu.vector_store %arg8[%c16_194, %c128_195], %427 {strides = array<i32>} : memref<64x512xf32, #tpu.memory_space<vmem>>, vector<2x128xf32>,
    %429 = vector.extract_strided_slice %424 {offsets = [0, 0], sizes = [2, 128], strides = [1, 1]} : vector<8x128xf32> to vector<2x128xf32>
    %c18 = arith.constant 18 : index
    %c256_196 = arith.constant 256 : index
    %430 = vector.load %arg8[%c18, %c256_196] : memref<64x512xf32, #tpu.memory_space<vmem>>, vector<2x128xf32>
    tpu.vector_store %arg8[%c18, %c256_196], %429 {strides = array<i32>} : memref<64x512xf32, #tpu.memory_space<vmem>>, vector<2x128xf32>,
    %431 = vector.extract_strided_slice %423 {offsets = [2, 0], sizes = [2, 128], strides = [1, 1]} : vector<8x128xf32> to vector<2x128xf32>
    %c18_197 = arith.constant 18 : index
    %c384_198 = arith.constant 384 : index
    %432 = vector.load %arg8[%c18_197, %c384_198] : memref<64x512xf32, #tpu.memory_space<vmem>>, vector<2x128xf32>
    tpu.vector_store %arg8[%c18_197, %c384_198], %431 {strides = array<i32>} : memref<64x512xf32, #tpu.memory_space<vmem>>, vector<2x128xf32>,
    %c24_199 = arith.constant 24 : index
    %c0_200 = arith.constant 0 : index
    %433 = vector.load %arg10[%c24_199, %c0_200] : memref<64x128xf32, #tpu.memory_space<vmem>>, vector<8x128xf32>
    %c32_201 = arith.constant 32 : index
    %c0_202 = arith.constant 0 : index
    %434 = vector.load %arg10[%c32_201, %c0_202] : memref<64x128xf32, #tpu.memory_space<vmem>>, vector<8x128xf32>
    %435 = vector.extract_strided_slice %433 {offsets = [0, 0], sizes = [2, 128], strides = [1, 1]} : vector<8x128xf32> to vector<2x128xf32>
    %c24_203 = arith.constant 24 : index
    %c0_204 = arith.constant 0 : index
    %436 = vector.load %arg8[%c24_203, %c0_204] : memref<64x512xf32, #tpu.memory_space<vmem>>, vector<2x128xf32>
    tpu.vector_store %arg8[%c24_203, %c0_204], %435 {strides = array<i32>} : memref<64x512xf32, #tpu.memory_space<vmem>>, vector<2x128xf32>,
    %437 = vector.extract_strided_slice %434 {offsets = [2, 0], sizes = [2, 128], strides = [1, 1]} : vector<8x128xf32> to vector<2x128xf32>
    %c24_205 = arith.constant 24 : index
    %c128_206 = arith.constant 128 : index
    %438 = vector.load %arg8[%c24_205, %c128_206] : memref<64x512xf32, #tpu.memory_space<vmem>>, vector<2x128xf32>
    tpu.vector_store %arg8[%c24_205, %c128_206], %437 {strides = array<i32>} : memref<64x512xf32, #tpu.memory_space<vmem>>, vector<2x128xf32>,
    %439 = vector.extract_strided_slice %434 {offsets = [0, 0], sizes = [2, 128], strides = [1, 1]} : vector<8x128xf32> to vector<2x128xf32>
    %c26 = arith.constant 26 : index
    %c256_207 = arith.constant 256 : index
    %440 = vector.load %arg8[%c26, %c256_207] : memref<64x512xf32, #tpu.memory_space<vmem>>, vector<2x128xf32>
    tpu.vector_store %arg8[%c26, %c256_207], %439 {strides = array<i32>} : memref<64x512xf32, #tpu.memory_space<vmem>>, vector<2x128xf32>,
    %441 = vector.extract_strided_slice %433 {offsets = [2, 0], sizes = [2, 128], strides = [1, 1]} : vector<8x128xf32> to vector<2x128xf32>
    %c26_208 = arith.constant 26 : index
    %c384_209 = arith.constant 384 : index
    %442 = vector.load %arg8[%c26_208, %c384_209] : memref<64x512xf32, #tpu.memory_space<vmem>>, vector<2x128xf32>
    tpu.vector_store %arg8[%c26_208, %c384_209], %441 {strides = array<i32>} : memref<64x512xf32, #tpu.memory_space<vmem>>, vector<2x128xf32>,
    %c32_210 = arith.constant 32 : index
    %c0_211 = arith.constant 0 : index
    %443 = vector.load %arg10[%c32_210, %c0_211] : memref<64x128xf32, #tpu.memory_space<vmem>>, vector<8x128xf32>
    %c24_212 = arith.constant 24 : index
    %c0_213 = arith.constant 0 : index
    %444 = vector.load %arg10[%c24_212, %c0_213] : memref<64x128xf32, #tpu.memory_space<vmem>>, vector<8x128xf32>
    %445 = vector.extract_strided_slice %443 {offsets = [0, 0], sizes = [2, 128], strides = [1, 1]} : vector<8x128xf32> to vector<2x128xf32>
    %c32_214 = arith.constant 32 : index
    %c0_215 = arith.constant 0 : index
    %446 = vector.load %arg8[%c32_214, %c0_215] : memref<64x512xf32, #tpu.memory_space<vmem>>, vector<2x128xf32>
    tpu.vector_store %arg8[%c32_214, %c0_215], %445 {strides = array<i32>} : memref<64x512xf32, #tpu.memory_space<vmem>>, vector<2x128xf32>,
    %447 = vector.extract_strided_slice %444 {offsets = [2, 0], sizes = [2, 128], strides = [1, 1]} : vector<8x128xf32> to vector<2x128xf32>
    %c32_216 = arith.constant 32 : index
    %c128_217 = arith.constant 128 : index
    %448 = vector.load %arg8[%c32_216, %c128_217] : memref<64x512xf32, #tpu.memory_space<vmem>>, vector<2x128xf32>
    tpu.vector_store %arg8[%c32_216, %c128_217], %447 {strides = array<i32>} : memref<64x512xf32, #tpu.memory_space<vmem>>, vector<2x128xf32>,
    %449 = vector.extract_strided_slice %444 {offsets = [0, 0], sizes = [2, 128], strides = [1, 1]} : vector<8x128xf32> to vector<2x128xf32>
    %c34 = arith.constant 34 : index
    %c256_218 = arith.constant 256 : index
    %450 = vector.load %arg8[%c34, %c256_218] : memref<64x512xf32, #tpu.memory_space<vmem>>, vector<2x128xf32>
    tpu.vector_store %arg8[%c34, %c256_218], %449 {strides = array<i32>} : memref<64x512xf32, #tpu.memory_space<vmem>>, vector<2x128xf32>,
    %451 = vector.extract_strided_slice %443 {offsets = [2, 0], sizes = [2, 128], strides = [1, 1]} : vector<8x128xf32> to vector<2x128xf32>
    %c34_219 = arith.constant 34 : index
    %c384_220 = arith.constant 384 : index
    %452 = vector.load %arg8[%c34_219, %c384_220] : memref<64x512xf32, #tpu.memory_space<vmem>>, vector<2x128xf32>
    tpu.vector_store %arg8[%c34_219, %c384_220], %451 {strides = array<i32>} : memref<64x512xf32, #tpu.memory_space<vmem>>, vector<2x128xf32>,
    %c40_221 = arith.constant 40 : index
    %c0_222 = arith.constant 0 : index
    %453 = vector.load %arg10[%c40_221, %c0_222] : memref<64x128xf32, #tpu.memory_space<vmem>>, vector<8x128xf32>
    %c16_223 = arith.constant 16 : index
    %c0_224 = arith.constant 0 : index
    %454 = vector.load %arg10[%c16_223, %c0_224] : memref<64x128xf32, #tpu.memory_space<vmem>>, vector<8x128xf32>
    %455 = vector.extract_strided_slice %453 {offsets = [0, 0], sizes = [2, 128], strides = [1, 1]} : vector<8x128xf32> to vector<2x128xf32>
    %c40_225 = arith.constant 40 : index
    %c0_226 = arith.constant 0 : index
    %456 = vector.load %arg8[%c40_225, %c0_226] : memref<64x512xf32, #tpu.memory_space<vmem>>, vector<2x128xf32>
    tpu.vector_store %arg8[%c40_225, %c0_226], %455 {strides = array<i32>} : memref<64x512xf32, #tpu.memory_space<vmem>>, vector<2x128xf32>,
    %457 = vector.extract_strided_slice %454 {offsets = [2, 0], sizes = [2, 128], strides = [1, 1]} : vector<8x128xf32> to vector<2x128xf32>
    %c40_227 = arith.constant 40 : index
    %c128_228 = arith.constant 128 : index
    %458 = vector.load %arg8[%c40_227, %c128_228] : memref<64x512xf32, #tpu.memory_space<vmem>>, vector<2x128xf32>
    tpu.vector_store %arg8[%c40_227, %c128_228], %457 {strides = array<i32>} : memref<64x512xf32, #tpu.memory_space<vmem>>, vector<2x128xf32>,
    %459 = vector.extract_strided_slice %454 {offsets = [0, 0], sizes = [2, 128], strides = [1, 1]} : vector<8x128xf32> to vector<2x128xf32>
    %c42 = arith.constant 42 : index
    %c256_229 = arith.constant 256 : index
    %460 = vector.load %arg8[%c42, %c256_229] : memref<64x512xf32, #tpu.memory_space<vmem>>, vector<2x128xf32>
    tpu.vector_store %arg8[%c42, %c256_229], %459 {strides = array<i32>} : memref<64x512xf32, #tpu.memory_space<vmem>>, vector<2x128xf32>,
    %461 = vector.extract_strided_slice %453 {offsets = [2, 0], sizes = [2, 128], strides = [1, 1]} : vector<8x128xf32> to vector<2x128xf32>
    %c42_230 = arith.constant 42 : index
    %c384_231 = arith.constant 384 : index
    %462 = vector.load %arg8[%c42_230, %c384_231] : memref<64x512xf32, #tpu.memory_space<vmem>>, vector<2x128xf32>
    tpu.vector_store %arg8[%c42_230, %c384_231], %461 {strides = array<i32>} : memref<64x512xf32, #tpu.memory_space<vmem>>, vector<2x128xf32>,
    %c48_232 = arith.constant 48 : index
    %c0_233 = arith.constant 0 : index
    %463 = vector.load %arg10[%c48_232, %c0_233] : memref<64x128xf32, #tpu.memory_space<vmem>>, vector<8x128xf32>
    %c8_234 = arith.constant 8 : index
    %c0_235 = arith.constant 0 : index
    %464 = vector.load %arg10[%c8_234, %c0_235] : memref<64x128xf32, #tpu.memory_space<vmem>>, vector<8x128xf32>
    %465 = vector.extract_strided_slice %463 {offsets = [0, 0], sizes = [2, 128], strides = [1, 1]} : vector<8x128xf32> to vector<2x128xf32>
    %c48_236 = arith.constant 48 : index
    %c0_237 = arith.constant 0 : index
    %466 = vector.load %arg8[%c48_236, %c0_237] : memref<64x512xf32, #tpu.memory_space<vmem>>, vector<2x128xf32>
    tpu.vector_store %arg8[%c48_236, %c0_237], %465 {strides = array<i32>} : memref<64x512xf32, #tpu.memory_space<vmem>>, vector<2x128xf32>,
    %467 = vector.extract_strided_slice %464 {offsets = [2, 0], sizes = [2, 128], strides = [1, 1]} : vector<8x128xf32> to vector<2x128xf32>
    %c48_238 = arith.constant 48 : index
    %c128_239 = arith.constant 128 : index
    %468 = vector.load %arg8[%c48_238, %c128_239] : memref<64x512xf32, #tpu.memory_space<vmem>>, vector<2x128xf32>
    tpu.vector_store %arg8[%c48_238, %c128_239], %467 {strides = array<i32>} : memref<64x512xf32, #tpu.memory_space<vmem>>, vector<2x128xf32>,
    %469 = vector.extract_strided_slice %464 {offsets = [0, 0], sizes = [2, 128], strides = [1, 1]} : vector<8x128xf32> to vector<2x128xf32>
    %c50 = arith.constant 50 : index
    %c256_240 = arith.constant 256 : index
    %470 = vector.load %arg8[%c50, %c256_240] : memref<64x512xf32, #tpu.memory_space<vmem>>, vector<2x128xf32>
    tpu.vector_store %arg8[%c50, %c256_240], %469 {strides = array<i32>} : memref<64x512xf32, #tpu.memory_space<vmem>>, vector<2x128xf32>,
    %471 = vector.extract_strided_slice %463 {offsets = [2, 0], sizes = [2, 128], strides = [1, 1]} : vector<8x128xf32> to vector<2x128xf32>
    %c50_241 = arith.constant 50 : index
    %c384_242 = arith.constant 384 : index
    %472 = vector.load %arg8[%c50_241, %c384_242] : memref<64x512xf32, #tpu.memory_space<vmem>>, vector<2x128xf32>
    tpu.vector_store %arg8[%c50_241, %c384_242], %471 {strides = array<i32>} : memref<64x512xf32, #tpu.memory_space<vmem>>, vector<2x128xf32>,
    %c56_243 = arith.constant 56 : index
    %c0_244 = arith.constant 0 : index
    %473 = vector.load %arg10[%c56_243, %c0_244] : memref<64x128xf32, #tpu.memory_space<vmem>>, vector<8x128xf32>
    %c0_245 = arith.constant 0 : index
    %c0_246 = arith.constant 0 : index
    %474 = vector.load %arg10[%c0_245, %c0_246] : memref<64x128xf32, #tpu.memory_space<vmem>>, vector<8x128xf32>
    %475 = vector.extract_strided_slice %473 {offsets = [0, 0], sizes = [2, 128], strides = [1, 1]} : vector<8x128xf32> to vector<2x128xf32>
    %c56_247 = arith.constant 56 : index
    %c0_248 = arith.constant 0 : index
    %476 = vector.load %arg8[%c56_247, %c0_248] : memref<64x512xf32, #tpu.memory_space<vmem>>, vector<2x128xf32>
    tpu.vector_store %arg8[%c56_247, %c0_248], %475 {strides = array<i32>} : memref<64x512xf32, #tpu.memory_space<vmem>>, vector<2x128xf32>,
    %477 = vector.extract_strided_slice %474 {offsets = [2, 0], sizes = [2, 128], strides = [1, 1]} : vector<8x128xf32> to vector<2x128xf32>
    %c56_249 = arith.constant 56 : index
    %c128_250 = arith.constant 128 : index
    %478 = vector.load %arg8[%c56_249, %c128_250] : memref<64x512xf32, #tpu.memory_space<vmem>>, vector<2x128xf32>
    tpu.vector_store %arg8[%c56_249, %c128_250], %477 {strides = array<i32>} : memref<64x512xf32, #tpu.memory_space<vmem>>, vector<2x128xf32>,
    %479 = vector.extract_strided_slice %474 {offsets = [0, 0], sizes = [2, 128], strides = [1, 1]} : vector<8x128xf32> to vector<2x128xf32>
    %c58 = arith.constant 58 : index
    %c256_251 = arith.constant 256 : index
    %480 = vector.load %arg8[%c58, %c256_251] : memref<64x512xf32, #tpu.memory_space<vmem>>, vector<2x128xf32>
    tpu.vector_store %arg8[%c58, %c256_251], %479 {strides = array<i32>} : memref<64x512xf32, #tpu.memory_space<vmem>>, vector<2x128xf32>,
    %481 = vector.extract_strided_slice %473 {offsets = [2, 0], sizes = [2, 128], strides = [1, 1]} : vector<8x128xf32> to vector<2x128xf32>
    %c58_252 = arith.constant 58 : index
    %c384_253 = arith.constant 384 : index
    %482 = vector.load %arg8[%c58_252, %c384_253] : memref<64x512xf32, #tpu.memory_space<vmem>>, vector<2x128xf32>
    tpu.vector_store %arg8[%c58_252, %c384_253], %481 {strides = array<i32>} : memref<64x512xf32, #tpu.memory_space<vmem>>, vector<2x128xf32>,
    %c0_254 = arith.constant 0 : index
    %c0_255 = arith.constant 0 : index
    %483 = vector.load %arg8[%c0_254, %c0_255] : memref<64x512xf32, #tpu.memory_space<vmem>>, vector<64x512xf32>
    %484 = arith.truncf %483 : vector<64x512xf32> to vector<64x512xbf16>
    %c1 = arith.constant 1 : index
    %c0_256 = arith.constant 0 : index
    %c0_257 = arith.constant 0 : index
    %485 = vector.load %arg2[%c1, %c0_256, %c0_257] : memref<2x512x512xbf16, #tpu.memory_space<vmem>>, vector<1x512x512xbf16>
    %486 = vector.shape_cast %485 : vector<1x512x512xbf16> to vector<512x512xbf16>
    %cst_258 = arith.constant dense<0.000000e+00> : vector<64x512xf32>
    %487 = tpu.matmul %484, %486, %cst_258 {dimension_numbers = #tpu.dot_dimension_numbers<[1], [0], [0], [1], [0, 0, 1, 1], [], []>} : vector<64x512xbf16>, vector<512x512xbf16>, vector<64x512xf32> -> vector<64x512xf32>
    %c0_259 = arith.constant 0 : index
    %c0_260 = arith.constant 0 : index
    %488 = vector.load %arg9[%c0_259, %c0_260] : memref<64x512xf32, #tpu.memory_space<vmem>>, vector<64x512xf32>
    tpu.vector_store %arg9[%c0_259, %c0_260], %487 {strides = array<i32>} : memref<64x512xf32, #tpu.memory_space<vmem>>, vector<64x512xf32>,
    %c1_261 = arith.constant 1 : index
    %c0_262 = arith.constant 0 : index
    %c0_263 = arith.constant 0 : index
    %489 = vector.load %arg3[%c1_261, %c0_262, %c0_263] : memref<2x256x512xbf16, #tpu.memory_space<vmem>>, vector<1x256x512xbf16>
    %490 = vector.shape_cast %489 : vector<1x256x512xbf16> to vector<256x512xbf16>
    %c1_264 = arith.constant 1 : index
    %c0_265 = arith.constant 0 : index
    %c0_266 = arith.constant 0 : index
    %491 = vector.load %arg4[%c1_264, %c0_265, %c0_266] : memref<2x8x512xf32, #tpu.memory_space<vmem>>, vector<1x8x512xf32>
    %492 = vector.shape_cast %491 : vector<1x8x512xf32> to vector<8x512xf32>
    %cst_267 = arith.constant 0.000000e+00 : f32
    %493 = vector.broadcast %cst_267 : f32 to vector<8x128xf32>
    %c0_268 = arith.constant 0 : index
    %c0_269 = arith.constant 0 : index
    %494 = vector.load %arg11[%c0_268, %c0_269] : memref<8x128xf32, #tpu.memory_space<vmem>>, vector<8x128xf32>
    tpu.vector_store %arg11[%c0_268, %c0_269], %493 {strides = array<i32>} : memref<8x128xf32, #tpu.memory_space<vmem>>, vector<8x128xf32>,
    %cst_270 = arith.constant 0.000000e+00 : f32
    %495 = vector.broadcast %cst_270 : f32 to vector<8x128xf32>
    %c0_271 = arith.constant 0 : index
    %c0_272 = arith.constant 0 : index
    %496 = vector.load %arg12[%c0_271, %c0_272] : memref<8x128xf32, #tpu.memory_space<vmem>>, vector<8x128xf32>
    tpu.vector_store %arg12[%c0_271, %c0_272], %495 {strides = array<i32>} : memref<8x128xf32, #tpu.memory_space<vmem>>, vector<8x128xf32>,
    %c0_273 = arith.constant 0 : index
    %c0_274 = arith.constant 0 : index
    %497 = vector.load %arg11[%c0_273, %c0_274] : memref<8x128xf32, #tpu.memory_space<vmem>>, vector<8x128xf32>
    %c0_275 = arith.constant 0 : index
    %c0_276 = arith.constant 0 : index
    %498 = vector.load %arg12[%c0_275, %c0_276] : memref<8x128xf32, #tpu.memory_space<vmem>>, vector<8x128xf32>
    %499 = arith.mulf %497, %4 : vector<8x128xf32>
    %500 = arith.mulf %497, %11 : vector<8x128xf32>
    %501 = tpu.concatenate %499, %500 in 1 : vector<8x128xf32>, vector<8x128xf32> -> vector<8x256xf32>
    %502 = arith.truncf %501 : vector<8x256xf32> to vector<8x256xbf16>
    %c0_277 = arith.constant 0 : index
    %c0_278 = arith.constant 0 : index
    %503 = vector.load %arg9[%c0_277, %c0_278] : memref<64x512xf32, #tpu.memory_space<vmem>>, vector<8x512xf32>
    %504 = arith.addf %503, %492 : vector<8x512xf32>
    %cst_279 = arith.constant dense<0.000000e+00> : vector<8x512xf32>
    %505 = tpu.matmul %502, %490, %cst_279 {dimension_numbers = #tpu.dot_dimension_numbers<[1], [0], [0], [1], [0, 0, 1, 1], [], []>} : vector<8x256xbf16>, vector<256x512xbf16>, vector<8x512xf32> -> vector<8x512xf32>
    %506 = arith.addf %504, %505 : vector<8x512xf32>
    %507 = vector.extract_strided_slice %506 {offsets = [0, 0], sizes = [8, 128], strides = [1, 1]} : vector<8x512xf32> to vector<8x128xf32>
    %508 = arith.negf %507 : vector<8x128xf32>
    %509 = math.exp %508 : vector<8x128xf32>
    %cst_280 = arith.constant 1.000000e+00 : f32
    %510 = vector.broadcast %cst_280 : f32 to vector<8x128xf32>
    %511 = arith.addf %510, %509 : vector<8x128xf32>
    %512 = arith.divf %510, %511 : vector<8x128xf32>
    %513 = vector.extract_strided_slice %506 {offsets = [0, 128], sizes = [8, 128], strides = [1, 1]} : vector<8x512xf32> to vector<8x128xf32>
    %514 = arith.negf %513 : vector<8x128xf32>
    %515 = math.exp %514 : vector<8x128xf32>
    %cst_281 = arith.constant 1.000000e+00 : f32
    %516 = vector.broadcast %cst_281 : f32 to vector<8x128xf32>
    %517 = arith.addf %516, %515 : vector<8x128xf32>
    %518 = arith.divf %516, %517 : vector<8x128xf32>
    %519 = vector.extract_strided_slice %506 {offsets = [0, 256], sizes = [8, 128], strides = [1, 1]} : vector<8x512xf32> to vector<8x128xf32>
    %520 = math.tanh %519 : vector<8x128xf32>
    %521 = vector.extract_strided_slice %506 {offsets = [0, 384], sizes = [8, 128], strides = [1, 1]} : vector<8x512xf32> to vector<8x128xf32>
    %522 = arith.negf %521 : vector<8x128xf32>
    %523 = math.exp %522 : vector<8x128xf32>
    %cst_282 = arith.constant 1.000000e+00 : f32
    %524 = vector.broadcast %cst_282 : f32 to vector<8x128xf32>
    %525 = arith.addf %524, %523 : vector<8x128xf32>
    %526 = arith.divf %524, %525 : vector<8x128xf32>
    %527 = arith.mulf %518, %498 : vector<8x128xf32>
    %528 = arith.mulf %512, %520 : vector<8x128xf32>
    %529 = arith.addf %527, %528 : vector<8x128xf32>
    %530 = math.tanh %529 : vector<8x128xf32>
    %531 = arith.mulf %526, %530 : vector<8x128xf32>
    %c0_283 = arith.constant 0 : index
    %c0_284 = arith.constant 0 : index
    %532 = vector.load %arg1[%c0_283, %c0_284] : memref<64x128xf32, #tpu.memory_space<vmem>>, vector<8x128xf32>
    %533 = arith.subf %529, %498 : vector<8x128xf32>
    %534 = arith.mulf %532, %533 : vector<8x128xf32>
    %535 = arith.addf %498, %534 : vector<8x128xf32>
    %c0_285 = arith.constant 0 : index
    %c0_286 = arith.constant 0 : index
    %536 = vector.load %arg12[%c0_285, %c0_286] : memref<8x128xf32, #tpu.memory_space<vmem>>, vector<8x128xf32>
    tpu.vector_store %arg12[%c0_285, %c0_286], %535 {strides = array<i32>} : memref<8x128xf32, #tpu.memory_space<vmem>>, vector<8x128xf32>,
    %537 = arith.subf %531, %497 : vector<8x128xf32>
    %538 = arith.mulf %532, %537 : vector<8x128xf32>
    %539 = arith.addf %497, %538 : vector<8x128xf32>
    %c0_287 = arith.constant 0 : index
    %c0_288 = arith.constant 0 : index
    %540 = vector.load %arg11[%c0_287, %c0_288] : memref<8x128xf32, #tpu.memory_space<vmem>>, vector<8x128xf32>
    tpu.vector_store %arg11[%c0_287, %c0_288], %539 {strides = array<i32>} : memref<8x128xf32, #tpu.memory_space<vmem>>, vector<8x128xf32>,
    %541 = arith.mulf %532, %531 : vector<8x128xf32>
    %c0_289 = arith.constant 0 : index
    %c0_290 = arith.constant 0 : index
    %542 = vector.load %arg5[%c0_289, %c0_290] : memref<64x128xf32, #tpu.memory_space<vmem>>, vector<8x128xf32>
    tpu.vector_store %arg5[%c0_289, %c0_290], %541 {strides = array<i32>} : memref<64x128xf32, #tpu.memory_space<vmem>>, vector<8x128xf32>,
    %c0_291 = arith.constant 0 : index
    %c0_292 = arith.constant 0 : index
    %543 = vector.load %arg11[%c0_291, %c0_292] : memref<8x128xf32, #tpu.memory_space<vmem>>, vector<8x128xf32>
    %c0_293 = arith.constant 0 : index
    %c0_294 = arith.constant 0 : index
    %544 = vector.load %arg12[%c0_293, %c0_294] : memref<8x128xf32, #tpu.memory_space<vmem>>, vector<8x128xf32>
    %545 = arith.mulf %543, %4 : vector<8x128xf32>
    %546 = arith.mulf %543, %11 : vector<8x128xf32>
    %547 = tpu.concatenate %545, %546 in 1 : vector<8x128xf32>, vector<8x128xf32> -> vector<8x256xf32>
    %548 = arith.truncf %547 : vector<8x256xf32> to vector<8x256xbf16>
    %c8_295 = arith.constant 8 : index
    %c0_296 = arith.constant 0 : index
    %549 = vector.load %arg9[%c8_295, %c0_296] : memref<64x512xf32, #tpu.memory_space<vmem>>, vector<8x512xf32>
    %550 = arith.addf %549, %492 : vector<8x512xf32>
    %cst_297 = arith.constant dense<0.000000e+00> : vector<8x512xf32>
    %551 = tpu.matmul %548, %490, %cst_297 {dimension_numbers = #tpu.dot_dimension_numbers<[1], [0], [0], [1], [0, 0, 1, 1], [], []>} : vector<8x256xbf16>, vector<256x512xbf16>, vector<8x512xf32> -> vector<8x512xf32>
    %552 = arith.addf %550, %551 : vector<8x512xf32>
    %553 = vector.extract_strided_slice %552 {offsets = [0, 0], sizes = [8, 128], strides = [1, 1]} : vector<8x512xf32> to vector<8x128xf32>
    %554 = arith.negf %553 : vector<8x128xf32>
    %555 = math.exp %554 : vector<8x128xf32>
    %cst_298 = arith.constant 1.000000e+00 : f32
    %556 = vector.broadcast %cst_298 : f32 to vector<8x128xf32>
    %557 = arith.addf %556, %555 : vector<8x128xf32>
    %558 = arith.divf %556, %557 : vector<8x128xf32>
    %559 = vector.extract_strided_slice %552 {offsets = [0, 128], sizes = [8, 128], strides = [1, 1]} : vector<8x512xf32> to vector<8x128xf32>
    %560 = arith.negf %559 : vector<8x128xf32>
    %561 = math.exp %560 : vector<8x128xf32>
    %cst_299 = arith.constant 1.000000e+00 : f32
    %562 = vector.broadcast %cst_299 : f32 to vector<8x128xf32>
    %563 = arith.addf %562, %561 : vector<8x128xf32>
    %564 = arith.divf %562, %563 : vector<8x128xf32>
    %565 = vector.extract_strided_slice %552 {offsets = [0, 256], sizes = [8, 128], strides = [1, 1]} : vector<8x512xf32> to vector<8x128xf32>
    %566 = math.tanh %565 : vector<8x128xf32>
    %567 = vector.extract_strided_slice %552 {offsets = [0, 384], sizes = [8, 128], strides = [1, 1]} : vector<8x512xf32> to vector<8x128xf32>
    %568 = arith.negf %567 : vector<8x128xf32>
    %569 = math.exp %568 : vector<8x128xf32>
    %cst_300 = arith.constant 1.000000e+00 : f32
    %570 = vector.broadcast %cst_300 : f32 to vector<8x128xf32>
    %571 = arith.addf %570, %569 : vector<8x128xf32>
    %572 = arith.divf %570, %571 : vector<8x128xf32>
    %573 = arith.mulf %564, %544 : vector<8x128xf32>
    %574 = arith.mulf %558, %566 : vector<8x128xf32>
    %575 = arith.addf %573, %574 : vector<8x128xf32>
    %576 = math.tanh %575 : vector<8x128xf32>
    %577 = arith.mulf %572, %576 : vector<8x128xf32>
    %c8_301 = arith.constant 8 : index
    %c0_302 = arith.constant 0 : index
    %578 = vector.load %arg1[%c8_301, %c0_302] : memref<64x128xf32, #tpu.memory_space<vmem>>, vector<8x128xf32>
    %579 = arith.subf %575, %544 : vector<8x128xf32>
    %580 = arith.mulf %578, %579 : vector<8x128xf32>
    %581 = arith.addf %544, %580 : vector<8x128xf32>
    %c0_303 = arith.constant 0 : index
    %c0_304 = arith.constant 0 : index
    %582 = vector.load %arg12[%c0_303, %c0_304] : memref<8x128xf32, #tpu.memory_space<vmem>>, vector<8x128xf32>
    tpu.vector_store %arg12[%c0_303, %c0_304], %581 {strides = array<i32>} : memref<8x128xf32, #tpu.memory_space<vmem>>, vector<8x128xf32>,
    %583 = arith.subf %577, %543 : vector<8x128xf32>
    %584 = arith.mulf %578, %583 : vector<8x128xf32>
    %585 = arith.addf %543, %584 : vector<8x128xf32>
    %c0_305 = arith.constant 0 : index
    %c0_306 = arith.constant 0 : index
    %586 = vector.load %arg11[%c0_305, %c0_306] : memref<8x128xf32, #tpu.memory_space<vmem>>, vector<8x128xf32>
    tpu.vector_store %arg11[%c0_305, %c0_306], %585 {strides = array<i32>} : memref<8x128xf32, #tpu.memory_space<vmem>>, vector<8x128xf32>,
    %587 = arith.mulf %578, %577 : vector<8x128xf32>
    %c8_307 = arith.constant 8 : index
    %c0_308 = arith.constant 0 : index
    %588 = vector.load %arg5[%c8_307, %c0_308] : memref<64x128xf32, #tpu.memory_space<vmem>>, vector<8x128xf32>
    tpu.vector_store %arg5[%c8_307, %c0_308], %587 {strides = array<i32>} : memref<64x128xf32, #tpu.memory_space<vmem>>, vector<8x128xf32>,
    %c0_309 = arith.constant 0 : index
    %c0_310 = arith.constant 0 : index
    %589 = vector.load %arg11[%c0_309, %c0_310] : memref<8x128xf32, #tpu.memory_space<vmem>>, vector<8x128xf32>
    %c0_311 = arith.constant 0 : index
    %c0_312 = arith.constant 0 : index
    %590 = vector.load %arg12[%c0_311, %c0_312] : memref<8x128xf32, #tpu.memory_space<vmem>>, vector<8x128xf32>
    %591 = arith.mulf %589, %4 : vector<8x128xf32>
    %592 = arith.mulf %589, %11 : vector<8x128xf32>
    %593 = tpu.concatenate %591, %592 in 1 : vector<8x128xf32>, vector<8x128xf32> -> vector<8x256xf32>
    %594 = arith.truncf %593 : vector<8x256xf32> to vector<8x256xbf16>
    %c16_313 = arith.constant 16 : index
    %c0_314 = arith.constant 0 : index
    %595 = vector.load %arg9[%c16_313, %c0_314] : memref<64x512xf32, #tpu.memory_space<vmem>>, vector<8x512xf32>
    %596 = arith.addf %595, %492 : vector<8x512xf32>
    %cst_315 = arith.constant dense<0.000000e+00> : vector<8x512xf32>
    %597 = tpu.matmul %594, %490, %cst_315 {dimension_numbers = #tpu.dot_dimension_numbers<[1], [0], [0], [1], [0, 0, 1, 1], [], []>} : vector<8x256xbf16>, vector<256x512xbf16>, vector<8x512xf32> -> vector<8x512xf32>
    %598 = arith.addf %596, %597 : vector<8x512xf32>
    %599 = vector.extract_strided_slice %598 {offsets = [0, 0], sizes = [8, 128], strides = [1, 1]} : vector<8x512xf32> to vector<8x128xf32>
    %600 = arith.negf %599 : vector<8x128xf32>
    %601 = math.exp %600 : vector<8x128xf32>
    %cst_316 = arith.constant 1.000000e+00 : f32
    %602 = vector.broadcast %cst_316 : f32 to vector<8x128xf32>
    %603 = arith.addf %602, %601 : vector<8x128xf32>
    %604 = arith.divf %602, %603 : vector<8x128xf32>
    %605 = vector.extract_strided_slice %598 {offsets = [0, 128], sizes = [8, 128], strides = [1, 1]} : vector<8x512xf32> to vector<8x128xf32>
    %606 = arith.negf %605 : vector<8x128xf32>
    %607 = math.exp %606 : vector<8x128xf32>
    %cst_317 = arith.constant 1.000000e+00 : f32
    %608 = vector.broadcast %cst_317 : f32 to vector<8x128xf32>
    %609 = arith.addf %608, %607 : vector<8x128xf32>
    %610 = arith.divf %608, %609 : vector<8x128xf32>
    %611 = vector.extract_strided_slice %598 {offsets = [0, 256], sizes = [8, 128], strides = [1, 1]} : vector<8x512xf32> to vector<8x128xf32>
    %612 = math.tanh %611 : vector<8x128xf32>
    %613 = vector.extract_strided_slice %598 {offsets = [0, 384], sizes = [8, 128], strides = [1, 1]} : vector<8x512xf32> to vector<8x128xf32>
    %614 = arith.negf %613 : vector<8x128xf32>
    %615 = math.exp %614 : vector<8x128xf32>
    %cst_318 = arith.constant 1.000000e+00 : f32
    %616 = vector.broadcast %cst_318 : f32 to vector<8x128xf32>
    %617 = arith.addf %616, %615 : vector<8x128xf32>
    %618 = arith.divf %616, %617 : vector<8x128xf32>
    %619 = arith.mulf %610, %590 : vector<8x128xf32>
    %620 = arith.mulf %604, %612 : vector<8x128xf32>
    %621 = arith.addf %619, %620 : vector<8x128xf32>
    %622 = math.tanh %621 : vector<8x128xf32>
    %623 = arith.mulf %618, %622 : vector<8x128xf32>
    %c16_319 = arith.constant 16 : index
    %c0_320 = arith.constant 0 : index
    %624 = vector.load %arg1[%c16_319, %c0_320] : memref<64x128xf32, #tpu.memory_space<vmem>>, vector<8x128xf32>
    %625 = arith.subf %621, %590 : vector<8x128xf32>
    %626 = arith.mulf %624, %625 : vector<8x128xf32>
    %627 = arith.addf %590, %626 : vector<8x128xf32>
    %c0_321 = arith.constant 0 : index
    %c0_322 = arith.constant 0 : index
    %628 = vector.load %arg12[%c0_321, %c0_322] : memref<8x128xf32, #tpu.memory_space<vmem>>, vector<8x128xf32>
    tpu.vector_store %arg12[%c0_321, %c0_322], %627 {strides = array<i32>} : memref<8x128xf32, #tpu.memory_space<vmem>>, vector<8x128xf32>,
    %629 = arith.subf %623, %589 : vector<8x128xf32>
    %630 = arith.mulf %624, %629 : vector<8x128xf32>
    %631 = arith.addf %589, %630 : vector<8x128xf32>
    %c0_323 = arith.constant 0 : index
    %c0_324 = arith.constant 0 : index
    %632 = vector.load %arg11[%c0_323, %c0_324] : memref<8x128xf32, #tpu.memory_space<vmem>>, vector<8x128xf32>
    tpu.vector_store %arg11[%c0_323, %c0_324], %631 {strides = array<i32>} : memref<8x128xf32, #tpu.memory_space<vmem>>, vector<8x128xf32>,
    %633 = arith.mulf %624, %623 : vector<8x128xf32>
    %c16_325 = arith.constant 16 : index
    %c0_326 = arith.constant 0 : index
    %634 = vector.load %arg5[%c16_325, %c0_326] : memref<64x128xf32, #tpu.memory_space<vmem>>, vector<8x128xf32>
    tpu.vector_store %arg5[%c16_325, %c0_326], %633 {strides = array<i32>} : memref<64x128xf32, #tpu.memory_space<vmem>>, vector<8x128xf32>,
    %c0_327 = arith.constant 0 : index
    %c0_328 = arith.constant 0 : index
    %635 = vector.load %arg11[%c0_327, %c0_328] : memref<8x128xf32, #tpu.memory_space<vmem>>, vector<8x128xf32>
    %c0_329 = arith.constant 0 : index
    %c0_330 = arith.constant 0 : index
    %636 = vector.load %arg12[%c0_329, %c0_330] : memref<8x128xf32, #tpu.memory_space<vmem>>, vector<8x128xf32>
    %637 = arith.mulf %635, %4 : vector<8x128xf32>
    %638 = arith.mulf %635, %11 : vector<8x128xf32>
    %639 = tpu.concatenate %637, %638 in 1 : vector<8x128xf32>, vector<8x128xf32> -> vector<8x256xf32>
    %640 = arith.truncf %639 : vector<8x256xf32> to vector<8x256xbf16>
    %c24_331 = arith.constant 24 : index
    %c0_332 = arith.constant 0 : index
    %641 = vector.load %arg9[%c24_331, %c0_332] : memref<64x512xf32, #tpu.memory_space<vmem>>, vector<8x512xf32>
    %642 = arith.addf %641, %492 : vector<8x512xf32>
    %cst_333 = arith.constant dense<0.000000e+00> : vector<8x512xf32>
    %643 = tpu.matmul %640, %490, %cst_333 {dimension_numbers = #tpu.dot_dimension_numbers<[1], [0], [0], [1], [0, 0, 1, 1], [], []>} : vector<8x256xbf16>, vector<256x512xbf16>, vector<8x512xf32> -> vector<8x512xf32>
    %644 = arith.addf %642, %643 : vector<8x512xf32>
    %645 = vector.extract_strided_slice %644 {offsets = [0, 0], sizes = [8, 128], strides = [1, 1]} : vector<8x512xf32> to vector<8x128xf32>
    %646 = arith.negf %645 : vector<8x128xf32>
    %647 = math.exp %646 : vector<8x128xf32>
    %cst_334 = arith.constant 1.000000e+00 : f32
    %648 = vector.broadcast %cst_334 : f32 to vector<8x128xf32>
    %649 = arith.addf %648, %647 : vector<8x128xf32>
    %650 = arith.divf %648, %649 : vector<8x128xf32>
    %651 = vector.extract_strided_slice %644 {offsets = [0, 128], sizes = [8, 128], strides = [1, 1]} : vector<8x512xf32> to vector<8x128xf32>
    %652 = arith.negf %651 : vector<8x128xf32>
    %653 = math.exp %652 : vector<8x128xf32>
    %cst_335 = arith.constant 1.000000e+00 : f32
    %654 = vector.broadcast %cst_335 : f32 to vector<8x128xf32>
    %655 = arith.addf %654, %653 : vector<8x128xf32>
    %656 = arith.divf %654, %655 : vector<8x128xf32>
    %657 = vector.extract_strided_slice %644 {offsets = [0, 256], sizes = [8, 128], strides = [1, 1]} : vector<8x512xf32> to vector<8x128xf32>
    %658 = math.tanh %657 : vector<8x128xf32>
    %659 = vector.extract_strided_slice %644 {offsets = [0, 384], sizes = [8, 128], strides = [1, 1]} : vector<8x512xf32> to vector<8x128xf32>
    %660 = arith.negf %659 : vector<8x128xf32>
    %661 = math.exp %660 : vector<8x128xf32>
    %cst_336 = arith.constant 1.000000e+00 : f32
    %662 = vector.broadcast %cst_336 : f32 to vector<8x128xf32>
    %663 = arith.addf %662, %661 : vector<8x128xf32>
    %664 = arith.divf %662, %663 : vector<8x128xf32>
    %665 = arith.mulf %656, %636 : vector<8x128xf32>
    %666 = arith.mulf %650, %658 : vector<8x128xf32>
    %667 = arith.addf %665, %666 : vector<8x128xf32>
    %668 = math.tanh %667 : vector<8x128xf32>
    %669 = arith.mulf %664, %668 : vector<8x128xf32>
    %c24_337 = arith.constant 24 : index
    %c0_338 = arith.constant 0 : index
    %670 = vector.load %arg1[%c24_337, %c0_338] : memref<64x128xf32, #tpu.memory_space<vmem>>, vector<8x128xf32>
    %671 = arith.subf %667, %636 : vector<8x128xf32>
    %672 = arith.mulf %670, %671 : vector<8x128xf32>
    %673 = arith.addf %636, %672 : vector<8x128xf32>
    %c0_339 = arith.constant 0 : index
    %c0_340 = arith.constant 0 : index
    %674 = vector.load %arg12[%c0_339, %c0_340] : memref<8x128xf32, #tpu.memory_space<vmem>>, vector<8x128xf32>
    tpu.vector_store %arg12[%c0_339, %c0_340], %673 {strides = array<i32>} : memref<8x128xf32, #tpu.memory_space<vmem>>, vector<8x128xf32>,
    %675 = arith.subf %669, %635 : vector<8x128xf32>
    %676 = arith.mulf %670, %675 : vector<8x128xf32>
    %677 = arith.addf %635, %676 : vector<8x128xf32>
    %c0_341 = arith.constant 0 : index
    %c0_342 = arith.constant 0 : index
    %678 = vector.load %arg11[%c0_341, %c0_342] : memref<8x128xf32, #tpu.memory_space<vmem>>, vector<8x128xf32>
    tpu.vector_store %arg11[%c0_341, %c0_342], %677 {strides = array<i32>} : memref<8x128xf32, #tpu.memory_space<vmem>>, vector<8x128xf32>,
    %679 = arith.mulf %670, %669 : vector<8x128xf32>
    %c24_343 = arith.constant 24 : index
    %c0_344 = arith.constant 0 : index
    %680 = vector.load %arg5[%c24_343, %c0_344] : memref<64x128xf32, #tpu.memory_space<vmem>>, vector<8x128xf32>
    tpu.vector_store %arg5[%c24_343, %c0_344], %679 {strides = array<i32>} : memref<64x128xf32, #tpu.memory_space<vmem>>, vector<8x128xf32>,
    %c0_345 = arith.constant 0 : index
    %c0_346 = arith.constant 0 : index
    %681 = vector.load %arg11[%c0_345, %c0_346] : memref<8x128xf32, #tpu.memory_space<vmem>>, vector<8x128xf32>
    %c0_347 = arith.constant 0 : index
    %c0_348 = arith.constant 0 : index
    %682 = vector.load %arg12[%c0_347, %c0_348] : memref<8x128xf32, #tpu.memory_space<vmem>>, vector<8x128xf32>
    %683 = arith.mulf %681, %4 : vector<8x128xf32>
    %684 = arith.mulf %681, %11 : vector<8x128xf32>
    %685 = tpu.concatenate %683, %684 in 1 : vector<8x128xf32>, vector<8x128xf32> -> vector<8x256xf32>
    %686 = arith.truncf %685 : vector<8x256xf32> to vector<8x256xbf16>
    %c32_349 = arith.constant 32 : index
    %c0_350 = arith.constant 0 : index
    %687 = vector.load %arg9[%c32_349, %c0_350] : memref<64x512xf32, #tpu.memory_space<vmem>>, vector<8x512xf32>
    %688 = arith.addf %687, %492 : vector<8x512xf32>
    %cst_351 = arith.constant dense<0.000000e+00> : vector<8x512xf32>
    %689 = tpu.matmul %686, %490, %cst_351 {dimension_numbers = #tpu.dot_dimension_numbers<[1], [0], [0], [1], [0, 0, 1, 1], [], []>} : vector<8x256xbf16>, vector<256x512xbf16>, vector<8x512xf32> -> vector<8x512xf32>
    %690 = arith.addf %688, %689 : vector<8x512xf32>
    %691 = vector.extract_strided_slice %690 {offsets = [0, 0], sizes = [8, 128], strides = [1, 1]} : vector<8x512xf32> to vector<8x128xf32>
    %692 = arith.negf %691 : vector<8x128xf32>
    %693 = math.exp %692 : vector<8x128xf32>
    %cst_352 = arith.constant 1.000000e+00 : f32
    %694 = vector.broadcast %cst_352 : f32 to vector<8x128xf32>
    %695 = arith.addf %694, %693 : vector<8x128xf32>
    %696 = arith.divf %694, %695 : vector<8x128xf32>
    %697 = vector.extract_strided_slice %690 {offsets = [0, 128], sizes = [8, 128], strides = [1, 1]} : vector<8x512xf32> to vector<8x128xf32>
    %698 = arith.negf %697 : vector<8x128xf32>
    %699 = math.exp %698 : vector<8x128xf32>
    %cst_353 = arith.constant 1.000000e+00 : f32
    %700 = vector.broadcast %cst_353 : f32 to vector<8x128xf32>
    %701 = arith.addf %700, %699 : vector<8x128xf32>
    %702 = arith.divf %700, %701 : vector<8x128xf32>
    %703 = vector.extract_strided_slice %690 {offsets = [0, 256], sizes = [8, 128], strides = [1, 1]} : vector<8x512xf32> to vector<8x128xf32>
    %704 = math.tanh %703 : vector<8x128xf32>
    %705 = vector.extract_strided_slice %690 {offsets = [0, 384], sizes = [8, 128], strides = [1, 1]} : vector<8x512xf32> to vector<8x128xf32>
    %706 = arith.negf %705 : vector<8x128xf32>
    %707 = math.exp %706 : vector<8x128xf32>
    %cst_354 = arith.constant 1.000000e+00 : f32
    %708 = vector.broadcast %cst_354 : f32 to vector<8x128xf32>
    %709 = arith.addf %708, %707 : vector<8x128xf32>
    %710 = arith.divf %708, %709 : vector<8x128xf32>
    %711 = arith.mulf %702, %682 : vector<8x128xf32>
    %712 = arith.mulf %696, %704 : vector<8x128xf32>
    %713 = arith.addf %711, %712 : vector<8x128xf32>
    %714 = math.tanh %713 : vector<8x128xf32>
    %715 = arith.mulf %710, %714 : vector<8x128xf32>
    %c32_355 = arith.constant 32 : index
    %c0_356 = arith.constant 0 : index
    %716 = vector.load %arg1[%c32_355, %c0_356] : memref<64x128xf32, #tpu.memory_space<vmem>>, vector<8x128xf32>
    %717 = arith.subf %713, %682 : vector<8x128xf32>
    %718 = arith.mulf %716, %717 : vector<8x128xf32>
    %719 = arith.addf %682, %718 : vector<8x128xf32>
    %c0_357 = arith.constant 0 : index
    %c0_358 = arith.constant 0 : index
    %720 = vector.load %arg12[%c0_357, %c0_358] : memref<8x128xf32, #tpu.memory_space<vmem>>, vector<8x128xf32>
    tpu.vector_store %arg12[%c0_357, %c0_358], %719 {strides = array<i32>} : memref<8x128xf32, #tpu.memory_space<vmem>>, vector<8x128xf32>,
    %721 = arith.subf %715, %681 : vector<8x128xf32>
    %722 = arith.mulf %716, %721 : vector<8x128xf32>
    %723 = arith.addf %681, %722 : vector<8x128xf32>
    %c0_359 = arith.constant 0 : index
    %c0_360 = arith.constant 0 : index
    %724 = vector.load %arg11[%c0_359, %c0_360] : memref<8x128xf32, #tpu.memory_space<vmem>>, vector<8x128xf32>
    tpu.vector_store %arg11[%c0_359, %c0_360], %723 {strides = array<i32>} : memref<8x128xf32, #tpu.memory_space<vmem>>, vector<8x128xf32>,
    %725 = arith.mulf %716, %715 : vector<8x128xf32>
    %c32_361 = arith.constant 32 : index
    %c0_362 = arith.constant 0 : index
    %726 = vector.load %arg5[%c32_361, %c0_362] : memref<64x128xf32, #tpu.memory_space<vmem>>, vector<8x128xf32>
    tpu.vector_store %arg5[%c32_361, %c0_362], %725 {strides = array<i32>} : memref<64x128xf32, #tpu.memory_space<vmem>>, vector<8x128xf32>,
    %c0_363 = arith.constant 0 : index
    %c0_364 = arith.constant 0 : index
    %727 = vector.load %arg11[%c0_363, %c0_364] : memref<8x128xf32, #tpu.memory_space<vmem>>, vector<8x128xf32>
    %c0_365 = arith.constant 0 : index
    %c0_366 = arith.constant 0 : index
    %728 = vector.load %arg12[%c0_365, %c0_366] : memref<8x128xf32, #tpu.memory_space<vmem>>, vector<8x128xf32>
    %729 = arith.mulf %727, %4 : vector<8x128xf32>
    %730 = arith.mulf %727, %11 : vector<8x128xf32>
    %731 = tpu.concatenate %729, %730 in 1 : vector<8x128xf32>, vector<8x128xf32> -> vector<8x256xf32>
    %732 = arith.truncf %731 : vector<8x256xf32> to vector<8x256xbf16>
    %c40_367 = arith.constant 40 : index
    %c0_368 = arith.constant 0 : index
    %733 = vector.load %arg9[%c40_367, %c0_368] : memref<64x512xf32, #tpu.memory_space<vmem>>, vector<8x512xf32>
    %734 = arith.addf %733, %492 : vector<8x512xf32>
    %cst_369 = arith.constant dense<0.000000e+00> : vector<8x512xf32>
    %735 = tpu.matmul %732, %490, %cst_369 {dimension_numbers = #tpu.dot_dimension_numbers<[1], [0], [0], [1], [0, 0, 1, 1], [], []>} : vector<8x256xbf16>, vector<256x512xbf16>, vector<8x512xf32> -> vector<8x512xf32>
    %736 = arith.addf %734, %735 : vector<8x512xf32>
    %737 = vector.extract_strided_slice %736 {offsets = [0, 0], sizes = [8, 128], strides = [1, 1]} : vector<8x512xf32> to vector<8x128xf32>
    %738 = arith.negf %737 : vector<8x128xf32>
    %739 = math.exp %738 : vector<8x128xf32>
    %cst_370 = arith.constant 1.000000e+00 : f32
    %740 = vector.broadcast %cst_370 : f32 to vector<8x128xf32>
    %741 = arith.addf %740, %739 : vector<8x128xf32>
    %742 = arith.divf %740, %741 : vector<8x128xf32>
    %743 = vector.extract_strided_slice %736 {offsets = [0, 128], sizes = [8, 128], strides = [1, 1]} : vector<8x512xf32> to vector<8x128xf32>
    %744 = arith.negf %743 : vector<8x128xf32>
    %745 = math.exp %744 : vector<8x128xf32>
    %cst_371 = arith.constant 1.000000e+00 : f32
    %746 = vector.broadcast %cst_371 : f32 to vector<8x128xf32>
    %747 = arith.addf %746, %745 : vector<8x128xf32>
    %748 = arith.divf %746, %747 : vector<8x128xf32>
    %749 = vector.extract_strided_slice %736 {offsets = [0, 256], sizes = [8, 128], strides = [1, 1]} : vector<8x512xf32> to vector<8x128xf32>
    %750 = math.tanh %749 : vector<8x128xf32>
    %751 = vector.extract_strided_slice %736 {offsets = [0, 384], sizes = [8, 128], strides = [1, 1]} : vector<8x512xf32> to vector<8x128xf32>
    %752 = arith.negf %751 : vector<8x128xf32>
    %753 = math.exp %752 : vector<8x128xf32>
    %cst_372 = arith.constant 1.000000e+00 : f32
    %754 = vector.broadcast %cst_372 : f32 to vector<8x128xf32>
    %755 = arith.addf %754, %753 : vector<8x128xf32>
    %756 = arith.divf %754, %755 : vector<8x128xf32>
    %757 = arith.mulf %748, %728 : vector<8x128xf32>
    %758 = arith.mulf %742, %750 : vector<8x128xf32>
    %759 = arith.addf %757, %758 : vector<8x128xf32>
    %760 = math.tanh %759 : vector<8x128xf32>
    %761 = arith.mulf %756, %760 : vector<8x128xf32>
    %c40_373 = arith.constant 40 : index
    %c0_374 = arith.constant 0 : index
    %762 = vector.load %arg1[%c40_373, %c0_374] : memref<64x128xf32, #tpu.memory_space<vmem>>, vector<8x128xf32>
    %763 = arith.subf %759, %728 : vector<8x128xf32>
    %764 = arith.mulf %762, %763 : vector<8x128xf32>
    %765 = arith.addf %728, %764 : vector<8x128xf32>
    %c0_375 = arith.constant 0 : index
    %c0_376 = arith.constant 0 : index
    %766 = vector.load %arg12[%c0_375, %c0_376] : memref<8x128xf32, #tpu.memory_space<vmem>>, vector<8x128xf32>
    tpu.vector_store %arg12[%c0_375, %c0_376], %765 {strides = array<i32>} : memref<8x128xf32, #tpu.memory_space<vmem>>, vector<8x128xf32>,
    %767 = arith.subf %761, %727 : vector<8x128xf32>
    %768 = arith.mulf %762, %767 : vector<8x128xf32>
    %769 = arith.addf %727, %768 : vector<8x128xf32>
    %c0_377 = arith.constant 0 : index
    %c0_378 = arith.constant 0 : index
    %770 = vector.load %arg11[%c0_377, %c0_378] : memref<8x128xf32, #tpu.memory_space<vmem>>, vector<8x128xf32>
    tpu.vector_store %arg11[%c0_377, %c0_378], %769 {strides = array<i32>} : memref<8x128xf32, #tpu.memory_space<vmem>>, vector<8x128xf32>,
    %771 = arith.mulf %762, %761 : vector<8x128xf32>
    %c40_379 = arith.constant 40 : index
    %c0_380 = arith.constant 0 : index
    %772 = vector.load %arg5[%c40_379, %c0_380] : memref<64x128xf32, #tpu.memory_space<vmem>>, vector<8x128xf32>
    tpu.vector_store %arg5[%c40_379, %c0_380], %771 {strides = array<i32>} : memref<64x128xf32, #tpu.memory_space<vmem>>, vector<8x128xf32>,
    %c0_381 = arith.constant 0 : index
    %c0_382 = arith.constant 0 : index
    %773 = vector.load %arg11[%c0_381, %c0_382] : memref<8x128xf32, #tpu.memory_space<vmem>>, vector<8x128xf32>
    %c0_383 = arith.constant 0 : index
    %c0_384 = arith.constant 0 : index
    %774 = vector.load %arg12[%c0_383, %c0_384] : memref<8x128xf32, #tpu.memory_space<vmem>>, vector<8x128xf32>
    %775 = arith.mulf %773, %4 : vector<8x128xf32>
    %776 = arith.mulf %773, %11 : vector<8x128xf32>
    %777 = tpu.concatenate %775, %776 in 1 : vector<8x128xf32>, vector<8x128xf32> -> vector<8x256xf32>
    %778 = arith.truncf %777 : vector<8x256xf32> to vector<8x256xbf16>
    %c48_385 = arith.constant 48 : index
    %c0_386 = arith.constant 0 : index
    %779 = vector.load %arg9[%c48_385, %c0_386] : memref<64x512xf32, #tpu.memory_space<vmem>>, vector<8x512xf32>
    %780 = arith.addf %779, %492 : vector<8x512xf32>
    %cst_387 = arith.constant dense<0.000000e+00> : vector<8x512xf32>
    %781 = tpu.matmul %778, %490, %cst_387 {dimension_numbers = #tpu.dot_dimension_numbers<[1], [0], [0], [1], [0, 0, 1, 1], [], []>} : vector<8x256xbf16>, vector<256x512xbf16>, vector<8x512xf32> -> vector<8x512xf32>
    %782 = arith.addf %780, %781 : vector<8x512xf32>
    %783 = vector.extract_strided_slice %782 {offsets = [0, 0], sizes = [8, 128], strides = [1, 1]} : vector<8x512xf32> to vector<8x128xf32>
    %784 = arith.negf %783 : vector<8x128xf32>
    %785 = math.exp %784 : vector<8x128xf32>
    %cst_388 = arith.constant 1.000000e+00 : f32
    %786 = vector.broadcast %cst_388 : f32 to vector<8x128xf32>
    %787 = arith.addf %786, %785 : vector<8x128xf32>
    %788 = arith.divf %786, %787 : vector<8x128xf32>
    %789 = vector.extract_strided_slice %782 {offsets = [0, 128], sizes = [8, 128], strides = [1, 1]} : vector<8x512xf32> to vector<8x128xf32>
    %790 = arith.negf %789 : vector<8x128xf32>
    %791 = math.exp %790 : vector<8x128xf32>
    %cst_389 = arith.constant 1.000000e+00 : f32
    %792 = vector.broadcast %cst_389 : f32 to vector<8x128xf32>
    %793 = arith.addf %792, %791 : vector<8x128xf32>
    %794 = arith.divf %792, %793 : vector<8x128xf32>
    %795 = vector.extract_strided_slice %782 {offsets = [0, 256], sizes = [8, 128], strides = [1, 1]} : vector<8x512xf32> to vector<8x128xf32>
    %796 = math.tanh %795 : vector<8x128xf32>
    %797 = vector.extract_strided_slice %782 {offsets = [0, 384], sizes = [8, 128], strides = [1, 1]} : vector<8x512xf32> to vector<8x128xf32>
    %798 = arith.negf %797 : vector<8x128xf32>
    %799 = math.exp %798 : vector<8x128xf32>
    %cst_390 = arith.constant 1.000000e+00 : f32
    %800 = vector.broadcast %cst_390 : f32 to vector<8x128xf32>
    %801 = arith.addf %800, %799 : vector<8x128xf32>
    %802 = arith.divf %800, %801 : vector<8x128xf32>
    %803 = arith.mulf %794, %774 : vector<8x128xf32>
    %804 = arith.mulf %788, %796 : vector<8x128xf32>
    %805 = arith.addf %803, %804 : vector<8x128xf32>
    %806 = math.tanh %805 : vector<8x128xf32>
    %807 = arith.mulf %802, %806 : vector<8x128xf32>
    %c48_391 = arith.constant 48 : index
    %c0_392 = arith.constant 0 : index
    %808 = vector.load %arg1[%c48_391, %c0_392] : memref<64x128xf32, #tpu.memory_space<vmem>>, vector<8x128xf32>
    %809 = arith.subf %805, %774 : vector<8x128xf32>
    %810 = arith.mulf %808, %809 : vector<8x128xf32>
    %811 = arith.addf %774, %810 : vector<8x128xf32>
    %c0_393 = arith.constant 0 : index
    %c0_394 = arith.constant 0 : index
    %812 = vector.load %arg12[%c0_393, %c0_394] : memref<8x128xf32, #tpu.memory_space<vmem>>, vector<8x128xf32>
    tpu.vector_store %arg12[%c0_393, %c0_394], %811 {strides = array<i32>} : memref<8x128xf32, #tpu.memory_space<vmem>>, vector<8x128xf32>,
    %813 = arith.subf %807, %773 : vector<8x128xf32>
    %814 = arith.mulf %808, %813 : vector<8x128xf32>
    %815 = arith.addf %773, %814 : vector<8x128xf32>
    %c0_395 = arith.constant 0 : index
    %c0_396 = arith.constant 0 : index
    %816 = vector.load %arg11[%c0_395, %c0_396] : memref<8x128xf32, #tpu.memory_space<vmem>>, vector<8x128xf32>
    tpu.vector_store %arg11[%c0_395, %c0_396], %815 {strides = array<i32>} : memref<8x128xf32, #tpu.memory_space<vmem>>, vector<8x128xf32>,
    %817 = arith.mulf %808, %807 : vector<8x128xf32>
    %c48_397 = arith.constant 48 : index
    %c0_398 = arith.constant 0 : index
    %818 = vector.load %arg5[%c48_397, %c0_398] : memref<64x128xf32, #tpu.memory_space<vmem>>, vector<8x128xf32>
    tpu.vector_store %arg5[%c48_397, %c0_398], %817 {strides = array<i32>} : memref<64x128xf32, #tpu.memory_space<vmem>>, vector<8x128xf32>,
    %c0_399 = arith.constant 0 : index
    %c0_400 = arith.constant 0 : index
    %819 = vector.load %arg11[%c0_399, %c0_400] : memref<8x128xf32, #tpu.memory_space<vmem>>, vector<8x128xf32>
    %c0_401 = arith.constant 0 : index
    %c0_402 = arith.constant 0 : index
    %820 = vector.load %arg12[%c0_401, %c0_402] : memref<8x128xf32, #tpu.memory_space<vmem>>, vector<8x128xf32>
    %821 = arith.mulf %819, %4 : vector<8x128xf32>
    %822 = arith.mulf %819, %11 : vector<8x128xf32>
    %823 = tpu.concatenate %821, %822 in 1 : vector<8x128xf32>, vector<8x128xf32> -> vector<8x256xf32>
    %824 = arith.truncf %823 : vector<8x256xf32> to vector<8x256xbf16>
    %c56_403 = arith.constant 56 : index
    %c0_404 = arith.constant 0 : index
    %825 = vector.load %arg9[%c56_403, %c0_404] : memref<64x512xf32, #tpu.memory_space<vmem>>, vector<8x512xf32>
    %826 = arith.addf %825, %492 : vector<8x512xf32>
    %cst_405 = arith.constant dense<0.000000e+00> : vector<8x512xf32>
    %827 = tpu.matmul %824, %490, %cst_405 {dimension_numbers = #tpu.dot_dimension_numbers<[1], [0], [0], [1], [0, 0, 1, 1], [], []>} : vector<8x256xbf16>, vector<256x512xbf16>, vector<8x512xf32> -> vector<8x512xf32>
    %828 = arith.addf %826, %827 : vector<8x512xf32>
    %829 = vector.extract_strided_slice %828 {offsets = [0, 0], sizes = [8, 128], strides = [1, 1]} : vector<8x512xf32> to vector<8x128xf32>
    %830 = arith.negf %829 : vector<8x128xf32>
    %831 = math.exp %830 : vector<8x128xf32>
    %cst_406 = arith.constant 1.000000e+00 : f32
    %832 = vector.broadcast %cst_406 : f32 to vector<8x128xf32>
    %833 = arith.addf %832, %831 : vector<8x128xf32>
    %834 = arith.divf %832, %833 : vector<8x128xf32>
    %835 = vector.extract_strided_slice %828 {offsets = [0, 128], sizes = [8, 128], strides = [1, 1]} : vector<8x512xf32> to vector<8x128xf32>
    %836 = arith.negf %835 : vector<8x128xf32>
    %837 = math.exp %836 : vector<8x128xf32>
    %cst_407 = arith.constant 1.000000e+00 : f32
    %838 = vector.broadcast %cst_407 : f32 to vector<8x128xf32>
    %839 = arith.addf %838, %837 : vector<8x128xf32>
    %840 = arith.divf %838, %839 : vector<8x128xf32>
    %841 = vector.extract_strided_slice %828 {offsets = [0, 256], sizes = [8, 128], strides = [1, 1]} : vector<8x512xf32> to vector<8x128xf32>
    %842 = math.tanh %841 : vector<8x128xf32>
    %843 = vector.extract_strided_slice %828 {offsets = [0, 384], sizes = [8, 128], strides = [1, 1]} : vector<8x512xf32> to vector<8x128xf32>
    %844 = arith.negf %843 : vector<8x128xf32>
    %845 = math.exp %844 : vector<8x128xf32>
    %cst_408 = arith.constant 1.000000e+00 : f32
    %846 = vector.broadcast %cst_408 : f32 to vector<8x128xf32>
    %847 = arith.addf %846, %845 : vector<8x128xf32>
    %848 = arith.divf %846, %847 : vector<8x128xf32>
    %849 = arith.mulf %840, %820 : vector<8x128xf32>
    %850 = arith.mulf %834, %842 : vector<8x128xf32>
    %851 = arith.addf %849, %850 : vector<8x128xf32>
    %852 = math.tanh %851 : vector<8x128xf32>
    %853 = arith.mulf %848, %852 : vector<8x128xf32>
    %c56_409 = arith.constant 56 : index
    %c0_410 = arith.constant 0 : index
    %854 = vector.load %arg1[%c56_409, %c0_410] : memref<64x128xf32, #tpu.memory_space<vmem>>, vector<8x128xf32>
    %855 = arith.subf %851, %820 : vector<8x128xf32>
    %856 = arith.mulf %854, %855 : vector<8x128xf32>
    %857 = arith.addf %820, %856 : vector<8x128xf32>
    %c0_411 = arith.constant 0 : index
    %c0_412 = arith.constant 0 : index
    %858 = vector.load %arg12[%c0_411, %c0_412] : memref<8x128xf32, #tpu.memory_space<vmem>>, vector<8x128xf32>
    tpu.vector_store %arg12[%c0_411, %c0_412], %857 {strides = array<i32>} : memref<8x128xf32, #tpu.memory_space<vmem>>, vector<8x128xf32>,
    %859 = arith.subf %853, %819 : vector<8x128xf32>
    %860 = arith.mulf %854, %859 : vector<8x128xf32>
    %861 = arith.addf %819, %860 : vector<8x128xf32>
    %c0_413 = arith.constant 0 : index
    %c0_414 = arith.constant 0 : index
    %862 = vector.load %arg11[%c0_413, %c0_414] : memref<8x128xf32, #tpu.memory_space<vmem>>, vector<8x128xf32>
    tpu.vector_store %arg11[%c0_413, %c0_414], %861 {strides = array<i32>} : memref<8x128xf32, #tpu.memory_space<vmem>>, vector<8x128xf32>,
    %863 = arith.mulf %854, %853 : vector<8x128xf32>
    %c56_415 = arith.constant 56 : index
    %c0_416 = arith.constant 0 : index
    %864 = vector.load %arg5[%c56_415, %c0_416] : memref<64x128xf32, #tpu.memory_space<vmem>>, vector<8x128xf32>
    tpu.vector_store %arg5[%c56_415, %c0_416], %863 {strides = array<i32>} : memref<64x128xf32, #tpu.memory_space<vmem>>, vector<8x128xf32>,
    %c0_417 = arith.constant 0 : index
    %c0_418 = arith.constant 0 : index
    %865 = vector.load %arg11[%c0_417, %c0_418] : memref<8x128xf32, #tpu.memory_space<vmem>>, vector<8x128xf32>
    %c1_419 = arith.constant 1 : index
    %c0_420 = arith.constant 0 : index
    %c0_421 = arith.constant 0 : index
    %866 = vector.load %arg6[%c1_419, %c0_420, %c0_421] : memref<2x8x128xf32, #tpu.memory_space<vmem>>, vector<1x8x128xf32>
    %867 = vector.shape_cast %866 : vector<1x8x128xf32> to vector<8x128xf32>
    %868 = vector.shape_cast %865 : vector<8x128xf32> to vector<1x8x128xf32>
    tpu.vector_store %arg6[%c1_419, %c0_420, %c0_421], %868 {strides = array<i32>} : memref<2x8x128xf32, #tpu.memory_space<vmem>>, vector<1x8x128xf32>,
    %c0_422 = arith.constant 0 : index
    %c0_423 = arith.constant 0 : index
    %869 = vector.load %arg12[%c0_422, %c0_423] : memref<8x128xf32, #tpu.memory_space<vmem>>, vector<8x128xf32>
    %c1_424 = arith.constant 1 : index
    %c0_425 = arith.constant 0 : index
    %c0_426 = arith.constant 0 : index
    %870 = vector.load %arg7[%c1_424, %c0_425, %c0_426] : memref<2x8x128xf32, #tpu.memory_space<vmem>>, vector<1x8x128xf32>
    %871 = vector.shape_cast %870 : vector<1x8x128xf32> to vector<8x128xf32>
    %872 = vector.shape_cast %869 : vector<8x128xf32> to vector<1x8x128xf32>
    tpu.vector_store %arg7[%c1_424, %c0_425, %c0_426], %872 {strides = array<i32>} : memref<2x8x128xf32, #tpu.memory_space<vmem>>, vector<1x8x128xf32>,
    return
  }
}

</mosaic_0001>

<llo_original>
// kernel: tpu_custom_call.1
$region0: #{tpu_custom_call.1}
  #allocation0 [shape = 'u32[]', space=smem, size = 0x4, offset = 0x4, fixed_abs, tag = 'smem constant byte address 0x4 - core index']
  #allocation1 [shape = 'u32[144,128]{1,0:T(1,128)}', space=vmem, size = 0x12000, scoped, tag = 'internal scratch']
  #allocation2 [shape = 'f32[64,512]{1,0:T(8,128)}', space=vmem, size = 0x20000, scoped, tag = 'scratch operand']
  #allocation3 [shape = 'f32[64,512]{1,0:T(8,128)}', space=vmem, size = 0x20000, scoped, tag = 'scratch operand']
  #allocation4 [shape = 'f32[64,128]{1,0:T(8,128)}', space=vmem, size = 0x8000, scoped, tag = 'scratch operand']
  #allocation5 [shape = 'f32[8,128]{1,0:T(8,128)}', space=vmem, size = 0x1000, scoped, tag = 'scratch operand']
  #allocation6 [shape = 'f32[8,128]{1,0:T(8,128)}', space=vmem, size = 0x1000, scoped, tag = 'scratch operand']
  %s0 = inlined_call_operand.hbm [shape: bf16[64,512], index: 0, kind: input, shape index: {}]
  %s1 = inlined_call_operand.hbm [shape: f32[64,128], index: 1, kind: input, shape index: {}]
  %s2 = inlined_call_operand.hbm [shape: bf16[2,512,512], index: 2, kind: input, shape index: {}]
  %s3 = inlined_call_operand.hbm [shape: bf16[2,256,512], index: 3, kind: input, shape index: {}]
  %s4 = inlined_call_operand.hbm [shape: f32[2,8,512], index: 4, kind: input, shape index: {}]
  %s5 = inlined_call_operand.hbm [shape: f32[64,128], index: 5, kind: output, shape index: {0}]
  %s6 = inlined_call_operand.hbm [shape: f32[2,8,128], index: 6, kind: output, shape index: {1}]
  %s7 = inlined_call_operand.hbm [shape: f32[2,8,128], index: 7, kind: output, shape index: {2}]
  %8 = xla_tuple %s5, %s6, %s7
  %s9 = sld [smem:[#allocation0]]
  $region66: #{tpu_custom_call.1} parent=0
    _
  %s11 = ssub.s32 1, %s9
  %s12 = scalar_select 0, %s11, %s9
  $region1: #{tpu_custom_call.1} parent=0
    #allocation7 [shape = 'u8[65536]{0}', space=vmem, size = 0x10000, scoped, tag = 'input window, operand 0, single buffered']
    #allocation8 [shape = 's32[1]{0}', space=sflag, size = 0x4, scoped, tag = 'scoped memory for tpu_custom_call.1']
    #allocation9 [shape = 's32[1]{0}', space=sflag, size = 0x4, scoped, tag = 'scoped memory for tpu_custom_call.1']
    #allocation10 [shape = 'u8[32768]{0}', space=vmem, size = 0x8000, scoped, tag = 'input window, operand 1, single buffered']
    #allocation11 [shape = 's32[1]{0}', space=sflag, size = 0x4, scoped, tag = 'scoped memory for tpu_custom_call.1']
    #allocation12 [shape = 'u8[1048576]{0}', space=vmem, size = 0x100000, scoped, tag = 'input window, operand 2, single buffered']
    #allocation13 [shape = 'u8[524288]{0}', space=vmem, size = 0x80000, scoped, tag = 'input window, operand 3, single buffered']
    #allocation14 [shape = 's32[1]{0}', space=sflag, size = 0x4, scoped, tag = 'scoped memory for tpu_custom_call.1']
    #allocation15 [shape = 'u8[32768]{0}', space=vmem, size = 0x8000, scoped, tag = 'input window, operand 4, single buffered']
    #allocation16 [shape = 'u8[32768]{0}', space=vmem, size = 0x8000, scoped, tag = 'output window, operand 0, single buffered']
    #allocation17 [shape = 'u8[8192]{0}', space=vmem, size = 0x2000, scoped, tag = 'output window, operand 1, single buffered']
    #allocation18 [shape = 's32[1]{0}', space=sflag, size = 0x4, scoped, tag = 'scoped memory for tpu_custom_call.1']
    #allocation19 [shape = 'u8[8192]{0}', space=vmem, size = 0x2000, scoped, tag = 'output window, operand 2, single buffered']
    %13 = vsyncpa [#allocation8], 0
    %14 = vsyncpa [#allocation11], 0
    %15 = vsyncpa [#allocation14], 0
    %16 = vsyncpa [#allocation9], 0
    %17 = vsyncpa [#allocation18], 0
    // Predicated region
    $region2: #{tpu_custom_call.1} parent=1 // pred_check
      _
    $region3: #{tpu_custom_call.1} parent=1 // pred_check_branch
      %19 = sbr.rel (0) target = $region5
    $region4: #{tpu_custom_call.1} parent=1 // pred_region
      %s21 = ssub.s32 2048, 2048
      %22 = vsyncadd [#allocation8], %s21
      %s23 = sshll.u32 [#allocation7], 4
      %s24 = int_to_ptr.vmem [resolvable:$true] %s23
      %29 = dma.hbm_to_vmem [thread:$0]  %s0, 2048, %s24, [#allocation8], 256, 256, 16
    $region5: #{tpu_custom_call.1} parent=1 // pred_fallthru
      _
    // Predicated region
    $region6: #{tpu_custom_call.1} parent=1 // pred_check
      _
    $region7: #{tpu_custom_call.1} parent=1 // pred_check_branch
      %31 = sbr.rel (0) target = $region9
    $region8: #{tpu_custom_call.1} parent=1 // pred_region
      %s33 = ssub.s32 1024, 1024
      %34 = vsyncadd [#allocation11], %s33
      %s35 = sshll.u32 [#allocation10], 4
      %s36 = int_to_ptr.vmem [resolvable:$true] %s35
      %41 = dma.hbm_to_vmem [thread:$0]  %s1, 1024, %s36, [#allocation11], 128, 128, 8
    $region9: #{tpu_custom_call.1} parent=1 // pred_fallthru
      _
    // Predicated region
    $region10: #{tpu_custom_call.1} parent=1 // pred_check
      _
    $region11: #{tpu_custom_call.1} parent=1 // pred_check_branch
      %43 = sbr.rel (0) target = $region13
    $region12: #{tpu_custom_call.1} parent=1 // pred_region
      %s45 = ssub.s32 32768, 32768
      %46 = vsyncadd [#allocation11], %s45
      %s47 = sshll.u32 [#allocation12], 4
      %s48 = int_to_ptr.vmem [resolvable:$true] %s47
      %53 = dma.hbm_to_vmem [thread:$0]  %s2, 32768, %s48, [#allocation11], 256, 256, 16
    $region13: #{tpu_custom_call.1} parent=1 // pred_fallthru
      _
    // Predicated region
    $region14: #{tpu_custom_call.1} parent=1 // pred_check
      _
    $region15: #{tpu_custom_call.1} parent=1 // pred_check_branch
      %55 = sbr.rel (0) target = $region17
    $region16: #{tpu_custom_call.1} parent=1 // pred_region
      %s57 = ssub.s32 16384, 16384
      %58 = vsyncadd [#allocation14], %s57
      %s59 = sshll.u32 [#allocation13], 4
      %s60 = int_to_ptr.vmem [resolvable:$true] %s59
      %65 = dma.hbm_to_vmem [thread:$0]  %s3, 16384, %s60, [#allocation14], 256, 256, 16
    $region17: #{tpu_custom_call.1} parent=1 // pred_fallthru
      _
    // Predicated region
    $region18: #{tpu_custom_call.1} parent=1 // pred_check
      _
    $region19: #{tpu_custom_call.1} parent=1 // pred_check_branch
      %67 = sbr.rel (0) target = $region21
    $region20: #{tpu_custom_call.1} parent=1 // pred_region
      %s69 = ssub.s32 1024, 1024
      %70 = vsyncadd [#allocation14], %s69
      %s71 = sshll.u32 [#allocation15], 4
      %s72 = int_to_ptr.vmem [resolvable:$true] %s71
      %77 = dma.hbm_to_vmem [thread:$0]  %s4, 1024, %s72, [#allocation14], 512, 512, 32
    $region21: #{tpu_custom_call.1} parent=1 // pred_fallthru
      _
    // Predicated region
    $region22: #{tpu_custom_call.1} parent=1 // pred_check
      _
    $region23: #{tpu_custom_call.1} parent=1 // pred_check_branch
      %79 = sbr.rel (0) target = $region25
    $region24: #{tpu_custom_call.1} parent=1 // pred_region
      %80 = dma.done [#allocation8], 2048
    $region25: #{tpu_custom_call.1} parent=1 // pred_fallthru
      _
    // Predicated region
    $region26: #{tpu_custom_call.1} parent=1 // pred_check
      _
    $region27: #{tpu_custom_call.1} parent=1 // pred_check_branch
      %82 = sbr.rel (0) target = $region29
    $region28: #{tpu_custom_call.1} parent=1 // pred_region
      %83 = dma.done [#allocation11], 1024
    $region29: #{tpu_custom_call.1} parent=1 // pred_fallthru
      _
    // Predicated region
    $region30: #{tpu_custom_call.1} parent=1 // pred_check
      _
    $region31: #{tpu_custom_call.1} parent=1 // pred_check_branch
      %85 = sbr.rel (0) target = $region33
    $region32: #{tpu_custom_call.1} parent=1 // pred_region
      %86 = dma.done [#allocation11], 32768
    $region33: #{tpu_custom_call.1} parent=1 // pred_fallthru
      _
    // Predicated region
    $region34: #{tpu_custom_call.1} parent=1 // pred_check
      _
    $region35: #{tpu_custom_call.1} parent=1 // pred_check_branch
      %88 = sbr.rel (0) target = $region37
    $region36: #{tpu_custom_call.1} parent=1 // pred_region
      %89 = dma.done [#allocation14], 16384
    $region37: #{tpu_custom_call.1} parent=1 // pred_fallthru
      _
    // Predicated region
    $region38: #{tpu_custom_call.1} parent=1 // pred_check
      _
    $region39: #{tpu_custom_call.1} parent=1 // pred_check_branch
      %91 = sbr.rel (0) target = $region41
    $region40: #{tpu_custom_call.1} parent=1 // pred_region
      %92 = dma.done [#allocation14], 1024
    $region41: #{tpu_custom_call.1} parent=1 // pred_fallthru
      _
    %v93 = vlaneseq
    %v94 = vshrl.u32 %v93, 7
    %vm95 = vcmp.lt.s32.totalorder %v94, 2
    %v96 = vsel %vm95, 1, 0
    %v97 = vcvt.s32.f32 %v96
    %vm98 = vcmp.ge.s32.totalorder %v94, 2
    %vm99 = vcmp.lt.s32.totalorder %v94, 4
    %vm100 = vmand %vm98, %vm99
    %v101 = vsel %vm100, 1, 0
    %v102 = vcvt.s32.f32 %v101
    %v103 = vld [vmem:[#allocation7] sm:$0xff]
    %v104 = vld [vmem:[#allocation7 + $0x8] sm:$0xff]
    %v105 = vld [vmem:[#allocation7 + $0x10] sm:$0xff]
    %v106 = vld [vmem:[#allocation7 + $0x18] sm:$0xff]
    %v107 = vld [vmem:[#allocation7 + $0x20] sm:$0xff]
    %v108 = vld [vmem:[#allocation7 + $0x28] sm:$0xff]
    %v109 = vld [vmem:[#allocation7 + $0x30] sm:$0xff]
    %v110 = vld [vmem:[#allocation7 + $0x38] sm:$0xff]
    %v111 = vld [vmem:[#allocation7 + $0x40] sm:$0xff]
    %v112 = vld [vmem:[#allocation7 + $0x48] sm:$0xff]
    %v113 = vld [vmem:[#allocation7 + $0x50] sm:$0xff]
    %v114 = vld [vmem:[#allocation7 + $0x58] sm:$0xff]
    %v115 = vld [vmem:[#allocation7 + $0x60] sm:$0xff]
    %v116 = vld [vmem:[#allocation7 + $0x68] sm:$0xff]
    %v117 = vld [vmem:[#allocation7 + $0x70] sm:$0xff]
    %v118 = vld [vmem:[#allocation7 + $0x78] sm:$0xff]
    %v119 = vld [vmem:[#allocation12] sm:$0xff]
    %v120 = vld [vmem:[#allocation12 + $0x8] sm:$0xff]
    %v121 = vld [vmem:[#allocation12 + $0x10] sm:$0xff]
    %v122 = vld [vmem:[#allocation12 + $0x18] sm:$0xff]
    %v123 = vld [vmem:[#allocation12 + $0x20] sm:$0xff]
    %v124 = vld [vmem:[#allocation12 + $0x28] sm:$0xff]
    %v125 = vld [vmem:[#allocation12 + $0x30] sm:$0xff]
    %v126 = vld [vmem:[#allocation12 + $0x38] sm:$0xff]
    %v127 = vld [vmem:[#allocation12 + $0x40] sm:$0xff]
    %v128 = vld [vmem:[#allocation12 + $0x48] sm:$0xff]
    %v129 = vld [vmem:[#allocation12 + $0x50] sm:$0xff]
    %v130 = vld [vmem:[#allocation12 + $0x58] sm:$0xff]
    %v131 = vld [vmem:[#allocation12 + $0x60] sm:$0xff]
    %v132 = vld [vmem:[#allocation12 + $0x68] sm:$0xff]
    %v133 = vld [vmem:[#allocation12 + $0x70] sm:$0xff]
    %v134 = vld [vmem:[#allocation12 + $0x78] sm:$0xff]
    %v135 = vld [vmem:[#allocation12 + $0x80] sm:$0xff]
    %v136 = vld [vmem:[#allocation12 + $0x88] sm:$0xff]
    %v137 = vld [vmem:[#allocation12 + $0x90] sm:$0xff]
    %v138 = vld [vmem:[#allocation12 + $0x98] sm:$0xff]
    %v139 = vld [vmem:[#allocation12 + $0xa0] sm:$0xff]
    %v140 = vld [vmem:[#allocation12 + $0xa8] sm:$0xff]
    %v141 = vld [vmem:[#allocation12 + $0xb0] sm:$0xff]
    %v142 = vld [vmem:[#allocation12 + $0xb8] sm:$0xff]
    %v143 = vld [vmem:[#allocation12 + $0xc0] sm:$0xff]
    %v144 = vld [vmem:[#allocation12 + $0xc8] sm:$0xff]
    %v145 = vld [vmem:[#allocation12 + $0xd0] sm:$0xff]
    %v146 = vld [vmem:[#allocation12 + $0xd8] sm:$0xff]
    %v147 = vld [vmem:[#allocation12 + $0xe0] sm:$0xff]
    %v148 = vld [vmem:[#allocation12 + $0xe8] sm:$0xff]
    %v149 = vld [vmem:[#allocation12 + $0xf0] sm:$0xff]
    %v150 = vld [vmem:[#allocation12 + $0xf8] sm:$0xff]
    %v151 = vld [vmem:[#allocation12 + $0x100] sm:$0xff]
    %v152 = vld [vmem:[#allocation12 + $0x108] sm:$0xff]
    %v153 = vld [vmem:[#allocation12 + $0x110] sm:$0xff]
    %v154 = vld [vmem:[#allocation12 + $0x118] sm:$0xff]
    %v155 = vld [vmem:[#allocation12 + $0x120] sm:$0xff]
    %v156 = vld [vmem:[#allocation12 + $0x128] sm:$0xff]
    %v157 = vld [vmem:[#allocation12 + $0x130] sm:$0xff]
    %v158 = vld [vmem:[#allocation12 + $0x138] sm:$0xff]
    %v159 = vld [vmem:[#allocation12 + $0x140] sm:$0xff]
    %v160 = vld [vmem:[#allocation12 + $0x148] sm:$0xff]
    %v161 = vld [vmem:[#allocation12 + $0x150] sm:$0xff]
    %v162 = vld [vmem:[#allocation12 + $0x158] sm:$0xff]
    %v163 = vld [vmem:[#allocation12 + $0x160] sm:$0xff]
    %v164 = vld [vmem:[#allocation12 + $0x168] sm:$0xff]
    %v165 = vld [vmem:[#allocation12 + $0x170] sm:$0xff]
    %v166 = vld [vmem:[#allocation12 + $0x178] sm:$0xff]
    %v167 = vld [vmem:[#allocation12 + $0x180] sm:$0xff]
    %v168 = vld [vmem:[#allocation12 + $0x188] sm:$0xff]
    %v169 = vld [vmem:[#allocation12 + $0x190] sm:$0xff]
    %v170 = vld [vmem:[#allocation12 + $0x198] sm:$0xff]
    %v171 = vld [vmem:[#allocation12 + $0x1a0] sm:$0xff]
    %v172 = vld [vmem:[#allocation12 + $0x1a8] sm:$0xff]
    %v173 = vld [vmem:[#allocation12 + $0x1b0] sm:$0xff]
    %v174 = vld [vmem:[#allocation12 + $0x1b8] sm:$0xff]
    %v175 = vld [vmem:[#allocation12 + $0x1c0] sm:$0xff]
    %v176 = vld [vmem:[#allocation12 + $0x1c8] sm:$0xff]
    %v177 = vld [vmem:[#allocation12 + $0x1d0] sm:$0xff]
    %v178 = vld [vmem:[#allocation12 + $0x1d8] sm:$0xff]
    %v179 = vld [vmem:[#allocation12 + $0x1e0] sm:$0xff]
    %v180 = vld [vmem:[#allocation12 + $0x1e8] sm:$0xff]
    %v181 = vld [vmem:[#allocation12 + $0x1f0] sm:$0xff]
    %v182 = vld [vmem:[#allocation12 + $0x1f8] sm:$0xff]
    %v183 = vld [vmem:[#allocation12 + $0x200] sm:$0xff]
    %v184 = vld [vmem:[#allocation12 + $0x208] sm:$0xff]
    %v185 = vld [vmem:[#allocation12 + $0x210] sm:$0xff]
    %v186 = vld [vmem:[#allocation12 + $0x218] sm:$0xff]
    %v187 = vld [vmem:[#allocation12 + $0x220] sm:$0xff]
    %v188 = vld [vmem:[#allocation12 + $0x228] sm:$0xff]
    %v189 = vld [vmem:[#allocation12 + $0x230] sm:$0xff]
    %v190 = vld [vmem:[#allocation12 + $0x238] sm:$0xff]
    %v191 = vld [vmem:[#allocation12 + $0x240] sm:$0xff]
    %v192 = vld [vmem:[#allocation12 + $0x248] sm:$0xff]
    %v193 = vld [vmem:[#allocation12 + $0x250] sm:$0xff]
    %v194 = vld [vmem:[#allocation12 + $0x258] sm:$0xff]
    %v195 = vld [vmem:[#allocation12 + $0x260] sm:$0xff]
    %v196 = vld [vmem:[#allocation12 + $0x268] sm:$0xff]
    %v197 = vld [vmem:[#allocation12 + $0x270] sm:$0xff]
    %v198 = vld [vmem:[#allocation12 + $0x278] sm:$0xff]
    %v199 = vld [vmem:[#allocation12 + $0x280] sm:$0xff]
    %v200 = vld [vmem:[#allocation12 + $0x288] sm:$0xff]
    %v201 = vld [vmem:[#allocation12 + $0x290] sm:$0xff]
    %v202 = vld [vmem:[#allocation12 + $0x298] sm:$0xff]
    %v203 = vld [vmem:[#allocation12 + $0x2a0] sm:$0xff]
    %v204 = vld [vmem:[#allocation12 + $0x2a8] sm:$0xff]
    %v205 = vld [vmem:[#allocation12 + $0x2b0] sm:$0xff]
    %v206 = vld [vmem:[#allocation12 + $0x2b8] sm:$0xff]
    %v207 = vld [vmem:[#allocation12 + $0x2c0] sm:$0xff]
    %v208 = vld [vmem:[#allocation12 + $0x2c8] sm:$0xff]
    %v209 = vld [vmem:[#allocation12 + $0x2d0] sm:$0xff]
    %v210 = vld [vmem:[#allocation12 + $0x2d8] sm:$0xff]
    %v211 = vld [vmem:[#allocation12 + $0x2e0] sm:$0xff]
    %v212 = vld [vmem:[#allocation12 + $0x2e8] sm:$0xff]
    %v213 = vld [vmem:[#allocation12 + $0x2f0] sm:$0xff]
    %v214 = vld [vmem:[#allocation12 + $0x2f8] sm:$0xff]
    %v215 = vld [vmem:[#allocation12 + $0x300] sm:$0xff]
    %v216 = vld [vmem:[#allocation12 + $0x308] sm:$0xff]
    %v217 = vld [vmem:[#allocation12 + $0x310] sm:$0xff]
    %v218 = vld [vmem:[#allocation12 + $0x318] sm:$0xff]
    %v219 = vld [vmem:[#allocation12 + $0x320] sm:$0xff]
    %v220 = vld [vmem:[#allocation12 + $0x328] sm:$0xff]
    %v221 = vld [vmem:[#allocation12 + $0x330] sm:$0xff]
    %v222 = vld [vmem:[#allocation12 + $0x338] sm:$0xff]
    %v223 = vld [vmem:[#allocation12 + $0x340] sm:$0xff]
    %v224 = vld [vmem:[#allocation12 + $0x348] sm:$0xff]
    %v225 = vld [vmem:[#allocation12 + $0x350] sm:$0xff]
    %v226 = vld [vmem:[#allocation12 + $0x358] sm:$0xff]
    %v227 = vld [vmem:[#allocation12 + $0x360] sm:$0xff]
    %v228 = vld [vmem:[#allocation12 + $0x368] sm:$0xff]
    %v229 = vld [vmem:[#allocation12 + $0x370] sm:$0xff]
    %v230 = vld [vmem:[#allocation12 + $0x378] sm:$0xff]
    %v231 = vld [vmem:[#allocation12 + $0x380] sm:$0xff]
    %v232 = vld [vmem:[#allocation12 + $0x388] sm:$0xff]
    %v233 = vld [vmem:[#allocation12 + $0x390] sm:$0xff]
    %v234 = vld [vmem:[#allocation12 + $0x398] sm:$0xff]
    %v235 = vld [vmem:[#allocation12 + $0x3a0] sm:$0xff]
    %v236 = vld [vmem:[#allocation12 + $0x3a8] sm:$0xff]
    %v237 = vld [vmem:[#allocation12 + $0x3b0] sm:$0xff]
    %v238 = vld [vmem:[#allocation12 + $0x3b8] sm:$0xff]
    %v239 = vld [vmem:[#allocation12 + $0x3c0] sm:$0xff]
    %v240 = vld [vmem:[#allocation12 + $0x3c8] sm:$0xff]
    %v241 = vld [vmem:[#allocation12 + $0x3d0] sm:$0xff]
    %v242 = vld [vmem:[#allocation12 + $0x3d8] sm:$0xff]
    %v243 = vld [vmem:[#allocation12 + $0x3e0] sm:$0xff]
    %v244 = vld [vmem:[#allocation12 + $0x3e8] sm:$0xff]
    %v245 = vld [vmem:[#allocation12 + $0x3f0] sm:$0xff]
    %v246 = vld [vmem:[#allocation12 + $0x3f8] sm:$0xff]
    %v263 = vunpack.c.l.b16 %v103
    %v264 = vunpack.c.h.b16 %v103
    %v265 = vunpack.c.l.b16 %v104
    %v266 = vunpack.c.h.b16 %v104
    %v267 = vunpack.c.l.b16 %v105
    %v268 = vunpack.c.h.b16 %v105
    %v269 = vunpack.c.l.b16 %v106
    %v270 = vunpack.c.h.b16 %v106
    %v271 = vunpack.c.l.b16 %v107
    %v272 = vunpack.c.h.b16 %v107
    %v273 = vunpack.c.l.b16 %v108
    %v274 = vunpack.c.h.b16 %v108
    %v275 = vunpack.c.l.b16 %v109
    %v276 = vunpack.c.h.b16 %v109
    %v277 = vunpack.c.l.b16 %v110
    %v278 = vunpack.c.h.b16 %v110
    %v279 = vunpack.c.l.b16 %v111
    %v280 = vunpack.c.h.b16 %v111
    %v281 = vunpack.c.l.b16 %v112
    %v282 = vunpack.c.h.b16 %v112
    %v283 = vunpack.c.l.b16 %v113
    %v284 = vunpack.c.h.b16 %v113
    %v285 = vunpack.c.l.b16 %v114
    %v286 = vunpack.c.h.b16 %v114
    %v287 = vunpack.c.l.b16 %v115
    %v288 = vunpack.c.h.b16 %v115
    %v289 = vunpack.c.l.b16 %v116
    %v290 = vunpack.c.h.b16 %v116
    %v291 = vunpack.c.l.b16 %v117
    %v292 = vunpack.c.h.b16 %v117
    %v293 = vunpack.c.l.b16 %v118
    %v294 = vunpack.c.h.b16 %v118
    %v295 = vpack.c.b16 %v267, %v263
    %v296 = vpack.c.b16 %v268, %v264
    %v297 = vpack.c.b16 %v269, %v265
    %v298 = vpack.c.b16 %v270, %v266
    %v299 = vpack.c.b16 %v275, %v271
    %v300 = vpack.c.b16 %v276, %v272
    %v301 = vpack.c.b16 %v277, %v273
    %v302 = vpack.c.b16 %v278, %v274
    %v303 = vpack.c.b16 %v283, %v279
    %v304 = vpack.c.b16 %v284, %v280
    %v305 = vpack.c.b16 %v285, %v281
    %v306 = vpack.c.b16 %v286, %v282
    %v307 = vpack.c.b16 %v291, %v287
    %v308 = vpack.c.b16 %v292, %v288
    %v309 = vpack.c.b16 %v293, %v289
    %v310 = vpack.c.b16 %v294, %v290
    %v455 = vunpack.c.l.b16 %v119
    %v456 = vunpack.c.h.b16 %v119
    %v457 = vunpack.c.l.b16 %v120
    %v458 = vunpack.c.h.b16 %v120
    %v459 = vunpack.c.l.b16 %v121
    %v460 = vunpack.c.h.b16 %v121
    %v461 = vunpack.c.l.b16 %v122
    %v462 = vunpack.c.h.b16 %v122
    %v463 = vunpack.c.l.b16 %v123
    %v464 = vunpack.c.h.b16 %v123
    %v465 = vunpack.c.l.b16 %v124
    %v466 = vunpack.c.h.b16 %v124
    %v467 = vunpack.c.l.b16 %v125
    %v468 = vunpack.c.h.b16 %v125
    %v469 = vunpack.c.l.b16 %v126
    %v470 = vunpack.c.h.b16 %v126
    %v471 = vunpack.c.l.b16 %v127
    %v472 = vunpack.c.h.b16 %v127
    %v473 = vunpack.c.l.b16 %v128
    %v474 = vunpack.c.h.b16 %v128
    %v475 = vunpack.c.l.b16 %v129
    %v476 = vunpack.c.h.b16 %v129
    %v477 = vunpack.c.l.b16 %v130
    %v478 = vunpack.c.h.b16 %v130
    %v479 = vunpack.c.l.b16 %v131
    %v480 = vunpack.c.h.b16 %v131
    %v481 = vunpack.c.l.b16 %v132
    %v482 = vunpack.c.h.b16 %v132
    %v483 = vunpack.c.l.b16 %v133
    %v484 = vunpack.c.h.b16 %v133
    %v485 = vunpack.c.l.b16 %v134
    %v486 = vunpack.c.h.b16 %v134
    %v487 = vunpack.c.l.b16 %v135
    %v488 = vunpack.c.h.b16 %v135
    %v489 = vunpack.c.l.b16 %v136
    %v490 = vunpack.c.h.b16 %v136
    %v491 = vunpack.c.l.b16 %v137
    %v492 = vunpack.c.h.b16 %v137
    %v493 = vunpack.c.l.b16 %v138
    %v494 = vunpack.c.h.b16 %v138
    %v495 = vunpack.c.l.b16 %v139
    %v496 = vunpack.c.h.b16 %v139
    %v497 = vunpack.c.l.b16 %v140
    %v498 = vunpack.c.h.b16 %v140
    %v499 = vunpack.c.l.b16 %v141
    %v500 = vunpack.c.h.b16 %v141
    %v501 = vunpack.c.l.b16 %v142
    %v502 = vunpack.c.h.b16 %v142
    %v503 = vunpack.c.l.b16 %v143
    %v504 = vunpack.c.h.b16 %v143
    %v505 = vunpack.c.l.b16 %v144
    %v506 = vunpack.c.h.b16 %v144
    %v507 = vunpack.c.l.b16 %v145
    %v508 = vunpack.c.h.b16 %v145
    %v509 = vunpack.c.l.b16 %v146
    %v510 = vunpack.c.h.b16 %v146
    %v511 = vunpack.c.l.b16 %v147
    %v512 = vunpack.c.h.b16 %v147
    %v513 = vunpack.c.l.b16 %v148
    %v514 = vunpack.c.h.b16 %v148
    %v515 = vunpack.c.l.b16 %v149
    %v516 = vunpack.c.h.b16 %v149
    %v517 = vunpack.c.l.b16 %v150
    %v518 = vunpack.c.h.b16 %v150
    %v519 = vunpack.c.l.b16 %v151
    %v520 = vunpack.c.h.b16 %v151
    %v521 = vunpack.c.l.b16 %v152
    %v522 = vunpack.c.h.b16 %v152
    %v523 = vunpack.c.l.b16 %v153
    %v524 = vunpack.c.h.b16 %v153
    %v525 = vunpack.c.l.b16 %v154
    %v526 = vunpack.c.h.b16 %v154
    %v527 = vunpack.c.l.b16 %v155
    %v528 = vunpack.c.h.b16 %v155
    %v529 = vunpack.c.l.b16 %v156
    %v530 = vunpack.c.h.b16 %v156
    %v531 = vunpack.c.l.b16 %v157
    %v532 = vunpack.c.h.b16 %v157
    %v533 = vunpack.c.l.b16 %v158
    %v534 = vunpack.c.h.b16 %v158
    %v535 = vunpack.c.l.b16 %v159
    %v536 = vunpack.c.h.b16 %v159
    %v537 = vunpack.c.l.b16 %v160
    %v538 = vunpack.c.h.b16 %v160
    %v539 = vunpack.c.l.b16 %v161
    %v540 = vunpack.c.h.b16 %v161
    %v541 = vunpack.c.l.b16 %v162
    %v542 = vunpack.c.h.b16 %v162
    %v543 = vunpack.c.l.b16 %v163
    %v544 = vunpack.c.h.b16 %v163
    %v545 = vunpack.c.l.b16 %v164
    %v546 = vunpack.c.h.b16 %v164
    %v547 = vunpack.c.l.b16 %v165
    %v548 = vunpack.c.h.b16 %v165
    %v549 = vunpack.c.l.b16 %v166
    %v550 = vunpack.c.h.b16 %v166
    %v551 = vunpack.c.l.b16 %v167
    %v552 = vunpack.c.h.b16 %v167
    %v553 = vunpack.c.l.b16 %v168
    %v554 = vunpack.c.h.b16 %v168
    %v555 = vunpack.c.l.b16 %v169
    %v556 = vunpack.c.h.b16 %v169
    %v557 = vunpack.c.l.b16 %v170
    %v558 = vunpack.c.h.b16 %v170
    %v559 = vunpack.c.l.b16 %v171
    %v560 = vunpack.c.h.b16 %v171
    %v561 = vunpack.c.l.b16 %v172
    %v562 = vunpack.c.h.b16 %v172
    %v563 = vunpack.c.l.b16 %v173
    %v564 = vunpack.c.h.b16 %v173
    %v565 = vunpack.c.l.b16 %v174
    %v566 = vunpack.c.h.b16 %v174
    %v567 = vunpack.c.l.b16 %v175
    %v568 = vunpack.c.h.b16 %v175
    %v569 = vunpack.c.l.b16 %v176
    %v570 = vunpack.c.h.b16 %v176
    %v571 = vunpack.c.l.b16 %v177
    %v572 = vunpack.c.h.b16 %v177
    %v573 = vunpack.c.l.b16 %v178
    %v574 = vunpack.c.h.b16 %v178
    %v575 = vunpack.c.l.b16 %v179
    %v576 = vunpack.c.h.b16 %v179
    %v577 = vunpack.c.l.b16 %v180
    %v578 = vunpack.c.h.b16 %v180
    %v579 = vunpack.c.l.b16 %v181
    %v580 = vunpack.c.h.b16 %v181
    %v581 = vunpack.c.l.b16 %v182
    %v582 = vunpack.c.h.b16 %v182
    %v583 = vunpack.c.l.b16 %v183
    %v584 = vunpack.c.h.b16 %v183
    %v585 = vunpack.c.l.b16 %v184
    %v586 = vunpack.c.h.b16 %v184
    %v587 = vunpack.c.l.b16 %v185
    %v588 = vunpack.c.h.b16 %v185
    %v589 = vunpack.c.l.b16 %v186
    %v590 = vunpack.c.h.b16 %v186
    %v591 = vunpack.c.l.b16 %v187
    %v592 = vunpack.c.h.b16 %v187
    %v593 = vunpack.c.l.b16 %v188
    %v594 = vunpack.c.h.b16 %v188
    %v595 = vunpack.c.l.b16 %v189
    %v596 = vunpack.c.h.b16 %v189
    %v597 = vunpack.c.l.b16 %v190
    %v598 = vunpack.c.h.b16 %v190
    %v599 = vunpack.c.l.b16 %v191
    %v600 = vunpack.c.h.b16 %v191
    %v601 = vunpack.c.l.b16 %v192
    %v602 = vunpack.c.h.b16 %v192
    %v603 = vunpack.c.l.b16 %v193
    %v604 = vunpack.c.h.b16 %v193
    %v605 = vunpack.c.l.b16 %v194
    %v606 = vunpack.c.h.b16 %v194
    %v607 = vunpack.c.l.b16 %v195
    %v608 = vunpack.c.h.b16 %v195
    %v609 = vunpack.c.l.b16 %v196
    %v610 = vunpack.c.h.b16 %v196
    %v611 = vunpack.c.l.b16 %v197
    %v612 = vunpack.c.h.b16 %v197
    %v613 = vunpack.c.l.b16 %v198
    %v614 = vunpack.c.h.b16 %v198
    %v615 = vunpack.c.l.b16 %v199
    %v616 = vunpack.c.h.b16 %v199
    %v617 = vunpack.c.l.b16 %v200
    %v618 = vunpack.c.h.b16 %v200
    %v619 = vunpack.c.l.b16 %v201
    %v620 = vunpack.c.h.b16 %v201
    %v621 = vunpack.c.l.b16 %v202
    %v622 = vunpack.c.h.b16 %v202
    %v623 = vunpack.c.l.b16 %v203
    %v624 = vunpack.c.h.b16 %v203
    %v625 = vunpack.c.l.b16 %v204
    %v626 = vunpack.c.h.b16 %v204
    %v627 = vunpack.c.l.b16 %v205
    %v628 = vunpack.c.h.b16 %v205
    %v629 = vunpack.c.l.b16 %v206
    %v630 = vunpack.c.h.b16 %v206
    %v631 = vunpack.c.l.b16 %v207
    %v632 = vunpack.c.h.b16 %v207
    %v633 = vunpack.c.l.b16 %v208
    %v634 = vunpack.c.h.b16 %v208
    %v635 = vunpack.c.l.b16 %v209
    %v636 = vunpack.c.h.b16 %v209
    %v637 = vunpack.c.l.b16 %v210
    %v638 = vunpack.c.h.b16 %v210
    %v639 = vunpack.c.l.b16 %v211
    %v640 = vunpack.c.h.b16 %v211
    %v641 = vunpack.c.l.b16 %v212
    %v642 = vunpack.c.h.b16 %v212
    %v643 = vunpack.c.l.b16 %v213
    %v644 = vunpack.c.h.b16 %v213
    %v645 = vunpack.c.l.b16 %v214
    %v646 = vunpack.c.h.b16 %v214
    %v647 = vunpack.c.l.b16 %v215
    %v648 = vunpack.c.h.b16 %v215
    %v649 = vunpack.c.l.b16 %v216
    %v650 = vunpack.c.h.b16 %v216
    %v651 = vunpack.c.l.b16 %v217
    %v652 = vunpack.c.h.b16 %v217
    %v653 = vunpack.c.l.b16 %v218
    %v654 = vunpack.c.h.b16 %v218
    %v655 = vunpack.c.l.b16 %v219
    %v656 = vunpack.c.h.b16 %v219
    %v657 = vunpack.c.l.b16 %v220
    %v658 = vunpack.c.h.b16 %v220
    %v659 = vunpack.c.l.b16 %v221
    %v660 = vunpack.c.h.b16 %v221
    %v661 = vunpack.c.l.b16 %v222
    %v662 = vunpack.c.h.b16 %v222
    %v663 = vunpack.c.l.b16 %v223
    %v664 = vunpack.c.h.b16 %v223
    %v665 = vunpack.c.l.b16 %v224
    %v666 = vunpack.c.h.b16 %v224
    %v667 = vunpack.c.l.b16 %v225
    %v668 = vunpack.c.h.b16 %v225
    %v669 = vunpack.c.l.b16 %v226
    %v670 = vunpack.c.h.b16 %v226
    %v671 = vunpack.c.l.b16 %v227
    %v672 = vunpack.c.h.b16 %v227
    %v673 = vunpack.c.l.b16 %v228
    %v674 = vunpack.c.h.b16 %v228
    %v675 = vunpack.c.l.b16 %v229
    %v676 = vunpack.c.h.b16 %v229
    %v677 = vunpack.c.l.b16 %v230
    %v678 = vunpack.c.h.b16 %v230
    %v679 = vunpack.c.l.b16 %v231
    %v680 = vunpack.c.h.b16 %v231
    %v681 = vunpack.c.l.b16 %v232
    %v682 = vunpack.c.h.b16 %v232
    %v683 = vunpack.c.l.b16 %v233
    %v684 = vunpack.c.h.b16 %v233
    %v685 = vunpack.c.l.b16 %v234
    %v686 = vunpack.c.h.b16 %v234
    %v687 = vunpack.c.l.b16 %v235
    %v688 = vunpack.c.h.b16 %v235
    %v689 = vunpack.c.l.b16 %v236
    %v690 = vunpack.c.h.b16 %v236
    %v691 = vunpack.c.l.b16 %v237
    %v692 = vunpack.c.h.b16 %v237
    %v693 = vunpack.c.l.b16 %v238
    %v694 = vunpack.c.h.b16 %v238
    %v695 = vunpack.c.l.b16 %v239
    %v696 = vunpack.c.h.b16 %v239
    %v697 = vunpack.c.l.b16 %v240
    %v698 = vunpack.c.h.b16 %v240
    %v699 = vunpack.c.l.b16 %v241
    %v700 = vunpack.c.h.b16 %v241
    %v701 = vunpack.c.l.b16 %v242
    %v702 = vunpack.c.h.b16 %v242
    %v703 = vunpack.c.l.b16 %v243
    %v704 = vunpack.c.h.b16 %v243
    %v705 = vunpack.c.l.b16 %v244
    %v706 = vunpack.c.h.b16 %v244
    %v707 = vunpack.c.l.b16 %v245
    %v708 = vunpack.c.h.b16 %v245
    %v709 = vunpack.c.l.b16 %v246
    %v710 = vunpack.c.h.b16 %v246
    %v711 = vpack.c.b16 %v459, %v455
    %v712 = vpack.c.b16 %v460, %v456
    %v713 = vpack.c.b16 %v461, %v457
    %v714 = vpack.c.b16 %v462, %v458
    %v715 = vpack.c.b16 %v467, %v463
    %v716 = vpack.c.b16 %v468, %v464
    %v717 = vpack.c.b16 %v469, %v465
    %v718 = vpack.c.b16 %v470, %v466
    %v719 = vpack.c.b16 %v475, %v471
    %v720 = vpack.c.b16 %v476, %v472
    %v721 = vpack.c.b16 %v477, %v473
    %v722 = vpack.c.b16 %v478, %v474
    %v723 = vpack.c.b16 %v483, %v479
    %v724 = vpack.c.b16 %v484, %v480
    %v725 = vpack.c.b16 %v485, %v481
    %v726 = vpack.c.b16 %v486, %v482
    %v727 = vpack.c.b16 %v491, %v487
    %v728 = vpack.c.b16 %v492, %v488
    %v729 = vpack.c.b16 %v493, %v489
    %v730 = vpack.c.b16 %v494, %v490
    %v731 = vpack.c.b16 %v499, %v495
    %v732 = vpack.c.b16 %v500, %v496
    %v733 = vpack.c.b16 %v501, %v497
    %v734 = vpack.c.b16 %v502, %v498
    %v735 = vpack.c.b16 %v507, %v503
    %v736 = vpack.c.b16 %v508, %v504
    %v737 = vpack.c.b16 %v509, %v505
    %v738 = vpack.c.b16 %v510, %v506
    %v739 = vpack.c.b16 %v515, %v511
    %v740 = vpack.c.b16 %v516, %v512
    %v741 = vpack.c.b16 %v517, %v513
    %v742 = vpack.c.b16 %v518, %v514
    %v743 = vpack.c.b16 %v523, %v519
    %v744 = vpack.c.b16 %v524, %v520
    %v745 = vpack.c.b16 %v525, %v521
    %v746 = vpack.c.b16 %v526, %v522
    %v747 = vpack.c.b16 %v531, %v527
    %v748 = vpack.c.b16 %v532, %v528
    %v749 = vpack.c.b16 %v533, %v529
    %v750 = vpack.c.b16 %v534, %v530
    %v751 = vpack.c.b16 %v539, %v535
    %v752 = vpack.c.b16 %v540, %v536
    %v753 = vpack.c.b16 %v541, %v537
    %v754 = vpack.c.b16 %v542, %v538
    %v755 = vpack.c.b16 %v547, %v543
    %v756 = vpack.c.b16 %v548, %v544
    %v757 = vpack.c.b16 %v549, %v545
    %v758 = vpack.c.b16 %v550, %v546
    %v759 = vpack.c.b16 %v555, %v551
    %v760 = vpack.c.b16 %v556, %v552
    %v761 = vpack.c.b16 %v557, %v553
    %v762 = vpack.c.b16 %v558, %v554
    %v763 = vpack.c.b16 %v563, %v559
    %v764 = vpack.c.b16 %v564, %v560
    %v765 = vpack.c.b16 %v565, %v561
    %v766 = vpack.c.b16 %v566, %v562
    %v767 = vpack.c.b16 %v571, %v567
    %v768 = vpack.c.b16 %v572, %v568
    %v769 = vpack.c.b16 %v573, %v569
    %v770 = vpack.c.b16 %v574, %v570
    %v771 = vpack.c.b16 %v579, %v575
    %v772 = vpack.c.b16 %v580, %v576
    %v773 = vpack.c.b16 %v581, %v577
    %v774 = vpack.c.b16 %v582, %v578
    %v775 = vpack.c.b16 %v587, %v583
    %v776 = vpack.c.b16 %v588, %v584
    %v777 = vpack.c.b16 %v589, %v585
    %v778 = vpack.c.b16 %v590, %v586
    %v779 = vpack.c.b16 %v595, %v591
    %v780 = vpack.c.b16 %v596, %v592
    %v781 = vpack.c.b16 %v597, %v593
    %v782 = vpack.c.b16 %v598, %v594
    %v783 = vpack.c.b16 %v603, %v599
    %v784 = vpack.c.b16 %v604, %v600
    %v785 = vpack.c.b16 %v605, %v601
    %v786 = vpack.c.b16 %v606, %v602
    %v787 = vpack.c.b16 %v611, %v607
    %v788 = vpack.c.b16 %v612, %v608
    %v789 = vpack.c.b16 %v613, %v609
    %v790 = vpack.c.b16 %v614, %v610
    %v791 = vpack.c.b16 %v619, %v615
    %v792 = vpack.c.b16 %v620, %v616
    %v793 = vpack.c.b16 %v621, %v617
    %v794 = vpack.c.b16 %v622, %v618
    %v795 = vpack.c.b16 %v627, %v623
    %v796 = vpack.c.b16 %v628, %v624
    %v797 = vpack.c.b16 %v629, %v625
    %v798 = vpack.c.b16 %v630, %v626
    %v799 = vpack.c.b16 %v635, %v631
    %v800 = vpack.c.b16 %v636, %v632
    %v801 = vpack.c.b16 %v637, %v633
    %v802 = vpack.c.b16 %v638, %v634
    %v803 = vpack.c.b16 %v643, %v639
    %v804 = vpack.c.b16 %v644, %v640
    %v805 = vpack.c.b16 %v645, %v641
    %v806 = vpack.c.b16 %v646, %v642
    %v807 = vpack.c.b16 %v651, %v647
    %v808 = vpack.c.b16 %v652, %v648
    %v809 = vpack.c.b16 %v653, %v649
    %v810 = vpack.c.b16 %v654, %v650
    %v811 = vpack.c.b16 %v659, %v655
    %v812 = vpack.c.b16 %v660, %v656
    %v813 = vpack.c.b16 %v661, %v657
    %v814 = vpack.c.b16 %v662, %v658
    %v815 = vpack.c.b16 %v667, %v663
    %v816 = vpack.c.b16 %v668, %v664
    %v817 = vpack.c.b16 %v669, %v665
    %v818 = vpack.c.b16 %v670, %v666
    %v819 = vpack.c.b16 %v675, %v671
    %v820 = vpack.c.b16 %v676, %v672
    %v821 = vpack.c.b16 %v677, %v673
    %v822 = vpack.c.b16 %v678, %v674
    %v823 = vpack.c.b16 %v683, %v679
    %v824 = vpack.c.b16 %v684, %v680
    %v825 = vpack.c.b16 %v685, %v681
    %v826 = vpack.c.b16 %v686, %v682
    %v827 = vpack.c.b16 %v691, %v687
    %v828 = vpack.c.b16 %v692, %v688
    %v829 = vpack.c.b16 %v693, %v689
    %v830 = vpack.c.b16 %v694, %v690
    %v831 = vpack.c.b16 %v699, %v695
    %v832 = vpack.c.b16 %v700, %v696
    %v833 = vpack.c.b16 %v701, %v697
    %v834 = vpack.c.b16 %v702, %v698
    %v835 = vpack.c.b16 %v707, %v703
    %v836 = vpack.c.b16 %v708, %v704
    %v837 = vpack.c.b16 %v709, %v705
    %v838 = vpack.c.b16 %v710, %v706
    %967 = vmatprep.subr.bf16.mxu0 %v712
    %968 = vmatpush1.bf16.msra.mxu0 %v711
    %969 = vmatprep.subr.bf16.mxu0 %v716
    %970 = vmatpush1.bf16.msra.mxu0 %v715
    %971 = vmatprep.subr.bf16.mxu0 %v720
    %972 = vmatpush1.bf16.msra.mxu0 %v719
    %973 = vmatprep.subr.bf16.mxu0 %v724
    %974 = vmatpush1.bf16.msra.mxu0 %v723
    %975 = vmatprep.subr.bf16.mxu0 %v728
    %976 = vmatpush1.bf16.msra.mxu0 %v727
    %977 = vmatprep.subr.bf16.mxu0 %v732
    %978 = vmatpush1.bf16.msra.mxu0 %v731
    %979 = vmatprep.subr.bf16.mxu0 %v736
    %980 = vmatpush1.bf16.msra.mxu0 %v735
    %981 = vmatprep.subr.bf16.mxu0 %v740
    %982 = vmatpush1.bf16.msra.mxu0 %v739
    %983 = vmatprep.subr.bf16.mxu0 %v744
    %984 = vmatpush1.bf16.msra.mxu0 %v743
    %985 = vmatprep.subr.bf16.mxu0 %v748
    %986 = vmatpush1.bf16.msra.mxu0 %v747
    %987 = vmatprep.subr.bf16.mxu0 %v752
    %988 = vmatpush1.bf16.msra.mxu0 %v751
    %989 = vmatprep.subr.bf16.mxu0 %v756
    %990 = vmatpush1.bf16.msra.mxu0 %v755
    %991 = vmatprep.subr.bf16.mxu0 %v760
    %992 = vmatpush1.bf16.msra.mxu0 %v759
    %993 = vmatprep.subr.bf16.mxu0 %v764
    %994 = vmatpush1.bf16.msra.mxu0 %v763
    %995 = vmatprep.subr.bf16.mxu0 %v768
    %996 = vmatpush1.bf16.msra.mxu0 %v767
    %997 = vmatprep.subr.bf16.mxu0 %v772
    %998 = vmatpush1.bf16.msra.mxu0 %v771
    %999 = vmatprep.mubr.bf16.mxu0 %v296
    %1000 = vmatmul.mubr.bf16.gmra.mrb[0].mxu0 %v295
    %v1001 = vpop.f32.mrb[0].mxu0
    %v1002 = vadd.f32 0.0, %v1001
    %v1003 = vpop.f32.mrb[0].mxu0
    %v1004 = vadd.f32 0.0, %v1003
    %v1005 = vpop.f32.mrb[0].mxu0
    %v1006 = vadd.f32 0.0, %v1005
    %v1007 = vpop.f32.mrb[0].mxu0
    %v1008 = vadd.f32 0.0, %v1007
    %1009 = vmatprep.mubr.bf16.mxu0 %v300
    %1010 = vmatmul.mubr.bf16.gmra.mrb[0].mxu0 %v299
    %v1011 = vpop.f32.mrb[0].mxu0
    %v1012 = vadd.f32 0.0, %v1011
    %v1013 = vpop.f32.mrb[0].mxu0
    %v1014 = vadd.f32 0.0, %v1013
    %v1015 = vpop.f32.mrb[0].mxu0
    %v1016 = vadd.f32 0.0, %v1015
    %v1017 = vpop.f32.mrb[0].mxu0
    %v1018 = vadd.f32 0.0, %v1017
    %1019 = vmatprep.mubr.bf16.mxu0 %v304
    %1020 = vmatmul.mubr.bf16.gmra.mrb[0].mxu0 %v303
    %v1021 = vpop.f32.mrb[0].mxu0
    %v1022 = vadd.f32 0.0, %v1021
    %v1023 = vpop.f32.mrb[0].mxu0
    %v1024 = vadd.f32 0.0, %v1023
    %v1025 = vpop.f32.mrb[0].mxu0
    %v1026 = vadd.f32 0.0, %v1025
    %v1027 = vpop.f32.mrb[0].mxu0
    %v1028 = vadd.f32 0.0, %v1027
    %1029 = vmatprep.mubr.bf16.mxu0 %v308
    %1030 = vmatmul.mubr.bf16.gmra.mrb[0].mxu0 %v307
    %v1031 = vpop.f32.mrb[0].mxu0
    %v1032 = vadd.f32 0.0, %v1031
    %v1033 = vpop.f32.mrb[0].mxu0
    %v1034 = vadd.f32 0.0, %v1033
    %v1035 = vpop.f32.mrb[0].mxu0
    %v1036 = vadd.f32 0.0, %v1035
    %v1037 = vpop.f32.mrb[0].mxu0
    %v1038 = vadd.f32 0.0, %v1037
    %1039 = vdwg.mxu0
    %1040 = vmatprep.subr.bf16.mxu0 %v776
    %1041 = vmatpush1.bf16.msra.mxu0 %v775
    %1042 = vmatprep.subr.bf16.mxu0 %v780
    %1043 = vmatpush1.bf16.msra.mxu0 %v779
    %1044 = vmatprep.subr.bf16.mxu0 %v784
    %1045 = vmatpush1.bf16.msra.mxu0 %v783
    %1046 = vmatprep.subr.bf16.mxu0 %v788
    %1047 = vmatpush1.bf16.msra.mxu0 %v787
    %1048 = vmatprep.subr.bf16.mxu0 %v792
    %1049 = vmatpush1.bf16.msra.mxu0 %v791
    %1050 = vmatprep.subr.bf16.mxu0 %v796
    %1051 = vmatpush1.bf16.msra.mxu0 %v795
    %1052 = vmatprep.subr.bf16.mxu0 %v800
    %1053 = vmatpush1.bf16.msra.mxu0 %v799
    %1054 = vmatprep.subr.bf16.mxu0 %v804
    %1055 = vmatpush1.bf16.msra.mxu0 %v803
    %1056 = vmatprep.subr.bf16.mxu0 %v808
    %1057 = vmatpush1.bf16.msra.mxu0 %v807
    %1058 = vmatprep.subr.bf16.mxu0 %v812
    %1059 = vmatpush1.bf16.msra.mxu0 %v811
    %1060 = vmatprep.subr.bf16.mxu0 %v816
    %1061 = vmatpush1.bf16.msra.mxu0 %v815
    %1062 = vmatprep.subr.bf16.mxu0 %v820
    %1063 = vmatpush1.bf16.msra.mxu0 %v819
    %1064 = vmatprep.subr.bf16.mxu0 %v824
    %1065 = vmatpush1.bf16.msra.mxu0 %v823
    %1066 = vmatprep.subr.bf16.mxu0 %v828
    %1067 = vmatpush1.bf16.msra.mxu0 %v827
    %1068 = vmatprep.subr.bf16.mxu0 %v832
    %1069 = vmatpush1.bf16.msra.mxu0 %v831
    %1070 = vmatprep.subr.bf16.mxu0 %v836
    %1071 = vmatpush1.bf16.msra.mxu0 %v835
    %1072 = vmatprep.mubr.bf16.mxu0 %v298
    %1073 = vmatmul.mubr.bf16.gmra.mrb[0].mxu0 %v297
    %v1074 = vpop.f32.mrb[0].mxu0
    %v1075 = vadd.f32 %v1002, %v1074
    %v1076 = vpop.f32.mrb[0].mxu0
    %v1077 = vadd.f32 %v1004, %v1076
    %v1078 = vpop.f32.mrb[0].mxu0
    %v1079 = vadd.f32 %v1006, %v1078
    %v1080 = vpop.f32.mrb[0].mxu0
    %v1081 = vadd.f32 %v1008, %v1080
    %1082 = vmatprep.mubr.bf16.mxu0 %v302
    %1083 = vmatmul.mubr.bf16.gmra.mrb[0].mxu0 %v301
    %v1084 = vpop.f32.mrb[0].mxu0
    %v1085 = vadd.f32 %v1012, %v1084
    %v1086 = vpop.f32.mrb[0].mxu0
    %v1087 = vadd.f32 %v1014, %v1086
    %v1088 = vpop.f32.mrb[0].mxu0
    %v1089 = vadd.f32 %v1016, %v1088
    %v1090 = vpop.f32.mrb[0].mxu0
    %v1091 = vadd.f32 %v1018, %v1090
    %1092 = vmatprep.mubr.bf16.mxu0 %v306
    %1093 = vmatmul.mubr.bf16.gmra.mrb[0].mxu0 %v305
    %v1094 = vpop.f32.mrb[0].mxu0
    %v1095 = vadd.f32 %v1022, %v1094
    %v1096 = vpop.f32.mrb[0].mxu0
    %v1097 = vadd.f32 %v1024, %v1096
    %v1098 = vpop.f32.mrb[0].mxu0
    %v1099 = vadd.f32 %v1026, %v1098
    %v1100 = vpop.f32.mrb[0].mxu0
    %v1101 = vadd.f32 %v1028, %v1100
    %1102 = vmatprep.mubr.bf16.mxu0 %v310
    %1103 = vmatmul.mubr.bf16.gmra.mrb[0].mxu0 %v309
    %v1104 = vpop.f32.mrb[0].mxu0
    %v1105 = vadd.f32 %v1032, %v1104
    %v1106 = vpop.f32.mrb[0].mxu0
    %v1107 = vadd.f32 %v1034, %v1106
    %v1108 = vpop.f32.mrb[0].mxu0
    %v1109 = vadd.f32 %v1036, %v1108
    %v1110 = vpop.f32.mrb[0].mxu0
    %v1111 = vadd.f32 %v1038, %v1110
    %1112 = vdwg.mxu0
    %1113 = vmatprep.subr.bf16.mxu0 %v714
    %1114 = vmatpush1.bf16.msra.mxu0 %v713
    %1115 = vmatprep.subr.bf16.mxu0 %v718
    %1116 = vmatpush1.bf16.msra.mxu0 %v717
    %1117 = vmatprep.subr.bf16.mxu0 %v722
    %1118 = vmatpush1.bf16.msra.mxu0 %v721
    %1119 = vmatprep.subr.bf16.mxu0 %v726
    %1120 = vmatpush1.bf16.msra.mxu0 %v725
    %1121 = vmatprep.subr.bf16.mxu0 %v730
    %1122 = vmatpush1.bf16.msra.mxu0 %v729
    %1123 = vmatprep.subr.bf16.mxu0 %v734
    %1124 = vmatpush1.bf16.msra.mxu0 %v733
    %1125 = vmatprep.subr.bf16.mxu0 %v738
    %1126 = vmatpush1.bf16.msra.mxu0 %v737
    %1127 = vmatprep.subr.bf16.mxu0 %v742
    %1128 = vmatpush1.bf16.msra.mxu0 %v741
    %1129 = vmatprep.subr.bf16.mxu0 %v746
    %1130 = vmatpush1.bf16.msra.mxu0 %v745
    %1131 = vmatprep.subr.bf16.mxu0 %v750
    %1132 = vmatpush1.bf16.msra.mxu0 %v749
    %1133 = vmatprep.subr.bf16.mxu0 %v754
    %1134 = vmatpush1.bf16.msra.mxu0 %v753
    %1135 = vmatprep.subr.bf16.mxu0 %v758
    %1136 = vmatpush1.bf16.msra.mxu0 %v757
    %1137 = vmatprep.subr.bf16.mxu0 %v762
    %1138 = vmatpush1.bf16.msra.mxu0 %v761
    %1139 = vmatprep.subr.bf16.mxu0 %v766
    %1140 = vmatpush1.bf16.msra.mxu0 %v765
    %1141 = vmatprep.subr.bf16.mxu0 %v770
    %1142 = vmatpush1.bf16.msra.mxu0 %v769
    %1143 = vmatprep.subr.bf16.mxu0 %v774
    %1144 = vmatpush1.bf16.msra.mxu0 %v773
    %1145 = vmatprep.mubr.bf16.mxu0 %v296
    %1146 = vmatmul.mubr.bf16.gmra.mrb[0].mxu0 %v295
    %v1147 = vpop.f32.mrb[0].mxu0
    %v1148 = vadd.f32 0.0, %v1147
    %v1149 = vpop.f32.mrb[0].mxu0
    %v1150 = vadd.f32 0.0, %v1149
    %v1151 = vpop.f32.mrb[0].mxu0
    %v1152 = vadd.f32 0.0, %v1151
    %v1153 = vpop.f32.mrb[0].mxu0
    %v1154 = vadd.f32 0.0, %v1153
    %1155 = vmatprep.mubr.bf16.mxu0 %v300
    %1156 = vmatmul.mubr.bf16.gmra.mrb[0].mxu0 %v299
    %v1157 = vpop.f32.mrb[0].mxu0
    %v1158 = vadd.f32 0.0, %v1157
    %v1159 = vpop.f32.mrb[0].mxu0
    %v1160 = vadd.f32 0.0, %v1159
    %v1161 = vpop.f32.mrb[0].mxu0
    %v1162 = vadd.f32 0.0, %v1161
    %v1163 = vpop.f32.mrb[0].mxu0
    %v1164 = vadd.f32 0.0, %v1163
    %1165 = vmatprep.mubr.bf16.mxu0 %v304
    %1166 = vmatmul.mubr.bf16.gmra.mrb[0].mxu0 %v303
    %v1167 = vpop.f32.mrb[0].mxu0
    %v1168 = vadd.f32 0.0, %v1167
    %v1169 = vpop.f32.mrb[0].mxu0
    %v1170 = vadd.f32 0.0, %v1169
    %v1171 = vpop.f32.mrb[0].mxu0
    %v1172 = vadd.f32 0.0, %v1171
    %v1173 = vpop.f32.mrb[0].mxu0
    %v1174 = vadd.f32 0.0, %v1173
    %1175 = vmatprep.mubr.bf16.mxu0 %v308
    %1176 = vmatmul.mubr.bf16.gmra.mrb[0].mxu0 %v307
    %v1177 = vpop.f32.mrb[0].mxu0
    %v1178 = vadd.f32 0.0, %v1177
    %v1179 = vpop.f32.mrb[0].mxu0
    %v1180 = vadd.f32 0.0, %v1179
    %v1181 = vpop.f32.mrb[0].mxu0
    %v1182 = vadd.f32 0.0, %v1181
    %v1183 = vpop.f32.mrb[0].mxu0
    %v1184 = vadd.f32 0.0, %v1183
    %1185 = vdwg.mxu0
    %1186 = vmatprep.subr.bf16.mxu0 %v778
    %1187 = vmatpush1.bf16.msra.mxu0 %v777
    %1188 = vmatprep.subr.bf16.mxu0 %v782
    %1189 = vmatpush1.bf16.msra.mxu0 %v781
    %1190 = vmatprep.subr.bf16.mxu0 %v786
    %1191 = vmatpush1.bf16.msra.mxu0 %v785
    %1192 = vmatprep.subr.bf16.mxu0 %v790
    %1193 = vmatpush1.bf16.msra.mxu0 %v789
    %1194 = vmatprep.subr.bf16.mxu0 %v794
    %1195 = vmatpush1.bf16.msra.mxu0 %v793
    %1196 = vmatprep.subr.bf16.mxu0 %v798
    %1197 = vmatpush1.bf16.msra.mxu0 %v797
    %1198 = vmatprep.subr.bf16.mxu0 %v802
    %1199 = vmatpush1.bf16.msra.mxu0 %v801
    %1200 = vmatprep.subr.bf16.mxu0 %v806
    %1201 = vmatpush1.bf16.msra.mxu0 %v805
    %1202 = vmatprep.subr.bf16.mxu0 %v810
    %1203 = vmatpush1.bf16.msra.mxu0 %v809
    %1204 = vmatprep.subr.bf16.mxu0 %v814
    %1205 = vmatpush1.bf16.msra.mxu0 %v813
    %1206 = vmatprep.subr.bf16.mxu0 %v818
    %1207 = vmatpush1.bf16.msra.mxu0 %v817
    %1208 = vmatprep.subr.bf16.mxu0 %v822
    %1209 = vmatpush1.bf16.msra.mxu0 %v821
    %1210 = vmatprep.subr.bf16.mxu0 %v826
    %1211 = vmatpush1.bf16.msra.mxu0 %v825
    %1212 = vmatprep.subr.bf16.mxu0 %v830
    %1213 = vmatpush1.bf16.msra.mxu0 %v829
    %1214 = vmatprep.subr.bf16.mxu0 %v834
    %1215 = vmatpush1.bf16.msra.mxu0 %v833
    %1216 = vmatprep.subr.bf16.mxu0 %v838
    %1217 = vmatpush1.bf16.msra.mxu0 %v837
    %1218 = vmatprep.mubr.bf16.mxu0 %v298
    %1219 = vmatmul.mubr.bf16.gmra.mrb[0].mxu0 %v297
    %v1220 = vpop.f32.mrb[0].mxu0
    %v1221 = vadd.f32 %v1148, %v1220
    %v1222 = vpop.f32.mrb[0].mxu0
    %v1223 = vadd.f32 %v1150, %v1222
    %v1224 = vpop.f32.mrb[0].mxu0
    %v1225 = vadd.f32 %v1152, %v1224
    %v1226 = vpop.f32.mrb[0].mxu0
    %v1227 = vadd.f32 %v1154, %v1226
    %1228 = vmatprep.mubr.bf16.mxu0 %v302
    %1229 = vmatmul.mubr.bf16.gmra.mrb[0].mxu0 %v301
    %v1230 = vpop.f32.mrb[0].mxu0
    %v1231 = vadd.f32 %v1158, %v1230
    %v1232 = vpop.f32.mrb[0].mxu0
    %v1233 = vadd.f32 %v1160, %v1232
    %v1234 = vpop.f32.mrb[0].mxu0
    %v1235 = vadd.f32 %v1162, %v1234
    %v1236 = vpop.f32.mrb[0].mxu0
    %v1237 = vadd.f32 %v1164, %v1236
    %1238 = vmatprep.mubr.bf16.mxu0 %v306
    %1239 = vmatmul.mubr.bf16.gmra.mrb[0].mxu0 %v305
    %v1240 = vpop.f32.mrb[0].mxu0
    %v1241 = vadd.f32 %v1168, %v1240
    %v1242 = vpop.f32.mrb[0].mxu0
    %v1243 = vadd.f32 %v1170, %v1242
    %v1244 = vpop.f32.mrb[0].mxu0
    %v1245 = vadd.f32 %v1172, %v1244
    %v1246 = vpop.f32.mrb[0].mxu0
    %v1247 = vadd.f32 %v1174, %v1246
    %1248 = vmatprep.mubr.bf16.mxu0 %v310
    %1249 = vmatmul.mubr.bf16.gmra.mrb[0].mxu0 %v309
    %v1250 = vpop.f32.mrb[0].mxu0
    %v1251 = vadd.f32 %v1178, %v1250
    %v1252 = vpop.f32.mrb[0].mxu0
    %v1253 = vadd.f32 %v1180, %v1252
    %v1254 = vpop.f32.mrb[0].mxu0
    %v1255 = vadd.f32 %v1182, %v1254
    %v1256 = vpop.f32.mrb[0].mxu0
    %v1257 = vadd.f32 %v1184, %v1256
    %1258 = vdwg.mxu0
    %1259 = vst [vmem:[#allocation3] sm:$0xff] %v1075
    %1260 = vst [vmem:[#allocation3 + $0x8] sm:$0xff] %v1077
    %1261 = vst [vmem:[#allocation3 + $0x10] sm:$0xff] %v1221
    %1262 = vst [vmem:[#allocation3 + $0x18] sm:$0xff] %v1223
    %1263 = vst [vmem:[#allocation3 + $0x20] sm:$0xff] %v1079
    %1264 = vst [vmem:[#allocation3 + $0x28] sm:$0xff] %v1081
    %1265 = vst [vmem:[#allocation3 + $0x30] sm:$0xff] %v1225
    %1266 = vst [vmem:[#allocation3 + $0x38] sm:$0xff] %v1227
    %1267 = vst [vmem:[#allocation3 + $0x40] sm:$0xff] %v1085
    %1268 = vst [vmem:[#allocation3 + $0x48] sm:$0xff] %v1087
    %1269 = vst [vmem:[#allocation3 + $0x50] sm:$0xff] %v1231
    %1270 = vst [vmem:[#allocation3 + $0x58] sm:$0xff] %v1233
    %1271 = vst [vmem:[#allocation3 + $0x60] sm:$0xff] %v1089
    %1272 = vst [vmem:[#allocation3 + $0x68] sm:$0xff] %v1091
    %1273 = vst [vmem:[#allocation3 + $0x70] sm:$0xff] %v1235
    %1274 = vst [vmem:[#allocation3 + $0x78] sm:$0xff] %v1237
    %1275 = vst [vmem:[#allocation3 + $0x80] sm:$0xff] %v1095
    %1276 = vst [vmem:[#allocation3 + $0x88] sm:$0xff] %v1097
    %1277 = vst [vmem:[#allocation3 + $0x90] sm:$0xff] %v1241
    %1278 = vst [vmem:[#allocation3 + $0x98] sm:$0xff] %v1243
    %1279 = vst [vmem:[#allocation3 + $0xa0] sm:$0xff] %v1099
    %1280 = vst [vmem:[#allocation3 + $0xa8] sm:$0xff] %v1101
    %1281 = vst [vmem:[#allocation3 + $0xb0] sm:$0xff] %v1245
    %1282 = vst [vmem:[#allocation3 + $0xb8] sm:$0xff] %v1247
    %1283 = vst [vmem:[#allocation3 + $0xc0] sm:$0xff] %v1105
    %1284 = vst [vmem:[#allocation3 + $0xc8] sm:$0xff] %v1107
    %1285 = vst [vmem:[#allocation3 + $0xd0] sm:$0xff] %v1251
    %1286 = vst [vmem:[#allocation3 + $0xd8] sm:$0xff] %v1253
    %1287 = vst [vmem:[#allocation3 + $0xe0] sm:$0xff] %v1109
    %1288 = vst [vmem:[#allocation3 + $0xe8] sm:$0xff] %v1111
    %1289 = vst [vmem:[#allocation3 + $0xf0] sm:$0xff] %v1255
    %1290 = vst [vmem:[#allocation3 + $0xf8] sm:$0xff] %v1257
    %v1291 = vld [vmem:[#allocation13] sm:$0xff]
    %v1292 = vld [vmem:[#allocation13 + $0x8] sm:$0xff]
    %v1293 = vld [vmem:[#allocation13 + $0x10] sm:$0xff]
    %v1294 = vld [vmem:[#allocation13 + $0x18] sm:$0xff]
    %v1295 = vld [vmem:[#allocation13 + $0x20] sm:$0xff]
    %v1296 = vld [vmem:[#allocation13 + $0x28] sm:$0xff]
    %v1297 = vld [vmem:[#allocation13 + $0x30] sm:$0xff]
    %v1298 = vld [vmem:[#allocation13 + $0x38] sm:$0xff]
    %v1299 = vld [vmem:[#allocation13 + $0x40] sm:$0xff]
    %v1300 = vld [vmem:[#allocation13 + $0x48] sm:$0xff]
    %v1301 = vld [vmem:[#allocation13 + $0x50] sm:$0xff]
    %v1302 = vld [vmem:[#allocation13 + $0x58] sm:$0xff]
    %v1303 = vld [vmem:[#allocation13 + $0x60] sm:$0xff]
    %v1304 = vld [vmem:[#allocation13 + $0x68] sm:$0xff]
    %v1305 = vld [vmem:[#allocation13 + $0x70] sm:$0xff]
    %v1306 = vld [vmem:[#allocation13 + $0x78] sm:$0xff]
    %v1307 = vld [vmem:[#allocation13 + $0x80] sm:$0xff]
    %v1308 = vld [vmem:[#allocation13 + $0x88] sm:$0xff]
    %v1309 = vld [vmem:[#allocation13 + $0x90] sm:$0xff]
    %v1310 = vld [vmem:[#allocation13 + $0x98] sm:$0xff]
    %v1311 = vld [vmem:[#allocation13 + $0xa0] sm:$0xff]
    %v1312 = vld [vmem:[#allocation13 + $0xa8] sm:$0xff]
    %v1313 = vld [vmem:[#allocation13 + $0xb0] sm:$0xff]
    %v1314 = vld [vmem:[#allocation13 + $0xb8] sm:$0xff]
    %v1315 = vld [vmem:[#allocation13 + $0xc0] sm:$0xff]
    %v1316 = vld [vmem:[#allocation13 + $0xc8] sm:$0xff]
    %v1317 = vld [vmem:[#allocation13 + $0xd0] sm:$0xff]
    %v1318 = vld [vmem:[#allocation13 + $0xd8] sm:$0xff]
    %v1319 = vld [vmem:[#allocation13 + $0xe0] sm:$0xff]
    %v1320 = vld [vmem:[#allocation13 + $0xe8] sm:$0xff]
    %v1321 = vld [vmem:[#allocation13 + $0xf0] sm:$0xff]
    %v1322 = vld [vmem:[#allocation13 + $0xf8] sm:$0xff]
    %v1323 = vld [vmem:[#allocation13 + $0x100] sm:$0xff]
    %v1324 = vld [vmem:[#allocation13 + $0x108] sm:$0xff]
    %v1325 = vld [vmem:[#allocation13 + $0x110] sm:$0xff]
    %v1326 = vld [vmem:[#allocation13 + $0x118] sm:$0xff]
    %v1327 = vld [vmem:[#allocation13 + $0x120] sm:$0xff]
    %v1328 = vld [vmem:[#allocation13 + $0x128] sm:$0xff]
    %v1329 = vld [vmem:[#allocation13 + $0x130] sm:$0xff]
    %v1330 = vld [vmem:[#allocation13 + $0x138] sm:$0xff]
    %v1331 = vld [vmem:[#allocation13 + $0x140] sm:$0xff]
    %v1332 = vld [vmem:[#allocation13 + $0x148] sm:$0xff]
    %v1333 = vld [vmem:[#allocation13 + $0x150] sm:$0xff]
    %v1334 = vld [vmem:[#allocation13 + $0x158] sm:$0xff]
    %v1335 = vld [vmem:[#allocation13 + $0x160] sm:$0xff]
    %v1336 = vld [vmem:[#allocation13 + $0x168] sm:$0xff]
    %v1337 = vld [vmem:[#allocation13 + $0x170] sm:$0xff]
    %v1338 = vld [vmem:[#allocation13 + $0x178] sm:$0xff]
    %v1339 = vld [vmem:[#allocation13 + $0x180] sm:$0xff]
    %v1340 = vld [vmem:[#allocation13 + $0x188] sm:$0xff]
    %v1341 = vld [vmem:[#allocation13 + $0x190] sm:$0xff]
    %v1342 = vld [vmem:[#allocation13 + $0x198] sm:$0xff]
    %v1343 = vld [vmem:[#allocation13 + $0x1a0] sm:$0xff]
    %v1344 = vld [vmem:[#allocation13 + $0x1a8] sm:$0xff]
    %v1345 = vld [vmem:[#allocation13 + $0x1b0] sm:$0xff]
    %v1346 = vld [vmem:[#allocation13 + $0x1b8] sm:$0xff]
    %v1347 = vld [vmem:[#allocation13 + $0x1c0] sm:$0xff]
    %v1348 = vld [vmem:[#allocation13 + $0x1c8] sm:$0xff]
    %v1349 = vld [vmem:[#allocation13 + $0x1d0] sm:$0xff]
    %v1350 = vld [vmem:[#allocation13 + $0x1d8] sm:$0xff]
    %v1351 = vld [vmem:[#allocation13 + $0x1e0] sm:$0xff]
    %v1352 = vld [vmem:[#allocation13 + $0x1e8] sm:$0xff]
    %v1353 = vld [vmem:[#allocation13 + $0x1f0] sm:$0xff]
    %v1354 = vld [vmem:[#allocation13 + $0x1f8] sm:$0xff]
    %v1355 = vld [vmem:[#allocation15] sm:$0xff]
    %v1356 = vld [vmem:[#allocation15 + $0x8] sm:$0xff]
    %v1357 = vld [vmem:[#allocation15 + $0x10] sm:$0xff]
    %v1358 = vld [vmem:[#allocation15 + $0x18] sm:$0xff]
    %1359 = vst [vmem:[#allocation5] sm:$0xff] 0.0
    %1360 = vst [vmem:[#allocation6] sm:$0xff] 0.0
    %v1361 = vld [vmem:[#allocation5] sm:$0xff]
    %v1362 = vld [vmem:[#allocation6] sm:$0xff]
    %v1363 = vmul.f32 %v1361, %v97
    %v1364 = vmul.f32 %v1361, %v102
    %v1365 = vpack.c.bf16 %v1363, %v1363
    %v1366 = vpack.c.bf16 %v1364, %v1364
    %v1367 = vld [vmem:[#allocation3] sm:$0xff]
    %v1368 = vld [vmem:[#allocation3 + $0x8] sm:$0xff]
    %v1369 = vld [vmem:[#allocation3 + $0x10] sm:$0xff]
    %v1370 = vld [vmem:[#allocation3 + $0x18] sm:$0xff]
    %v1371 = vadd.f32 %v1367, %v1355
    %v1372 = vadd.f32 %v1368, %v1356
    %v1373 = vadd.f32 %v1369, %v1357
    %v1374 = vadd.f32 %v1370, %v1358
    %v1439 = vunpack.c.l.b16 %v1291
    %v1440 = vunpack.c.h.b16 %v1291
    %v1441 = vunpack.c.l.b16 %v1292
    %v1442 = vunpack.c.h.b16 %v1292
    %v1443 = vunpack.c.l.b16 %v1293
    %v1444 = vunpack.c.h.b16 %v1293
    %v1445 = vunpack.c.l.b16 %v1294
    %v1446 = vunpack.c.h.b16 %v1294
    %v1447 = vunpack.c.l.b16 %v1295
    %v1448 = vunpack.c.h.b16 %v1295
    %v1449 = vunpack.c.l.b16 %v1296
    %v1450 = vunpack.c.h.b16 %v1296
    %v1451 = vunpack.c.l.b16 %v1297
    %v1452 = vunpack.c.h.b16 %v1297
    %v1453 = vunpack.c.l.b16 %v1298
    %v1454 = vunpack.c.h.b16 %v1298
    %v1455 = vunpack.c.l.b16 %v1299
    %v1456 = vunpack.c.h.b16 %v1299
    %v1457 = vunpack.c.l.b16 %v1300
    %v1458 = vunpack.c.h.b16 %v1300
    %v1459 = vunpack.c.l.b16 %v1301
    %v1460 = vunpack.c.h.b16 %v1301
    %v1461 = vunpack.c.l.b16 %v1302
    %v1462 = vunpack.c.h.b16 %v1302
    %v1463 = vunpack.c.l.b16 %v1303
    %v1464 = vunpack.c.h.b16 %v1303
    %v1465 = vunpack.c.l.b16 %v1304
    %v1466 = vunpack.c.h.b16 %v1304
    %v1467 = vunpack.c.l.b16 %v1305
    %v1468 = vunpack.c.h.b16 %v1305
    %v1469 = vunpack.c.l.b16 %v1306
    %v1470 = vunpack.c.h.b16 %v1306
    %v1471 = vunpack.c.l.b16 %v1307
    %v1472 = vunpack.c.h.b16 %v1307
    %v1473 = vunpack.c.l.b16 %v1308
    %v1474 = vunpack.c.h.b16 %v1308
    %v1475 = vunpack.c.l.b16 %v1309
    %v1476 = vunpack.c.h.b16 %v1309
    %v1477 = vunpack.c.l.b16 %v1310
    %v1478 = vunpack.c.h.b16 %v1310
    %v1479 = vunpack.c.l.b16 %v1311
    %v1480 = vunpack.c.h.b16 %v1311
    %v1481 = vunpack.c.l.b16 %v1312
    %v1482 = vunpack.c.h.b16 %v1312
    %v1483 = vunpack.c.l.b16 %v1313
    %v1484 = vunpack.c.h.b16 %v1313
    %v1485 = vunpack.c.l.b16 %v1314
    %v1486 = vunpack.c.h.b16 %v1314
    %v1487 = vunpack.c.l.b16 %v1315
    %v1488 = vunpack.c.h.b16 %v1315
    %v1489 = vunpack.c.l.b16 %v1316
    %v1490 = vunpack.c.h.b16 %v1316
    %v1491 = vunpack.c.l.b16 %v1317
    %v1492 = vunpack.c.h.b16 %v1317
    %v1493 = vunpack.c.l.b16 %v1318
    %v1494 = vunpack.c.h.b16 %v1318
    %v1495 = vunpack.c.l.b16 %v1319
    %v1496 = vunpack.c.h.b16 %v1319
    %v1497 = vunpack.c.l.b16 %v1320
    %v1498 = vunpack.c.h.b16 %v1320
    %v1499 = vunpack.c.l.b16 %v1321
    %v1500 = vunpack.c.h.b16 %v1321
    %v1501 = vunpack.c.l.b16 %v1322
    %v1502 = vunpack.c.h.b16 %v1322
    %v1503 = vunpack.c.l.b16 %v1323
    %v1504 = vunpack.c.h.b16 %v1323
    %v1505 = vunpack.c.l.b16 %v1324
    %v1506 = vunpack.c.h.b16 %v1324
    %v1507 = vunpack.c.l.b16 %v1325
    %v1508 = vunpack.c.h.b16 %v1325
    %v1509 = vunpack.c.l.b16 %v1326
    %v1510 = vunpack.c.h.b16 %v1326
    %v1511 = vunpack.c.l.b16 %v1327
    %v1512 = vunpack.c.h.b16 %v1327
    %v1513 = vunpack.c.l.b16 %v1328
    %v1514 = vunpack.c.h.b16 %v1328
    %v1515 = vunpack.c.l.b16 %v1329
    %v1516 = vunpack.c.h.b16 %v1329
    %v1517 = vunpack.c.l.b16 %v1330
    %v1518 = vunpack.c.h.b16 %v1330
    %v1519 = vunpack.c.l.b16 %v1331
    %v1520 = vunpack.c.h.b16 %v1331
    %v1521 = vunpack.c.l.b16 %v1332
    %v1522 = vunpack.c.h.b16 %v1332
    %v1523 = vunpack.c.l.b16 %v1333
    %v1524 = vunpack.c.h.b16 %v1333
    %v1525 = vunpack.c.l.b16 %v1334
    %v1526 = vunpack.c.h.b16 %v1334
    %v1527 = vunpack.c.l.b16 %v1335
    %v1528 = vunpack.c.h.b16 %v1335
    %v1529 = vunpack.c.l.b16 %v1336
    %v1530 = vunpack.c.h.b16 %v1336
    %v1531 = vunpack.c.l.b16 %v1337
    %v1532 = vunpack.c.h.b16 %v1337
    %v1533 = vunpack.c.l.b16 %v1338
    %v1534 = vunpack.c.h.b16 %v1338
    %v1535 = vunpack.c.l.b16 %v1339
    %v1536 = vunpack.c.h.b16 %v1339
    %v1537 = vunpack.c.l.b16 %v1340
    %v1538 = vunpack.c.h.b16 %v1340
    %v1539 = vunpack.c.l.b16 %v1341
    %v1540 = vunpack.c.h.b16 %v1341
    %v1541 = vunpack.c.l.b16 %v1342
    %v1542 = vunpack.c.h.b16 %v1342
    %v1543 = vunpack.c.l.b16 %v1343
    %v1544 = vunpack.c.h.b16 %v1343
    %v1545 = vunpack.c.l.b16 %v1344
    %v1546 = vunpack.c.h.b16 %v1344
    %v1547 = vunpack.c.l.b16 %v1345
    %v1548 = vunpack.c.h.b16 %v1345
    %v1549 = vunpack.c.l.b16 %v1346
    %v1550 = vunpack.c.h.b16 %v1346
    %v1551 = vunpack.c.l.b16 %v1347
    %v1552 = vunpack.c.h.b16 %v1347
    %v1553 = vunpack.c.l.b16 %v1348
    %v1554 = vunpack.c.h.b16 %v1348
    %v1555 = vunpack.c.l.b16 %v1349
    %v1556 = vunpack.c.h.b16 %v1349
    %v1557 = vunpack.c.l.b16 %v1350
    %v1558 = vunpack.c.h.b16 %v1350
    %v1559 = vunpack.c.l.b16 %v1351
    %v1560 = vunpack.c.h.b16 %v1351
    %v1561 = vunpack.c.l.b16 %v1352
    %v1562 = vunpack.c.h.b16 %v1352
    %v1563 = vunpack.c.l.b16 %v1353
    %v1564 = vunpack.c.h.b16 %v1353
    %v1565 = vunpack.c.l.b16 %v1354
    %v1566 = vunpack.c.h.b16 %v1354
    %v1567 = vpack.c.b16 %v1443, %v1439
    %v1568 = vpack.c.b16 %v1444, %v1440
    %v1569 = vpack.c.b16 %v1445, %v1441
    %v1570 = vpack.c.b16 %v1446, %v1442
    %v1571 = vpack.c.b16 %v1451, %v1447
    %v1572 = vpack.c.b16 %v1452, %v1448
    %v1573 = vpack.c.b16 %v1453, %v1449
    %v1574 = vpack.c.b16 %v1454, %v1450
    %v1575 = vpack.c.b16 %v1459, %v1455
    %v1576 = vpack.c.b16 %v1460, %v1456
    %v1577 = vpack.c.b16 %v1461, %v1457
    %v1578 = vpack.c.b16 %v1462, %v1458
    %v1579 = vpack.c.b16 %v1467, %v1463
    %v1580 = vpack.c.b16 %v1468, %v1464
    %v1581 = vpack.c.b16 %v1469, %v1465
    %v1582 = vpack.c.b16 %v1470, %v1466
    %v1583 = vpack.c.b16 %v1475, %v1471
    %v1584 = vpack.c.b16 %v1476, %v1472
    %v1585 = vpack.c.b16 %v1477, %v1473
    %v1586 = vpack.c.b16 %v1478, %v1474
    %v1587 = vpack.c.b16 %v1483, %v1479
    %v1588 = vpack.c.b16 %v1484, %v1480
    %v1589 = vpack.c.b16 %v1485, %v1481
    %v1590 = vpack.c.b16 %v1486, %v1482
    %v1591 = vpack.c.b16 %v1491, %v1487
    %v1592 = vpack.c.b16 %v1492, %v1488
    %v1593 = vpack.c.b16 %v1493, %v1489
    %v1594 = vpack.c.b16 %v1494, %v1490
    %v1595 = vpack.c.b16 %v1499, %v1495
    %v1596 = vpack.c.b16 %v1500, %v1496
    %v1597 = vpack.c.b16 %v1501, %v1497
    %v1598 = vpack.c.b16 %v1502, %v1498
    %v1599 = vpack.c.b16 %v1507, %v1503
    %v1600 = vpack.c.b16 %v1508, %v1504
    %v1601 = vpack.c.b16 %v1509, %v1505
    %v1602 = vpack.c.b16 %v1510, %v1506
    %v1603 = vpack.c.b16 %v1515, %v1511
    %v1604 = vpack.c.b16 %v1516, %v1512
    %v1605 = vpack.c.b16 %v1517, %v1513
    %v1606 = vpack.c.b16 %v1518, %v1514
    %v1607 = vpack.c.b16 %v1523, %v1519
    %v1608 = vpack.c.b16 %v1524, %v1520
    %v1609 = vpack.c.b16 %v1525, %v1521
    %v1610 = vpack.c.b16 %v1526, %v1522
    %v1611 = vpack.c.b16 %v1531, %v1527
    %v1612 = vpack.c.b16 %v1532, %v1528
    %v1613 = vpack.c.b16 %v1533, %v1529
    %v1614 = vpack.c.b16 %v1534, %v1530
    %v1615 = vpack.c.b16 %v1539, %v1535
    %v1616 = vpack.c.b16 %v1540, %v1536
    %v1617 = vpack.c.b16 %v1541, %v1537
    %v1618 = vpack.c.b16 %v1542, %v1538
    %v1619 = vpack.c.b16 %v1547, %v1543
    %v1620 = vpack.c.b16 %v1548, %v1544
    %v1621 = vpack.c.b16 %v1549, %v1545
    %v1622 = vpack.c.b16 %v1550, %v1546
    %v1623 = vpack.c.b16 %v1555, %v1551
    %v1624 = vpack.c.b16 %v1556, %v1552
    %v1625 = vpack.c.b16 %v1557, %v1553
    %v1626 = vpack.c.b16 %v1558, %v1554
    %v1627 = vpack.c.b16 %v1563, %v1559
    %v1628 = vpack.c.b16 %v1564, %v1560
    %v1629 = vpack.c.b16 %v1565, %v1561
    %v1630 = vpack.c.b16 %v1566, %v1562
    %1695 = vmatprep.subr.bf16.mxu0 %v1568
    %1696 = vmatpush1.bf16.msra.mxu0 %v1567
    %1697 = vmatprep.subr.bf16.mxu0 %v1572
    %1698 = vmatpush1.bf16.msra.mxu0 %v1571
    %1699 = vmatprep.subr.bf16.mxu0 %v1576
    %1700 = vmatpush1.bf16.msra.mxu0 %v1575
    %1701 = vmatprep.subr.bf16.mxu0 %v1580
    %1702 = vmatpush1.bf16.msra.mxu0 %v1579
    %1703 = vmatprep.subr.bf16.mxu0 %v1584
    %1704 = vmatpush1.bf16.msra.mxu0 %v1583
    %1705 = vmatprep.subr.bf16.mxu0 %v1588
    %1706 = vmatpush1.bf16.msra.mxu0 %v1587
    %1707 = vmatprep.subr.bf16.mxu0 %v1592
    %1708 = vmatpush1.bf16.msra.mxu0 %v1591
    %1709 = vmatprep.subr.bf16.mxu0 %v1596
    %1710 = vmatpush1.bf16.msra.mxu0 %v1595
    %1711 = vmatprep.subr.bf16.mxu0 %v1600
    %1712 = vmatpush1.bf16.msra.mxu0 %v1599
    %1713 = vmatprep.subr.bf16.mxu0 %v1604
    %1714 = vmatpush1.bf16.msra.mxu0 %v1603
    %1715 = vmatprep.subr.bf16.mxu0 %v1608
    %1716 = vmatpush1.bf16.msra.mxu0 %v1607
    %1717 = vmatprep.subr.bf16.mxu0 %v1612
    %1718 = vmatpush1.bf16.msra.mxu0 %v1611
    %1719 = vmatprep.subr.bf16.mxu0 %v1616
    %1720 = vmatpush1.bf16.msra.mxu0 %v1615
    %1721 = vmatprep.subr.bf16.mxu0 %v1620
    %1722 = vmatpush1.bf16.msra.mxu0 %v1619
    %1723 = vmatprep.subr.bf16.mxu0 %v1624
    %1724 = vmatpush1.bf16.msra.mxu0 %v1623
    %1725 = vmatprep.subr.bf16.mxu0 %v1628
    %1726 = vmatpush1.bf16.msra.mxu0 %v1627
    %1727 = vmatprep.mubr.bf16.mxu0 %v1366
    %1728 = vmatmul.mubr.bf16.gmra.mrb[0].mxu0 %v1365
    %v1729 = vpop.f32.mrb[0].mxu0
    %v1730 = vadd.f32 0.0, %v1729
    %v1731 = vpop.f32.mrb[0].mxu0
    %v1732 = vadd.f32 0.0, %v1731
    %v1733 = vpop.f32.mrb[0].mxu0
    %v1734 = vpop.f32.mrb[0].mxu0
    %1735 = vdwg.mxu0
    %1736 = vmatprep.subr.bf16.mxu0 %v1570
    %1737 = vmatpush1.bf16.msra.mxu0 %v1569
    %1738 = vmatprep.subr.bf16.mxu0 %v1574
    %1739 = vmatpush1.bf16.msra.mxu0 %v1573
    %1740 = vmatprep.subr.bf16.mxu0 %v1578
    %1741 = vmatpush1.bf16.msra.mxu0 %v1577
    %1742 = vmatprep.subr.bf16.mxu0 %v1582
    %1743 = vmatpush1.bf16.msra.mxu0 %v1581
    %1744 = vmatprep.subr.bf16.mxu0 %v1586
    %1745 = vmatpush1.bf16.msra.mxu0 %v1585
    %1746 = vmatprep.subr.bf16.mxu0 %v1590
    %1747 = vmatpush1.bf16.msra.mxu0 %v1589
    %1748 = vmatprep.subr.bf16.mxu0 %v1594
    %1749 = vmatpush1.bf16.msra.mxu0 %v1593
    %1750 = vmatprep.subr.bf16.mxu0 %v1598
    %1751 = vmatpush1.bf16.msra.mxu0 %v1597
    %1752 = vmatprep.subr.bf16.mxu0 %v1602
    %1753 = vmatpush1.bf16.msra.mxu0 %v1601
    %1754 = vmatprep.subr.bf16.mxu0 %v1606
    %1755 = vmatpush1.bf16.msra.mxu0 %v1605
    %1756 = vmatprep.subr.bf16.mxu0 %v1610
    %1757 = vmatpush1.bf16.msra.mxu0 %v1609
    %1758 = vmatprep.subr.bf16.mxu0 %v1614
    %1759 = vmatpush1.bf16.msra.mxu0 %v1613
    %1760 = vmatprep.subr.bf16.mxu0 %v1618
    %1761 = vmatpush1.bf16.msra.mxu0 %v1617
    %1762 = vmatprep.subr.bf16.mxu0 %v1622
    %1763 = vmatpush1.bf16.msra.mxu0 %v1621
    %1764 = vmatprep.subr.bf16.mxu0 %v1626
    %1765 = vmatpush1.bf16.msra.mxu0 %v1625
    %1766 = vmatprep.subr.bf16.mxu0 %v1630
    %1767 = vmatpush1.bf16.msra.mxu0 %v1629
    %1768 = vmatprep.mubr.bf16.mxu0 %v1366
    %1769 = vmatmul.mubr.bf16.gmra.mrb[0].mxu0 %v1365
    %v1770 = vpop.f32.mrb[0].mxu0
    %v1771 = vadd.f32 0.0, %v1770
    %v1772 = vpop.f32.mrb[0].mxu0
    %v1773 = vadd.f32 0.0, %v1772
    %v1774 = vpop.f32.mrb[0].mxu0
    %v1775 = vpop.f32.mrb[0].mxu0
    %1776 = vdwg.mxu0
    %v1777 = vadd.f32 %v1371, %v1730
    %v1778 = vadd.f32 %v1372, %v1732
    %v1779 = vadd.f32 %v1373, %v1771
    %v1780 = vadd.f32 %v1374, %v1773
    %v1781 = vxor.u32 %v1777, 2147483648
    %v1782 = vmul.f32 %v1781, 1.442695
    %v1783 = vpow.pop %v1782
    %v1784 = vadd.f32 %v1783, 1.0
    %v1785 = vrcp.pop %v1784
    %v1786 = vmul.f32 1.0, %v1785
    %v1787 = vxor.u32 %v1778, 2147483648
    %v1788 = vmul.f32 %v1787, 1.442695
    %v1789 = vpow.pop %v1788
    %v1790 = vadd.f32 %v1789, 1.0
    %v1791 = vrcp.pop %v1790
    %v1792 = vmul.f32 1.0, %v1791
    %v1793 = vtanh.pop %v1779
    %v1794 = vxor.u32 %v1780, 2147483648
    %v1795 = vmul.f32 %v1794, 1.442695
    %v1796 = vpow.pop %v1795
    %v1797 = vadd.f32 %v1796, 1.0
    %v1798 = vrcp.pop %v1797
    %v1799 = vmul.f32 1.0, %v1798
    %v1800 = vmul.f32 %v1792, %v1362
    %v1801 = vmul.f32 %v1786, %v1793
    %v1802 = vadd.f32 %v1800, %v1801
    %v1803 = vtanh.pop %v1802
    %v1804 = vmul.f32 %v1799, %v1803
    %v1805 = vld [vmem:[#allocation10] sm:$0xff]
    %v1806 = vsub.f32 %v1802, %v1362
    %v1807 = vmul.f32 %v1805, %v1806
    %v1808 = vadd.f32 %v1362, %v1807
    %1809 = vst [vmem:[#allocation6] sm:$0xff] %v1808
    %v1810 = vsub.f32 %v1804, %v1361
    %v1811 = vmul.f32 %v1805, %v1810
    %v1812 = vadd.f32 %v1361, %v1811
    %1813 = vst [vmem:[#allocation5] sm:$0xff] %v1812
    %v1814 = vmul.f32 %v1805, %v1804
    %1815 = vst [vmem:[#allocation4] sm:$0xff] %v1814
    %v1816 = vld [vmem:[#allocation5] sm:$0xff]
    %v1817 = vld [vmem:[#allocation6] sm:$0xff]
    %v1818 = vmul.f32 %v1816, %v97
    %v1819 = vmul.f32 %v1816, %v102
    %v1820 = vpack.c.bf16 %v1818, %v1818
    %v1821 = vpack.c.bf16 %v1819, %v1819
    %v1822 = vld [vmem:[#allocation3 + $0x20] sm:$0xff]
    %v1823 = vld [vmem:[#allocation3 + $0x28] sm:$0xff]
    %v1824 = vld [vmem:[#allocation3 + $0x30] sm:$0xff]
    %v1825 = vld [vmem:[#allocation3 + $0x38] sm:$0xff]
    %v1826 = vadd.f32 %v1822, %v1355
    %v1827 = vadd.f32 %v1823, %v1356
    %v1828 = vadd.f32 %v1824, %v1357
    %v1829 = vadd.f32 %v1825, %v1358
    %1830 = vmatprep.subr.bf16.mxu0 %v1568
    %1831 = vmatpush1.bf16.msra.mxu0 %v1567
    %1832 = vmatprep.subr.bf16.mxu0 %v1572
    %1833 = vmatpush1.bf16.msra.mxu0 %v1571
    %1834 = vmatprep.subr.bf16.mxu0 %v1576
    %1835 = vmatpush1.bf16.msra.mxu0 %v1575
    %1836 = vmatprep.subr.bf16.mxu0 %v1580
    %1837 = vmatpush1.bf16.msra.mxu0 %v1579
    %1838 = vmatprep.subr.bf16.mxu0 %v1584
    %1839 = vmatpush1.bf16.msra.mxu0 %v1583
    %1840 = vmatprep.subr.bf16.mxu0 %v1588
    %1841 = vmatpush1.bf16.msra.mxu0 %v1587
    %1842 = vmatprep.subr.bf16.mxu0 %v1592
    %1843 = vmatpush1.bf16.msra.mxu0 %v1591
    %1844 = vmatprep.subr.bf16.mxu0 %v1596
    %1845 = vmatpush1.bf16.msra.mxu0 %v1595
    %1846 = vmatprep.subr.bf16.mxu0 %v1600
    %1847 = vmatpush1.bf16.msra.mxu0 %v1599
    %1848 = vmatprep.subr.bf16.mxu0 %v1604
    %1849 = vmatpush1.bf16.msra.mxu0 %v1603
    %1850 = vmatprep.subr.bf16.mxu0 %v1608
    %1851 = vmatpush1.bf16.msra.mxu0 %v1607
    %1852 = vmatprep.subr.bf16.mxu0 %v1612
    %1853 = vmatpush1.bf16.msra.mxu0 %v1611
    %1854 = vmatprep.subr.bf16.mxu0 %v1616
    %1855 = vmatpush1.bf16.msra.mxu0 %v1615
    %1856 = vmatprep.subr.bf16.mxu0 %v1620
    %1857 = vmatpush1.bf16.msra.mxu0 %v1619
    %1858 = vmatprep.subr.bf16.mxu0 %v1624
    %1859 = vmatpush1.bf16.msra.mxu0 %v1623
    %1860 = vmatprep.subr.bf16.mxu0 %v1628
    %1861 = vmatpush1.bf16.msra.mxu0 %v1627
    %1862 = vmatprep.mubr.bf16.mxu0 %v1821
    %1863 = vmatmul.mubr.bf16.gmra.mrb[0].mxu0 %v1820
    %v1864 = vpop.f32.mrb[0].mxu0
    %v1865 = vadd.f32 0.0, %v1864
    %v1866 = vpop.f32.mrb[0].mxu0
    %v1867 = vadd.f32 0.0, %v1866
    %v1868 = vpop.f32.mrb[0].mxu0
    %v1869 = vpop.f32.mrb[0].mxu0
    %1870 = vdwg.mxu0
    %1871 = vmatprep.subr.bf16.mxu0 %v1570
    %1872 = vmatpush1.bf16.msra.mxu0 %v1569
    %1873 = vmatprep.subr.bf16.mxu0 %v1574
    %1874 = vmatpush1.bf16.msra.mxu0 %v1573
    %1875 = vmatprep.subr.bf16.mxu0 %v1578
    %1876 = vmatpush1.bf16.msra.mxu0 %v1577
    %1877 = vmatprep.subr.bf16.mxu0 %v1582
    %1878 = vmatpush1.bf16.msra.mxu0 %v1581
    %1879 = vmatprep.subr.bf16.mxu0 %v1586
    %1880 = vmatpush1.bf16.msra.mxu0 %v1585
    %1881 = vmatprep.subr.bf16.mxu0 %v1590
    %1882 = vmatpush1.bf16.msra.mxu0 %v1589
    %1883 = vmatprep.subr.bf16.mxu0 %v1594
    %1884 = vmatpush1.bf16.msra.mxu0 %v1593
    %1885 = vmatprep.subr.bf16.mxu0 %v1598
    %1886 = vmatpush1.bf16.msra.mxu0 %v1597
    %1887 = vmatprep.subr.bf16.mxu0 %v1602
    %1888 = vmatpush1.bf16.msra.mxu0 %v1601
    %1889 = vmatprep.subr.bf16.mxu0 %v1606
    %1890 = vmatpush1.bf16.msra.mxu0 %v1605
    %1891 = vmatprep.subr.bf16.mxu0 %v1610
    %1892 = vmatpush1.bf16.msra.mxu0 %v1609
    %1893 = vmatprep.subr.bf16.mxu0 %v1614
    %1894 = vmatpush1.bf16.msra.mxu0 %v1613
    %1895 = vmatprep.subr.bf16.mxu0 %v1618
    %1896 = vmatpush1.bf16.msra.mxu0 %v1617
    %1897 = vmatprep.subr.bf16.mxu0 %v1622
    %1898 = vmatpush1.bf16.msra.mxu0 %v1621
    %1899 = vmatprep.subr.bf16.mxu0 %v1626
    %1900 = vmatpush1.bf16.msra.mxu0 %v1625
    %1901 = vmatprep.subr.bf16.mxu0 %v1630
    %1902 = vmatpush1.bf16.msra.mxu0 %v1629
    %1903 = vmatprep.mubr.bf16.mxu0 %v1821
    %1904 = vmatmul.mubr.bf16.gmra.mrb[0].mxu0 %v1820
    %v1905 = vpop.f32.mrb[0].mxu0
    %v1906 = vadd.f32 0.0, %v1905
    %v1907 = vpop.f32.mrb[0].mxu0
    %v1908 = vadd.f32 0.0, %v1907
    %v1909 = vpop.f32.mrb[0].mxu0
    %v1910 = vpop.f32.mrb[0].mxu0
    %1911 = vdwg.mxu0
    %v1912 = vadd.f32 %v1826, %v1865
    %v1913 = vadd.f32 %v1827, %v1867
    %v1914 = vadd.f32 %v1828, %v1906
    %v1915 = vadd.f32 %v1829, %v1908
    %v1916 = vxor.u32 %v1912, 2147483648
    %v1917 = vmul.f32 %v1916, 1.442695
    %v1918 = vpow.pop %v1917
    %v1919 = vadd.f32 %v1918, 1.0
    %v1920 = vrcp.pop %v1919
    %v1921 = vmul.f32 1.0, %v1920
    %v1922 = vxor.u32 %v1913, 2147483648
    %v1923 = vmul.f32 %v1922, 1.442695
    %v1924 = vpow.pop %v1923
    %v1925 = vadd.f32 %v1924, 1.0
    %v1926 = vrcp.pop %v1925
    %v1927 = vmul.f32 1.0, %v1926
    %v1928 = vtanh.pop %v1914
    %v1929 = vxor.u32 %v1915, 2147483648
    %v1930 = vmul.f32 %v1929, 1.442695
    %v1931 = vpow.pop %v1930
    %v1932 = vadd.f32 %v1931, 1.0
    %v1933 = vrcp.pop %v1932
    %v1934 = vmul.f32 1.0, %v1933
    %v1935 = vmul.f32 %v1927, %v1817
    %v1936 = vmul.f32 %v1921, %v1928
    %v1937 = vadd.f32 %v1935, %v1936
    %v1938 = vtanh.pop %v1937
    %v1939 = vmul.f32 %v1934, %v1938
    %v1940 = vld [vmem:[#allocation10 + $0x8] sm:$0xff]
    %v1941 = vsub.f32 %v1937, %v1817
    %v1942 = vmul.f32 %v1940, %v1941
    %v1943 = vadd.f32 %v1817, %v1942
    %1944 = vst [vmem:[#allocation6] sm:$0xff] %v1943
    %v1945 = vsub.f32 %v1939, %v1816
    %v1946 = vmul.f32 %v1940, %v1945
    %v1947 = vadd.f32 %v1816, %v1946
    %1948 = vst [vmem:[#allocation5] sm:$0xff] %v1947
    %v1949 = vmul.f32 %v1940, %v1939
    %1950 = vst [vmem:[#allocation4 + $0x8] sm:$0xff] %v1949
    %v1951 = vld [vmem:[#allocation5] sm:$0xff]
    %v1952 = vld [vmem:[#allocation6] sm:$0xff]
    %v1953 = vmul.f32 %v1951, %v97
    %v1954 = vmul.f32 %v1951, %v102
    %v1955 = vpack.c.bf16 %v1953, %v1953
    %v1956 = vpack.c.bf16 %v1954, %v1954
    %v1957 = vld [vmem:[#allocation3 + $0x40] sm:$0xff]
    %v1958 = vld [vmem:[#allocation3 + $0x48] sm:$0xff]
    %v1959 = vld [vmem:[#allocation3 + $0x50] sm:$0xff]
    %v1960 = vld [vmem:[#allocation3 + $0x58] sm:$0xff]
    %v1961 = vadd.f32 %v1957, %v1355
    %v1962 = vadd.f32 %v1958, %v1356
    %v1963 = vadd.f32 %v1959, %v1357
    %v1964 = vadd.f32 %v1960, %v1358
    %1965 = vmatprep.subr.bf16.mxu0 %v1568
    %1966 = vmatpush1.bf16.msra.mxu0 %v1567
    %1967 = vmatprep.subr.bf16.mxu0 %v1572
    %1968 = vmatpush1.bf16.msra.mxu0 %v1571
    %1969 = vmatprep.subr.bf16.mxu0 %v1576
    %1970 = vmatpush1.bf16.msra.mxu0 %v1575
    %1971 = vmatprep.subr.bf16.mxu0 %v1580
    %1972 = vmatpush1.bf16.msra.mxu0 %v1579
    %1973 = vmatprep.subr.bf16.mxu0 %v1584
    %1974 = vmatpush1.bf16.msra.mxu0 %v1583
    %1975 = vmatprep.subr.bf16.mxu0 %v1588
    %1976 = vmatpush1.bf16.msra.mxu0 %v1587
    %1977 = vmatprep.subr.bf16.mxu0 %v1592
    %1978 = vmatpush1.bf16.msra.mxu0 %v1591
    %1979 = vmatprep.subr.bf16.mxu0 %v1596
    %1980 = vmatpush1.bf16.msra.mxu0 %v1595
    %1981 = vmatprep.subr.bf16.mxu0 %v1600
    %1982 = vmatpush1.bf16.msra.mxu0 %v1599
    %1983 = vmatprep.subr.bf16.mxu0 %v1604
    %1984 = vmatpush1.bf16.msra.mxu0 %v1603
    %1985 = vmatprep.subr.bf16.mxu0 %v1608
    %1986 = vmatpush1.bf16.msra.mxu0 %v1607
    %1987 = vmatprep.subr.bf16.mxu0 %v1612
    %1988 = vmatpush1.bf16.msra.mxu0 %v1611
    %1989 = vmatprep.subr.bf16.mxu0 %v1616
    %1990 = vmatpush1.bf16.msra.mxu0 %v1615
    %1991 = vmatprep.subr.bf16.mxu0 %v1620
    %1992 = vmatpush1.bf16.msra.mxu0 %v1619
    %1993 = vmatprep.subr.bf16.mxu0 %v1624
    %1994 = vmatpush1.bf16.msra.mxu0 %v1623
    %1995 = vmatprep.subr.bf16.mxu0 %v1628
    %1996 = vmatpush1.bf16.msra.mxu0 %v1627
    %1997 = vmatprep.mubr.bf16.mxu0 %v1956
    %1998 = vmatmul.mubr.bf16.gmra.mrb[0].mxu0 %v1955
    %v1999 = vpop.f32.mrb[0].mxu0
    %v2000 = vadd.f32 0.0, %v1999
    %v2001 = vpop.f32.mrb[0].mxu0
    %v2002 = vadd.f32 0.0, %v2001
    %v2003 = vpop.f32.mrb[0].mxu0
    %v2004 = vpop.f32.mrb[0].mxu0
    %2005 = vdwg.mxu0
    %2006 = vmatprep.subr.bf16.mxu0 %v1570
    %2007 = vmatpush1.bf16.msra.mxu0 %v1569
    %2008 = vmatprep.subr.bf16.mxu0 %v1574
    %2009 = vmatpush1.bf16.msra.mxu0 %v1573
    %2010 = vmatprep.subr.bf16.mxu0 %v1578
    %2011 = vmatpush1.bf16.msra.mxu0 %v1577
    %2012 = vmatprep.subr.bf16.mxu0 %v1582
    %2013 = vmatpush1.bf16.msra.mxu0 %v1581
    %2014 = vmatprep.subr.bf16.mxu0 %v1586
    %2015 = vmatpush1.bf16.msra.mxu0 %v1585
    %2016 = vmatprep.subr.bf16.mxu0 %v1590
    %2017 = vmatpush1.bf16.msra.mxu0 %v1589
    %2018 = vmatprep.subr.bf16.mxu0 %v1594
    %2019 = vmatpush1.bf16.msra.mxu0 %v1593
    %2020 = vmatprep.subr.bf16.mxu0 %v1598
    %2021 = vmatpush1.bf16.msra.mxu0 %v1597
    %2022 = vmatprep.subr.bf16.mxu0 %v1602
    %2023 = vmatpush1.bf16.msra.mxu0 %v1601
    %2024 = vmatprep.subr.bf16.mxu0 %v1606
    %2025 = vmatpush1.bf16.msra.mxu0 %v1605
    %2026 = vmatprep.subr.bf16.mxu0 %v1610
    %2027 = vmatpush1.bf16.msra.mxu0 %v1609
    %2028 = vmatprep.subr.bf16.mxu0 %v1614
    %2029 = vmatpush1.bf16.msra.mxu0 %v1613
    %2030 = vmatprep.subr.bf16.mxu0 %v1618
    %2031 = vmatpush1.bf16.msra.mxu0 %v1617
    %2032 = vmatprep.subr.bf16.mxu0 %v1622
    %2033 = vmatpush1.bf16.msra.mxu0 %v1621
    %2034 = vmatprep.subr.bf16.mxu0 %v1626
    %2035 = vmatpush1.bf16.msra.mxu0 %v1625
    %2036 = vmatprep.subr.bf16.mxu0 %v1630
    %2037 = vmatpush1.bf16.msra.mxu0 %v1629
    %2038 = vmatprep.mubr.bf16.mxu0 %v1956
    %2039 = vmatmul.mubr.bf16.gmra.mrb[0].mxu0 %v1955
    %v2040 = vpop.f32.mrb[0].mxu0
    %v2041 = vadd.f32 0.0, %v2040
    %v2042 = vpop.f32.mrb[0].mxu0
    %v2043 = vadd.f32 0.0, %v2042
    %v2044 = vpop.f32.mrb[0].mxu0
    %v2045 = vpop.f32.mrb[0].mxu0
    %2046 = vdwg.mxu0
    %v2047 = vadd.f32 %v1961, %v2000
    %v2048 = vadd.f32 %v1962, %v2002
    %v2049 = vadd.f32 %v1963, %v2041
    %v2050 = vadd.f32 %v1964, %v2043
    %v2051 = vxor.u32 %v2047, 2147483648
    %v2052 = vmul.f32 %v2051, 1.442695
    %v2053 = vpow.pop %v2052
    %v2054 = vadd.f32 %v2053, 1.0
    %v2055 = vrcp.pop %v2054
    %v2056 = vmul.f32 1.0, %v2055
    %v2057 = vxor.u32 %v2048, 2147483648
    %v2058 = vmul.f32 %v2057, 1.442695
    %v2059 = vpow.pop %v2058
    %v2060 = vadd.f32 %v2059, 1.0
    %v2061 = vrcp.pop %v2060
    %v2062 = vmul.f32 1.0, %v2061
    %v2063 = vtanh.pop %v2049
    %v2064 = vxor.u32 %v2050, 2147483648
    %v2065 = vmul.f32 %v2064, 1.442695
    %v2066 = vpow.pop %v2065
    %v2067 = vadd.f32 %v2066, 1.0
    %v2068 = vrcp.pop %v2067
    %v2069 = vmul.f32 1.0, %v2068
    %v2070 = vmul.f32 %v2062, %v1952
    %v2071 = vmul.f32 %v2056, %v2063
    %v2072 = vadd.f32 %v2070, %v2071
    %v2073 = vtanh.pop %v2072
    %v2074 = vmul.f32 %v2069, %v2073
    %v2075 = vld [vmem:[#allocation10 + $0x10] sm:$0xff]
    %v2076 = vsub.f32 %v2072, %v1952
    %v2077 = vmul.f32 %v2075, %v2076
    %v2078 = vadd.f32 %v1952, %v2077
    %2079 = vst [vmem:[#allocation6] sm:$0xff] %v2078
    %v2080 = vsub.f32 %v2074, %v1951
    %v2081 = vmul.f32 %v2075, %v2080
    %v2082 = vadd.f32 %v1951, %v2081
    %2083 = vst [vmem:[#allocation5] sm:$0xff] %v2082
    %v2084 = vmul.f32 %v2075, %v2074
    %2085 = vst [vmem:[#allocation4 + $0x10] sm:$0xff] %v2084
    %v2086 = vld [vmem:[#allocation5] sm:$0xff]
    %v2087 = vld [vmem:[#allocation6] sm:$0xff]
    %v2088 = vmul.f32 %v2086, %v97
    %v2089 = vmul.f32 %v2086, %v102
    %v2090 = vpack.c.bf16 %v2088, %v2088
    %v2091 = vpack.c.bf16 %v2089, %v2089
    %v2092 = vld [vmem:[#allocation3 + $0x60] sm:$0xff]
    %v2093 = vld [vmem:[#allocation3 + $0x68] sm:$0xff]
    %v2094 = vld [vmem:[#allocation3 + $0x70] sm:$0xff]
    %v2095 = vld [vmem:[#allocation3 + $0x78] sm:$0xff]
    %v2096 = vadd.f32 %v2092, %v1355
    %v2097 = vadd.f32 %v2093, %v1356
    %v2098 = vadd.f32 %v2094, %v1357
    %v2099 = vadd.f32 %v2095, %v1358
    %2100 = vmatprep.subr.bf16.mxu0 %v1568
    %2101 = vmatpush1.bf16.msra.mxu0 %v1567
    %2102 = vmatprep.subr.bf16.mxu0 %v1572
    %2103 = vmatpush1.bf16.msra.mxu0 %v1571
    %2104 = vmatprep.subr.bf16.mxu0 %v1576
    %2105 = vmatpush1.bf16.msra.mxu0 %v1575
    %2106 = vmatprep.subr.bf16.mxu0 %v1580
    %2107 = vmatpush1.bf16.msra.mxu0 %v1579
    %2108 = vmatprep.subr.bf16.mxu0 %v1584
    %2109 = vmatpush1.bf16.msra.mxu0 %v1583
    %2110 = vmatprep.subr.bf16.mxu0 %v1588
    %2111 = vmatpush1.bf16.msra.mxu0 %v1587
    %2112 = vmatprep.subr.bf16.mxu0 %v1592
    %2113 = vmatpush1.bf16.msra.mxu0 %v1591
    %2114 = vmatprep.subr.bf16.mxu0 %v1596
    %2115 = vmatpush1.bf16.msra.mxu0 %v1595
    %2116 = vmatprep.subr.bf16.mxu0 %v1600
    %2117 = vmatpush1.bf16.msra.mxu0 %v1599
    %2118 = vmatprep.subr.bf16.mxu0 %v1604
    %2119 = vmatpush1.bf16.msra.mxu0 %v1603
    %2120 = vmatprep.subr.bf16.mxu0 %v1608
    %2121 = vmatpush1.bf16.msra.mxu0 %v1607
    %2122 = vmatprep.subr.bf16.mxu0 %v1612
    %2123 = vmatpush1.bf16.msra.mxu0 %v1611
    %2124 = vmatprep.subr.bf16.mxu0 %v1616
    %2125 = vmatpush1.bf16.msra.mxu0 %v1615
    %2126 = vmatprep.subr.bf16.mxu0 %v1620
    %2127 = vmatpush1.bf16.msra.mxu0 %v1619
    %2128 = vmatprep.subr.bf16.mxu0 %v1624
    %2129 = vmatpush1.bf16.msra.mxu0 %v1623
    %2130 = vmatprep.subr.bf16.mxu0 %v1628
    %2131 = vmatpush1.bf16.msra.mxu0 %v1627
    %2132 = vmatprep.mubr.bf16.mxu0 %v2091
    %2133 = vmatmul.mubr.bf16.gmra.mrb[0].mxu0 %v2090
    %v2134 = vpop.f32.mrb[0].mxu0
    %v2135 = vadd.f32 0.0, %v2134
    %v2136 = vpop.f32.mrb[0].mxu0
    %v2137 = vadd.f32 0.0, %v2136
    %v2138 = vpop.f32.mrb[0].mxu0
    %v2139 = vpop.f32.mrb[0].mxu0
    %2140 = vdwg.mxu0
    %2141 = vmatprep.subr.bf16.mxu0 %v1570
    %2142 = vmatpush1.bf16.msra.mxu0 %v1569
    %2143 = vmatprep.subr.bf16.mxu0 %v1574
    %2144 = vmatpush1.bf16.msra.mxu0 %v1573
    %2145 = vmatprep.subr.bf16.mxu0 %v1578
    %2146 = vmatpush1.bf16.msra.mxu0 %v1577
    %2147 = vmatprep.subr.bf16.mxu0 %v1582
    %2148 = vmatpush1.bf16.msra.mxu0 %v1581
    %2149 = vmatprep.subr.bf16.mxu0 %v1586
    %2150 = vmatpush1.bf16.msra.mxu0 %v1585
    %2151 = vmatprep.subr.bf16.mxu0 %v1590
    %2152 = vmatpush1.bf16.msra.mxu0 %v1589
    %2153 = vmatprep.subr.bf16.mxu0 %v1594
    %2154 = vmatpush1.bf16.msra.mxu0 %v1593
    %2155 = vmatprep.subr.bf16.mxu0 %v1598
    %2156 = vmatpush1.bf16.msra.mxu0 %v1597
    %2157 = vmatprep.subr.bf16.mxu0 %v1602
    %2158 = vmatpush1.bf16.msra.mxu0 %v1601
    %2159 = vmatprep.subr.bf16.mxu0 %v1606
    %2160 = vmatpush1.bf16.msra.mxu0 %v1605
    %2161 = vmatprep.subr.bf16.mxu0 %v1610
    %2162 = vmatpush1.bf16.msra.mxu0 %v1609
    %2163 = vmatprep.subr.bf16.mxu0 %v1614
    %2164 = vmatpush1.bf16.msra.mxu0 %v1613
    %2165 = vmatprep.subr.bf16.mxu0 %v1618
    %2166 = vmatpush1.bf16.msra.mxu0 %v1617
    %2167 = vmatprep.subr.bf16.mxu0 %v1622
    %2168 = vmatpush1.bf16.msra.mxu0 %v1621
    %2169 = vmatprep.subr.bf16.mxu0 %v1626
    %2170 = vmatpush1.bf16.msra.mxu0 %v1625
    %2171 = vmatprep.subr.bf16.mxu0 %v1630
    %2172 = vmatpush1.bf16.msra.mxu0 %v1629
    %2173 = vmatprep.mubr.bf16.mxu0 %v2091
    %2174 = vmatmul.mubr.bf16.gmra.mrb[0].mxu0 %v2090
    %v2175 = vpop.f32.mrb[0].mxu0
    %v2176 = vadd.f32 0.0, %v2175
    %v2177 = vpop.f32.mrb[0].mxu0
    %v2178 = vadd.f32 0.0, %v2177
    %v2179 = vpop.f32.mrb[0].mxu0
    %v2180 = vpop.f32.mrb[0].mxu0
    %2181 = vdwg.mxu0
    %v2182 = vadd.f32 %v2096, %v2135
    %v2183 = vadd.f32 %v2097, %v2137
    %v2184 = vadd.f32 %v2098, %v2176
    %v2185 = vadd.f32 %v2099, %v2178
    %v2186 = vxor.u32 %v2182, 2147483648
    %v2187 = vmul.f32 %v2186, 1.442695
    %v2188 = vpow.pop %v2187
    %v2189 = vadd.f32 %v2188, 1.0
    %v2190 = vrcp.pop %v2189
    %v2191 = vmul.f32 1.0, %v2190
    %v2192 = vxor.u32 %v2183, 2147483648
    %v2193 = vmul.f32 %v2192, 1.442695
    %v2194 = vpow.pop %v2193
    %v2195 = vadd.f32 %v2194, 1.0
    %v2196 = vrcp.pop %v2195
    %v2197 = vmul.f32 1.0, %v2196
    %v2198 = vtanh.pop %v2184
    %v2199 = vxor.u32 %v2185, 2147483648
    %v2200 = vmul.f32 %v2199, 1.442695
    %v2201 = vpow.pop %v2200
    %v2202 = vadd.f32 %v2201, 1.0
    %v2203 = vrcp.pop %v2202
    %v2204 = vmul.f32 1.0, %v2203
    %v2205 = vmul.f32 %v2197, %v2087
    %v2206 = vmul.f32 %v2191, %v2198
    %v2207 = vadd.f32 %v2205, %v2206
    %v2208 = vtanh.pop %v2207
    %v2209 = vmul.f32 %v2204, %v2208
    %v2210 = vld [vmem:[#allocation10 + $0x18] sm:$0xff]
    %v2211 = vsub.f32 %v2207, %v2087
    %v2212 = vmul.f32 %v2210, %v2211
    %v2213 = vadd.f32 %v2087, %v2212
    %2214 = vst [vmem:[#allocation6] sm:$0xff] %v2213
    %v2215 = vsub.f32 %v2209, %v2086
    %v2216 = vmul.f32 %v2210, %v2215
    %v2217 = vadd.f32 %v2086, %v2216
    %2218 = vst [vmem:[#allocation5] sm:$0xff] %v2217
    %v2219 = vmul.f32 %v2210, %v2209
    %2220 = vst [vmem:[#allocation4 + $0x18] sm:$0xff] %v2219
    %v2221 = vld [vmem:[#allocation5] sm:$0xff]
    %v2222 = vld [vmem:[#allocation6] sm:$0xff]
    %v2223 = vmul.f32 %v2221, %v97
    %v2224 = vmul.f32 %v2221, %v102
    %v2225 = vpack.c.bf16 %v2223, %v2223
    %v2226 = vpack.c.bf16 %v2224, %v2224
    %v2227 = vld [vmem:[#allocation3 + $0x80] sm:$0xff]
    %v2228 = vld [vmem:[#allocation3 + $0x88] sm:$0xff]
    %v2229 = vld [vmem:[#allocation3 + $0x90] sm:$0xff]
    %v2230 = vld [vmem:[#allocation3 + $0x98] sm:$0xff]
    %v2231 = vadd.f32 %v2227, %v1355
    %v2232 = vadd.f32 %v2228, %v1356
    %v2233 = vadd.f32 %v2229, %v1357
    %v2234 = vadd.f32 %v2230, %v1358
    %2235 = vmatprep.subr.bf16.mxu0 %v1568
    %2236 = vmatpush1.bf16.msra.mxu0 %v1567
    %2237 = vmatprep.subr.bf16.mxu0 %v1572
    %2238 = vmatpush1.bf16.msra.mxu0 %v1571
    %2239 = vmatprep.subr.bf16.mxu0 %v1576
    %2240 = vmatpush1.bf16.msra.mxu0 %v1575
    %2241 = vmatprep.subr.bf16.mxu0 %v1580
    %2242 = vmatpush1.bf16.msra.mxu0 %v1579
    %2243 = vmatprep.subr.bf16.mxu0 %v1584
    %2244 = vmatpush1.bf16.msra.mxu0 %v1583
    %2245 = vmatprep.subr.bf16.mxu0 %v1588
    %2246 = vmatpush1.bf16.msra.mxu0 %v1587
    %2247 = vmatprep.subr.bf16.mxu0 %v1592
    %2248 = vmatpush1.bf16.msra.mxu0 %v1591
    %2249 = vmatprep.subr.bf16.mxu0 %v1596
    %2250 = vmatpush1.bf16.msra.mxu0 %v1595
    %2251 = vmatprep.subr.bf16.mxu0 %v1600
    %2252 = vmatpush1.bf16.msra.mxu0 %v1599
    %2253 = vmatprep.subr.bf16.mxu0 %v1604
    %2254 = vmatpush1.bf16.msra.mxu0 %v1603
    %2255 = vmatprep.subr.bf16.mxu0 %v1608
    %2256 = vmatpush1.bf16.msra.mxu0 %v1607
    %2257 = vmatprep.subr.bf16.mxu0 %v1612
    %2258 = vmatpush1.bf16.msra.mxu0 %v1611
    %2259 = vmatprep.subr.bf16.mxu0 %v1616
    %2260 = vmatpush1.bf16.msra.mxu0 %v1615
    %2261 = vmatprep.subr.bf16.mxu0 %v1620
    %2262 = vmatpush1.bf16.msra.mxu0 %v1619
    %2263 = vmatprep.subr.bf16.mxu0 %v1624
    %2264 = vmatpush1.bf16.msra.mxu0 %v1623
    %2265 = vmatprep.subr.bf16.mxu0 %v1628
    %2266 = vmatpush1.bf16.msra.mxu0 %v1627
    %2267 = vmatprep.mubr.bf16.mxu0 %v2226
    %2268 = vmatmul.mubr.bf16.gmra.mrb[0].mxu0 %v2225
    %v2269 = vpop.f32.mrb[0].mxu0
    %v2270 = vadd.f32 0.0, %v2269
    %v2271 = vpop.f32.mrb[0].mxu0
    %v2272 = vadd.f32 0.0, %v2271
    %v2273 = vpop.f32.mrb[0].mxu0
    %v2274 = vpop.f32.mrb[0].mxu0
    %2275 = vdwg.mxu0
    %2276 = vmatprep.subr.bf16.mxu0 %v1570
    %2277 = vmatpush1.bf16.msra.mxu0 %v1569
    %2278 = vmatprep.subr.bf16.mxu0 %v1574
    %2279 = vmatpush1.bf16.msra.mxu0 %v1573
    %2280 = vmatprep.subr.bf16.mxu0 %v1578
    %2281 = vmatpush1.bf16.msra.mxu0 %v1577
    %2282 = vmatprep.subr.bf16.mxu0 %v1582
    %2283 = vmatpush1.bf16.msra.mxu0 %v1581
    %2284 = vmatprep.subr.bf16.mxu0 %v1586
    %2285 = vmatpush1.bf16.msra.mxu0 %v1585
    %2286 = vmatprep.subr.bf16.mxu0 %v1590
    %2287 = vmatpush1.bf16.msra.mxu0 %v1589
    %2288 = vmatprep.subr.bf16.mxu0 %v1594
    %2289 = vmatpush1.bf16.msra.mxu0 %v1593
    %2290 = vmatprep.subr.bf16.mxu0 %v1598
    %2291 = vmatpush1.bf16.msra.mxu0 %v1597
    %2292 = vmatprep.subr.bf16.mxu0 %v1602
    %2293 = vmatpush1.bf16.msra.mxu0 %v1601
    %2294 = vmatprep.subr.bf16.mxu0 %v1606
    %2295 = vmatpush1.bf16.msra.mxu0 %v1605
    %2296 = vmatprep.subr.bf16.mxu0 %v1610
    %2297 = vmatpush1.bf16.msra.mxu0 %v1609
    %2298 = vmatprep.subr.bf16.mxu0 %v1614
    %2299 = vmatpush1.bf16.msra.mxu0 %v1613
    %2300 = vmatprep.subr.bf16.mxu0 %v1618
    %2301 = vmatpush1.bf16.msra.mxu0 %v1617
    %2302 = vmatprep.subr.bf16.mxu0 %v1622
    %2303 = vmatpush1.bf16.msra.mxu0 %v1621
    %2304 = vmatprep.subr.bf16.mxu0 %v1626
    %2305 = vmatpush1.bf16.msra.mxu0 %v1625
    %2306 = vmatprep.subr.bf16.mxu0 %v1630
    %2307 = vmatpush1.bf16.msra.mxu0 %v1629
    %2308 = vmatprep.mubr.bf16.mxu0 %v2226
    %2309 = vmatmul.mubr.bf16.gmra.mrb[0].mxu0 %v2225
    %v2310 = vpop.f32.mrb[0].mxu0
    %v2311 = vadd.f32 0.0, %v2310
    %v2312 = vpop.f32.mrb[0].mxu0
    %v2313 = vadd.f32 0.0, %v2312
    %v2314 = vpop.f32.mrb[0].mxu0
    %v2315 = vpop.f32.mrb[0].mxu0
    %2316 = vdwg.mxu0
    %v2317 = vadd.f32 %v2231, %v2270
    %v2318 = vadd.f32 %v2232, %v2272
    %v2319 = vadd.f32 %v2233, %v2311
    %v2320 = vadd.f32 %v2234, %v2313
    %v2321 = vxor.u32 %v2317, 2147483648
    %v2322 = vmul.f32 %v2321, 1.442695
    %v2323 = vpow.pop %v2322
    %v2324 = vadd.f32 %v2323, 1.0
    %v2325 = vrcp.pop %v2324
    %v2326 = vmul.f32 1.0, %v2325
    %v2327 = vxor.u32 %v2318, 2147483648
    %v2328 = vmul.f32 %v2327, 1.442695
    %v2329 = vpow.pop %v2328
    %v2330 = vadd.f32 %v2329, 1.0
    %v2331 = vrcp.pop %v2330
    %v2332 = vmul.f32 1.0, %v2331
    %v2333 = vtanh.pop %v2319
    %v2334 = vxor.u32 %v2320, 2147483648
    %v2335 = vmul.f32 %v2334, 1.442695
    %v2336 = vpow.pop %v2335
    %v2337 = vadd.f32 %v2336, 1.0
    %v2338 = vrcp.pop %v2337
    %v2339 = vmul.f32 1.0, %v2338
    %v2340 = vmul.f32 %v2332, %v2222
    %v2341 = vmul.f32 %v2326, %v2333
    %v2342 = vadd.f32 %v2340, %v2341
    %v2343 = vtanh.pop %v2342
    %v2344 = vmul.f32 %v2339, %v2343
    %v2345 = vld [vmem:[#allocation10 + $0x20] sm:$0xff]
    %v2346 = vsub.f32 %v2342, %v2222
    %v2347 = vmul.f32 %v2345, %v2346
    %v2348 = vadd.f32 %v2222, %v2347
    %2349 = vst [vmem:[#allocation6] sm:$0xff] %v2348
    %v2350 = vsub.f32 %v2344, %v2221
    %v2351 = vmul.f32 %v2345, %v2350
    %v2352 = vadd.f32 %v2221, %v2351
    %2353 = vst [vmem:[#allocation5] sm:$0xff] %v2352
    %v2354 = vmul.f32 %v2345, %v2344
    %2355 = vst [vmem:[#allocation4 + $0x20] sm:$0xff] %v2354
    %v2356 = vld [vmem:[#allocation5] sm:$0xff]
    %v2357 = vld [vmem:[#allocation6] sm:$0xff]
    %v2358 = vmul.f32 %v2356, %v97
    %v2359 = vmul.f32 %v2356, %v102
    %v2360 = vpack.c.bf16 %v2358, %v2358
    %v2361 = vpack.c.bf16 %v2359, %v2359
    %v2362 = vld [vmem:[#allocation3 + $0xa0] sm:$0xff]
    %v2363 = vld [vmem:[#allocation3 + $0xa8] sm:$0xff]
    %v2364 = vld [vmem:[#allocation3 + $0xb0] sm:$0xff]
    %v2365 = vld [vmem:[#allocation3 + $0xb8] sm:$0xff]
    %v2366 = vadd.f32 %v2362, %v1355
    %v2367 = vadd.f32 %v2363, %v1356
    %v2368 = vadd.f32 %v2364, %v1357
    %v2369 = vadd.f32 %v2365, %v1358
    %2370 = vmatprep.subr.bf16.mxu0 %v1568
    %2371 = vmatpush1.bf16.msra.mxu0 %v1567
    %2372 = vmatprep.subr.bf16.mxu0 %v1572
    %2373 = vmatpush1.bf16.msra.mxu0 %v1571
    %2374 = vmatprep.subr.bf16.mxu0 %v1576
    %2375 = vmatpush1.bf16.msra.mxu0 %v1575
    %2376 = vmatprep.subr.bf16.mxu0 %v1580
    %2377 = vmatpush1.bf16.msra.mxu0 %v1579
    %2378 = vmatprep.subr.bf16.mxu0 %v1584
    %2379 = vmatpush1.bf16.msra.mxu0 %v1583
    %2380 = vmatprep.subr.bf16.mxu0 %v1588
    %2381 = vmatpush1.bf16.msra.mxu0 %v1587
    %2382 = vmatprep.subr.bf16.mxu0 %v1592
    %2383 = vmatpush1.bf16.msra.mxu0 %v1591
    %2384 = vmatprep.subr.bf16.mxu0 %v1596
    %2385 = vmatpush1.bf16.msra.mxu0 %v1595
    %2386 = vmatprep.subr.bf16.mxu0 %v1600
    %2387 = vmatpush1.bf16.msra.mxu0 %v1599
    %2388 = vmatprep.subr.bf16.mxu0 %v1604
    %2389 = vmatpush1.bf16.msra.mxu0 %v1603
    %2390 = vmatprep.subr.bf16.mxu0 %v1608
    %2391 = vmatpush1.bf16.msra.mxu0 %v1607
    %2392 = vmatprep.subr.bf16.mxu0 %v1612
    %2393 = vmatpush1.bf16.msra.mxu0 %v1611
    %2394 = vmatprep.subr.bf16.mxu0 %v1616
    %2395 = vmatpush1.bf16.msra.mxu0 %v1615
    %2396 = vmatprep.subr.bf16.mxu0 %v1620
    %2397 = vmatpush1.bf16.msra.mxu0 %v1619
    %2398 = vmatprep.subr.bf16.mxu0 %v1624
    %2399 = vmatpush1.bf16.msra.mxu0 %v1623
    %2400 = vmatprep.subr.bf16.mxu0 %v1628
    %2401 = vmatpush1.bf16.msra.mxu0 %v1627
    %2402 = vmatprep.mubr.bf16.mxu0 %v2361
    %2403 = vmatmul.mubr.bf16.gmra.mrb[0].mxu0 %v2360
    %v2404 = vpop.f32.mrb[0].mxu0
    %v2405 = vadd.f32 0.0, %v2404
    %v2406 = vpop.f32.mrb[0].mxu0
    %v2407 = vadd.f32 0.0, %v2406
    %v2408 = vpop.f32.mrb[0].mxu0
    %v2409 = vpop.f32.mrb[0].mxu0
    %2410 = vdwg.mxu0
    %2411 = vmatprep.subr.bf16.mxu0 %v1570
    %2412 = vmatpush1.bf16.msra.mxu0 %v1569
    %2413 = vmatprep.subr.bf16.mxu0 %v1574
    %2414 = vmatpush1.bf16.msra.mxu0 %v1573
    %2415 = vmatprep.subr.bf16.mxu0 %v1578
    %2416 = vmatpush1.bf16.msra.mxu0 %v1577
    %2417 = vmatprep.subr.bf16.mxu0 %v1582
    %2418 = vmatpush1.bf16.msra.mxu0 %v1581
    %2419 = vmatprep.subr.bf16.mxu0 %v1586
    %2420 = vmatpush1.bf16.msra.mxu0 %v1585
    %2421 = vmatprep.subr.bf16.mxu0 %v1590
    %2422 = vmatpush1.bf16.msra.mxu0 %v1589
    %2423 = vmatprep.subr.bf16.mxu0 %v1594
    %2424 = vmatpush1.bf16.msra.mxu0 %v1593
    %2425 = vmatprep.subr.bf16.mxu0 %v1598
    %2426 = vmatpush1.bf16.msra.mxu0 %v1597
    %2427 = vmatprep.subr.bf16.mxu0 %v1602
    %2428 = vmatpush1.bf16.msra.mxu0 %v1601
    %2429 = vmatprep.subr.bf16.mxu0 %v1606
    %2430 = vmatpush1.bf16.msra.mxu0 %v1605
    %2431 = vmatprep.subr.bf16.mxu0 %v1610
    %2432 = vmatpush1.bf16.msra.mxu0 %v1609
    %2433 = vmatprep.subr.bf16.mxu0 %v1614
    %2434 = vmatpush1.bf16.msra.mxu0 %v1613
    %2435 = vmatprep.subr.bf16.mxu0 %v1618
    %2436 = vmatpush1.bf16.msra.mxu0 %v1617
    %2437 = vmatprep.subr.bf16.mxu0 %v1622
    %2438 = vmatpush1.bf16.msra.mxu0 %v1621
    %2439 = vmatprep.subr.bf16.mxu0 %v1626
    %2440 = vmatpush1.bf16.msra.mxu0 %v1625
    %2441 = vmatprep.subr.bf16.mxu0 %v1630
    %2442 = vmatpush1.bf16.msra.mxu0 %v1629
    %2443 = vmatprep.mubr.bf16.mxu0 %v2361
    %2444 = vmatmul.mubr.bf16.gmra.mrb[0].mxu0 %v2360
    %v2445 = vpop.f32.mrb[0].mxu0
    %v2446 = vadd.f32 0.0, %v2445
    %v2447 = vpop.f32.mrb[0].mxu0
    %v2448 = vadd.f32 0.0, %v2447
    %v2449 = vpop.f32.mrb[0].mxu0
    %v2450 = vpop.f32.mrb[0].mxu0
    %2451 = vdwg.mxu0
    %v2452 = vadd.f32 %v2366, %v2405
    %v2453 = vadd.f32 %v2367, %v2407
    %v2454 = vadd.f32 %v2368, %v2446
    %v2455 = vadd.f32 %v2369, %v2448
    %v2456 = vxor.u32 %v2452, 2147483648
    %v2457 = vmul.f32 %v2456, 1.442695
    %v2458 = vpow.pop %v2457
    %v2459 = vadd.f32 %v2458, 1.0
    %v2460 = vrcp.pop %v2459
    %v2461 = vmul.f32 1.0, %v2460
    %v2462 = vxor.u32 %v2453, 2147483648
    %v2463 = vmul.f32 %v2462, 1.442695
    %v2464 = vpow.pop %v2463
    %v2465 = vadd.f32 %v2464, 1.0
    %v2466 = vrcp.pop %v2465
    %v2467 = vmul.f32 1.0, %v2466
    %v2468 = vtanh.pop %v2454
    %v2469 = vxor.u32 %v2455, 2147483648
    %v2470 = vmul.f32 %v2469, 1.442695
    %v2471 = vpow.pop %v2470
    %v2472 = vadd.f32 %v2471, 1.0
    %v2473 = vrcp.pop %v2472
    %v2474 = vmul.f32 1.0, %v2473
    %v2475 = vmul.f32 %v2467, %v2357
    %v2476 = vmul.f32 %v2461, %v2468
    %v2477 = vadd.f32 %v2475, %v2476
    %v2478 = vtanh.pop %v2477
    %v2479 = vmul.f32 %v2474, %v2478
    %v2480 = vld [vmem:[#allocation10 + $0x28] sm:$0xff]
    %v2481 = vsub.f32 %v2477, %v2357
    %v2482 = vmul.f32 %v2480, %v2481
    %v2483 = vadd.f32 %v2357, %v2482
    %2484 = vst [vmem:[#allocation6] sm:$0xff] %v2483
    %v2485 = vsub.f32 %v2479, %v2356
    %v2486 = vmul.f32 %v2480, %v2485
    %v2487 = vadd.f32 %v2356, %v2486
    %2488 = vst [vmem:[#allocation5] sm:$0xff] %v2487
    %v2489 = vmul.f32 %v2480, %v2479
    %2490 = vst [vmem:[#allocation4 + $0x28] sm:$0xff] %v2489
    %v2491 = vld [vmem:[#allocation5] sm:$0xff]
    %v2492 = vld [vmem:[#allocation6] sm:$0xff]
    %v2493 = vmul.f32 %v2491, %v97
    %v2494 = vmul.f32 %v2491, %v102
    %v2495 = vpack.c.bf16 %v2493, %v2493
    %v2496 = vpack.c.bf16 %v2494, %v2494
    %v2497 = vld [vmem:[#allocation3 + $0xc0] sm:$0xff]
    %v2498 = vld [vmem:[#allocation3 + $0xc8] sm:$0xff]
    %v2499 = vld [vmem:[#allocation3 + $0xd0] sm:$0xff]
    %v2500 = vld [vmem:[#allocation3 + $0xd8] sm:$0xff]
    %v2501 = vadd.f32 %v2497, %v1355
    %v2502 = vadd.f32 %v2498, %v1356
    %v2503 = vadd.f32 %v2499, %v1357
    %v2504 = vadd.f32 %v2500, %v1358
    %2505 = vmatprep.subr.bf16.mxu0 %v1568
    %2506 = vmatpush1.bf16.msra.mxu0 %v1567
    %2507 = vmatprep.subr.bf16.mxu0 %v1572
    %2508 = vmatpush1.bf16.msra.mxu0 %v1571
    %2509 = vmatprep.subr.bf16.mxu0 %v1576
    %2510 = vmatpush1.bf16.msra.mxu0 %v1575
    %2511 = vmatprep.subr.bf16.mxu0 %v1580
    %2512 = vmatpush1.bf16.msra.mxu0 %v1579
    %2513 = vmatprep.subr.bf16.mxu0 %v1584
    %2514 = vmatpush1.bf16.msra.mxu0 %v1583
    %2515 = vmatprep.subr.bf16.mxu0 %v1588
    %2516 = vmatpush1.bf16.msra.mxu0 %v1587
    %2517 = vmatprep.subr.bf16.mxu0 %v1592
    %2518 = vmatpush1.bf16.msra.mxu0 %v1591
    %2519 = vmatprep.subr.bf16.mxu0 %v1596
    %2520 = vmatpush1.bf16.msra.mxu0 %v1595
    %2521 = vmatprep.subr.bf16.mxu0 %v1600
    %2522 = vmatpush1.bf16.msra.mxu0 %v1599
    %2523 = vmatprep.subr.bf16.mxu0 %v1604
    %2524 = vmatpush1.bf16.msra.mxu0 %v1603
    %2525 = vmatprep.subr.bf16.mxu0 %v1608
    %2526 = vmatpush1.bf16.msra.mxu0 %v1607
    %2527 = vmatprep.subr.bf16.mxu0 %v1612
    %2528 = vmatpush1.bf16.msra.mxu0 %v1611
    %2529 = vmatprep.subr.bf16.mxu0 %v1616
    %2530 = vmatpush1.bf16.msra.mxu0 %v1615
    %2531 = vmatprep.subr.bf16.mxu0 %v1620
    %2532 = vmatpush1.bf16.msra.mxu0 %v1619
    %2533 = vmatprep.subr.bf16.mxu0 %v1624
    %2534 = vmatpush1.bf16.msra.mxu0 %v1623
    %2535 = vmatprep.subr.bf16.mxu0 %v1628
    %2536 = vmatpush1.bf16.msra.mxu0 %v1627
    %2537 = vmatprep.mubr.bf16.mxu0 %v2496
    %2538 = vmatmul.mubr.bf16.gmra.mrb[0].mxu0 %v2495
    %v2539 = vpop.f32.mrb[0].mxu0
    %v2540 = vadd.f32 0.0, %v2539
    %v2541 = vpop.f32.mrb[0].mxu0
    %v2542 = vadd.f32 0.0, %v2541
    %v2543 = vpop.f32.mrb[0].mxu0
    %v2544 = vpop.f32.mrb[0].mxu0
    %2545 = vdwg.mxu0
    %2546 = vmatprep.subr.bf16.mxu0 %v1570
    %2547 = vmatpush1.bf16.msra.mxu0 %v1569
    %2548 = vmatprep.subr.bf16.mxu0 %v1574
    %2549 = vmatpush1.bf16.msra.mxu0 %v1573
    %2550 = vmatprep.subr.bf16.mxu0 %v1578
    %2551 = vmatpush1.bf16.msra.mxu0 %v1577
    %2552 = vmatprep.subr.bf16.mxu0 %v1582
    %2553 = vmatpush1.bf16.msra.mxu0 %v1581
    %2554 = vmatprep.subr.bf16.mxu0 %v1586
    %2555 = vmatpush1.bf16.msra.mxu0 %v1585
    %2556 = vmatprep.subr.bf16.mxu0 %v1590
    %2557 = vmatpush1.bf16.msra.mxu0 %v1589
    %2558 = vmatprep.subr.bf16.mxu0 %v1594
    %2559 = vmatpush1.bf16.msra.mxu0 %v1593
    %2560 = vmatprep.subr.bf16.mxu0 %v1598
    %2561 = vmatpush1.bf16.msra.mxu0 %v1597
    %2562 = vmatprep.subr.bf16.mxu0 %v1602
    %2563 = vmatpush1.bf16.msra.mxu0 %v1601
    %2564 = vmatprep.subr.bf16.mxu0 %v1606
    %2565 = vmatpush1.bf16.msra.mxu0 %v1605
    %2566 = vmatprep.subr.bf16.mxu0 %v1610
    %2567 = vmatpush1.bf16.msra.mxu0 %v1609
    %2568 = vmatprep.subr.bf16.mxu0 %v1614
    %2569 = vmatpush1.bf16.msra.mxu0 %v1613
    %2570 = vmatprep.subr.bf16.mxu0 %v1618
    %2571 = vmatpush1.bf16.msra.mxu0 %v1617
    %2572 = vmatprep.subr.bf16.mxu0 %v1622
    %2573 = vmatpush1.bf16.msra.mxu0 %v1621
    %2574 = vmatprep.subr.bf16.mxu0 %v1626
    %2575 = vmatpush1.bf16.msra.mxu0 %v1625
    %2576 = vmatprep.subr.bf16.mxu0 %v1630
    %2577 = vmatpush1.bf16.msra.mxu0 %v1629
    %2578 = vmatprep.mubr.bf16.mxu0 %v2496
    %2579 = vmatmul.mubr.bf16.gmra.mrb[0].mxu0 %v2495
    %v2580 = vpop.f32.mrb[0].mxu0
    %v2581 = vadd.f32 0.0, %v2580
    %v2582 = vpop.f32.mrb[0].mxu0
    %v2583 = vadd.f32 0.0, %v2582
    %v2584 = vpop.f32.mrb[0].mxu0
    %v2585 = vpop.f32.mrb[0].mxu0
    %2586 = vdwg.mxu0
    %v2587 = vadd.f32 %v2501, %v2540
    %v2588 = vadd.f32 %v2502, %v2542
    %v2589 = vadd.f32 %v2503, %v2581
    %v2590 = vadd.f32 %v2504, %v2583
    %v2591 = vxor.u32 %v2587, 2147483648
    %v2592 = vmul.f32 %v2591, 1.442695
    %v2593 = vpow.pop %v2592
    %v2594 = vadd.f32 %v2593, 1.0
    %v2595 = vrcp.pop %v2594
    %v2596 = vmul.f32 1.0, %v2595
    %v2597 = vxor.u32 %v2588, 2147483648
    %v2598 = vmul.f32 %v2597, 1.442695
    %v2599 = vpow.pop %v2598
    %v2600 = vadd.f32 %v2599, 1.0
    %v2601 = vrcp.pop %v2600
    %v2602 = vmul.f32 1.0, %v2601
    %v2603 = vtanh.pop %v2589
    %v2604 = vxor.u32 %v2590, 2147483648
    %v2605 = vmul.f32 %v2604, 1.442695
    %v2606 = vpow.pop %v2605
    %v2607 = vadd.f32 %v2606, 1.0
    %v2608 = vrcp.pop %v2607
    %v2609 = vmul.f32 1.0, %v2608
    %v2610 = vmul.f32 %v2602, %v2492
    %v2611 = vmul.f32 %v2596, %v2603
    %v2612 = vadd.f32 %v2610, %v2611
    %v2613 = vtanh.pop %v2612
    %v2614 = vmul.f32 %v2609, %v2613
    %v2615 = vld [vmem:[#allocation10 + $0x30] sm:$0xff]
    %v2616 = vsub.f32 %v2612, %v2492
    %v2617 = vmul.f32 %v2615, %v2616
    %v2618 = vadd.f32 %v2492, %v2617
    %2619 = vst [vmem:[#allocation6] sm:$0xff] %v2618
    %v2620 = vsub.f32 %v2614, %v2491
    %v2621 = vmul.f32 %v2615, %v2620
    %v2622 = vadd.f32 %v2491, %v2621
    %2623 = vst [vmem:[#allocation5] sm:$0xff] %v2622
    %v2624 = vmul.f32 %v2615, %v2614
    %2625 = vst [vmem:[#allocation4 + $0x30] sm:$0xff] %v2624
    %v2626 = vld [vmem:[#allocation5] sm:$0xff]
    %v2627 = vld [vmem:[#allocation6] sm:$0xff]
    %v2628 = vmul.f32 %v2626, %v97
    %v2629 = vmul.f32 %v2626, %v102
    %v2630 = vpack.c.bf16 %v2628, %v2628
    %v2631 = vpack.c.bf16 %v2629, %v2629
    %v2632 = vld [vmem:[#allocation3 + $0xe0] sm:$0xff]
    %v2633 = vld [vmem:[#allocation3 + $0xe8] sm:$0xff]
    %v2634 = vld [vmem:[#allocation3 + $0xf0] sm:$0xff]
    %v2635 = vld [vmem:[#allocation3 + $0xf8] sm:$0xff]
    %v2636 = vadd.f32 %v2632, %v1355
    %v2637 = vadd.f32 %v2633, %v1356
    %v2638 = vadd.f32 %v2634, %v1357
    %v2639 = vadd.f32 %v2635, %v1358
    %2640 = vmatprep.subr.bf16.mxu0 %v1568
    %2641 = vmatpush1.bf16.msra.mxu0 %v1567
    %2642 = vmatprep.subr.bf16.mxu0 %v1572
    %2643 = vmatpush1.bf16.msra.mxu0 %v1571
    %2644 = vmatprep.subr.bf16.mxu0 %v1576
    %2645 = vmatpush1.bf16.msra.mxu0 %v1575
    %2646 = vmatprep.subr.bf16.mxu0 %v1580
    %2647 = vmatpush1.bf16.msra.mxu0 %v1579
    %2648 = vmatprep.subr.bf16.mxu0 %v1584
    %2649 = vmatpush1.bf16.msra.mxu0 %v1583
    %2650 = vmatprep.subr.bf16.mxu0 %v1588
    %2651 = vmatpush1.bf16.msra.mxu0 %v1587
    %2652 = vmatprep.subr.bf16.mxu0 %v1592
    %2653 = vmatpush1.bf16.msra.mxu0 %v1591
    %2654 = vmatprep.subr.bf16.mxu0 %v1596
    %2655 = vmatpush1.bf16.msra.mxu0 %v1595
    %2656 = vmatprep.subr.bf16.mxu0 %v1600
    %2657 = vmatpush1.bf16.msra.mxu0 %v1599
    %2658 = vmatprep.subr.bf16.mxu0 %v1604
    %2659 = vmatpush1.bf16.msra.mxu0 %v1603
    %2660 = vmatprep.subr.bf16.mxu0 %v1608
    %2661 = vmatpush1.bf16.msra.mxu0 %v1607
    %2662 = vmatprep.subr.bf16.mxu0 %v1612
    %2663 = vmatpush1.bf16.msra.mxu0 %v1611
    %2664 = vmatprep.subr.bf16.mxu0 %v1616
    %2665 = vmatpush1.bf16.msra.mxu0 %v1615
    %2666 = vmatprep.subr.bf16.mxu0 %v1620
    %2667 = vmatpush1.bf16.msra.mxu0 %v1619
    %2668 = vmatprep.subr.bf16.mxu0 %v1624
    %2669 = vmatpush1.bf16.msra.mxu0 %v1623
    %2670 = vmatprep.subr.bf16.mxu0 %v1628
    %2671 = vmatpush1.bf16.msra.mxu0 %v1627
    %2672 = vmatprep.mubr.bf16.mxu0 %v2631
    %2673 = vmatmul.mubr.bf16.gmra.mrb[0].mxu0 %v2630
    %v2674 = vpop.f32.mrb[0].mxu0
    %v2675 = vadd.f32 0.0, %v2674
    %v2676 = vpop.f32.mrb[0].mxu0
    %v2677 = vadd.f32 0.0, %v2676
    %v2678 = vpop.f32.mrb[0].mxu0
    %v2679 = vpop.f32.mrb[0].mxu0
    %2680 = vdwg.mxu0
    %2681 = vmatprep.subr.bf16.mxu0 %v1570
    %2682 = vmatpush1.bf16.msra.mxu0 %v1569
    %2683 = vmatprep.subr.bf16.mxu0 %v1574
    %2684 = vmatpush1.bf16.msra.mxu0 %v1573
    %2685 = vmatprep.subr.bf16.mxu0 %v1578
    %2686 = vmatpush1.bf16.msra.mxu0 %v1577
    %2687 = vmatprep.subr.bf16.mxu0 %v1582
    %2688 = vmatpush1.bf16.msra.mxu0 %v1581
    %2689 = vmatprep.subr.bf16.mxu0 %v1586
    %2690 = vmatpush1.bf16.msra.mxu0 %v1585
    %2691 = vmatprep.subr.bf16.mxu0 %v1590
    %2692 = vmatpush1.bf16.msra.mxu0 %v1589
    %2693 = vmatprep.subr.bf16.mxu0 %v1594
    %2694 = vmatpush1.bf16.msra.mxu0 %v1593
    %2695 = vmatprep.subr.bf16.mxu0 %v1598
    %2696 = vmatpush1.bf16.msra.mxu0 %v1597
    %2697 = vmatprep.subr.bf16.mxu0 %v1602
    %2698 = vmatpush1.bf16.msra.mxu0 %v1601
    %2699 = vmatprep.subr.bf16.mxu0 %v1606
    %2700 = vmatpush1.bf16.msra.mxu0 %v1605
    %2701 = vmatprep.subr.bf16.mxu0 %v1610
    %2702 = vmatpush1.bf16.msra.mxu0 %v1609
    %2703 = vmatprep.subr.bf16.mxu0 %v1614
    %2704 = vmatpush1.bf16.msra.mxu0 %v1613
    %2705 = vmatprep.subr.bf16.mxu0 %v1618
    %2706 = vmatpush1.bf16.msra.mxu0 %v1617
    %2707 = vmatprep.subr.bf16.mxu0 %v1622
    %2708 = vmatpush1.bf16.msra.mxu0 %v1621
    %2709 = vmatprep.subr.bf16.mxu0 %v1626
    %2710 = vmatpush1.bf16.msra.mxu0 %v1625
    %2711 = vmatprep.subr.bf16.mxu0 %v1630
    %2712 = vmatpush1.bf16.msra.mxu0 %v1629
    %2713 = vmatprep.mubr.bf16.mxu0 %v2631
    %2714 = vmatmul.mubr.bf16.gmra.mrb[0].mxu0 %v2630
    %v2715 = vpop.f32.mrb[0].mxu0
    %v2716 = vadd.f32 0.0, %v2715
    %v2717 = vpop.f32.mrb[0].mxu0
    %v2718 = vadd.f32 0.0, %v2717
    %v2719 = vpop.f32.mrb[0].mxu0
    %v2720 = vpop.f32.mrb[0].mxu0
    %2721 = vdwg.mxu0
    %v2722 = vadd.f32 %v2636, %v2675
    %v2723 = vadd.f32 %v2637, %v2677
    %v2724 = vadd.f32 %v2638, %v2716
    %v2725 = vadd.f32 %v2639, %v2718
    %v2726 = vxor.u32 %v2722, 2147483648
    %v2727 = vmul.f32 %v2726, 1.442695
    %v2728 = vpow.pop %v2727
    %v2729 = vadd.f32 %v2728, 1.0
    %v2730 = vrcp.pop %v2729
    %v2731 = vmul.f32 1.0, %v2730
    %v2732 = vxor.u32 %v2723, 2147483648
    %v2733 = vmul.f32 %v2732, 1.442695
    %v2734 = vpow.pop %v2733
    %v2735 = vadd.f32 %v2734, 1.0
    %v2736 = vrcp.pop %v2735
    %v2737 = vmul.f32 1.0, %v2736
    %v2738 = vtanh.pop %v2724
    %v2739 = vxor.u32 %v2725, 2147483648
    %v2740 = vmul.f32 %v2739, 1.442695
    %v2741 = vpow.pop %v2740
    %v2742 = vadd.f32 %v2741, 1.0
    %v2743 = vrcp.pop %v2742
    %v2744 = vmul.f32 1.0, %v2743
    %v2745 = vmul.f32 %v2737, %v2627
    %v2746 = vmul.f32 %v2731, %v2738
    %v2747 = vadd.f32 %v2745, %v2746
    %v2748 = vtanh.pop %v2747
    %v2749 = vmul.f32 %v2744, %v2748
    %v2750 = vld [vmem:[#allocation10 + $0x38] sm:$0xff]
    %v2751 = vsub.f32 %v2747, %v2627
    %v2752 = vmul.f32 %v2750, %v2751
    %v2753 = vadd.f32 %v2627, %v2752
    %2754 = vst [vmem:[#allocation6] sm:$0xff] %v2753
    %v2755 = vsub.f32 %v2749, %v2626
    %v2756 = vmul.f32 %v2750, %v2755
    %v2757 = vadd.f32 %v2626, %v2756
    %2758 = vst [vmem:[#allocation5] sm:$0xff] %v2757
    %v2759 = vmul.f32 %v2750, %v2749
    %2760 = vst [vmem:[#allocation4 + $0x38] sm:$0xff] %v2759
    %v2761 = vld [vmem:[#allocation5] sm:$0xff]
    %2762 = vst [vmem:[#allocation17] sm:$0xff] %v2761
    %v2763 = vld [vmem:[#allocation6] sm:$0xff]
    %2764 = vst [vmem:[#allocation19] sm:$0xff] %v2763
    %2765 = vst [vmem:[#allocation2] sm:$0xff] 0.0
    %2766 = vst [vmem:[#allocation2 + $0x8] sm:$0xff] 0.0
    %2767 = vst [vmem:[#allocation2 + $0x10] sm:$0xff] 0.0
    %2768 = vst [vmem:[#allocation2 + $0x18] sm:$0xff] 0.0
    %2769 = vst [vmem:[#allocation2 + $0x20] sm:$0xff] 0.0
    %2770 = vst [vmem:[#allocation2 + $0x28] sm:$0xff] 0.0
    %2771 = vst [vmem:[#allocation2 + $0x30] sm:$0xff] 0.0
    %2772 = vst [vmem:[#allocation2 + $0x38] sm:$0xff] 0.0
    %2773 = vst [vmem:[#allocation2 + $0x40] sm:$0xff] 0.0
    %2774 = vst [vmem:[#allocation2 + $0x48] sm:$0xff] 0.0
    %2775 = vst [vmem:[#allocation2 + $0x50] sm:$0xff] 0.0
    %2776 = vst [vmem:[#allocation2 + $0x58] sm:$0xff] 0.0
    %2777 = vst [vmem:[#allocation2 + $0x60] sm:$0xff] 0.0
    %2778 = vst [vmem:[#allocation2 + $0x68] sm:$0xff] 0.0
    %2779 = vst [vmem:[#allocation2 + $0x70] sm:$0xff] 0.0
    %2780 = vst [vmem:[#allocation2 + $0x78] sm:$0xff] 0.0
    %2781 = vst [vmem:[#allocation2 + $0x80] sm:$0xff] 0.0
    %2782 = vst [vmem:[#allocation2 + $0x88] sm:$0xff] 0.0
    %2783 = vst [vmem:[#allocation2 + $0x90] sm:$0xff] 0.0
    %2784 = vst [vmem:[#allocation2 + $0x98] sm:$0xff] 0.0
    %2785 = vst [vmem:[#allocation2 + $0xa0] sm:$0xff] 0.0
    %2786 = vst [vmem:[#allocation2 + $0xa8] sm:$0xff] 0.0
    %2787 = vst [vmem:[#allocation2 + $0xb0] sm:$0xff] 0.0
    %2788 = vst [vmem:[#allocation2 + $0xb8] sm:$0xff] 0.0
    %2789 = vst [vmem:[#allocation2 + $0xc0] sm:$0xff] 0.0
    %2790 = vst [vmem:[#allocation2 + $0xc8] sm:$0xff] 0.0
    %2791 = vst [vmem:[#allocation2 + $0xd0] sm:$0xff] 0.0
    %2792 = vst [vmem:[#allocation2 + $0xd8] sm:$0xff] 0.0
    %2793 = vst [vmem:[#allocation2 + $0xe0] sm:$0xff] 0.0
    %2794 = vst [vmem:[#allocation2 + $0xe8] sm:$0xff] 0.0
    %2795 = vst [vmem:[#allocation2 + $0xf0] sm:$0xff] 0.0
    %2796 = vst [vmem:[#allocation2 + $0xf8] sm:$0xff] 0.0
    %v2797 = vld [vmem:[#allocation4] sm:$0xff]
    %v2798 = vld [vmem:[#allocation4 + $0x38] sm:$0xff]
    %2799 = vst [vmem:[#allocation2] sm:$0x3] %v2797
    %v2801 = vrot.slane %v2798, 2
    %2803 = vst [vmem:[#allocation2 + $0x8] sm:$0x3] %v2801
    %v2804 = vrot.slane %v2798, 6
    %2806 = vst [vmem:[#allocation2 + $0x10] sm:$0xc] %v2804
    %2807 = vst [vmem:[#allocation2 + $0x18] sm:$0xc] %v2797
    %v2808 = vld [vmem:[#allocation4 + $0x8] sm:$0xff]
    %v2809 = vld [vmem:[#allocation4 + $0x30] sm:$0xff]
    %2810 = vst [vmem:[#allocation2 + $0x20] sm:$0x3] %v2808
    %v2812 = vrot.slane %v2809, 2
    %2814 = vst [vmem:[#allocation2 + $0x28] sm:$0x3] %v2812
    %v2815 = vrot.slane %v2809, 6
    %2817 = vst [vmem:[#allocation2 + $0x30] sm:$0xc] %v2815
    %2818 = vst [vmem:[#allocation2 + $0x38] sm:$0xc] %v2808
    %v2819 = vld [vmem:[#allocation4 + $0x10] sm:$0xff]
    %v2820 = vld [vmem:[#allocation4 + $0x28] sm:$0xff]
    %2821 = vst [vmem:[#allocation2 + $0x40] sm:$0x3] %v2819
    %v2823 = vrot.slane %v2820, 2
    %2825 = vst [vmem:[#allocation2 + $0x48] sm:$0x3] %v2823
    %v2826 = vrot.slane %v2820, 6
    %2828 = vst [vmem:[#allocation2 + $0x50] sm:$0xc] %v2826
    %2829 = vst [vmem:[#allocation2 + $0x58] sm:$0xc] %v2819
    %v2830 = vld [vmem:[#allocation4 + $0x18] sm:$0xff]
    %v2831 = vld [vmem:[#allocation4 + $0x20] sm:$0xff]
    %2832 = vst [vmem:[#allocation2 + $0x60] sm:$0x3] %v2830
    %v2834 = vrot.slane %v2831, 2
    %2836 = vst [vmem:[#allocation2 + $0x68] sm:$0x3] %v2834
    %v2837 = vrot.slane %v2831, 6
    %2839 = vst [vmem:[#allocation2 + $0x70] sm:$0xc] %v2837
    %2840 = vst [vmem:[#allocation2 + $0x78] sm:$0xc] %v2830
    %v2841 = vld [vmem:[#allocation4 + $0x20] sm:$0xff]
    %v2842 = vld [vmem:[#allocation4 + $0x18] sm:$0xff]
    %2843 = vst [vmem:[#allocation2 + $0x80] sm:$0x3] %v2841
    %v2845 = vrot.slane %v2842, 2
    %2847 = vst [vmem:[#allocation2 + $0x88] sm:$0x3] %v2845
    %v2848 = vrot.slane %v2842, 6
    %2850 = vst [vmem:[#allocation2 + $0x90] sm:$0xc] %v2848
    %2851 = vst [vmem:[#allocation2 + $0x98] sm:$0xc] %v2841
    %v2852 = vld [vmem:[#allocation4 + $0x28] sm:$0xff]
    %v2853 = vld [vmem:[#allocation4 + $0x10] sm:$0xff]
    %2854 = vst [vmem:[#allocation2 + $0xa0] sm:$0x3] %v2852
    %v2856 = vrot.slane %v2853, 2
    %2858 = vst [vmem:[#allocation2 + $0xa8] sm:$0x3] %v2856
    %v2859 = vrot.slane %v2853, 6
    %2861 = vst [vmem:[#allocation2 + $0xb0] sm:$0xc] %v2859
    %2862 = vst [vmem:[#allocation2 + $0xb8] sm:$0xc] %v2852
    %v2863 = vld [vmem:[#allocation4 + $0x30] sm:$0xff]
    %v2864 = vld [vmem:[#allocation4 + $0x8] sm:$0xff]
    %2865 = vst [vmem:[#allocation2 + $0xc0] sm:$0x3] %v2863
    %v2867 = vrot.slane %v2864, 2
    %2869 = vst [vmem:[#allocation2 + $0xc8] sm:$0x3] %v2867
    %v2870 = vrot.slane %v2864, 6
    %2872 = vst [vmem:[#allocation2 + $0xd0] sm:$0xc] %v2870
    %2873 = vst [vmem:[#allocation2 + $0xd8] sm:$0xc] %v2863
    %v2874 = vld [vmem:[#allocation4 + $0x38] sm:$0xff]
    %v2875 = vld [vmem:[#allocation4] sm:$0xff]
    %2876 = vst [vmem:[#allocation2 + $0xe0] sm:$0x3] %v2874
    %v2878 = vrot.slane %v2875, 2
    %2880 = vst [vmem:[#allocation2 + $0xe8] sm:$0x3] %v2878
    %v2881 = vrot.slane %v2875, 6
    %2883 = vst [vmem:[#allocation2 + $0xf0] sm:$0xc] %v2881
    %2884 = vst [vmem:[#allocation2 + $0xf8] sm:$0xc] %v2874
    %v2885 = vld [vmem:[#allocation2] sm:$0xff]
    %v2886 = vld [vmem:[#allocation2 + $0x8] sm:$0xff]
    %v2887 = vld [vmem:[#allocation2 + $0x10] sm:$0xff]
    %v2888 = vld [vmem:[#allocation2 + $0x18] sm:$0xff]
    %v2889 = vld [vmem:[#allocation2 + $0x20] sm:$0xff]
    %v2890 = vld [vmem:[#allocation2 + $0x28] sm:$0xff]
    %v2891 = vld [vmem:[#allocation2 + $0x30] sm:$0xff]
    %v2892 = vld [vmem:[#allocation2 + $0x38] sm:$0xff]
    %v2893 = vld [vmem:[#allocation2 + $0x40] sm:$0xff]
    %v2894 = vld [vmem:[#allocation2 + $0x48] sm:$0xff]
    %v2895 = vld [vmem:[#allocation2 + $0x50] sm:$0xff]
    %v2896 = vld [vmem:[#allocation2 + $0x58] sm:$0xff]
    %v2897 = vld [vmem:[#allocation2 + $0x60] sm:$0xff]
    %v2898 = vld [vmem:[#allocation2 + $0x68] sm:$0xff]
    %v2899 = vld [vmem:[#allocation2 + $0x70] sm:$0xff]
    %v2900 = vld [vmem:[#allocation2 + $0x78] sm:$0xff]
    %v2901 = vld [vmem:[#allocation2 + $0x80] sm:$0xff]
    %v2902 = vld [vmem:[#allocation2 + $0x88] sm:$0xff]
    %v2903 = vld [vmem:[#allocation2 + $0x90] sm:$0xff]
    %v2904 = vld [vmem:[#allocation2 + $0x98] sm:$0xff]
    %v2905 = vld [vmem:[#allocation2 + $0xa0] sm:$0xff]
    %v2906 = vld [vmem:[#allocation2 + $0xa8] sm:$0xff]
    %v2907 = vld [vmem:[#allocation2 + $0xb0] sm:$0xff]
    %v2908 = vld [vmem:[#allocation2 + $0xb8] sm:$0xff]
    %v2909 = vld [vmem:[#allocation2 + $0xc0] sm:$0xff]
    %v2910 = vld [vmem:[#allocation2 + $0xc8] sm:$0xff]
    %v2911 = vld [vmem:[#allocation2 + $0xd0] sm:$0xff]
    %v2912 = vld [vmem:[#allocation2 + $0xd8] sm:$0xff]
    %v2913 = vld [vmem:[#allocation2 + $0xe0] sm:$0xff]
    %v2914 = vld [vmem:[#allocation2 + $0xe8] sm:$0xff]
    %v2915 = vld [vmem:[#allocation2 + $0xf0] sm:$0xff]
    %v2916 = vld [vmem:[#allocation2 + $0xf8] sm:$0xff]
    %v2917 = vpack.c.bf16 %v2889, %v2885
    %v2918 = vpack.c.bf16 %v2890, %v2886
    %v2919 = vpack.c.bf16 %v2891, %v2887
    %v2920 = vpack.c.bf16 %v2892, %v2888
    %v2921 = vpack.c.bf16 %v2897, %v2893
    %v2922 = vpack.c.bf16 %v2898, %v2894
    %v2923 = vpack.c.bf16 %v2899, %v2895
    %v2924 = vpack.c.bf16 %v2900, %v2896
    %v2925 = vpack.c.bf16 %v2905, %v2901
    %v2926 = vpack.c.bf16 %v2906, %v2902
    %v2927 = vpack.c.bf16 %v2907, %v2903
    %v2928 = vpack.c.bf16 %v2908, %v2904
    %v2929 = vpack.c.bf16 %v2913, %v2909
    %v2930 = vpack.c.bf16 %v2914, %v2910
    %v2931 = vpack.c.bf16 %v2915, %v2911
    %v2932 = vpack.c.bf16 %v2916, %v2912
    %s2933 = scalar_lea.vmem [#allocation12], 1024
    %v2934 = vld [vmem:[%s2933] sm:$0xff]
    %v2935 = vld [vmem:[%s2933 + $0x8] sm:$0xff]
    %v2936 = vld [vmem:[%s2933 + $0x10] sm:$0xff]
    %v2937 = vld [vmem:[%s2933 + $0x18] sm:$0xff]
    %v2938 = vld [vmem:[%s2933 + $0x20] sm:$0xff]
    %v2939 = vld [vmem:[%s2933 + $0x28] sm:$0xff]
    %v2940 = vld [vmem:[%s2933 + $0x30] sm:$0xff]
    %v2941 = vld [vmem:[%s2933 + $0x38] sm:$0xff]
    %v2942 = vld [vmem:[%s2933 + $0x40] sm:$0xff]
    %v2943 = vld [vmem:[%s2933 + $0x48] sm:$0xff]
    %v2944 = vld [vmem:[%s2933 + $0x50] sm:$0xff]
    %v2945 = vld [vmem:[%s2933 + $0x58] sm:$0xff]
    %v2946 = vld [vmem:[%s2933 + $0x60] sm:$0xff]
    %v2947 = vld [vmem:[%s2933 + $0x68] sm:$0xff]
    %v2948 = vld [vmem:[%s2933 + $0x70] sm:$0xff]
    %v2949 = vld [vmem:[%s2933 + $0x78] sm:$0xff]
    %v2950 = vld [vmem:[%s2933 + $0x80] sm:$0xff]
    %v2951 = vld [vmem:[%s2933 + $0x88] sm:$0xff]
    %v2952 = vld [vmem:[%s2933 + $0x90] sm:$0xff]
    %v2953 = vld [vmem:[%s2933 + $0x98] sm:$0xff]
    %v2954 = vld [vmem:[%s2933 + $0xa0] sm:$0xff]
    %v2955 = vld [vmem:[%s2933 + $0xa8] sm:$0xff]
    %v2956 = vld [vmem:[%s2933 + $0xb0] sm:$0xff]
    %v2957 = vld [vmem:[%s2933 + $0xb8] sm:$0xff]
    %v2958 = vld [vmem:[%s2933 + $0xc0] sm:$0xff]
    %v2959 = vld [vmem:[%s2933 + $0xc8] sm:$0xff]
    %v2960 = vld [vmem:[%s2933 + $0xd0] sm:$0xff]
    %v2961 = vld [vmem:[%s2933 + $0xd8] sm:$0xff]
    %v2962 = vld [vmem:[%s2933 + $0xe0] sm:$0xff]
    %v2963 = vld [vmem:[%s2933 + $0xe8] sm:$0xff]
    %v2964 = vld [vmem:[%s2933 + $0xf0] sm:$0xff]
    %v2965 = vld [vmem:[%s2933 + $0xf8] sm:$0xff]
    %v2966 = vld [vmem:[%s2933 + $0x100] sm:$0xff]
    %v2967 = vld [vmem:[%s2933 + $0x108] sm:$0xff]
    %v2968 = vld [vmem:[%s2933 + $0x110] sm:$0xff]
    %v2969 = vld [vmem:[%s2933 + $0x118] sm:$0xff]
    %v2970 = vld [vmem:[%s2933 + $0x120] sm:$0xff]
    %v2971 = vld [vmem:[%s2933 + $0x128] sm:$0xff]
    %v2972 = vld [vmem:[%s2933 + $0x130] sm:$0xff]
    %v2973 = vld [vmem:[%s2933 + $0x138] sm:$0xff]
    %v2974 = vld [vmem:[%s2933 + $0x140] sm:$0xff]
    %v2975 = vld [vmem:[%s2933 + $0x148] sm:$0xff]
    %v2976 = vld [vmem:[%s2933 + $0x150] sm:$0xff]
    %v2977 = vld [vmem:[%s2933 + $0x158] sm:$0xff]
    %v2978 = vld [vmem:[%s2933 + $0x160] sm:$0xff]
    %v2979 = vld [vmem:[%s2933 + $0x168] sm:$0xff]
    %v2980 = vld [vmem:[%s2933 + $0x170] sm:$0xff]
    %v2981 = vld [vmem:[%s2933 + $0x178] sm:$0xff]
    %v2982 = vld [vmem:[%s2933 + $0x180] sm:$0xff]
    %v2983 = vld [vmem:[%s2933 + $0x188] sm:$0xff]
    %v2984 = vld [vmem:[%s2933 + $0x190] sm:$0xff]
    %v2985 = vld [vmem:[%s2933 + $0x198] sm:$0xff]
    %v2986 = vld [vmem:[%s2933 + $0x1a0] sm:$0xff]
    %v2987 = vld [vmem:[%s2933 + $0x1a8] sm:$0xff]
    %v2988 = vld [vmem:[%s2933 + $0x1b0] sm:$0xff]
    %v2989 = vld [vmem:[%s2933 + $0x1b8] sm:$0xff]
    %v2990 = vld [vmem:[%s2933 + $0x1c0] sm:$0xff]
    %v2991 = vld [vmem:[%s2933 + $0x1c8] sm:$0xff]
    %v2992 = vld [vmem:[%s2933 + $0x1d0] sm:$0xff]
    %v2993 = vld [vmem:[%s2933 + $0x1d8] sm:$0xff]
    %v2994 = vld [vmem:[%s2933 + $0x1e0] sm:$0xff]
    %v2995 = vld [vmem:[%s2933 + $0x1e8] sm:$0xff]
    %v2996 = vld [vmem:[%s2933 + $0x1f0] sm:$0xff]
    %v2997 = vld [vmem:[%s2933 + $0x1f8] sm:$0xff]
    %v2998 = vld [vmem:[%s2933 + $0x200] sm:$0xff]
    %v2999 = vld [vmem:[%s2933 + $0x208] sm:$0xff]
    %v3000 = vld [vmem:[%s2933 + $0x210] sm:$0xff]
    %v3001 = vld [vmem:[%s2933 + $0x218] sm:$0xff]
    %v3002 = vld [vmem:[%s2933 + $0x220] sm:$0xff]
    %v3003 = vld [vmem:[%s2933 + $0x228] sm:$0xff]
    %v3004 = vld [vmem:[%s2933 + $0x230] sm:$0xff]
    %v3005 = vld [vmem:[%s2933 + $0x238] sm:$0xff]
    %v3006 = vld [vmem:[%s2933 + $0x240] sm:$0xff]
    %v3007 = vld [vmem:[%s2933 + $0x248] sm:$0xff]
    %v3008 = vld [vmem:[%s2933 + $0x250] sm:$0xff]
    %v3009 = vld [vmem:[%s2933 + $0x258] sm:$0xff]
    %v3010 = vld [vmem:[%s2933 + $0x260] sm:$0xff]
    %v3011 = vld [vmem:[%s2933 + $0x268] sm:$0xff]
    %v3012 = vld [vmem:[%s2933 + $0x270] sm:$0xff]
    %v3013 = vld [vmem:[%s2933 + $0x278] sm:$0xff]
    %v3014 = vld [vmem:[%s2933 + $0x280] sm:$0xff]
    %v3015 = vld [vmem:[%s2933 + $0x288] sm:$0xff]
    %v3016 = vld [vmem:[%s2933 + $0x290] sm:$0xff]
    %v3017 = vld [vmem:[%s2933 + $0x298] sm:$0xff]
    %v3018 = vld [vmem:[%s2933 + $0x2a0] sm:$0xff]
    %v3019 = vld [vmem:[%s2933 + $0x2a8] sm:$0xff]
    %v3020 = vld [vmem:[%s2933 + $0x2b0] sm:$0xff]
    %v3021 = vld [vmem:[%s2933 + $0x2b8] sm:$0xff]
    %v3022 = vld [vmem:[%s2933 + $0x2c0] sm:$0xff]
    %v3023 = vld [vmem:[%s2933 + $0x2c8] sm:$0xff]
    %v3024 = vld [vmem:[%s2933 + $0x2d0] sm:$0xff]
    %v3025 = vld [vmem:[%s2933 + $0x2d8] sm:$0xff]
    %v3026 = vld [vmem:[%s2933 + $0x2e0] sm:$0xff]
    %v3027 = vld [vmem:[%s2933 + $0x2e8] sm:$0xff]
    %v3028 = vld [vmem:[%s2933 + $0x2f0] sm:$0xff]
    %v3029 = vld [vmem:[%s2933 + $0x2f8] sm:$0xff]
    %v3030 = vld [vmem:[%s2933 + $0x300] sm:$0xff]
    %v3031 = vld [vmem:[%s2933 + $0x308] sm:$0xff]
    %v3032 = vld [vmem:[%s2933 + $0x310] sm:$0xff]
    %v3033 = vld [vmem:[%s2933 + $0x318] sm:$0xff]
    %v3034 = vld [vmem:[%s2933 + $0x320] sm:$0xff]
    %v3035 = vld [vmem:[%s2933 + $0x328] sm:$0xff]
    %v3036 = vld [vmem:[%s2933 + $0x330] sm:$0xff]
    %v3037 = vld [vmem:[%s2933 + $0x338] sm:$0xff]
    %v3038 = vld [vmem:[%s2933 + $0x340] sm:$0xff]
    %v3039 = vld [vmem:[%s2933 + $0x348] sm:$0xff]
    %v3040 = vld [vmem:[%s2933 + $0x350] sm:$0xff]
    %v3041 = vld [vmem:[%s2933 + $0x358] sm:$0xff]
    %v3042 = vld [vmem:[%s2933 + $0x360] sm:$0xff]
    %v3043 = vld [vmem:[%s2933 + $0x368] sm:$0xff]
    %v3044 = vld [vmem:[%s2933 + $0x370] sm:$0xff]
    %v3045 = vld [vmem:[%s2933 + $0x378] sm:$0xff]
    %v3046 = vld [vmem:[%s2933 + $0x380] sm:$0xff]
    %v3047 = vld [vmem:[%s2933 + $0x388] sm:$0xff]
    %v3048 = vld [vmem:[%s2933 + $0x390] sm:$0xff]
    %v3049 = vld [vmem:[%s2933 + $0x398] sm:$0xff]
    %v3050 = vld [vmem:[%s2933 + $0x3a0] sm:$0xff]
    %v3051 = vld [vmem:[%s2933 + $0x3a8] sm:$0xff]
    %v3052 = vld [vmem:[%s2933 + $0x3b0] sm:$0xff]
    %v3053 = vld [vmem:[%s2933 + $0x3b8] sm:$0xff]
    %v3054 = vld [vmem:[%s2933 + $0x3c0] sm:$0xff]
    %v3055 = vld [vmem:[%s2933 + $0x3c8] sm:$0xff]
    %v3056 = vld [vmem:[%s2933 + $0x3d0] sm:$0xff]
    %v3057 = vld [vmem:[%s2933 + $0x3d8] sm:$0xff]
    %v3058 = vld [vmem:[%s2933 + $0x3e0] sm:$0xff]
    %v3059 = vld [vmem:[%s2933 + $0x3e8] sm:$0xff]
    %v3060 = vld [vmem:[%s2933 + $0x3f0] sm:$0xff]
    %v3061 = vld [vmem:[%s2933 + $0x3f8] sm:$0xff]
    %v3190 = vunpack.c.l.b16 %v2934
    %v3191 = vunpack.c.h.b16 %v2934
    %v3192 = vunpack.c.l.b16 %v2935
    %v3193 = vunpack.c.h.b16 %v2935
    %v3194 = vunpack.c.l.b16 %v2936
    %v3195 = vunpack.c.h.b16 %v2936
    %v3196 = vunpack.c.l.b16 %v2937
    %v3197 = vunpack.c.h.b16 %v2937
    %v3198 = vunpack.c.l.b16 %v2938
    %v3199 = vunpack.c.h.b16 %v2938
    %v3200 = vunpack.c.l.b16 %v2939
    %v3201 = vunpack.c.h.b16 %v2939
    %v3202 = vunpack.c.l.b16 %v2940
    %v3203 = vunpack.c.h.b16 %v2940
    %v3204 = vunpack.c.l.b16 %v2941
    %v3205 = vunpack.c.h.b16 %v2941
    %v3206 = vunpack.c.l.b16 %v2942
    %v3207 = vunpack.c.h.b16 %v2942
    %v3208 = vunpack.c.l.b16 %v2943
    %v3209 = vunpack.c.h.b16 %v2943
    %v3210 = vunpack.c.l.b16 %v2944
    %v3211 = vunpack.c.h.b16 %v2944
    %v3212 = vunpack.c.l.b16 %v2945
    %v3213 = vunpack.c.h.b16 %v2945
    %v3214 = vunpack.c.l.b16 %v2946
    %v3215 = vunpack.c.h.b16 %v2946
    %v3216 = vunpack.c.l.b16 %v2947
    %v3217 = vunpack.c.h.b16 %v2947
    %v3218 = vunpack.c.l.b16 %v2948
    %v3219 = vunpack.c.h.b16 %v2948
    %v3220 = vunpack.c.l.b16 %v2949
    %v3221 = vunpack.c.h.b16 %v2949
    %v3222 = vunpack.c.l.b16 %v2950
    %v3223 = vunpack.c.h.b16 %v2950
    %v3224 = vunpack.c.l.b16 %v2951
    %v3225 = vunpack.c.h.b16 %v2951
    %v3226 = vunpack.c.l.b16 %v2952
    %v3227 = vunpack.c.h.b16 %v2952
    %v3228 = vunpack.c.l.b16 %v2953
    %v3229 = vunpack.c.h.b16 %v2953
    %v3230 = vunpack.c.l.b16 %v2954
    %v3231 = vunpack.c.h.b16 %v2954
    %v3232 = vunpack.c.l.b16 %v2955
    %v3233 = vunpack.c.h.b16 %v2955
    %v3234 = vunpack.c.l.b16 %v2956
    %v3235 = vunpack.c.h.b16 %v2956
    %v3236 = vunpack.c.l.b16 %v2957
    %v3237 = vunpack.c.h.b16 %v2957
    %v3238 = vunpack.c.l.b16 %v2958
    %v3239 = vunpack.c.h.b16 %v2958
    %v3240 = vunpack.c.l.b16 %v2959
    %v3241 = vunpack.c.h.b16 %v2959
    %v3242 = vunpack.c.l.b16 %v2960
    %v3243 = vunpack.c.h.b16 %v2960
    %v3244 = vunpack.c.l.b16 %v2961
    %v3245 = vunpack.c.h.b16 %v2961
    %v3246 = vunpack.c.l.b16 %v2962
    %v3247 = vunpack.c.h.b16 %v2962
    %v3248 = vunpack.c.l.b16 %v2963
    %v3249 = vunpack.c.h.b16 %v2963
    %v3250 = vunpack.c.l.b16 %v2964
    %v3251 = vunpack.c.h.b16 %v2964
    %v3252 = vunpack.c.l.b16 %v2965
    %v3253 = vunpack.c.h.b16 %v2965
    %v3254 = vunpack.c.l.b16 %v2966
    %v3255 = vunpack.c.h.b16 %v2966
    %v3256 = vunpack.c.l.b16 %v2967
    %v3257 = vunpack.c.h.b16 %v2967
    %v3258 = vunpack.c.l.b16 %v2968
    %v3259 = vunpack.c.h.b16 %v2968
    %v3260 = vunpack.c.l.b16 %v2969
    %v3261 = vunpack.c.h.b16 %v2969
    %v3262 = vunpack.c.l.b16 %v2970
    %v3263 = vunpack.c.h.b16 %v2970
    %v3264 = vunpack.c.l.b16 %v2971
    %v3265 = vunpack.c.h.b16 %v2971
    %v3266 = vunpack.c.l.b16 %v2972
    %v3267 = vunpack.c.h.b16 %v2972
    %v3268 = vunpack.c.l.b16 %v2973
    %v3269 = vunpack.c.h.b16 %v2973
    %v3270 = vunpack.c.l.b16 %v2974
    %v3271 = vunpack.c.h.b16 %v2974
    %v3272 = vunpack.c.l.b16 %v2975
    %v3273 = vunpack.c.h.b16 %v2975
    %v3274 = vunpack.c.l.b16 %v2976
    %v3275 = vunpack.c.h.b16 %v2976
    %v3276 = vunpack.c.l.b16 %v2977
    %v3277 = vunpack.c.h.b16 %v2977
    %v3278 = vunpack.c.l.b16 %v2978
    %v3279 = vunpack.c.h.b16 %v2978
    %v3280 = vunpack.c.l.b16 %v2979
    %v3281 = vunpack.c.h.b16 %v2979
    %v3282 = vunpack.c.l.b16 %v2980
    %v3283 = vunpack.c.h.b16 %v2980
    %v3284 = vunpack.c.l.b16 %v2981
    %v3285 = vunpack.c.h.b16 %v2981
    %v3286 = vunpack.c.l.b16 %v2982
    %v3287 = vunpack.c.h.b16 %v2982
    %v3288 = vunpack.c.l.b16 %v2983
    %v3289 = vunpack.c.h.b16 %v2983
    %v3290 = vunpack.c.l.b16 %v2984
    %v3291 = vunpack.c.h.b16 %v2984
    %v3292 = vunpack.c.l.b16 %v2985
    %v3293 = vunpack.c.h.b16 %v2985
    %v3294 = vunpack.c.l.b16 %v2986
    %v3295 = vunpack.c.h.b16 %v2986
    %v3296 = vunpack.c.l.b16 %v2987
    %v3297 = vunpack.c.h.b16 %v2987
    %v3298 = vunpack.c.l.b16 %v2988
    %v3299 = vunpack.c.h.b16 %v2988
    %v3300 = vunpack.c.l.b16 %v2989
    %v3301 = vunpack.c.h.b16 %v2989
    %v3302 = vunpack.c.l.b16 %v2990
    %v3303 = vunpack.c.h.b16 %v2990
    %v3304 = vunpack.c.l.b16 %v2991
    %v3305 = vunpack.c.h.b16 %v2991
    %v3306 = vunpack.c.l.b16 %v2992
    %v3307 = vunpack.c.h.b16 %v2992
    %v3308 = vunpack.c.l.b16 %v2993
    %v3309 = vunpack.c.h.b16 %v2993
    %v3310 = vunpack.c.l.b16 %v2994
    %v3311 = vunpack.c.h.b16 %v2994
    %v3312 = vunpack.c.l.b16 %v2995
    %v3313 = vunpack.c.h.b16 %v2995
    %v3314 = vunpack.c.l.b16 %v2996
    %v3315 = vunpack.c.h.b16 %v2996
    %v3316 = vunpack.c.l.b16 %v2997
    %v3317 = vunpack.c.h.b16 %v2997
    %v3318 = vunpack.c.l.b16 %v2998
    %v3319 = vunpack.c.h.b16 %v2998
    %v3320 = vunpack.c.l.b16 %v2999
    %v3321 = vunpack.c.h.b16 %v2999
    %v3322 = vunpack.c.l.b16 %v3000
    %v3323 = vunpack.c.h.b16 %v3000
    %v3324 = vunpack.c.l.b16 %v3001
    %v3325 = vunpack.c.h.b16 %v3001
    %v3326 = vunpack.c.l.b16 %v3002
    %v3327 = vunpack.c.h.b16 %v3002
    %v3328 = vunpack.c.l.b16 %v3003
    %v3329 = vunpack.c.h.b16 %v3003
    %v3330 = vunpack.c.l.b16 %v3004
    %v3331 = vunpack.c.h.b16 %v3004
    %v3332 = vunpack.c.l.b16 %v3005
    %v3333 = vunpack.c.h.b16 %v3005
    %v3334 = vunpack.c.l.b16 %v3006
    %v3335 = vunpack.c.h.b16 %v3006
    %v3336 = vunpack.c.l.b16 %v3007
    %v3337 = vunpack.c.h.b16 %v3007
    %v3338 = vunpack.c.l.b16 %v3008
    %v3339 = vunpack.c.h.b16 %v3008
    %v3340 = vunpack.c.l.b16 %v3009
    %v3341 = vunpack.c.h.b16 %v3009
    %v3342 = vunpack.c.l.b16 %v3010
    %v3343 = vunpack.c.h.b16 %v3010
    %v3344 = vunpack.c.l.b16 %v3011
    %v3345 = vunpack.c.h.b16 %v3011
    %v3346 = vunpack.c.l.b16 %v3012
    %v3347 = vunpack.c.h.b16 %v3012
    %v3348 = vunpack.c.l.b16 %v3013
    %v3349 = vunpack.c.h.b16 %v3013
    %v3350 = vunpack.c.l.b16 %v3014
    %v3351 = vunpack.c.h.b16 %v3014
    %v3352 = vunpack.c.l.b16 %v3015
    %v3353 = vunpack.c.h.b16 %v3015
    %v3354 = vunpack.c.l.b16 %v3016
    %v3355 = vunpack.c.h.b16 %v3016
    %v3356 = vunpack.c.l.b16 %v3017
    %v3357 = vunpack.c.h.b16 %v3017
    %v3358 = vunpack.c.l.b16 %v3018
    %v3359 = vunpack.c.h.b16 %v3018
    %v3360 = vunpack.c.l.b16 %v3019
    %v3361 = vunpack.c.h.b16 %v3019
    %v3362 = vunpack.c.l.b16 %v3020
    %v3363 = vunpack.c.h.b16 %v3020
    %v3364 = vunpack.c.l.b16 %v3021
    %v3365 = vunpack.c.h.b16 %v3021
    %v3366 = vunpack.c.l.b16 %v3022
    %v3367 = vunpack.c.h.b16 %v3022
    %v3368 = vunpack.c.l.b16 %v3023
    %v3369 = vunpack.c.h.b16 %v3023
    %v3370 = vunpack.c.l.b16 %v3024
    %v3371 = vunpack.c.h.b16 %v3024
    %v3372 = vunpack.c.l.b16 %v3025
    %v3373 = vunpack.c.h.b16 %v3025
    %v3374 = vunpack.c.l.b16 %v3026
    %v3375 = vunpack.c.h.b16 %v3026
    %v3376 = vunpack.c.l.b16 %v3027
    %v3377 = vunpack.c.h.b16 %v3027
    %v3378 = vunpack.c.l.b16 %v3028
    %v3379 = vunpack.c.h.b16 %v3028
    %v3380 = vunpack.c.l.b16 %v3029
    %v3381 = vunpack.c.h.b16 %v3029
    %v3382 = vunpack.c.l.b16 %v3030
    %v3383 = vunpack.c.h.b16 %v3030
    %v3384 = vunpack.c.l.b16 %v3031
    %v3385 = vunpack.c.h.b16 %v3031
    %v3386 = vunpack.c.l.b16 %v3032
    %v3387 = vunpack.c.h.b16 %v3032
    %v3388 = vunpack.c.l.b16 %v3033
    %v3389 = vunpack.c.h.b16 %v3033
    %v3390 = vunpack.c.l.b16 %v3034
    %v3391 = vunpack.c.h.b16 %v3034
    %v3392 = vunpack.c.l.b16 %v3035
    %v3393 = vunpack.c.h.b16 %v3035
    %v3394 = vunpack.c.l.b16 %v3036
    %v3395 = vunpack.c.h.b16 %v3036
    %v3396 = vunpack.c.l.b16 %v3037
    %v3397 = vunpack.c.h.b16 %v3037
    %v3398 = vunpack.c.l.b16 %v3038
    %v3399 = vunpack.c.h.b16 %v3038
    %v3400 = vunpack.c.l.b16 %v3039
    %v3401 = vunpack.c.h.b16 %v3039
    %v3402 = vunpack.c.l.b16 %v3040
    %v3403 = vunpack.c.h.b16 %v3040
    %v3404 = vunpack.c.l.b16 %v3041
    %v3405 = vunpack.c.h.b16 %v3041
    %v3406 = vunpack.c.l.b16 %v3042
    %v3407 = vunpack.c.h.b16 %v3042
    %v3408 = vunpack.c.l.b16 %v3043
    %v3409 = vunpack.c.h.b16 %v3043
    %v3410 = vunpack.c.l.b16 %v3044
    %v3411 = vunpack.c.h.b16 %v3044
    %v3412 = vunpack.c.l.b16 %v3045
    %v3413 = vunpack.c.h.b16 %v3045
    %v3414 = vunpack.c.l.b16 %v3046
    %v3415 = vunpack.c.h.b16 %v3046
    %v3416 = vunpack.c.l.b16 %v3047
    %v3417 = vunpack.c.h.b16 %v3047
    %v3418 = vunpack.c.l.b16 %v3048
    %v3419 = vunpack.c.h.b16 %v3048
    %v3420 = vunpack.c.l.b16 %v3049
    %v3421 = vunpack.c.h.b16 %v3049
    %v3422 = vunpack.c.l.b16 %v3050
    %v3423 = vunpack.c.h.b16 %v3050
    %v3424 = vunpack.c.l.b16 %v3051
    %v3425 = vunpack.c.h.b16 %v3051
    %v3426 = vunpack.c.l.b16 %v3052
    %v3427 = vunpack.c.h.b16 %v3052
    %v3428 = vunpack.c.l.b16 %v3053
    %v3429 = vunpack.c.h.b16 %v3053
    %v3430 = vunpack.c.l.b16 %v3054
    %v3431 = vunpack.c.h.b16 %v3054
    %v3432 = vunpack.c.l.b16 %v3055
    %v3433 = vunpack.c.h.b16 %v3055
    %v3434 = vunpack.c.l.b16 %v3056
    %v3435 = vunpack.c.h.b16 %v3056
    %v3436 = vunpack.c.l.b16 %v3057
    %v3437 = vunpack.c.h.b16 %v3057
    %v3438 = vunpack.c.l.b16 %v3058
    %v3439 = vunpack.c.h.b16 %v3058
    %v3440 = vunpack.c.l.b16 %v3059
    %v3441 = vunpack.c.h.b16 %v3059
    %v3442 = vunpack.c.l.b16 %v3060
    %v3443 = vunpack.c.h.b16 %v3060
    %v3444 = vunpack.c.l.b16 %v3061
    %v3445 = vunpack.c.h.b16 %v3061
    %v3446 = vpack.c.b16 %v3194, %v3190
    %v3447 = vpack.c.b16 %v3195, %v3191
    %v3448 = vpack.c.b16 %v3196, %v3192
    %v3449 = vpack.c.b16 %v3197, %v3193
    %v3450 = vpack.c.b16 %v3202, %v3198
    %v3451 = vpack.c.b16 %v3203, %v3199
    %v3452 = vpack.c.b16 %v3204, %v3200
    %v3453 = vpack.c.b16 %v3205, %v3201
    %v3454 = vpack.c.b16 %v3210, %v3206
    %v3455 = vpack.c.b16 %v3211, %v3207
    %v3456 = vpack.c.b16 %v3212, %v3208
    %v3457 = vpack.c.b16 %v3213, %v3209
    %v3458 = vpack.c.b16 %v3218, %v3214
    %v3459 = vpack.c.b16 %v3219, %v3215
    %v3460 = vpack.c.b16 %v3220, %v3216
    %v3461 = vpack.c.b16 %v3221, %v3217
    %v3462 = vpack.c.b16 %v3226, %v3222
    %v3463 = vpack.c.b16 %v3227, %v3223
    %v3464 = vpack.c.b16 %v3228, %v3224
    %v3465 = vpack.c.b16 %v3229, %v3225
    %v3466 = vpack.c.b16 %v3234, %v3230
    %v3467 = vpack.c.b16 %v3235, %v3231
    %v3468 = vpack.c.b16 %v3236, %v3232
    %v3469 = vpack.c.b16 %v3237, %v3233
    %v3470 = vpack.c.b16 %v3242, %v3238
    %v3471 = vpack.c.b16 %v3243, %v3239
    %v3472 = vpack.c.b16 %v3244, %v3240
    %v3473 = vpack.c.b16 %v3245, %v3241
    %v3474 = vpack.c.b16 %v3250, %v3246
    %v3475 = vpack.c.b16 %v3251, %v3247
    %v3476 = vpack.c.b16 %v3252, %v3248
    %v3477 = vpack.c.b16 %v3253, %v3249
    %v3478 = vpack.c.b16 %v3258, %v3254
    %v3479 = vpack.c.b16 %v3259, %v3255
    %v3480 = vpack.c.b16 %v3260, %v3256
    %v3481 = vpack.c.b16 %v3261, %v3257
    %v3482 = vpack.c.b16 %v3266, %v3262
    %v3483 = vpack.c.b16 %v3267, %v3263
    %v3484 = vpack.c.b16 %v3268, %v3264
    %v3485 = vpack.c.b16 %v3269, %v3265
    %v3486 = vpack.c.b16 %v3274, %v3270
    %v3487 = vpack.c.b16 %v3275, %v3271
    %v3488 = vpack.c.b16 %v3276, %v3272
    %v3489 = vpack.c.b16 %v3277, %v3273
    %v3490 = vpack.c.b16 %v3282, %v3278
    %v3491 = vpack.c.b16 %v3283, %v3279
    %v3492 = vpack.c.b16 %v3284, %v3280
    %v3493 = vpack.c.b16 %v3285, %v3281
    %v3494 = vpack.c.b16 %v3290, %v3286
    %v3495 = vpack.c.b16 %v3291, %v3287
    %v3496 = vpack.c.b16 %v3292, %v3288
    %v3497 = vpack.c.b16 %v3293, %v3289
    %v3498 = vpack.c.b16 %v3298, %v3294
    %v3499 = vpack.c.b16 %v3299, %v3295
    %v3500 = vpack.c.b16 %v3300, %v3296
    %v3501 = vpack.c.b16 %v3301, %v3297
    %v3502 = vpack.c.b16 %v3306, %v3302
    %v3503 = vpack.c.b16 %v3307, %v3303
    %v3504 = vpack.c.b16 %v3308, %v3304
    %v3505 = vpack.c.b16 %v3309, %v3305
    %v3506 = vpack.c.b16 %v3314, %v3310
    %v3507 = vpack.c.b16 %v3315, %v3311
    %v3508 = vpack.c.b16 %v3316, %v3312
    %v3509 = vpack.c.b16 %v3317, %v3313
    %v3510 = vpack.c.b16 %v3322, %v3318
    %v3511 = vpack.c.b16 %v3323, %v3319
    %v3512 = vpack.c.b16 %v3324, %v3320
    %v3513 = vpack.c.b16 %v3325, %v3321
    %v3514 = vpack.c.b16 %v3330, %v3326
    %v3515 = vpack.c.b16 %v3331, %v3327
    %v3516 = vpack.c.b16 %v3332, %v3328
    %v3517 = vpack.c.b16 %v3333, %v3329
    %v3518 = vpack.c.b16 %v3338, %v3334
    %v3519 = vpack.c.b16 %v3339, %v3335
    %v3520 = vpack.c.b16 %v3340, %v3336
    %v3521 = vpack.c.b16 %v3341, %v3337
    %v3522 = vpack.c.b16 %v3346, %v3342
    %v3523 = vpack.c.b16 %v3347, %v3343
    %v3524 = vpack.c.b16 %v3348, %v3344
    %v3525 = vpack.c.b16 %v3349, %v3345
    %v3526 = vpack.c.b16 %v3354, %v3350
    %v3527 = vpack.c.b16 %v3355, %v3351
    %v3528 = vpack.c.b16 %v3356, %v3352
    %v3529 = vpack.c.b16 %v3357, %v3353
    %v3530 = vpack.c.b16 %v3362, %v3358
    %v3531 = vpack.c.b16 %v3363, %v3359
    %v3532 = vpack.c.b16 %v3364, %v3360
    %v3533 = vpack.c.b16 %v3365, %v3361
    %v3534 = vpack.c.b16 %v3370, %v3366
    %v3535 = vpack.c.b16 %v3371, %v3367
    %v3536 = vpack.c.b16 %v3372, %v3368
    %v3537 = vpack.c.b16 %v3373, %v3369
    %v3538 = vpack.c.b16 %v3378, %v3374
    %v3539 = vpack.c.b16 %v3379, %v3375
    %v3540 = vpack.c.b16 %v3380, %v3376
    %v3541 = vpack.c.b16 %v3381, %v3377
    %v3542 = vpack.c.b16 %v3386, %v3382
    %v3543 = vpack.c.b16 %v3387, %v3383
    %v3544 = vpack.c.b16 %v3388, %v3384
    %v3545 = vpack.c.b16 %v3389, %v3385
    %v3546 = vpack.c.b16 %v3394, %v3390
    %v3547 = vpack.c.b16 %v3395, %v3391
    %v3548 = vpack.c.b16 %v3396, %v3392
    %v3549 = vpack.c.b16 %v3397, %v3393
    %v3550 = vpack.c.b16 %v3402, %v3398
    %v3551 = vpack.c.b16 %v3403, %v3399
    %v3552 = vpack.c.b16 %v3404, %v3400
    %v3553 = vpack.c.b16 %v3405, %v3401
    %v3554 = vpack.c.b16 %v3410, %v3406
    %v3555 = vpack.c.b16 %v3411, %v3407
    %v3556 = vpack.c.b16 %v3412, %v3408
    %v3557 = vpack.c.b16 %v3413, %v3409
    %v3558 = vpack.c.b16 %v3418, %v3414
    %v3559 = vpack.c.b16 %v3419, %v3415
    %v3560 = vpack.c.b16 %v3420, %v3416
    %v3561 = vpack.c.b16 %v3421, %v3417
    %v3562 = vpack.c.b16 %v3426, %v3422
    %v3563 = vpack.c.b16 %v3427, %v3423
    %v3564 = vpack.c.b16 %v3428, %v3424
    %v3565 = vpack.c.b16 %v3429, %v3425
    %v3566 = vpack.c.b16 %v3434, %v3430
    %v3567 = vpack.c.b16 %v3435, %v3431
    %v3568 = vpack.c.b16 %v3436, %v3432
    %v3569 = vpack.c.b16 %v3437, %v3433
    %v3570 = vpack.c.b16 %v3442, %v3438
    %v3571 = vpack.c.b16 %v3443, %v3439
    %v3572 = vpack.c.b16 %v3444, %v3440
    %v3573 = vpack.c.b16 %v3445, %v3441
    %3702 = vmatprep.subr.bf16.mxu0 %v3447
    %3703 = vmatpush1.bf16.msra.mxu0 %v3446
    %3704 = vmatprep.subr.bf16.mxu0 %v3451
    %3705 = vmatpush1.bf16.msra.mxu0 %v3450
    %3706 = vmatprep.subr.bf16.mxu0 %v3455
    %3707 = vmatpush1.bf16.msra.mxu0 %v3454
    %3708 = vmatprep.subr.bf16.mxu0 %v3459
    %3709 = vmatpush1.bf16.msra.mxu0 %v3458
    %3710 = vmatprep.subr.bf16.mxu0 %v3463
    %3711 = vmatpush1.bf16.msra.mxu0 %v3462
    %3712 = vmatprep.subr.bf16.mxu0 %v3467
    %3713 = vmatpush1.bf16.msra.mxu0 %v3466
    %3714 = vmatprep.subr.bf16.mxu0 %v3471
    %3715 = vmatpush1.bf16.msra.mxu0 %v3470
    %3716 = vmatprep.subr.bf16.mxu0 %v3475
    %3717 = vmatpush1.bf16.msra.mxu0 %v3474
    %3718 = vmatprep.subr.bf16.mxu0 %v3479
    %3719 = vmatpush1.bf16.msra.mxu0 %v3478
    %3720 = vmatprep.subr.bf16.mxu0 %v3483
    %3721 = vmatpush1.bf16.msra.mxu0 %v3482
    %3722 = vmatprep.subr.bf16.mxu0 %v3487
    %3723 = vmatpush1.bf16.msra.mxu0 %v3486
    %3724 = vmatprep.subr.bf16.mxu0 %v3491
    %3725 = vmatpush1.bf16.msra.mxu0 %v3490
    %3726 = vmatprep.subr.bf16.mxu0 %v3495
    %3727 = vmatpush1.bf16.msra.mxu0 %v3494
    %3728 = vmatprep.subr.bf16.mxu0 %v3499
    %3729 = vmatpush1.bf16.msra.mxu0 %v3498
    %3730 = vmatprep.subr.bf16.mxu0 %v3503
    %3731 = vmatpush1.bf16.msra.mxu0 %v3502
    %3732 = vmatprep.subr.bf16.mxu0 %v3507
    %3733 = vmatpush1.bf16.msra.mxu0 %v3506
    %3734 = vmatprep.mubr.bf16.mxu0 %v2918
    %3735 = vmatmul.mubr.bf16.gmra.mrb[0].mxu0 %v2917
    %v3736 = vpop.f32.mrb[0].mxu0
    %v3737 = vadd.f32 0.0, %v3736
    %v3738 = vpop.f32.mrb[0].mxu0
    %v3739 = vadd.f32 0.0, %v3738
    %v3740 = vpop.f32.mrb[0].mxu0
    %v3741 = vadd.f32 0.0, %v3740
    %v3742 = vpop.f32.mrb[0].mxu0
    %v3743 = vadd.f32 0.0, %v3742
    %3744 = vmatprep.mubr.bf16.mxu0 %v2922
    %3745 = vmatmul.mubr.bf16.gmra.mrb[0].mxu0 %v2921
    %v3746 = vpop.f32.mrb[0].mxu0
    %v3747 = vadd.f32 0.0, %v3746
    %v3748 = vpop.f32.mrb[0].mxu0
    %v3749 = vadd.f32 0.0, %v3748
    %v3750 = vpop.f32.mrb[0].mxu0
    %v3751 = vadd.f32 0.0, %v3750
    %v3752 = vpop.f32.mrb[0].mxu0
    %v3753 = vadd.f32 0.0, %v3752
    %3754 = vmatprep.mubr.bf16.mxu0 %v2926
    %3755 = vmatmul.mubr.bf16.gmra.mrb[0].mxu0 %v2925
    %v3756 = vpop.f32.mrb[0].mxu0
    %v3757 = vadd.f32 0.0, %v3756
    %v3758 = vpop.f32.mrb[0].mxu0
    %v3759 = vadd.f32 0.0, %v3758
    %v3760 = vpop.f32.mrb[0].mxu0
    %v3761 = vadd.f32 0.0, %v3760
    %v3762 = vpop.f32.mrb[0].mxu0
    %v3763 = vadd.f32 0.0, %v3762
    %3764 = vmatprep.mubr.bf16.mxu0 %v2930
    %3765 = vmatmul.mubr.bf16.gmra.mrb[0].mxu0 %v2929
    %v3766 = vpop.f32.mrb[0].mxu0
    %v3767 = vadd.f32 0.0, %v3766
    %v3768 = vpop.f32.mrb[0].mxu0
    %v3769 = vadd.f32 0.0, %v3768
    %v3770 = vpop.f32.mrb[0].mxu0
    %v3771 = vadd.f32 0.0, %v3770
    %v3772 = vpop.f32.mrb[0].mxu0
    %v3773 = vadd.f32 0.0, %v3772
    %3774 = vdwg.mxu0
    %3775 = vmatprep.subr.bf16.mxu0 %v3511
    %3776 = vmatpush1.bf16.msra.mxu0 %v3510
    %3777 = vmatprep.subr.bf16.mxu0 %v3515
    %3778 = vmatpush1.bf16.msra.mxu0 %v3514
    %3779 = vmatprep.subr.bf16.mxu0 %v3519
    %3780 = vmatpush1.bf16.msra.mxu0 %v3518
    %3781 = vmatprep.subr.bf16.mxu0 %v3523
    %3782 = vmatpush1.bf16.msra.mxu0 %v3522
    %3783 = vmatprep.subr.bf16.mxu0 %v3527
    %3784 = vmatpush1.bf16.msra.mxu0 %v3526
    %3785 = vmatprep.subr.bf16.mxu0 %v3531
    %3786 = vmatpush1.bf16.msra.mxu0 %v3530
    %3787 = vmatprep.subr.bf16.mxu0 %v3535
    %3788 = vmatpush1.bf16.msra.mxu0 %v3534
    %3789 = vmatprep.subr.bf16.mxu0 %v3539
    %3790 = vmatpush1.bf16.msra.mxu0 %v3538
    %3791 = vmatprep.subr.bf16.mxu0 %v3543
    %3792 = vmatpush1.bf16.msra.mxu0 %v3542
    %3793 = vmatprep.subr.bf16.mxu0 %v3547
    %3794 = vmatpush1.bf16.msra.mxu0 %v3546
    %3795 = vmatprep.subr.bf16.mxu0 %v3551
    %3796 = vmatpush1.bf16.msra.mxu0 %v3550
    %3797 = vmatprep.subr.bf16.mxu0 %v3555
    %3798 = vmatpush1.bf16.msra.mxu0 %v3554
    %3799 = vmatprep.subr.bf16.mxu0 %v3559
    %3800 = vmatpush1.bf16.msra.mxu0 %v3558
    %3801 = vmatprep.subr.bf16.mxu0 %v3563
    %3802 = vmatpush1.bf16.msra.mxu0 %v3562
    %3803 = vmatprep.subr.bf16.mxu0 %v3567
    %3804 = vmatpush1.bf16.msra.mxu0 %v3566
    %3805 = vmatprep.subr.bf16.mxu0 %v3571
    %3806 = vmatpush1.bf16.msra.mxu0 %v3570
    %3807 = vmatprep.mubr.bf16.mxu0 %v2920
    %3808 = vmatmul.mubr.bf16.gmra.mrb[0].mxu0 %v2919
    %v3809 = vpop.f32.mrb[0].mxu0
    %v3810 = vadd.f32 %v3737, %v3809
    %v3811 = vpop.f32.mrb[0].mxu0
    %v3812 = vadd.f32 %v3739, %v3811
    %v3813 = vpop.f32.mrb[0].mxu0
    %v3814 = vadd.f32 %v3741, %v3813
    %v3815 = vpop.f32.mrb[0].mxu0
    %v3816 = vadd.f32 %v3743, %v3815
    %3817 = vmatprep.mubr.bf16.mxu0 %v2924
    %3818 = vmatmul.mubr.bf16.gmra.mrb[0].mxu0 %v2923
    %v3819 = vpop.f32.mrb[0].mxu0
    %v3820 = vadd.f32 %v3747, %v3819
    %v3821 = vpop.f32.mrb[0].mxu0
    %v3822 = vadd.f32 %v3749, %v3821
    %v3823 = vpop.f32.mrb[0].mxu0
    %v3824 = vadd.f32 %v3751, %v3823
    %v3825 = vpop.f32.mrb[0].mxu0
    %v3826 = vadd.f32 %v3753, %v3825
    %3827 = vmatprep.mubr.bf16.mxu0 %v2928
    %3828 = vmatmul.mubr.bf16.gmra.mrb[0].mxu0 %v2927
    %v3829 = vpop.f32.mrb[0].mxu0
    %v3830 = vadd.f32 %v3757, %v3829
    %v3831 = vpop.f32.mrb[0].mxu0
    %v3832 = vadd.f32 %v3759, %v3831
    %v3833 = vpop.f32.mrb[0].mxu0
    %v3834 = vadd.f32 %v3761, %v3833
    %v3835 = vpop.f32.mrb[0].mxu0
    %v3836 = vadd.f32 %v3763, %v3835
    %3837 = vmatprep.mubr.bf16.mxu0 %v2932
    %3838 = vmatmul.mubr.bf16.gmra.mrb[0].mxu0 %v2931
    %v3839 = vpop.f32.mrb[0].mxu0
    %v3840 = vadd.f32 %v3767, %v3839
    %v3841 = vpop.f32.mrb[0].mxu0
    %v3842 = vadd.f32 %v3769, %v3841
    %v3843 = vpop.f32.mrb[0].mxu0
    %v3844 = vadd.f32 %v3771, %v3843
    %v3845 = vpop.f32.mrb[0].mxu0
    %v3846 = vadd.f32 %v3773, %v3845
    %3847 = vdwg.mxu0
    %3848 = vmatprep.subr.bf16.mxu0 %v3449
    %3849 = vmatpush1.bf16.msra.mxu0 %v3448
    %3850 = vmatprep.subr.bf16.mxu0 %v3453
    %3851 = vmatpush1.bf16.msra.mxu0 %v3452
    %3852 = vmatprep.subr.bf16.mxu0 %v3457
    %3853 = vmatpush1.bf16.msra.mxu0 %v3456
    %3854 = vmatprep.subr.bf16.mxu0 %v3461
    %3855 = vmatpush1.bf16.msra.mxu0 %v3460
    %3856 = vmatprep.subr.bf16.mxu0 %v3465
    %3857 = vmatpush1.bf16.msra.mxu0 %v3464
    %3858 = vmatprep.subr.bf16.mxu0 %v3469
    %3859 = vmatpush1.bf16.msra.mxu0 %v3468
    %3860 = vmatprep.subr.bf16.mxu0 %v3473
    %3861 = vmatpush1.bf16.msra.mxu0 %v3472
    %3862 = vmatprep.subr.bf16.mxu0 %v3477
    %3863 = vmatpush1.bf16.msra.mxu0 %v3476
    %3864 = vmatprep.subr.bf16.mxu0 %v3481
    %3865 = vmatpush1.bf16.msra.mxu0 %v3480
    %3866 = vmatprep.subr.bf16.mxu0 %v3485
    %3867 = vmatpush1.bf16.msra.mxu0 %v3484
    %3868 = vmatprep.subr.bf16.mxu0 %v3489
    %3869 = vmatpush1.bf16.msra.mxu0 %v3488
    %3870 = vmatprep.subr.bf16.mxu0 %v3493
    %3871 = vmatpush1.bf16.msra.mxu0 %v3492
    %3872 = vmatprep.subr.bf16.mxu0 %v3497
    %3873 = vmatpush1.bf16.msra.mxu0 %v3496
    %3874 = vmatprep.subr.bf16.mxu0 %v3501
    %3875 = vmatpush1.bf16.msra.mxu0 %v3500
    %3876 = vmatprep.subr.bf16.mxu0 %v3505
    %3877 = vmatpush1.bf16.msra.mxu0 %v3504
    %3878 = vmatprep.subr.bf16.mxu0 %v3509
    %3879 = vmatpush1.bf16.msra.mxu0 %v3508
    %3880 = vmatprep.mubr.bf16.mxu0 %v2918
    %3881 = vmatmul.mubr.bf16.gmra.mrb[0].mxu0 %v2917
    %v3882 = vpop.f32.mrb[0].mxu0
    %v3883 = vadd.f32 0.0, %v3882
    %v3884 = vpop.f32.mrb[0].mxu0
    %v3885 = vadd.f32 0.0, %v3884
    %v3886 = vpop.f32.mrb[0].mxu0
    %v3887 = vadd.f32 0.0, %v3886
    %v3888 = vpop.f32.mrb[0].mxu0
    %v3889 = vadd.f32 0.0, %v3888
    %3890 = vmatprep.mubr.bf16.mxu0 %v2922
    %3891 = vmatmul.mubr.bf16.gmra.mrb[0].mxu0 %v2921
    %v3892 = vpop.f32.mrb[0].mxu0
    %v3893 = vadd.f32 0.0, %v3892
    %v3894 = vpop.f32.mrb[0].mxu0
    %v3895 = vadd.f32 0.0, %v3894
    %v3896 = vpop.f32.mrb[0].mxu0
    %v3897 = vadd.f32 0.0, %v3896
    %v3898 = vpop.f32.mrb[0].mxu0
    %v3899 = vadd.f32 0.0, %v3898
    %3900 = vmatprep.mubr.bf16.mxu0 %v2926
    %3901 = vmatmul.mubr.bf16.gmra.mrb[0].mxu0 %v2925
    %v3902 = vpop.f32.mrb[0].mxu0
    %v3903 = vadd.f32 0.0, %v3902
    %v3904 = vpop.f32.mrb[0].mxu0
    %v3905 = vadd.f32 0.0, %v3904
    %v3906 = vpop.f32.mrb[0].mxu0
    %v3907 = vadd.f32 0.0, %v3906
    %v3908 = vpop.f32.mrb[0].mxu0
    %v3909 = vadd.f32 0.0, %v3908
    %3910 = vmatprep.mubr.bf16.mxu0 %v2930
    %3911 = vmatmul.mubr.bf16.gmra.mrb[0].mxu0 %v2929
    %v3912 = vpop.f32.mrb[0].mxu0
    %v3913 = vadd.f32 0.0, %v3912
    %v3914 = vpop.f32.mrb[0].mxu0
    %v3915 = vadd.f32 0.0, %v3914
    %v3916 = vpop.f32.mrb[0].mxu0
    %v3917 = vadd.f32 0.0, %v3916
    %v3918 = vpop.f32.mrb[0].mxu0
    %v3919 = vadd.f32 0.0, %v3918
    %3920 = vdwg.mxu0
    %3921 = vmatprep.subr.bf16.mxu0 %v3513
    %3922 = vmatpush1.bf16.msra.mxu0 %v3512
    %3923 = vmatprep.subr.bf16.mxu0 %v3517
    %3924 = vmatpush1.bf16.msra.mxu0 %v3516
    %3925 = vmatprep.subr.bf16.mxu0 %v3521
    %3926 = vmatpush1.bf16.msra.mxu0 %v3520
    %3927 = vmatprep.subr.bf16.mxu0 %v3525
    %3928 = vmatpush1.bf16.msra.mxu0 %v3524
    %3929 = vmatprep.subr.bf16.mxu0 %v3529
    %3930 = vmatpush1.bf16.msra.mxu0 %v3528
    %3931 = vmatprep.subr.bf16.mxu0 %v3533
    %3932 = vmatpush1.bf16.msra.mxu0 %v3532
    %3933 = vmatprep.subr.bf16.mxu0 %v3537
    %3934 = vmatpush1.bf16.msra.mxu0 %v3536
    %3935 = vmatprep.subr.bf16.mxu0 %v3541
    %3936 = vmatpush1.bf16.msra.mxu0 %v3540
    %3937 = vmatprep.subr.bf16.mxu0 %v3545
    %3938 = vmatpush1.bf16.msra.mxu0 %v3544
    %3939 = vmatprep.subr.bf16.mxu0 %v3549
    %3940 = vmatpush1.bf16.msra.mxu0 %v3548
    %3941 = vmatprep.subr.bf16.mxu0 %v3553
    %3942 = vmatpush1.bf16.msra.mxu0 %v3552
    %3943 = vmatprep.subr.bf16.mxu0 %v3557
    %3944 = vmatpush1.bf16.msra.mxu0 %v3556
    %3945 = vmatprep.subr.bf16.mxu0 %v3561
    %3946 = vmatpush1.bf16.msra.mxu0 %v3560
    %3947 = vmatprep.subr.bf16.mxu0 %v3565
    %3948 = vmatpush1.bf16.msra.mxu0 %v3564
    %3949 = vmatprep.subr.bf16.mxu0 %v3569
    %3950 = vmatpush1.bf16.msra.mxu0 %v3568
    %3951 = vmatprep.subr.bf16.mxu0 %v3573
    %3952 = vmatpush1.bf16.msra.mxu0 %v3572
    %3953 = vmatprep.mubr.bf16.mxu0 %v2920
    %3954 = vmatmul.mubr.bf16.gmra.mrb[0].mxu0 %v2919
    %v3955 = vpop.f32.mrb[0].mxu0
    %v3956 = vadd.f32 %v3883, %v3955
    %v3957 = vpop.f32.mrb[0].mxu0
    %v3958 = vadd.f32 %v3885, %v3957
    %v3959 = vpop.f32.mrb[0].mxu0
    %v3960 = vadd.f32 %v3887, %v3959
    %v3961 = vpop.f32.mrb[0].mxu0
    %v3962 = vadd.f32 %v3889, %v3961
    %3963 = vmatprep.mubr.bf16.mxu0 %v2924
    %3964 = vmatmul.mubr.bf16.gmra.mrb[0].mxu0 %v2923
    %v3965 = vpop.f32.mrb[0].mxu0
    %v3966 = vadd.f32 %v3893, %v3965
    %v3967 = vpop.f32.mrb[0].mxu0
    %v3968 = vadd.f32 %v3895, %v3967
    %v3969 = vpop.f32.mrb[0].mxu0
    %v3970 = vadd.f32 %v3897, %v3969
    %v3971 = vpop.f32.mrb[0].mxu0
    %v3972 = vadd.f32 %v3899, %v3971
    %3973 = vmatprep.mubr.bf16.mxu0 %v2928
    %3974 = vmatmul.mubr.bf16.gmra.mrb[0].mxu0 %v2927
    %v3975 = vpop.f32.mrb[0].mxu0
    %v3976 = vadd.f32 %v3903, %v3975
    %v3977 = vpop.f32.mrb[0].mxu0
    %v3978 = vadd.f32 %v3905, %v3977
    %v3979 = vpop.f32.mrb[0].mxu0
    %v3980 = vadd.f32 %v3907, %v3979
    %v3981 = vpop.f32.mrb[0].mxu0
    %v3982 = vadd.f32 %v3909, %v3981
    %3983 = vmatprep.mubr.bf16.mxu0 %v2932
    %3984 = vmatmul.mubr.bf16.gmra.mrb[0].mxu0 %v2931
    %v3985 = vpop.f32.mrb[0].mxu0
    %v3986 = vadd.f32 %v3913, %v3985
    %v3987 = vpop.f32.mrb[0].mxu0
    %v3988 = vadd.f32 %v3915, %v3987
    %v3989 = vpop.f32.mrb[0].mxu0
    %v3990 = vadd.f32 %v3917, %v3989
    %v3991 = vpop.f32.mrb[0].mxu0
    %v3992 = vadd.f32 %v3919, %v3991
    %3993 = vdwg.mxu0
    %3994 = vst [vmem:[#allocation3] sm:$0xff] %v3810
    %3995 = vst [vmem:[#allocation3 + $0x8] sm:$0xff] %v3812
    %3996 = vst [vmem:[#allocation3 + $0x10] sm:$0xff] %v3956
    %3997 = vst [vmem:[#allocation3 + $0x18] sm:$0xff] %v3958
    %3998 = vst [vmem:[#allocation3 + $0x20] sm:$0xff] %v3814
    %3999 = vst [vmem:[#allocation3 + $0x28] sm:$0xff] %v3816
    %4000 = vst [vmem:[#allocation3 + $0x30] sm:$0xff] %v3960
    %4001 = vst [vmem:[#allocation3 + $0x38] sm:$0xff] %v3962
    %4002 = vst [vmem:[#allocation3 + $0x40] sm:$0xff] %v3820
    %4003 = vst [vmem:[#allocation3 + $0x48] sm:$0xff] %v3822
    %4004 = vst [vmem:[#allocation3 + $0x50] sm:$0xff] %v3966
    %4005 = vst [vmem:[#allocation3 + $0x58] sm:$0xff] %v3968
    %4006 = vst [vmem:[#allocation3 + $0x60] sm:$0xff] %v3824
    %4007 = vst [vmem:[#allocation3 + $0x68] sm:$0xff] %v3826
    %4008 = vst [vmem:[#allocation3 + $0x70] sm:$0xff] %v3970
    %4009 = vst [vmem:[#allocation3 + $0x78] sm:$0xff] %v3972
    %4010 = vst [vmem:[#allocation3 + $0x80] sm:$0xff] %v3830
    %4011 = vst [vmem:[#allocation3 + $0x88] sm:$0xff] %v3832
    %4012 = vst [vmem:[#allocation3 + $0x90] sm:$0xff] %v3976
    %4013 = vst [vmem:[#allocation3 + $0x98] sm:$0xff] %v3978
    %4014 = vst [vmem:[#allocation3 + $0xa0] sm:$0xff] %v3834
    %4015 = vst [vmem:[#allocation3 + $0xa8] sm:$0xff] %v3836
    %4016 = vst [vmem:[#allocation3 + $0xb0] sm:$0xff] %v3980
    %4017 = vst [vmem:[#allocation3 + $0xb8] sm:$0xff] %v3982
    %4018 = vst [vmem:[#allocation3 + $0xc0] sm:$0xff] %v3840
    %4019 = vst [vmem:[#allocation3 + $0xc8] sm:$0xff] %v3842
    %4020 = vst [vmem:[#allocation3 + $0xd0] sm:$0xff] %v3986
    %4021 = vst [vmem:[#allocation3 + $0xd8] sm:$0xff] %v3988
    %4022 = vst [vmem:[#allocation3 + $0xe0] sm:$0xff] %v3844
    %4023 = vst [vmem:[#allocation3 + $0xe8] sm:$0xff] %v3846
    %4024 = vst [vmem:[#allocation3 + $0xf0] sm:$0xff] %v3990
    %4025 = vst [vmem:[#allocation3 + $0xf8] sm:$0xff] %v3992
    %s4026 = scalar_lea.vmem [#allocation13], 512
    %v4027 = vld [vmem:[%s4026] sm:$0xff]
    %v4028 = vld [vmem:[%s4026 + $0x8] sm:$0xff]
    %v4029 = vld [vmem:[%s4026 + $0x10] sm:$0xff]
    %v4030 = vld [vmem:[%s4026 + $0x18] sm:$0xff]
    %v4031 = vld [vmem:[%s4026 + $0x20] sm:$0xff]
    %v4032 = vld [vmem:[%s4026 + $0x28] sm:$0xff]
    %v4033 = vld [vmem:[%s4026 + $0x30] sm:$0xff]
    %v4034 = vld [vmem:[%s4026 + $0x38] sm:$0xff]
    %v4035 = vld [vmem:[%s4026 + $0x40] sm:$0xff]
    %v4036 = vld [vmem:[%s4026 + $0x48] sm:$0xff]
    %v4037 = vld [vmem:[%s4026 + $0x50] sm:$0xff]
    %v4038 = vld [vmem:[%s4026 + $0x58] sm:$0xff]
    %v4039 = vld [vmem:[%s4026 + $0x60] sm:$0xff]
    %v4040 = vld [vmem:[%s4026 + $0x68] sm:$0xff]
    %v4041 = vld [vmem:[%s4026 + $0x70] sm:$0xff]
    %v4042 = vld [vmem:[%s4026 + $0x78] sm:$0xff]
    %v4043 = vld [vmem:[%s4026 + $0x80] sm:$0xff]
    %v4044 = vld [vmem:[%s4026 + $0x88] sm:$0xff]
    %v4045 = vld [vmem:[%s4026 + $0x90] sm:$0xff]
    %v4046 = vld [vmem:[%s4026 + $0x98] sm:$0xff]
    %v4047 = vld [vmem:[%s4026 + $0xa0] sm:$0xff]
    %v4048 = vld [vmem:[%s4026 + $0xa8] sm:$0xff]
    %v4049 = vld [vmem:[%s4026 + $0xb0] sm:$0xff]
    %v4050 = vld [vmem:[%s4026 + $0xb8] sm:$0xff]
    %v4051 = vld [vmem:[%s4026 + $0xc0] sm:$0xff]
    %v4052 = vld [vmem:[%s4026 + $0xc8] sm:$0xff]
    %v4053 = vld [vmem:[%s4026 + $0xd0] sm:$0xff]
    %v4054 = vld [vmem:[%s4026 + $0xd8] sm:$0xff]
    %v4055 = vld [vmem:[%s4026 + $0xe0] sm:$0xff]
    %v4056 = vld [vmem:[%s4026 + $0xe8] sm:$0xff]
    %v4057 = vld [vmem:[%s4026 + $0xf0] sm:$0xff]
    %v4058 = vld [vmem:[%s4026 + $0xf8] sm:$0xff]
    %v4059 = vld [vmem:[%s4026 + $0x100] sm:$0xff]
    %v4060 = vld [vmem:[%s4026 + $0x108] sm:$0xff]
    %v4061 = vld [vmem:[%s4026 + $0x110] sm:$0xff]
    %v4062 = vld [vmem:[%s4026 + $0x118] sm:$0xff]
    %v4063 = vld [vmem:[%s4026 + $0x120] sm:$0xff]
    %v4064 = vld [vmem:[%s4026 + $0x128] sm:$0xff]
    %v4065 = vld [vmem:[%s4026 + $0x130] sm:$0xff]
    %v4066 = vld [vmem:[%s4026 + $0x138] sm:$0xff]
    %v4067 = vld [vmem:[%s4026 + $0x140] sm:$0xff]
    %v4068 = vld [vmem:[%s4026 + $0x148] sm:$0xff]
    %v4069 = vld [vmem:[%s4026 + $0x150] sm:$0xff]
    %v4070 = vld [vmem:[%s4026 + $0x158] sm:$0xff]
    %v4071 = vld [vmem:[%s4026 + $0x160] sm:$0xff]
    %v4072 = vld [vmem:[%s4026 + $0x168] sm:$0xff]
    %v4073 = vld [vmem:[%s4026 + $0x170] sm:$0xff]
    %v4074 = vld [vmem:[%s4026 + $0x178] sm:$0xff]
    %v4075 = vld [vmem:[%s4026 + $0x180] sm:$0xff]
    %v4076 = vld [vmem:[%s4026 + $0x188] sm:$0xff]
    %v4077 = vld [vmem:[%s4026 + $0x190] sm:$0xff]
    %v4078 = vld [vmem:[%s4026 + $0x198] sm:$0xff]
    %v4079 = vld [vmem:[%s4026 + $0x1a0] sm:$0xff]
    %v4080 = vld [vmem:[%s4026 + $0x1a8] sm:$0xff]
    %v4081 = vld [vmem:[%s4026 + $0x1b0] sm:$0xff]
    %v4082 = vld [vmem:[%s4026 + $0x1b8] sm:$0xff]
    %v4083 = vld [vmem:[%s4026 + $0x1c0] sm:$0xff]
    %v4084 = vld [vmem:[%s4026 + $0x1c8] sm:$0xff]
    %v4085 = vld [vmem:[%s4026 + $0x1d0] sm:$0xff]
    %v4086 = vld [vmem:[%s4026 + $0x1d8] sm:$0xff]
    %v4087 = vld [vmem:[%s4026 + $0x1e0] sm:$0xff]
    %v4088 = vld [vmem:[%s4026 + $0x1e8] sm:$0xff]
    %v4089 = vld [vmem:[%s4026 + $0x1f0] sm:$0xff]
    %v4090 = vld [vmem:[%s4026 + $0x1f8] sm:$0xff]
    %s4091 = scalar_lea.vmem [#allocation15], 32
    %v4092 = vld [vmem:[%s4091] sm:$0xff]
    %v4093 = vld [vmem:[%s4091 + $0x8] sm:$0xff]
    %v4094 = vld [vmem:[%s4091 + $0x10] sm:$0xff]
    %v4095 = vld [vmem:[%s4091 + $0x18] sm:$0xff]
    %4096 = vst [vmem:[#allocation5] sm:$0xff] 0.0
    %4097 = vst [vmem:[#allocation6] sm:$0xff] 0.0
    %v4098 = vld [vmem:[#allocation5] sm:$0xff]
    %v4099 = vld [vmem:[#allocation6] sm:$0xff]
    %v4100 = vmul.f32 %v4098, %v97
    %v4101 = vmul.f32 %v4098, %v102
    %v4102 = vpack.c.bf16 %v4100, %v4100
    %v4103 = vpack.c.bf16 %v4101, %v4101
    %v4104 = vld [vmem:[#allocation3] sm:$0xff]
    %v4105 = vld [vmem:[#allocation3 + $0x8] sm:$0xff]
    %v4106 = vld [vmem:[#allocation3 + $0x10] sm:$0xff]
    %v4107 = vld [vmem:[#allocation3 + $0x18] sm:$0xff]
    %v4108 = vadd.f32 %v4104, %v4092
    %v4109 = vadd.f32 %v4105, %v4093
    %v4110 = vadd.f32 %v4106, %v4094
    %v4111 = vadd.f32 %v4107, %v4095
    %v4176 = vunpack.c.l.b16 %v4027
    %v4177 = vunpack.c.h.b16 %v4027
    %v4178 = vunpack.c.l.b16 %v4028
    %v4179 = vunpack.c.h.b16 %v4028
    %v4180 = vunpack.c.l.b16 %v4029
    %v4181 = vunpack.c.h.b16 %v4029
    %v4182 = vunpack.c.l.b16 %v4030
    %v4183 = vunpack.c.h.b16 %v4030
    %v4184 = vunpack.c.l.b16 %v4031
    %v4185 = vunpack.c.h.b16 %v4031
    %v4186 = vunpack.c.l.b16 %v4032
    %v4187 = vunpack.c.h.b16 %v4032
    %v4188 = vunpack.c.l.b16 %v4033
    %v4189 = vunpack.c.h.b16 %v4033
    %v4190 = vunpack.c.l.b16 %v4034
    %v4191 = vunpack.c.h.b16 %v4034
    %v4192 = vunpack.c.l.b16 %v4035
    %v4193 = vunpack.c.h.b16 %v4035
    %v4194 = vunpack.c.l.b16 %v4036
    %v4195 = vunpack.c.h.b16 %v4036
    %v4196 = vunpack.c.l.b16 %v4037
    %v4197 = vunpack.c.h.b16 %v4037
    %v4198 = vunpack.c.l.b16 %v4038
    %v4199 = vunpack.c.h.b16 %v4038
    %v4200 = vunpack.c.l.b16 %v4039
    %v4201 = vunpack.c.h.b16 %v4039
    %v4202 = vunpack.c.l.b16 %v4040
    %v4203 = vunpack.c.h.b16 %v4040
    %v4204 = vunpack.c.l.b16 %v4041
    %v4205 = vunpack.c.h.b16 %v4041
    %v4206 = vunpack.c.l.b16 %v4042
    %v4207 = vunpack.c.h.b16 %v4042
    %v4208 = vunpack.c.l.b16 %v4043
    %v4209 = vunpack.c.h.b16 %v4043
    %v4210 = vunpack.c.l.b16 %v4044
    %v4211 = vunpack.c.h.b16 %v4044
    %v4212 = vunpack.c.l.b16 %v4045
    %v4213 = vunpack.c.h.b16 %v4045
    %v4214 = vunpack.c.l.b16 %v4046
    %v4215 = vunpack.c.h.b16 %v4046
    %v4216 = vunpack.c.l.b16 %v4047
    %v4217 = vunpack.c.h.b16 %v4047
    %v4218 = vunpack.c.l.b16 %v4048
    %v4219 = vunpack.c.h.b16 %v4048
    %v4220 = vunpack.c.l.b16 %v4049
    %v4221 = vunpack.c.h.b16 %v4049
    %v4222 = vunpack.c.l.b16 %v4050
    %v4223 = vunpack.c.h.b16 %v4050
    %v4224 = vunpack.c.l.b16 %v4051
    %v4225 = vunpack.c.h.b16 %v4051
    %v4226 = vunpack.c.l.b16 %v4052
    %v4227 = vunpack.c.h.b16 %v4052
    %v4228 = vunpack.c.l.b16 %v4053
    %v4229 = vunpack.c.h.b16 %v4053
    %v4230 = vunpack.c.l.b16 %v4054
    %v4231 = vunpack.c.h.b16 %v4054
    %v4232 = vunpack.c.l.b16 %v4055
    %v4233 = vunpack.c.h.b16 %v4055
    %v4234 = vunpack.c.l.b16 %v4056
    %v4235 = vunpack.c.h.b16 %v4056
    %v4236 = vunpack.c.l.b16 %v4057
    %v4237 = vunpack.c.h.b16 %v4057
    %v4238 = vunpack.c.l.b16 %v4058
    %v4239 = vunpack.c.h.b16 %v4058
    %v4240 = vunpack.c.l.b16 %v4059
    %v4241 = vunpack.c.h.b16 %v4059
    %v4242 = vunpack.c.l.b16 %v4060
    %v4243 = vunpack.c.h.b16 %v4060
    %v4244 = vunpack.c.l.b16 %v4061
    %v4245 = vunpack.c.h.b16 %v4061
    %v4246 = vunpack.c.l.b16 %v4062
    %v4247 = vunpack.c.h.b16 %v4062
    %v4248 = vunpack.c.l.b16 %v4063
    %v4249 = vunpack.c.h.b16 %v4063
    %v4250 = vunpack.c.l.b16 %v4064
    %v4251 = vunpack.c.h.b16 %v4064
    %v4252 = vunpack.c.l.b16 %v4065
    %v4253 = vunpack.c.h.b16 %v4065
    %v4254 = vunpack.c.l.b16 %v4066
    %v4255 = vunpack.c.h.b16 %v4066
    %v4256 = vunpack.c.l.b16 %v4067
    %v4257 = vunpack.c.h.b16 %v4067
    %v4258 = vunpack.c.l.b16 %v4068
    %v4259 = vunpack.c.h.b16 %v4068
    %v4260 = vunpack.c.l.b16 %v4069
    %v4261 = vunpack.c.h.b16 %v4069
    %v4262 = vunpack.c.l.b16 %v4070
    %v4263 = vunpack.c.h.b16 %v4070
    %v4264 = vunpack.c.l.b16 %v4071
    %v4265 = vunpack.c.h.b16 %v4071
    %v4266 = vunpack.c.l.b16 %v4072
    %v4267 = vunpack.c.h.b16 %v4072
    %v4268 = vunpack.c.l.b16 %v4073
    %v4269 = vunpack.c.h.b16 %v4073
    %v4270 = vunpack.c.l.b16 %v4074
    %v4271 = vunpack.c.h.b16 %v4074
    %v4272 = vunpack.c.l.b16 %v4075
    %v4273 = vunpack.c.h.b16 %v4075
    %v4274 = vunpack.c.l.b16 %v4076
    %v4275 = vunpack.c.h.b16 %v4076
    %v4276 = vunpack.c.l.b16 %v4077
    %v4277 = vunpack.c.h.b16 %v4077
    %v4278 = vunpack.c.l.b16 %v4078
    %v4279 = vunpack.c.h.b16 %v4078
    %v4280 = vunpack.c.l.b16 %v4079
    %v4281 = vunpack.c.h.b16 %v4079
    %v4282 = vunpack.c.l.b16 %v4080
    %v4283 = vunpack.c.h.b16 %v4080
    %v4284 = vunpack.c.l.b16 %v4081
    %v4285 = vunpack.c.h.b16 %v4081
    %v4286 = vunpack.c.l.b16 %v4082
    %v4287 = vunpack.c.h.b16 %v4082
    %v4288 = vunpack.c.l.b16 %v4083
    %v4289 = vunpack.c.h.b16 %v4083
    %v4290 = vunpack.c.l.b16 %v4084
    %v4291 = vunpack.c.h.b16 %v4084
    %v4292 = vunpack.c.l.b16 %v4085
    %v4293 = vunpack.c.h.b16 %v4085
    %v4294 = vunpack.c.l.b16 %v4086
    %v4295 = vunpack.c.h.b16 %v4086
    %v4296 = vunpack.c.l.b16 %v4087
    %v4297 = vunpack.c.h.b16 %v4087
    %v4298 = vunpack.c.l.b16 %v4088
    %v4299 = vunpack.c.h.b16 %v4088
    %v4300 = vunpack.c.l.b16 %v4089
    %v4301 = vunpack.c.h.b16 %v4089
    %v4302 = vunpack.c.l.b16 %v4090
    %v4303 = vunpack.c.h.b16 %v4090
    %v4304 = vpack.c.b16 %v4180, %v4176
    %v4305 = vpack.c.b16 %v4181, %v4177
    %v4306 = vpack.c.b16 %v4182, %v4178
    %v4307 = vpack.c.b16 %v4183, %v4179
    %v4308 = vpack.c.b16 %v4188, %v4184
    %v4309 = vpack.c.b16 %v4189, %v4185
    %v4310 = vpack.c.b16 %v4190, %v4186
    %v4311 = vpack.c.b16 %v4191, %v4187
    %v4312 = vpack.c.b16 %v4196, %v4192
    %v4313 = vpack.c.b16 %v4197, %v4193
    %v4314 = vpack.c.b16 %v4198, %v4194
    %v4315 = vpack.c.b16 %v4199, %v4195
    %v4316 = vpack.c.b16 %v4204, %v4200
    %v4317 = vpack.c.b16 %v4205, %v4201
    %v4318 = vpack.c.b16 %v4206, %v4202
    %v4319 = vpack.c.b16 %v4207, %v4203
    %v4320 = vpack.c.b16 %v4212, %v4208
    %v4321 = vpack.c.b16 %v4213, %v4209
    %v4322 = vpack.c.b16 %v4214, %v4210
    %v4323 = vpack.c.b16 %v4215, %v4211
    %v4324 = vpack.c.b16 %v4220, %v4216
    %v4325 = vpack.c.b16 %v4221, %v4217
    %v4326 = vpack.c.b16 %v4222, %v4218
    %v4327 = vpack.c.b16 %v4223, %v4219
    %v4328 = vpack.c.b16 %v4228, %v4224
    %v4329 = vpack.c.b16 %v4229, %v4225
    %v4330 = vpack.c.b16 %v4230, %v4226
    %v4331 = vpack.c.b16 %v4231, %v4227
    %v4332 = vpack.c.b16 %v4236, %v4232
    %v4333 = vpack.c.b16 %v4237, %v4233
    %v4334 = vpack.c.b16 %v4238, %v4234
    %v4335 = vpack.c.b16 %v4239, %v4235
    %v4336 = vpack.c.b16 %v4244, %v4240
    %v4337 = vpack.c.b16 %v4245, %v4241
    %v4338 = vpack.c.b16 %v4246, %v4242
    %v4339 = vpack.c.b16 %v4247, %v4243
    %v4340 = vpack.c.b16 %v4252, %v4248
    %v4341 = vpack.c.b16 %v4253, %v4249
    %v4342 = vpack.c.b16 %v4254, %v4250
    %v4343 = vpack.c.b16 %v4255, %v4251
    %v4344 = vpack.c.b16 %v4260, %v4256
    %v4345 = vpack.c.b16 %v4261, %v4257
    %v4346 = vpack.c.b16 %v4262, %v4258
    %v4347 = vpack.c.b16 %v4263, %v4259
    %v4348 = vpack.c.b16 %v4268, %v4264
    %v4349 = vpack.c.b16 %v4269, %v4265
    %v4350 = vpack.c.b16 %v4270, %v4266
    %v4351 = vpack.c.b16 %v4271, %v4267
    %v4352 = vpack.c.b16 %v4276, %v4272
    %v4353 = vpack.c.b16 %v4277, %v4273
    %v4354 = vpack.c.b16 %v4278, %v4274
    %v4355 = vpack.c.b16 %v4279, %v4275
    %v4356 = vpack.c.b16 %v4284, %v4280
    %v4357 = vpack.c.b16 %v4285, %v4281
    %v4358 = vpack.c.b16 %v4286, %v4282
    %v4359 = vpack.c.b16 %v4287, %v4283
    %v4360 = vpack.c.b16 %v4292, %v4288
    %v4361 = vpack.c.b16 %v4293, %v4289
    %v4362 = vpack.c.b16 %v4294, %v4290
    %v4363 = vpack.c.b16 %v4295, %v4291
    %v4364 = vpack.c.b16 %v4300, %v4296
    %v4365 = vpack.c.b16 %v4301, %v4297
    %v4366 = vpack.c.b16 %v4302, %v4298
    %v4367 = vpack.c.b16 %v4303, %v4299
    %4432 = vmatprep.subr.bf16.mxu0 %v4305
    %4433 = vmatpush1.bf16.msra.mxu0 %v4304
    %4434 = vmatprep.subr.bf16.mxu0 %v4309
    %4435 = vmatpush1.bf16.msra.mxu0 %v4308
    %4436 = vmatprep.subr.bf16.mxu0 %v4313
    %4437 = vmatpush1.bf16.msra.mxu0 %v4312
    %4438 = vmatprep.subr.bf16.mxu0 %v4317
    %4439 = vmatpush1.bf16.msra.mxu0 %v4316
    %4440 = vmatprep.subr.bf16.mxu0 %v4321
    %4441 = vmatpush1.bf16.msra.mxu0 %v4320
    %4442 = vmatprep.subr.bf16.mxu0 %v4325
    %4443 = vmatpush1.bf16.msra.mxu0 %v4324
    %4444 = vmatprep.subr.bf16.mxu0 %v4329
    %4445 = vmatpush1.bf16.msra.mxu0 %v4328
    %4446 = vmatprep.subr.bf16.mxu0 %v4333
    %4447 = vmatpush1.bf16.msra.mxu0 %v4332
    %4448 = vmatprep.subr.bf16.mxu0 %v4337
    %4449 = vmatpush1.bf16.msra.mxu0 %v4336
    %4450 = vmatprep.subr.bf16.mxu0 %v4341
    %4451 = vmatpush1.bf16.msra.mxu0 %v4340
    %4452 = vmatprep.subr.bf16.mxu0 %v4345
    %4453 = vmatpush1.bf16.msra.mxu0 %v4344
    %4454 = vmatprep.subr.bf16.mxu0 %v4349
    %4455 = vmatpush1.bf16.msra.mxu0 %v4348
    %4456 = vmatprep.subr.bf16.mxu0 %v4353
    %4457 = vmatpush1.bf16.msra.mxu0 %v4352
    %4458 = vmatprep.subr.bf16.mxu0 %v4357
    %4459 = vmatpush1.bf16.msra.mxu0 %v4356
    %4460 = vmatprep.subr.bf16.mxu0 %v4361
    %4461 = vmatpush1.bf16.msra.mxu0 %v4360
    %4462 = vmatprep.subr.bf16.mxu0 %v4365
    %4463 = vmatpush1.bf16.msra.mxu0 %v4364
    %4464 = vmatprep.mubr.bf16.mxu0 %v4103
    %4465 = vmatmul.mubr.bf16.gmra.mrb[0].mxu0 %v4102
    %v4466 = vpop.f32.mrb[0].mxu0
    %v4467 = vadd.f32 0.0, %v4466
    %v4468 = vpop.f32.mrb[0].mxu0
    %v4469 = vadd.f32 0.0, %v4468
    %v4470 = vpop.f32.mrb[0].mxu0
    %v4471 = vpop.f32.mrb[0].mxu0
    %4472 = vdwg.mxu0
    %4473 = vmatprep.subr.bf16.mxu0 %v4307
    %4474 = vmatpush1.bf16.msra.mxu0 %v4306
    %4475 = vmatprep.subr.bf16.mxu0 %v4311
    %4476 = vmatpush1.bf16.msra.mxu0 %v4310
    %4477 = vmatprep.subr.bf16.mxu0 %v4315
    %4478 = vmatpush1.bf16.msra.mxu0 %v4314
    %4479 = vmatprep.subr.bf16.mxu0 %v4319
    %4480 = vmatpush1.bf16.msra.mxu0 %v4318
    %4481 = vmatprep.subr.bf16.mxu0 %v4323
    %4482 = vmatpush1.bf16.msra.mxu0 %v4322
    %4483 = vmatprep.subr.bf16.mxu0 %v4327
    %4484 = vmatpush1.bf16.msra.mxu0 %v4326
    %4485 = vmatprep.subr.bf16.mxu0 %v4331
    %4486 = vmatpush1.bf16.msra.mxu0 %v4330
    %4487 = vmatprep.subr.bf16.mxu0 %v4335
    %4488 = vmatpush1.bf16.msra.mxu0 %v4334
    %4489 = vmatprep.subr.bf16.mxu0 %v4339
    %4490 = vmatpush1.bf16.msra.mxu0 %v4338
    %4491 = vmatprep.subr.bf16.mxu0 %v4343
    %4492 = vmatpush1.bf16.msra.mxu0 %v4342
    %4493 = vmatprep.subr.bf16.mxu0 %v4347
    %4494 = vmatpush1.bf16.msra.mxu0 %v4346
    %4495 = vmatprep.subr.bf16.mxu0 %v4351
    %4496 = vmatpush1.bf16.msra.mxu0 %v4350
    %4497 = vmatprep.subr.bf16.mxu0 %v4355
    %4498 = vmatpush1.bf16.msra.mxu0 %v4354
    %4499 = vmatprep.subr.bf16.mxu0 %v4359
    %4500 = vmatpush1.bf16.msra.mxu0 %v4358
    %4501 = vmatprep.subr.bf16.mxu0 %v4363
    %4502 = vmatpush1.bf16.msra.mxu0 %v4362
    %4503 = vmatprep.subr.bf16.mxu0 %v4367
    %4504 = vmatpush1.bf16.msra.mxu0 %v4366
    %4505 = vmatprep.mubr.bf16.mxu0 %v4103
    %4506 = vmatmul.mubr.bf16.gmra.mrb[0].mxu0 %v4102
    %v4507 = vpop.f32.mrb[0].mxu0
    %v4508 = vadd.f32 0.0, %v4507
    %v4509 = vpop.f32.mrb[0].mxu0
    %v4510 = vadd.f32 0.0, %v4509
    %v4511 = vpop.f32.mrb[0].mxu0
    %v4512 = vpop.f32.mrb[0].mxu0
    %4513 = vdwg.mxu0
    %v4514 = vadd.f32 %v4108, %v4467
    %v4515 = vadd.f32 %v4109, %v4469
    %v4516 = vadd.f32 %v4110, %v4508
    %v4517 = vadd.f32 %v4111, %v4510
    %v4518 = vxor.u32 %v4514, 2147483648
    %v4519 = vmul.f32 %v4518, 1.442695
    %v4520 = vpow.pop %v4519
    %v4521 = vadd.f32 %v4520, 1.0
    %v4522 = vrcp.pop %v4521
    %v4523 = vmul.f32 1.0, %v4522
    %v4524 = vxor.u32 %v4515, 2147483648
    %v4525 = vmul.f32 %v4524, 1.442695
    %v4526 = vpow.pop %v4525
    %v4527 = vadd.f32 %v4526, 1.0
    %v4528 = vrcp.pop %v4527
    %v4529 = vmul.f32 1.0, %v4528
    %v4530 = vtanh.pop %v4516
    %v4531 = vxor.u32 %v4517, 2147483648
    %v4532 = vmul.f32 %v4531, 1.442695
    %v4533 = vpow.pop %v4532
    %v4534 = vadd.f32 %v4533, 1.0
    %v4535 = vrcp.pop %v4534
    %v4536 = vmul.f32 1.0, %v4535
    %v4537 = vmul.f32 %v4529, %v4099
    %v4538 = vmul.f32 %v4523, %v4530
    %v4539 = vadd.f32 %v4537, %v4538
    %v4540 = vtanh.pop %v4539
    %v4541 = vmul.f32 %v4536, %v4540
    %v4542 = vld [vmem:[#allocation10] sm:$0xff]
    %v4543 = vsub.f32 %v4539, %v4099
    %v4544 = vmul.f32 %v4542, %v4543
    %v4545 = vadd.f32 %v4099, %v4544
    %4546 = vst [vmem:[#allocation6] sm:$0xff] %v4545
    %v4547 = vsub.f32 %v4541, %v4098
    %v4548 = vmul.f32 %v4542, %v4547
    %v4549 = vadd.f32 %v4098, %v4548
    %4550 = vst [vmem:[#allocation5] sm:$0xff] %v4549
    %v4551 = vmul.f32 %v4542, %v4541
    %4552 = vst [vmem:[#allocation16] sm:$0xff] %v4551
    %v4553 = vld [vmem:[#allocation5] sm:$0xff]
    %v4554 = vld [vmem:[#allocation6] sm:$0xff]
    %v4555 = vmul.f32 %v4553, %v97
    %v4556 = vmul.f32 %v4553, %v102
    %v4557 = vpack.c.bf16 %v4555, %v4555
    %v4558 = vpack.c.bf16 %v4556, %v4556
    %v4559 = vld [vmem:[#allocation3 + $0x20] sm:$0xff]
    %v4560 = vld [vmem:[#allocation3 + $0x28] sm:$0xff]
    %v4561 = vld [vmem:[#allocation3 + $0x30] sm:$0xff]
    %v4562 = vld [vmem:[#allocation3 + $0x38] sm:$0xff]
    %v4563 = vadd.f32 %v4559, %v4092
    %v4564 = vadd.f32 %v4560, %v4093
    %v4565 = vadd.f32 %v4561, %v4094
    %v4566 = vadd.f32 %v4562, %v4095
    %4567 = vmatprep.subr.bf16.mxu0 %v4305
    %4568 = vmatpush1.bf16.msra.mxu0 %v4304
    %4569 = vmatprep.subr.bf16.mxu0 %v4309
    %4570 = vmatpush1.bf16.msra.mxu0 %v4308
    %4571 = vmatprep.subr.bf16.mxu0 %v4313
    %4572 = vmatpush1.bf16.msra.mxu0 %v4312
    %4573 = vmatprep.subr.bf16.mxu0 %v4317
    %4574 = vmatpush1.bf16.msra.mxu0 %v4316
    %4575 = vmatprep.subr.bf16.mxu0 %v4321
    %4576 = vmatpush1.bf16.msra.mxu0 %v4320
    %4577 = vmatprep.subr.bf16.mxu0 %v4325
    %4578 = vmatpush1.bf16.msra.mxu0 %v4324
    %4579 = vmatprep.subr.bf16.mxu0 %v4329
    %4580 = vmatpush1.bf16.msra.mxu0 %v4328
    %4581 = vmatprep.subr.bf16.mxu0 %v4333
    %4582 = vmatpush1.bf16.msra.mxu0 %v4332
    %4583 = vmatprep.subr.bf16.mxu0 %v4337
    %4584 = vmatpush1.bf16.msra.mxu0 %v4336
    %4585 = vmatprep.subr.bf16.mxu0 %v4341
    %4586 = vmatpush1.bf16.msra.mxu0 %v4340
    %4587 = vmatprep.subr.bf16.mxu0 %v4345
    %4588 = vmatpush1.bf16.msra.mxu0 %v4344
    %4589 = vmatprep.subr.bf16.mxu0 %v4349
    %4590 = vmatpush1.bf16.msra.mxu0 %v4348
    %4591 = vmatprep.subr.bf16.mxu0 %v4353
    %4592 = vmatpush1.bf16.msra.mxu0 %v4352
    %4593 = vmatprep.subr.bf16.mxu0 %v4357
    %4594 = vmatpush1.bf16.msra.mxu0 %v4356
    %4595 = vmatprep.subr.bf16.mxu0 %v4361
    %4596 = vmatpush1.bf16.msra.mxu0 %v4360
    %4597 = vmatprep.subr.bf16.mxu0 %v4365
    %4598 = vmatpush1.bf16.msra.mxu0 %v4364
    %4599 = vmatprep.mubr.bf16.mxu0 %v4558
    %4600 = vmatmul.mubr.bf16.gmra.mrb[0].mxu0 %v4557
    %v4601 = vpop.f32.mrb[0].mxu0
    %v4602 = vadd.f32 0.0, %v4601
    %v4603 = vpop.f32.mrb[0].mxu0
    %v4604 = vadd.f32 0.0, %v4603
    %v4605 = vpop.f32.mrb[0].mxu0
    %v4606 = vpop.f32.mrb[0].mxu0
    %4607 = vdwg.mxu0
    %4608 = vmatprep.subr.bf16.mxu0 %v4307
    %4609 = vmatpush1.bf16.msra.mxu0 %v4306
    %4610 = vmatprep.subr.bf16.mxu0 %v4311
    %4611 = vmatpush1.bf16.msra.mxu0 %v4310
    %4612 = vmatprep.subr.bf16.mxu0 %v4315
    %4613 = vmatpush1.bf16.msra.mxu0 %v4314
    %4614 = vmatprep.subr.bf16.mxu0 %v4319
    %4615 = vmatpush1.bf16.msra.mxu0 %v4318
    %4616 = vmatprep.subr.bf16.mxu0 %v4323
    %4617 = vmatpush1.bf16.msra.mxu0 %v4322
    %4618 = vmatprep.subr.bf16.mxu0 %v4327
    %4619 = vmatpush1.bf16.msra.mxu0 %v4326
    %4620 = vmatprep.subr.bf16.mxu0 %v4331
    %4621 = vmatpush1.bf16.msra.mxu0 %v4330
    %4622 = vmatprep.subr.bf16.mxu0 %v4335
    %4623 = vmatpush1.bf16.msra.mxu0 %v4334
    %4624 = vmatprep.subr.bf16.mxu0 %v4339
    %4625 = vmatpush1.bf16.msra.mxu0 %v4338
    %4626 = vmatprep.subr.bf16.mxu0 %v4343
    %4627 = vmatpush1.bf16.msra.mxu0 %v4342
    %4628 = vmatprep.subr.bf16.mxu0 %v4347
    %4629 = vmatpush1.bf16.msra.mxu0 %v4346
    %4630 = vmatprep.subr.bf16.mxu0 %v4351
    %4631 = vmatpush1.bf16.msra.mxu0 %v4350
    %4632 = vmatprep.subr.bf16.mxu0 %v4355
    %4633 = vmatpush1.bf16.msra.mxu0 %v4354
    %4634 = vmatprep.subr.bf16.mxu0 %v4359
    %4635 = vmatpush1.bf16.msra.mxu0 %v4358
    %4636 = vmatprep.subr.bf16.mxu0 %v4363
    %4637 = vmatpush1.bf16.msra.mxu0 %v4362
    %4638 = vmatprep.subr.bf16.mxu0 %v4367
    %4639 = vmatpush1.bf16.msra.mxu0 %v4366
    %4640 = vmatprep.mubr.bf16.mxu0 %v4558
    %4641 = vmatmul.mubr.bf16.gmra.mrb[0].mxu0 %v4557
    %v4642 = vpop.f32.mrb[0].mxu0
    %v4643 = vadd.f32 0.0, %v4642
    %v4644 = vpop.f32.mrb[0].mxu0
    %v4645 = vadd.f32 0.0, %v4644
    %v4646 = vpop.f32.mrb[0].mxu0
    %v4647 = vpop.f32.mrb[0].mxu0
    %4648 = vdwg.mxu0
    %v4649 = vadd.f32 %v4563, %v4602
    %v4650 = vadd.f32 %v4564, %v4604
    %v4651 = vadd.f32 %v4565, %v4643
    %v4652 = vadd.f32 %v4566, %v4645
    %v4653 = vxor.u32 %v4649, 2147483648
    %v4654 = vmul.f32 %v4653, 1.442695
    %v4655 = vpow.pop %v4654
    %v4656 = vadd.f32 %v4655, 1.0
    %v4657 = vrcp.pop %v4656
    %v4658 = vmul.f32 1.0, %v4657
    %v4659 = vxor.u32 %v4650, 2147483648
    %v4660 = vmul.f32 %v4659, 1.442695
    %v4661 = vpow.pop %v4660
    %v4662 = vadd.f32 %v4661, 1.0
    %v4663 = vrcp.pop %v4662
    %v4664 = vmul.f32 1.0, %v4663
    %v4665 = vtanh.pop %v4651
    %v4666 = vxor.u32 %v4652, 2147483648
    %v4667 = vmul.f32 %v4666, 1.442695
    %v4668 = vpow.pop %v4667
    %v4669 = vadd.f32 %v4668, 1.0
    %v4670 = vrcp.pop %v4669
    %v4671 = vmul.f32 1.0, %v4670
    %v4672 = vmul.f32 %v4664, %v4554
    %v4673 = vmul.f32 %v4658, %v4665
    %v4674 = vadd.f32 %v4672, %v4673
    %v4675 = vtanh.pop %v4674
    %v4676 = vmul.f32 %v4671, %v4675
    %v4677 = vld [vmem:[#allocation10 + $0x8] sm:$0xff]
    %v4678 = vsub.f32 %v4674, %v4554
    %v4679 = vmul.f32 %v4677, %v4678
    %v4680 = vadd.f32 %v4554, %v4679
    %4681 = vst [vmem:[#allocation6] sm:$0xff] %v4680
    %v4682 = vsub.f32 %v4676, %v4553
    %v4683 = vmul.f32 %v4677, %v4682
    %v4684 = vadd.f32 %v4553, %v4683
    %4685 = vst [vmem:[#allocation5] sm:$0xff] %v4684
    %v4686 = vmul.f32 %v4677, %v4676
    %4687 = vst [vmem:[#allocation16 + $0x8] sm:$0xff] %v4686
    %v4688 = vld [vmem:[#allocation5] sm:$0xff]
    %v4689 = vld [vmem:[#allocation6] sm:$0xff]
    %v4690 = vmul.f32 %v4688, %v97
    %v4691 = vmul.f32 %v4688, %v102
    %v4692 = vpack.c.bf16 %v4690, %v4690
    %v4693 = vpack.c.bf16 %v4691, %v4691
    %v4694 = vld [vmem:[#allocation3 + $0x40] sm:$0xff]
    %v4695 = vld [vmem:[#allocation3 + $0x48] sm:$0xff]
    %v4696 = vld [vmem:[#allocation3 + $0x50] sm:$0xff]
    %v4697 = vld [vmem:[#allocation3 + $0x58] sm:$0xff]
    %v4698 = vadd.f32 %v4694, %v4092
    %v4699 = vadd.f32 %v4695, %v4093
    %v4700 = vadd.f32 %v4696, %v4094
    %v4701 = vadd.f32 %v4697, %v4095
    %4702 = vmatprep.subr.bf16.mxu0 %v4305
    %4703 = vmatpush1.bf16.msra.mxu0 %v4304
    %4704 = vmatprep.subr.bf16.mxu0 %v4309
    %4705 = vmatpush1.bf16.msra.mxu0 %v4308
    %4706 = vmatprep.subr.bf16.mxu0 %v4313
    %4707 = vmatpush1.bf16.msra.mxu0 %v4312
    %4708 = vmatprep.subr.bf16.mxu0 %v4317
    %4709 = vmatpush1.bf16.msra.mxu0 %v4316
    %4710 = vmatprep.subr.bf16.mxu0 %v4321
    %4711 = vmatpush1.bf16.msra.mxu0 %v4320
    %4712 = vmatprep.subr.bf16.mxu0 %v4325
    %4713 = vmatpush1.bf16.msra.mxu0 %v4324
    %4714 = vmatprep.subr.bf16.mxu0 %v4329
    %4715 = vmatpush1.bf16.msra.mxu0 %v4328
    %4716 = vmatprep.subr.bf16.mxu0 %v4333
    %4717 = vmatpush1.bf16.msra.mxu0 %v4332
    %4718 = vmatprep.subr.bf16.mxu0 %v4337
    %4719 = vmatpush1.bf16.msra.mxu0 %v4336
    %4720 = vmatprep.subr.bf16.mxu0 %v4341
    %4721 = vmatpush1.bf16.msra.mxu0 %v4340
    %4722 = vmatprep.subr.bf16.mxu0 %v4345
    %4723 = vmatpush1.bf16.msra.mxu0 %v4344
    %4724 = vmatprep.subr.bf16.mxu0 %v4349
    %4725 = vmatpush1.bf16.msra.mxu0 %v4348
    %4726 = vmatprep.subr.bf16.mxu0 %v4353
    %4727 = vmatpush1.bf16.msra.mxu0 %v4352
    %4728 = vmatprep.subr.bf16.mxu0 %v4357
    %4729 = vmatpush1.bf16.msra.mxu0 %v4356
    %4730 = vmatprep.subr.bf16.mxu0 %v4361
    %4731 = vmatpush1.bf16.msra.mxu0 %v4360
    %4732 = vmatprep.subr.bf16.mxu0 %v4365
    %4733 = vmatpush1.bf16.msra.mxu0 %v4364
    %4734 = vmatprep.mubr.bf16.mxu0 %v4693
    %4735 = vmatmul.mubr.bf16.gmra.mrb[0].mxu0 %v4692
    %v4736 = vpop.f32.mrb[0].mxu0
    %v4737 = vadd.f32 0.0, %v4736
    %v4738 = vpop.f32.mrb[0].mxu0
    %v4739 = vadd.f32 0.0, %v4738
    %v4740 = vpop.f32.mrb[0].mxu0
    %v4741 = vpop.f32.mrb[0].mxu0
    %4742 = vdwg.mxu0
    %4743 = vmatprep.subr.bf16.mxu0 %v4307
    %4744 = vmatpush1.bf16.msra.mxu0 %v4306
    %4745 = vmatprep.subr.bf16.mxu0 %v4311
    %4746 = vmatpush1.bf16.msra.mxu0 %v4310
    %4747 = vmatprep.subr.bf16.mxu0 %v4315
    %4748 = vmatpush1.bf16.msra.mxu0 %v4314
    %4749 = vmatprep.subr.bf16.mxu0 %v4319
    %4750 = vmatpush1.bf16.msra.mxu0 %v4318
    %4751 = vmatprep.subr.bf16.mxu0 %v4323
    %4752 = vmatpush1.bf16.msra.mxu0 %v4322
    %4753 = vmatprep.subr.bf16.mxu0 %v4327
    %4754 = vmatpush1.bf16.msra.mxu0 %v4326
    %4755 = vmatprep.subr.bf16.mxu0 %v4331
    %4756 = vmatpush1.bf16.msra.mxu0 %v4330
    %4757 = vmatprep.subr.bf16.mxu0 %v4335
    %4758 = vmatpush1.bf16.msra.mxu0 %v4334
    %4759 = vmatprep.subr.bf16.mxu0 %v4339
    %4760 = vmatpush1.bf16.msra.mxu0 %v4338
    %4761 = vmatprep.subr.bf16.mxu0 %v4343
    %4762 = vmatpush1.bf16.msra.mxu0 %v4342
    %4763 = vmatprep.subr.bf16.mxu0 %v4347
    %4764 = vmatpush1.bf16.msra.mxu0 %v4346
    %4765 = vmatprep.subr.bf16.mxu0 %v4351
    %4766 = vmatpush1.bf16.msra.mxu0 %v4350
    %4767 = vmatprep.subr.bf16.mxu0 %v4355
    %4768 = vmatpush1.bf16.msra.mxu0 %v4354
    %4769 = vmatprep.subr.bf16.mxu0 %v4359
    %4770 = vmatpush1.bf16.msra.mxu0 %v4358
    %4771 = vmatprep.subr.bf16.mxu0 %v4363
    %4772 = vmatpush1.bf16.msra.mxu0 %v4362
    %4773 = vmatprep.subr.bf16.mxu0 %v4367
    %4774 = vmatpush1.bf16.msra.mxu0 %v4366
    %4775 = vmatprep.mubr.bf16.mxu0 %v4693
    %4776 = vmatmul.mubr.bf16.gmra.mrb[0].mxu0 %v4692
    %v4777 = vpop.f32.mrb[0].mxu0
    %v4778 = vadd.f32 0.0, %v4777
    %v4779 = vpop.f32.mrb[0].mxu0
    %v4780 = vadd.f32 0.0, %v4779
    %v4781 = vpop.f32.mrb[0].mxu0
    %v4782 = vpop.f32.mrb[0].mxu0
    %4783 = vdwg.mxu0
    %v4784 = vadd.f32 %v4698, %v4737
    %v4785 = vadd.f32 %v4699, %v4739
    %v4786 = vadd.f32 %v4700, %v4778
    %v4787 = vadd.f32 %v4701, %v4780
    %v4788 = vxor.u32 %v4784, 2147483648
    %v4789 = vmul.f32 %v4788, 1.442695
    %v4790 = vpow.pop %v4789
    %v4791 = vadd.f32 %v4790, 1.0
    %v4792 = vrcp.pop %v4791
    %v4793 = vmul.f32 1.0, %v4792
    %v4794 = vxor.u32 %v4785, 2147483648
    %v4795 = vmul.f32 %v4794, 1.442695
    %v4796 = vpow.pop %v4795
    %v4797 = vadd.f32 %v4796, 1.0
    %v4798 = vrcp.pop %v4797
    %v4799 = vmul.f32 1.0, %v4798
    %v4800 = vtanh.pop %v4786
    %v4801 = vxor.u32 %v4787, 2147483648
    %v4802 = vmul.f32 %v4801, 1.442695
    %v4803 = vpow.pop %v4802
    %v4804 = vadd.f32 %v4803, 1.0
    %v4805 = vrcp.pop %v4804
    %v4806 = vmul.f32 1.0, %v4805
    %v4807 = vmul.f32 %v4799, %v4689
    %v4808 = vmul.f32 %v4793, %v4800
    %v4809 = vadd.f32 %v4807, %v4808
    %v4810 = vtanh.pop %v4809
    %v4811 = vmul.f32 %v4806, %v4810
    %v4812 = vld [vmem:[#allocation10 + $0x10] sm:$0xff]
    %v4813 = vsub.f32 %v4809, %v4689
    %v4814 = vmul.f32 %v4812, %v4813
    %v4815 = vadd.f32 %v4689, %v4814
    %4816 = vst [vmem:[#allocation6] sm:$0xff] %v4815
    %v4817 = vsub.f32 %v4811, %v4688
    %v4818 = vmul.f32 %v4812, %v4817
    %v4819 = vadd.f32 %v4688, %v4818
    %4820 = vst [vmem:[#allocation5] sm:$0xff] %v4819
    %v4821 = vmul.f32 %v4812, %v4811
    %4822 = vst [vmem:[#allocation16 + $0x10] sm:$0xff] %v4821
    %v4823 = vld [vmem:[#allocation5] sm:$0xff]
    %v4824 = vld [vmem:[#allocation6] sm:$0xff]
    %v4825 = vmul.f32 %v4823, %v97
    %v4826 = vmul.f32 %v4823, %v102
    %v4827 = vpack.c.bf16 %v4825, %v4825
    %v4828 = vpack.c.bf16 %v4826, %v4826
    %v4829 = vld [vmem:[#allocation3 + $0x60] sm:$0xff]
    %v4830 = vld [vmem:[#allocation3 + $0x68] sm:$0xff]
    %v4831 = vld [vmem:[#allocation3 + $0x70] sm:$0xff]
    %v4832 = vld [vmem:[#allocation3 + $0x78] sm:$0xff]
    %v4833 = vadd.f32 %v4829, %v4092
    %v4834 = vadd.f32 %v4830, %v4093
    %v4835 = vadd.f32 %v4831, %v4094
    %v4836 = vadd.f32 %v4832, %v4095
    %4837 = vmatprep.subr.bf16.mxu0 %v4305
    %4838 = vmatpush1.bf16.msra.mxu0 %v4304
    %4839 = vmatprep.subr.bf16.mxu0 %v4309
    %4840 = vmatpush1.bf16.msra.mxu0 %v4308
    %4841 = vmatprep.subr.bf16.mxu0 %v4313
    %4842 = vmatpush1.bf16.msra.mxu0 %v4312
    %4843 = vmatprep.subr.bf16.mxu0 %v4317
    %4844 = vmatpush1.bf16.msra.mxu0 %v4316
    %4845 = vmatprep.subr.bf16.mxu0 %v4321
    %4846 = vmatpush1.bf16.msra.mxu0 %v4320
    %4847 = vmatprep.subr.bf16.mxu0 %v4325
    %4848 = vmatpush1.bf16.msra.mxu0 %v4324
    %4849 = vmatprep.subr.bf16.mxu0 %v4329
    %4850 = vmatpush1.bf16.msra.mxu0 %v4328
    %4851 = vmatprep.subr.bf16.mxu0 %v4333
    %4852 = vmatpush1.bf16.msra.mxu0 %v4332
    %4853 = vmatprep.subr.bf16.mxu0 %v4337
    %4854 = vmatpush1.bf16.msra.mxu0 %v4336
    %4855 = vmatprep.subr.bf16.mxu0 %v4341
    %4856 = vmatpush1.bf16.msra.mxu0 %v4340
    %4857 = vmatprep.subr.bf16.mxu0 %v4345
    %4858 = vmatpush1.bf16.msra.mxu0 %v4344
    %4859 = vmatprep.subr.bf16.mxu0 %v4349
    %4860 = vmatpush1.bf16.msra.mxu0 %v4348
    %4861 = vmatprep.subr.bf16.mxu0 %v4353
    %4862 = vmatpush1.bf16.msra.mxu0 %v4352
    %4863 = vmatprep.subr.bf16.mxu0 %v4357
    %4864 = vmatpush1.bf16.msra.mxu0 %v4356
    %4865 = vmatprep.subr.bf16.mxu0 %v4361
    %4866 = vmatpush1.bf16.msra.mxu0 %v4360
    %4867 = vmatprep.subr.bf16.mxu0 %v4365
    %4868 = vmatpush1.bf16.msra.mxu0 %v4364
    %4869 = vmatprep.mubr.bf16.mxu0 %v4828
    %4870 = vmatmul.mubr.bf16.gmra.mrb[0].mxu0 %v4827
    %v4871 = vpop.f32.mrb[0].mxu0
    %v4872 = vadd.f32 0.0, %v4871
    %v4873 = vpop.f32.mrb[0].mxu0
    %v4874 = vadd.f32 0.0, %v4873
    %v4875 = vpop.f32.mrb[0].mxu0
    %v4876 = vpop.f32.mrb[0].mxu0
    %4877 = vdwg.mxu0
    %4878 = vmatprep.subr.bf16.mxu0 %v4307
    %4879 = vmatpush1.bf16.msra.mxu0 %v4306
    %4880 = vmatprep.subr.bf16.mxu0 %v4311
    %4881 = vmatpush1.bf16.msra.mxu0 %v4310
    %4882 = vmatprep.subr.bf16.mxu0 %v4315
    %4883 = vmatpush1.bf16.msra.mxu0 %v4314
    %4884 = vmatprep.subr.bf16.mxu0 %v4319
    %4885 = vmatpush1.bf16.msra.mxu0 %v4318
    %4886 = vmatprep.subr.bf16.mxu0 %v4323
    %4887 = vmatpush1.bf16.msra.mxu0 %v4322
    %4888 = vmatprep.subr.bf16.mxu0 %v4327
    %4889 = vmatpush1.bf16.msra.mxu0 %v4326
    %4890 = vmatprep.subr.bf16.mxu0 %v4331
    %4891 = vmatpush1.bf16.msra.mxu0 %v4330
    %4892 = vmatprep.subr.bf16.mxu0 %v4335
    %4893 = vmatpush1.bf16.msra.mxu0 %v4334
    %4894 = vmatprep.subr.bf16.mxu0 %v4339
    %4895 = vmatpush1.bf16.msra.mxu0 %v4338
    %4896 = vmatprep.subr.bf16.mxu0 %v4343
    %4897 = vmatpush1.bf16.msra.mxu0 %v4342
    %4898 = vmatprep.subr.bf16.mxu0 %v4347
    %4899 = vmatpush1.bf16.msra.mxu0 %v4346
    %4900 = vmatprep.subr.bf16.mxu0 %v4351
    %4901 = vmatpush1.bf16.msra.mxu0 %v4350
    %4902 = vmatprep.subr.bf16.mxu0 %v4355
    %4903 = vmatpush1.bf16.msra.mxu0 %v4354
    %4904 = vmatprep.subr.bf16.mxu0 %v4359
    %4905 = vmatpush1.bf16.msra.mxu0 %v4358
    %4906 = vmatprep.subr.bf16.mxu0 %v4363
    %4907 = vmatpush1.bf16.msra.mxu0 %v4362
    %4908 = vmatprep.subr.bf16.mxu0 %v4367
    %4909 = vmatpush1.bf16.msra.mxu0 %v4366
    %4910 = vmatprep.mubr.bf16.mxu0 %v4828
    %4911 = vmatmul.mubr.bf16.gmra.mrb[0].mxu0 %v4827
    %v4912 = vpop.f32.mrb[0].mxu0
    %v4913 = vadd.f32 0.0, %v4912
    %v4914 = vpop.f32.mrb[0].mxu0
    %v4915 = vadd.f32 0.0, %v4914
    %v4916 = vpop.f32.mrb[0].mxu0
    %v4917 = vpop.f32.mrb[0].mxu0
    %4918 = vdwg.mxu0
    %v4919 = vadd.f32 %v4833, %v4872
    %v4920 = vadd.f32 %v4834, %v4874
    %v4921 = vadd.f32 %v4835, %v4913
    %v4922 = vadd.f32 %v4836, %v4915
    %v4923 = vxor.u32 %v4919, 2147483648
    %v4924 = vmul.f32 %v4923, 1.442695
    %v4925 = vpow.pop %v4924
    %v4926 = vadd.f32 %v4925, 1.0
    %v4927 = vrcp.pop %v4926
    %v4928 = vmul.f32 1.0, %v4927
    %v4929 = vxor.u32 %v4920, 2147483648
    %v4930 = vmul.f32 %v4929, 1.442695
    %v4931 = vpow.pop %v4930
    %v4932 = vadd.f32 %v4931, 1.0
    %v4933 = vrcp.pop %v4932
    %v4934 = vmul.f32 1.0, %v4933
    %v4935 = vtanh.pop %v4921
    %v4936 = vxor.u32 %v4922, 2147483648
    %v4937 = vmul.f32 %v4936, 1.442695
    %v4938 = vpow.pop %v4937
    %v4939 = vadd.f32 %v4938, 1.0
    %v4940 = vrcp.pop %v4939
    %v4941 = vmul.f32 1.0, %v4940
    %v4942 = vmul.f32 %v4934, %v4824
    %v4943 = vmul.f32 %v4928, %v4935
    %v4944 = vadd.f32 %v4942, %v4943
    %v4945 = vtanh.pop %v4944
    %v4946 = vmul.f32 %v4941, %v4945
    %v4947 = vld [vmem:[#allocation10 + $0x18] sm:$0xff]
    %v4948 = vsub.f32 %v4944, %v4824
    %v4949 = vmul.f32 %v4947, %v4948
    %v4950 = vadd.f32 %v4824, %v4949
    %4951 = vst [vmem:[#allocation6] sm:$0xff] %v4950
    %v4952 = vsub.f32 %v4946, %v4823
    %v4953 = vmul.f32 %v4947, %v4952
    %v4954 = vadd.f32 %v4823, %v4953
    %4955 = vst [vmem:[#allocation5] sm:$0xff] %v4954
    %v4956 = vmul.f32 %v4947, %v4946
    %4957 = vst [vmem:[#allocation16 + $0x18] sm:$0xff] %v4956
    %v4958 = vld [vmem:[#allocation5] sm:$0xff]
    %v4959 = vld [vmem:[#allocation6] sm:$0xff]
    %v4960 = vmul.f32 %v4958, %v97
    %v4961 = vmul.f32 %v4958, %v102
    %v4962 = vpack.c.bf16 %v4960, %v4960
    %v4963 = vpack.c.bf16 %v4961, %v4961
    %v4964 = vld [vmem:[#allocation3 + $0x80] sm:$0xff]
    %v4965 = vld [vmem:[#allocation3 + $0x88] sm:$0xff]
    %v4966 = vld [vmem:[#allocation3 + $0x90] sm:$0xff]
    %v4967 = vld [vmem:[#allocation3 + $0x98] sm:$0xff]
    %v4968 = vadd.f32 %v4964, %v4092
    %v4969 = vadd.f32 %v4965, %v4093
    %v4970 = vadd.f32 %v4966, %v4094
    %v4971 = vadd.f32 %v4967, %v4095
    %4972 = vmatprep.subr.bf16.mxu0 %v4305
    %4973 = vmatpush1.bf16.msra.mxu0 %v4304
    %4974 = vmatprep.subr.bf16.mxu0 %v4309
    %4975 = vmatpush1.bf16.msra.mxu0 %v4308
    %4976 = vmatprep.subr.bf16.mxu0 %v4313
    %4977 = vmatpush1.bf16.msra.mxu0 %v4312
    %4978 = vmatprep.subr.bf16.mxu0 %v4317
    %4979 = vmatpush1.bf16.msra.mxu0 %v4316
    %4980 = vmatprep.subr.bf16.mxu0 %v4321
    %4981 = vmatpush1.bf16.msra.mxu0 %v4320
    %4982 = vmatprep.subr.bf16.mxu0 %v4325
    %4983 = vmatpush1.bf16.msra.mxu0 %v4324
    %4984 = vmatprep.subr.bf16.mxu0 %v4329
    %4985 = vmatpush1.bf16.msra.mxu0 %v4328
    %4986 = vmatprep.subr.bf16.mxu0 %v4333
    %4987 = vmatpush1.bf16.msra.mxu0 %v4332
    %4988 = vmatprep.subr.bf16.mxu0 %v4337
    %4989 = vmatpush1.bf16.msra.mxu0 %v4336
    %4990 = vmatprep.subr.bf16.mxu0 %v4341
    %4991 = vmatpush1.bf16.msra.mxu0 %v4340
    %4992 = vmatprep.subr.bf16.mxu0 %v4345
    %4993 = vmatpush1.bf16.msra.mxu0 %v4344
    %4994 = vmatprep.subr.bf16.mxu0 %v4349
    %4995 = vmatpush1.bf16.msra.mxu0 %v4348
    %4996 = vmatprep.subr.bf16.mxu0 %v4353
    %4997 = vmatpush1.bf16.msra.mxu0 %v4352
    %4998 = vmatprep.subr.bf16.mxu0 %v4357
    %4999 = vmatpush1.bf16.msra.mxu0 %v4356
    %5000 = vmatprep.subr.bf16.mxu0 %v4361
    %5001 = vmatpush1.bf16.msra.mxu0 %v4360
    %5002 = vmatprep.subr.bf16.mxu0 %v4365
    %5003 = vmatpush1.bf16.msra.mxu0 %v4364
    %5004 = vmatprep.mubr.bf16.mxu0 %v4963
    %5005 = vmatmul.mubr.bf16.gmra.mrb[0].mxu0 %v4962
    %v5006 = vpop.f32.mrb[0].mxu0
    %v5007 = vadd.f32 0.0, %v5006
    %v5008 = vpop.f32.mrb[0].mxu0
    %v5009 = vadd.f32 0.0, %v5008
    %v5010 = vpop.f32.mrb[0].mxu0
    %v5011 = vpop.f32.mrb[0].mxu0
    %5012 = vdwg.mxu0
    %5013 = vmatprep.subr.bf16.mxu0 %v4307
    %5014 = vmatpush1.bf16.msra.mxu0 %v4306
    %5015 = vmatprep.subr.bf16.mxu0 %v4311
    %5016 = vmatpush1.bf16.msra.mxu0 %v4310
    %5017 = vmatprep.subr.bf16.mxu0 %v4315
    %5018 = vmatpush1.bf16.msra.mxu0 %v4314
    %5019 = vmatprep.subr.bf16.mxu0 %v4319
    %5020 = vmatpush1.bf16.msra.mxu0 %v4318
    %5021 = vmatprep.subr.bf16.mxu0 %v4323
    %5022 = vmatpush1.bf16.msra.mxu0 %v4322
    %5023 = vmatprep.subr.bf16.mxu0 %v4327
    %5024 = vmatpush1.bf16.msra.mxu0 %v4326
    %5025 = vmatprep.subr.bf16.mxu0 %v4331
    %5026 = vmatpush1.bf16.msra.mxu0 %v4330
    %5027 = vmatprep.subr.bf16.mxu0 %v4335
    %5028 = vmatpush1.bf16.msra.mxu0 %v4334
    %5029 = vmatprep.subr.bf16.mxu0 %v4339
    %5030 = vmatpush1.bf16.msra.mxu0 %v4338
    %5031 = vmatprep.subr.bf16.mxu0 %v4343
    %5032 = vmatpush1.bf16.msra.mxu0 %v4342
    %5033 = vmatprep.subr.bf16.mxu0 %v4347
    %5034 = vmatpush1.bf16.msra.mxu0 %v4346
    %5035 = vmatprep.subr.bf16.mxu0 %v4351
    %5036 = vmatpush1.bf16.msra.mxu0 %v4350
    %5037 = vmatprep.subr.bf16.mxu0 %v4355
    %5038 = vmatpush1.bf16.msra.mxu0 %v4354
    %5039 = vmatprep.subr.bf16.mxu0 %v4359
    %5040 = vmatpush1.bf16.msra.mxu0 %v4358
    %5041 = vmatprep.subr.bf16.mxu0 %v4363
    %5042 = vmatpush1.bf16.msra.mxu0 %v4362
    %5043 = vmatprep.subr.bf16.mxu0 %v4367
    %5044 = vmatpush1.bf16.msra.mxu0 %v4366
    %5045 = vmatprep.mubr.bf16.mxu0 %v4963
    %5046 = vmatmul.mubr.bf16.gmra.mrb[0].mxu0 %v4962
    %v5047 = vpop.f32.mrb[0].mxu0
    %v5048 = vadd.f32 0.0, %v5047
    %v5049 = vpop.f32.mrb[0].mxu0
    %v5050 = vadd.f32 0.0, %v5049
    %v5051 = vpop.f32.mrb[0].mxu0
    %v5052 = vpop.f32.mrb[0].mxu0
    %5053 = vdwg.mxu0
    %v5054 = vadd.f32 %v4968, %v5007
    %v5055 = vadd.f32 %v4969, %v5009
    %v5056 = vadd.f32 %v4970, %v5048
    %v5057 = vadd.f32 %v4971, %v5050
    %v5058 = vxor.u32 %v5054, 2147483648
    %v5059 = vmul.f32 %v5058, 1.442695
    %v5060 = vpow.pop %v5059
    %v5061 = vadd.f32 %v5060, 1.0
    %v5062 = vrcp.pop %v5061
    %v5063 = vmul.f32 1.0, %v5062
    %v5064 = vxor.u32 %v5055, 2147483648
    %v5065 = vmul.f32 %v5064, 1.442695
    %v5066 = vpow.pop %v5065
    %v5067 = vadd.f32 %v5066, 1.0
    %v5068 = vrcp.pop %v5067
    %v5069 = vmul.f32 1.0, %v5068
    %v5070 = vtanh.pop %v5056
    %v5071 = vxor.u32 %v5057, 2147483648
    %v5072 = vmul.f32 %v5071, 1.442695
    %v5073 = vpow.pop %v5072
    %v5074 = vadd.f32 %v5073, 1.0
    %v5075 = vrcp.pop %v5074
    %v5076 = vmul.f32 1.0, %v5075
    %v5077 = vmul.f32 %v5069, %v4959
    %v5078 = vmul.f32 %v5063, %v5070
    %v5079 = vadd.f32 %v5077, %v5078
    %v5080 = vtanh.pop %v5079
    %v5081 = vmul.f32 %v5076, %v5080
    %v5082 = vld [vmem:[#allocation10 + $0x20] sm:$0xff]
    %v5083 = vsub.f32 %v5079, %v4959
    %v5084 = vmul.f32 %v5082, %v5083
    %v5085 = vadd.f32 %v4959, %v5084
    %5086 = vst [vmem:[#allocation6] sm:$0xff] %v5085
    %v5087 = vsub.f32 %v5081, %v4958
    %v5088 = vmul.f32 %v5082, %v5087
    %v5089 = vadd.f32 %v4958, %v5088
    %5090 = vst [vmem:[#allocation5] sm:$0xff] %v5089
    %v5091 = vmul.f32 %v5082, %v5081
    %5092 = vst [vmem:[#allocation16 + $0x20] sm:$0xff] %v5091
    %v5093 = vld [vmem:[#allocation5] sm:$0xff]
    %v5094 = vld [vmem:[#allocation6] sm:$0xff]
    %v5095 = vmul.f32 %v5093, %v97
    %v5096 = vmul.f32 %v5093, %v102
    %v5097 = vpack.c.bf16 %v5095, %v5095
    %v5098 = vpack.c.bf16 %v5096, %v5096
    %v5099 = vld [vmem:[#allocation3 + $0xa0] sm:$0xff]
    %v5100 = vld [vmem:[#allocation3 + $0xa8] sm:$0xff]
    %v5101 = vld [vmem:[#allocation3 + $0xb0] sm:$0xff]
    %v5102 = vld [vmem:[#allocation3 + $0xb8] sm:$0xff]
    %v5103 = vadd.f32 %v5099, %v4092
    %v5104 = vadd.f32 %v5100, %v4093
    %v5105 = vadd.f32 %v5101, %v4094
    %v5106 = vadd.f32 %v5102, %v4095
    %5107 = vmatprep.subr.bf16.mxu0 %v4305
    %5108 = vmatpush1.bf16.msra.mxu0 %v4304
    %5109 = vmatprep.subr.bf16.mxu0 %v4309
    %5110 = vmatpush1.bf16.msra.mxu0 %v4308
    %5111 = vmatprep.subr.bf16.mxu0 %v4313
    %5112 = vmatpush1.bf16.msra.mxu0 %v4312
    %5113 = vmatprep.subr.bf16.mxu0 %v4317
    %5114 = vmatpush1.bf16.msra.mxu0 %v4316
    %5115 = vmatprep.subr.bf16.mxu0 %v4321
    %5116 = vmatpush1.bf16.msra.mxu0 %v4320
    %5117 = vmatprep.subr.bf16.mxu0 %v4325
    %5118 = vmatpush1.bf16.msra.mxu0 %v4324
    %5119 = vmatprep.subr.bf16.mxu0 %v4329
    %5120 = vmatpush1.bf16.msra.mxu0 %v4328
    %5121 = vmatprep.subr.bf16.mxu0 %v4333
    %5122 = vmatpush1.bf16.msra.mxu0 %v4332
    %5123 = vmatprep.subr.bf16.mxu0 %v4337
    %5124 = vmatpush1.bf16.msra.mxu0 %v4336
    %5125 = vmatprep.subr.bf16.mxu0 %v4341
    %5126 = vmatpush1.bf16.msra.mxu0 %v4340
    %5127 = vmatprep.subr.bf16.mxu0 %v4345
    %5128 = vmatpush1.bf16.msra.mxu0 %v4344
    %5129 = vmatprep.subr.bf16.mxu0 %v4349
    %5130 = vmatpush1.bf16.msra.mxu0 %v4348
    %5131 = vmatprep.subr.bf16.mxu0 %v4353
    %5132 = vmatpush1.bf16.msra.mxu0 %v4352
    %5133 = vmatprep.subr.bf16.mxu0 %v4357
    %5134 = vmatpush1.bf16.msra.mxu0 %v4356
    %5135 = vmatprep.subr.bf16.mxu0 %v4361
    %5136 = vmatpush1.bf16.msra.mxu0 %v4360
    %5137 = vmatprep.subr.bf16.mxu0 %v4365
    %5138 = vmatpush1.bf16.msra.mxu0 %v4364
    %5139 = vmatprep.mubr.bf16.mxu0 %v5098
    %5140 = vmatmul.mubr.bf16.gmra.mrb[0].mxu0 %v5097
    %v5141 = vpop.f32.mrb[0].mxu0
    %v5142 = vadd.f32 0.0, %v5141
    %v5143 = vpop.f32.mrb[0].mxu0
    %v5144 = vadd.f32 0.0, %v5143
    %v5145 = vpop.f32.mrb[0].mxu0
    %v5146 = vpop.f32.mrb[0].mxu0
    %5147 = vdwg.mxu0
    %5148 = vmatprep.subr.bf16.mxu0 %v4307
    %5149 = vmatpush1.bf16.msra.mxu0 %v4306
    %5150 = vmatprep.subr.bf16.mxu0 %v4311
    %5151 = vmatpush1.bf16.msra.mxu0 %v4310
    %5152 = vmatprep.subr.bf16.mxu0 %v4315
    %5153 = vmatpush1.bf16.msra.mxu0 %v4314
    %5154 = vmatprep.subr.bf16.mxu0 %v4319
    %5155 = vmatpush1.bf16.msra.mxu0 %v4318
    %5156 = vmatprep.subr.bf16.mxu0 %v4323
    %5157 = vmatpush1.bf16.msra.mxu0 %v4322
    %5158 = vmatprep.subr.bf16.mxu0 %v4327
    %5159 = vmatpush1.bf16.msra.mxu0 %v4326
    %5160 = vmatprep.subr.bf16.mxu0 %v4331
    %5161 = vmatpush1.bf16.msra.mxu0 %v4330
    %5162 = vmatprep.subr.bf16.mxu0 %v4335
    %5163 = vmatpush1.bf16.msra.mxu0 %v4334
    %5164 = vmatprep.subr.bf16.mxu0 %v4339
    %5165 = vmatpush1.bf16.msra.mxu0 %v4338
    %5166 = vmatprep.subr.bf16.mxu0 %v4343
    %5167 = vmatpush1.bf16.msra.mxu0 %v4342
    %5168 = vmatprep.subr.bf16.mxu0 %v4347
    %5169 = vmatpush1.bf16.msra.mxu0 %v4346
    %5170 = vmatprep.subr.bf16.mxu0 %v4351
    %5171 = vmatpush1.bf16.msra.mxu0 %v4350
    %5172 = vmatprep.subr.bf16.mxu0 %v4355
    %5173 = vmatpush1.bf16.msra.mxu0 %v4354
    %5174 = vmatprep.subr.bf16.mxu0 %v4359
    %5175 = vmatpush1.bf16.msra.mxu0 %v4358
    %5176 = vmatprep.subr.bf16.mxu0 %v4363
    %5177 = vmatpush1.bf16.msra.mxu0 %v4362
    %5178 = vmatprep.subr.bf16.mxu0 %v4367
    %5179 = vmatpush1.bf16.msra.mxu0 %v4366
    %5180 = vmatprep.mubr.bf16.mxu0 %v5098
    %5181 = vmatmul.mubr.bf16.gmra.mrb[0].mxu0 %v5097
    %v5182 = vpop.f32.mrb[0].mxu0
    %v5183 = vadd.f32 0.0, %v5182
    %v5184 = vpop.f32.mrb[0].mxu0
    %v5185 = vadd.f32 0.0, %v5184
    %v5186 = vpop.f32.mrb[0].mxu0
    %v5187 = vpop.f32.mrb[0].mxu0
    %5188 = vdwg.mxu0
    %v5189 = vadd.f32 %v5103, %v5142
    %v5190 = vadd.f32 %v5104, %v5144
    %v5191 = vadd.f32 %v5105, %v5183
    %v5192 = vadd.f32 %v5106, %v5185
    %v5193 = vxor.u32 %v5189, 2147483648
    %v5194 = vmul.f32 %v5193, 1.442695
    %v5195 = vpow.pop %v5194
    %v5196 = vadd.f32 %v5195, 1.0
    %v5197 = vrcp.pop %v5196
    %v5198 = vmul.f32 1.0, %v5197
    %v5199 = vxor.u32 %v5190, 2147483648
    %v5200 = vmul.f32 %v5199, 1.442695
    %v5201 = vpow.pop %v5200
    %v5202 = vadd.f32 %v5201, 1.0
    %v5203 = vrcp.pop %v5202
    %v5204 = vmul.f32 1.0, %v5203
    %v5205 = vtanh.pop %v5191
    %v5206 = vxor.u32 %v5192, 2147483648
    %v5207 = vmul.f32 %v5206, 1.442695
    %v5208 = vpow.pop %v5207
    %v5209 = vadd.f32 %v5208, 1.0
    %v5210 = vrcp.pop %v5209
    %v5211 = vmul.f32 1.0, %v5210
    %v5212 = vmul.f32 %v5204, %v5094
    %v5213 = vmul.f32 %v5198, %v5205
    %v5214 = vadd.f32 %v5212, %v5213
    %v5215 = vtanh.pop %v5214
    %v5216 = vmul.f32 %v5211, %v5215
    %v5217 = vld [vmem:[#allocation10 + $0x28] sm:$0xff]
    %v5218 = vsub.f32 %v5214, %v5094
    %v5219 = vmul.f32 %v5217, %v5218
    %v5220 = vadd.f32 %v5094, %v5219
    %5221 = vst [vmem:[#allocation6] sm:$0xff] %v5220
    %v5222 = vsub.f32 %v5216, %v5093
    %v5223 = vmul.f32 %v5217, %v5222
    %v5224 = vadd.f32 %v5093, %v5223
    %5225 = vst [vmem:[#allocation5] sm:$0xff] %v5224
    %v5226 = vmul.f32 %v5217, %v5216
    %5227 = vst [vmem:[#allocation16 + $0x28] sm:$0xff] %v5226
    %v5228 = vld [vmem:[#allocation5] sm:$0xff]
    %v5229 = vld [vmem:[#allocation6] sm:$0xff]
    %v5230 = vmul.f32 %v5228, %v97
    %v5231 = vmul.f32 %v5228, %v102
    %v5232 = vpack.c.bf16 %v5230, %v5230
    %v5233 = vpack.c.bf16 %v5231, %v5231
    %v5234 = vld [vmem:[#allocation3 + $0xc0] sm:$0xff]
    %v5235 = vld [vmem:[#allocation3 + $0xc8] sm:$0xff]
    %v5236 = vld [vmem:[#allocation3 + $0xd0] sm:$0xff]
    %v5237 = vld [vmem:[#allocation3 + $0xd8] sm:$0xff]
    %v5238 = vadd.f32 %v5234, %v4092
    %v5239 = vadd.f32 %v5235, %v4093
    %v5240 = vadd.f32 %v5236, %v4094
    %v5241 = vadd.f32 %v5237, %v4095
    %5242 = vmatprep.subr.bf16.mxu0 %v4305
    %5243 = vmatpush1.bf16.msra.mxu0 %v4304
    %5244 = vmatprep.subr.bf16.mxu0 %v4309
    %5245 = vmatpush1.bf16.msra.mxu0 %v4308
    %5246 = vmatprep.subr.bf16.mxu0 %v4313
    %5247 = vmatpush1.bf16.msra.mxu0 %v4312
    %5248 = vmatprep.subr.bf16.mxu0 %v4317
    %5249 = vmatpush1.bf16.msra.mxu0 %v4316
    %5250 = vmatprep.subr.bf16.mxu0 %v4321
    %5251 = vmatpush1.bf16.msra.mxu0 %v4320
    %5252 = vmatprep.subr.bf16.mxu0 %v4325
    %5253 = vmatpush1.bf16.msra.mxu0 %v4324
    %5254 = vmatprep.subr.bf16.mxu0 %v4329
    %5255 = vmatpush1.bf16.msra.mxu0 %v4328
    %5256 = vmatprep.subr.bf16.mxu0 %v4333
    %5257 = vmatpush1.bf16.msra.mxu0 %v4332
    %5258 = vmatprep.subr.bf16.mxu0 %v4337
    %5259 = vmatpush1.bf16.msra.mxu0 %v4336
    %5260 = vmatprep.subr.bf16.mxu0 %v4341
    %5261 = vmatpush1.bf16.msra.mxu0 %v4340
    %5262 = vmatprep.subr.bf16.mxu0 %v4345
    %5263 = vmatpush1.bf16.msra.mxu0 %v4344
    %5264 = vmatprep.subr.bf16.mxu0 %v4349
    %5265 = vmatpush1.bf16.msra.mxu0 %v4348
    %5266 = vmatprep.subr.bf16.mxu0 %v4353
    %5267 = vmatpush1.bf16.msra.mxu0 %v4352
    %5268 = vmatprep.subr.bf16.mxu0 %v4357
    %5269 = vmatpush1.bf16.msra.mxu0 %v4356
    %5270 = vmatprep.subr.bf16.mxu0 %v4361
    %5271 = vmatpush1.bf16.msra.mxu0 %v4360
    %5272 = vmatprep.subr.bf16.mxu0 %v4365
    %5273 = vmatpush1.bf16.msra.mxu0 %v4364
    %5274 = vmatprep.mubr.bf16.mxu0 %v5233
    %5275 = vmatmul.mubr.bf16.gmra.mrb[0].mxu0 %v5232
    %v5276 = vpop.f32.mrb[0].mxu0
    %v5277 = vadd.f32 0.0, %v5276
    %v5278 = vpop.f32.mrb[0].mxu0
    %v5279 = vadd.f32 0.0, %v5278
    %v5280 = vpop.f32.mrb[0].mxu0
    %v5281 = vpop.f32.mrb[0].mxu0
    %5282 = vdwg.mxu0
    %5283 = vmatprep.subr.bf16.mxu0 %v4307
    %5284 = vmatpush1.bf16.msra.mxu0 %v4306
    %5285 = vmatprep.subr.bf16.mxu0 %v4311
    %5286 = vmatpush1.bf16.msra.mxu0 %v4310
    %5287 = vmatprep.subr.bf16.mxu0 %v4315
    %5288 = vmatpush1.bf16.msra.mxu0 %v4314
    %5289 = vmatprep.subr.bf16.mxu0 %v4319
    %5290 = vmatpush1.bf16.msra.mxu0 %v4318
    %5291 = vmatprep.subr.bf16.mxu0 %v4323
    %5292 = vmatpush1.bf16.msra.mxu0 %v4322
    %5293 = vmatprep.subr.bf16.mxu0 %v4327
    %5294 = vmatpush1.bf16.msra.mxu0 %v4326
    %5295 = vmatprep.subr.bf16.mxu0 %v4331
    %5296 = vmatpush1.bf16.msra.mxu0 %v4330
    %5297 = vmatprep.subr.bf16.mxu0 %v4335
    %5298 = vmatpush1.bf16.msra.mxu0 %v4334
    %5299 = vmatprep.subr.bf16.mxu0 %v4339
    %5300 = vmatpush1.bf16.msra.mxu0 %v4338
    %5301 = vmatprep.subr.bf16.mxu0 %v4343
    %5302 = vmatpush1.bf16.msra.mxu0 %v4342
    %5303 = vmatprep.subr.bf16.mxu0 %v4347
    %5304 = vmatpush1.bf16.msra.mxu0 %v4346
    %5305 = vmatprep.subr.bf16.mxu0 %v4351
    %5306 = vmatpush1.bf16.msra.mxu0 %v4350
    %5307 = vmatprep.subr.bf16.mxu0 %v4355
    %5308 = vmatpush1.bf16.msra.mxu0 %v4354
    %5309 = vmatprep.subr.bf16.mxu0 %v4359
    %5310 = vmatpush1.bf16.msra.mxu0 %v4358
    %5311 = vmatprep.subr.bf16.mxu0 %v4363
    %5312 = vmatpush1.bf16.msra.mxu0 %v4362
    %5313 = vmatprep.subr.bf16.mxu0 %v4367
    %5314 = vmatpush1.bf16.msra.mxu0 %v4366
    %5315 = vmatprep.mubr.bf16.mxu0 %v5233
    %5316 = vmatmul.mubr.bf16.gmra.mrb[0].mxu0 %v5232
    %v5317 = vpop.f32.mrb[0].mxu0
    %v5318 = vadd.f32 0.0, %v5317
    %v5319 = vpop.f32.mrb[0].mxu0
    %v5320 = vadd.f32 0.0, %v5319
    %v5321 = vpop.f32.mrb[0].mxu0
    %v5322 = vpop.f32.mrb[0].mxu0
    %5323 = vdwg.mxu0
    %v5324 = vadd.f32 %v5238, %v5277
    %v5325 = vadd.f32 %v5239, %v5279
    %v5326 = vadd.f32 %v5240, %v5318
    %v5327 = vadd.f32 %v5241, %v5320
    %v5328 = vxor.u32 %v5324, 2147483648
    %v5329 = vmul.f32 %v5328, 1.442695
    %v5330 = vpow.pop %v5329
    %v5331 = vadd.f32 %v5330, 1.0
    %v5332 = vrcp.pop %v5331
    %v5333 = vmul.f32 1.0, %v5332
    %v5334 = vxor.u32 %v5325, 2147483648
    %v5335 = vmul.f32 %v5334, 1.442695
    %v5336 = vpow.pop %v5335
    %v5337 = vadd.f32 %v5336, 1.0
    %v5338 = vrcp.pop %v5337
    %v5339 = vmul.f32 1.0, %v5338
    %v5340 = vtanh.pop %v5326
    %v5341 = vxor.u32 %v5327, 2147483648
    %v5342 = vmul.f32 %v5341, 1.442695
    %v5343 = vpow.pop %v5342
    %v5344 = vadd.f32 %v5343, 1.0
    %v5345 = vrcp.pop %v5344
    %v5346 = vmul.f32 1.0, %v5345
    %v5347 = vmul.f32 %v5339, %v5229
    %v5348 = vmul.f32 %v5333, %v5340
    %v5349 = vadd.f32 %v5347, %v5348
    %v5350 = vtanh.pop %v5349
    %v5351 = vmul.f32 %v5346, %v5350
    %v5352 = vld [vmem:[#allocation10 + $0x30] sm:$0xff]
    %v5353 = vsub.f32 %v5349, %v5229
    %v5354 = vmul.f32 %v5352, %v5353
    %v5355 = vadd.f32 %v5229, %v5354
    %5356 = vst [vmem:[#allocation6] sm:$0xff] %v5355
    %v5357 = vsub.f32 %v5351, %v5228
    %v5358 = vmul.f32 %v5352, %v5357
    %v5359 = vadd.f32 %v5228, %v5358
    %5360 = vst [vmem:[#allocation5] sm:$0xff] %v5359
    %v5361 = vmul.f32 %v5352, %v5351
    %5362 = vst [vmem:[#allocation16 + $0x30] sm:$0xff] %v5361
    %v5363 = vld [vmem:[#allocation5] sm:$0xff]
    %v5364 = vld [vmem:[#allocation6] sm:$0xff]
    %v5365 = vmul.f32 %v5363, %v97
    %v5366 = vmul.f32 %v5363, %v102
    %v5367 = vpack.c.bf16 %v5365, %v5365
    %v5368 = vpack.c.bf16 %v5366, %v5366
    %v5369 = vld [vmem:[#allocation3 + $0xe0] sm:$0xff]
    %v5370 = vld [vmem:[#allocation3 + $0xe8] sm:$0xff]
    %v5371 = vld [vmem:[#allocation3 + $0xf0] sm:$0xff]
    %v5372 = vld [vmem:[#allocation3 + $0xf8] sm:$0xff]
    %v5373 = vadd.f32 %v5369, %v4092
    %v5374 = vadd.f32 %v5370, %v4093
    %v5375 = vadd.f32 %v5371, %v4094
    %v5376 = vadd.f32 %v5372, %v4095
    %5377 = vmatprep.subr.bf16.mxu0 %v4305
    %5378 = vmatpush1.bf16.msra.mxu0 %v4304
    %5379 = vmatprep.subr.bf16.mxu0 %v4309
    %5380 = vmatpush1.bf16.msra.mxu0 %v4308
    %5381 = vmatprep.subr.bf16.mxu0 %v4313
    %5382 = vmatpush1.bf16.msra.mxu0 %v4312
    %5383 = vmatprep.subr.bf16.mxu0 %v4317
    %5384 = vmatpush1.bf16.msra.mxu0 %v4316
    %5385 = vmatprep.subr.bf16.mxu0 %v4321
    %5386 = vmatpush1.bf16.msra.mxu0 %v4320
    %5387 = vmatprep.subr.bf16.mxu0 %v4325
    %5388 = vmatpush1.bf16.msra.mxu0 %v4324
    %5389 = vmatprep.subr.bf16.mxu0 %v4329
    %5390 = vmatpush1.bf16.msra.mxu0 %v4328
    %5391 = vmatprep.subr.bf16.mxu0 %v4333
    %5392 = vmatpush1.bf16.msra.mxu0 %v4332
    %5393 = vmatprep.subr.bf16.mxu0 %v4337
    %5394 = vmatpush1.bf16.msra.mxu0 %v4336
    %5395 = vmatprep.subr.bf16.mxu0 %v4341
    %5396 = vmatpush1.bf16.msra.mxu0 %v4340
    %5397 = vmatprep.subr.bf16.mxu0 %v4345
    %5398 = vmatpush1.bf16.msra.mxu0 %v4344
    %5399 = vmatprep.subr.bf16.mxu0 %v4349
    %5400 = vmatpush1.bf16.msra.mxu0 %v4348
    %5401 = vmatprep.subr.bf16.mxu0 %v4353
    %5402 = vmatpush1.bf16.msra.mxu0 %v4352
    %5403 = vmatprep.subr.bf16.mxu0 %v4357
    %5404 = vmatpush1.bf16.msra.mxu0 %v4356
    %5405 = vmatprep.subr.bf16.mxu0 %v4361
    %5406 = vmatpush1.bf16.msra.mxu0 %v4360
    %5407 = vmatprep.subr.bf16.mxu0 %v4365
    %5408 = vmatpush1.bf16.msra.mxu0 %v4364
    %5409 = vmatprep.mubr.bf16.mxu0 %v5368
    %5410 = vmatmul.mubr.bf16.gmra.mrb[0].mxu0 %v5367
    %v5411 = vpop.f32.mrb[0].mxu0
    %v5412 = vadd.f32 0.0, %v5411
    %v5413 = vpop.f32.mrb[0].mxu0
    %v5414 = vadd.f32 0.0, %v5413
    %v5415 = vpop.f32.mrb[0].mxu0
    %v5416 = vpop.f32.mrb[0].mxu0
    %5417 = vdwg.mxu0
    %5418 = vmatprep.subr.bf16.mxu0 %v4307
    %5419 = vmatpush1.bf16.msra.mxu0 %v4306
    %5420 = vmatprep.subr.bf16.mxu0 %v4311
    %5421 = vmatpush1.bf16.msra.mxu0 %v4310
    %5422 = vmatprep.subr.bf16.mxu0 %v4315
    %5423 = vmatpush1.bf16.msra.mxu0 %v4314
    %5424 = vmatprep.subr.bf16.mxu0 %v4319
    %5425 = vmatpush1.bf16.msra.mxu0 %v4318
    %5426 = vmatprep.subr.bf16.mxu0 %v4323
    %5427 = vmatpush1.bf16.msra.mxu0 %v4322
    %5428 = vmatprep.subr.bf16.mxu0 %v4327
    %5429 = vmatpush1.bf16.msra.mxu0 %v4326
    %5430 = vmatprep.subr.bf16.mxu0 %v4331
    %5431 = vmatpush1.bf16.msra.mxu0 %v4330
    %5432 = vmatprep.subr.bf16.mxu0 %v4335
    %5433 = vmatpush1.bf16.msra.mxu0 %v4334
    %5434 = vmatprep.subr.bf16.mxu0 %v4339
    %5435 = vmatpush1.bf16.msra.mxu0 %v4338
    %5436 = vmatprep.subr.bf16.mxu0 %v4343
    %5437 = vmatpush1.bf16.msra.mxu0 %v4342
    %5438 = vmatprep.subr.bf16.mxu0 %v4347
    %5439 = vmatpush1.bf16.msra.mxu0 %v4346
    %5440 = vmatprep.subr.bf16.mxu0 %v4351
    %5441 = vmatpush1.bf16.msra.mxu0 %v4350
    %5442 = vmatprep.subr.bf16.mxu0 %v4355
    %5443 = vmatpush1.bf16.msra.mxu0 %v4354
    %5444 = vmatprep.subr.bf16.mxu0 %v4359
    %5445 = vmatpush1.bf16.msra.mxu0 %v4358
    %5446 = vmatprep.subr.bf16.mxu0 %v4363
    %5447 = vmatpush1.bf16.msra.mxu0 %v4362
    %5448 = vmatprep.subr.bf16.mxu0 %v4367
    %5449 = vmatpush1.bf16.msra.mxu0 %v4366
    %5450 = vmatprep.mubr.bf16.mxu0 %v5368
    %5451 = vmatmul.mubr.bf16.gmra.mrb[0].mxu0 %v5367
    %v5452 = vpop.f32.mrb[0].mxu0
    %v5453 = vadd.f32 0.0, %v5452
    %v5454 = vpop.f32.mrb[0].mxu0
    %v5455 = vadd.f32 0.0, %v5454
    %v5456 = vpop.f32.mrb[0].mxu0
    %v5457 = vpop.f32.mrb[0].mxu0
    %5458 = vdwg.mxu0
    %v5459 = vadd.f32 %v5373, %v5412
    %v5460 = vadd.f32 %v5374, %v5414
    %v5461 = vadd.f32 %v5375, %v5453
    %v5462 = vadd.f32 %v5376, %v5455
    %v5463 = vxor.u32 %v5459, 2147483648
    %v5464 = vmul.f32 %v5463, 1.442695
    %v5465 = vpow.pop %v5464
    %v5466 = vadd.f32 %v5465, 1.0
    %v5467 = vrcp.pop %v5466
    %v5468 = vmul.f32 1.0, %v5467
    %v5469 = vxor.u32 %v5460, 2147483648
    %v5470 = vmul.f32 %v5469, 1.442695
    %v5471 = vpow.pop %v5470
    %v5472 = vadd.f32 %v5471, 1.0
    %v5473 = vrcp.pop %v5472
    %v5474 = vmul.f32 1.0, %v5473
    %v5475 = vtanh.pop %v5461
    %v5476 = vxor.u32 %v5462, 2147483648
    %v5477 = vmul.f32 %v5476, 1.442695
    %v5478 = vpow.pop %v5477
    %v5479 = vadd.f32 %v5478, 1.0
    %v5480 = vrcp.pop %v5479
    %v5481 = vmul.f32 1.0, %v5480
    %v5482 = vmul.f32 %v5474, %v5364
    %v5483 = vmul.f32 %v5468, %v5475
    %v5484 = vadd.f32 %v5482, %v5483
    %v5485 = vtanh.pop %v5484
    %v5486 = vmul.f32 %v5481, %v5485
    %v5487 = vld [vmem:[#allocation10 + $0x38] sm:$0xff]
    %v5488 = vsub.f32 %v5484, %v5364
    %v5489 = vmul.f32 %v5487, %v5488
    %v5490 = vadd.f32 %v5364, %v5489
    %5491 = vst [vmem:[#allocation6] sm:$0xff] %v5490
    %v5492 = vsub.f32 %v5486, %v5363
    %v5493 = vmul.f32 %v5487, %v5492
    %v5494 = vadd.f32 %v5363, %v5493
    %5495 = vst [vmem:[#allocation5] sm:$0xff] %v5494
    %v5496 = vmul.f32 %v5487, %v5486
    %5497 = vst [vmem:[#allocation16 + $0x38] sm:$0xff] %v5496
    %v5498 = vld [vmem:[#allocation5] sm:$0xff]
    %s5499 = scalar_lea.vmem [#allocation17], 8
    %5500 = vst [vmem:[%s5499] sm:$0xff] %v5498
    %v5501 = vld [vmem:[#allocation6] sm:$0xff]
    %s5502 = scalar_lea.vmem [#allocation19], 8
    %5503 = vst [vmem:[%s5502] sm:$0xff] %v5501
    // Predicated region
    $region42: #{tpu_custom_call.1} parent=1 // pred_check
      _
    $region43: #{tpu_custom_call.1} parent=1 // pred_check_branch
      %5505 = sbr.rel (0) target = $region45
    $region44: #{tpu_custom_call.1} parent=1 // pred_region
      %s5507 = ssub.s32 1024, 1024
      %5508 = vsyncadd [#allocation9], %s5507
      %s5509 = sshll.u32 [#allocation16], 4
      %s5510 = int_to_ptr.vmem [resolvable:$true] %s5509
      %5515 = dma.vmem_to_hbm [thread:$0]  %s5510, 1024, %s5, [#allocation9], 128, 128, 8
    $region45: #{tpu_custom_call.1} parent=1 // pred_fallthru
      _
    // Predicated region
    $region46: #{tpu_custom_call.1} parent=1 // pred_check
      _
    $region47: #{tpu_custom_call.1} parent=1 // pred_check_branch
      %5517 = sbr.rel (0) target = $region49
    $region48: #{tpu_custom_call.1} parent=1 // pred_region
      %s5519 = ssub.s32 256, 256
      %5520 = vsyncadd [#allocation18], %s5519
      %s5521 = sshll.u32 [#allocation17], 4
      %s5522 = int_to_ptr.vmem [resolvable:$true] %s5521
      %5527 = dma.vmem_to_hbm [thread:$0]  %s5522, 256, %s6, [#allocation18], 128, 128, 8
    $region49: #{tpu_custom_call.1} parent=1 // pred_fallthru
      _
    // Predicated region
    $region50: #{tpu_custom_call.1} parent=1 // pred_check
      _
    $region51: #{tpu_custom_call.1} parent=1 // pred_check_branch
      %5529 = sbr.rel (0) target = $region53
    $region52: #{tpu_custom_call.1} parent=1 // pred_region
      %s5531 = ssub.s32 256, 256
      %5532 = vsyncadd [#allocation18], %s5531
      %s5533 = sshll.u32 [#allocation19], 4
      %s5534 = int_to_ptr.vmem [resolvable:$true] %s5533
      %5539 = dma.vmem_to_hbm [thread:$0]  %s5534, 256, %s7, [#allocation18], 128, 128, 8
    $region53: #{tpu_custom_call.1} parent=1 // pred_fallthru
      _
    // Predicated region
    $region54: #{tpu_custom_call.1} parent=1 // pred_check
      _
    $region55: #{tpu_custom_call.1} parent=1 // pred_check_branch
      %5541 = sbr.rel (0) target = $region57
    $region56: #{tpu_custom_call.1} parent=1 // pred_region
      %5542 = dma.done [#allocation9], 1024
    $region57: #{tpu_custom_call.1} parent=1 // pred_fallthru
      _
    // Predicated region
    $region58: #{tpu_custom_call.1} parent=1 // pred_check
      _
    $region59: #{tpu_custom_call.1} parent=1 // pred_check_branch
      %5544 = sbr.rel (0) target = $region61
    $region60: #{tpu_custom_call.1} parent=1 // pred_region
      %5545 = dma.done [#allocation18], 256
    $region61: #{tpu_custom_call.1} parent=1 // pred_fallthru
      _
    // Predicated region
    $region62: #{tpu_custom_call.1} parent=1 // pred_check
      _
    $region63: #{tpu_custom_call.1} parent=1 // pred_check_branch
      %5547 = sbr.rel (0) target = $region65
    $region64: #{tpu_custom_call.1} parent=1 // pred_region
      %5548 = dma.done [#allocation18], 256
    $region65: #{tpu_custom_call.1} parent=1 // pred_fallthru
      _
    %5549 = vsyncpa [#allocation8], 1
    %5550 = vsyncpa [#allocation11], 1
    %5551 = vsyncpa [#allocation14], 1
    %5552 = vsyncpa [#allocation9], 1
    %5553 = vsyncpa [#allocation18], 1

</llo_original>
